<compile_context>
chip_gen: v7x
topology: tpu7x:2x2x1
jax: 0.10.0
libtpu: 0.0.40
codegen_flags: <defaults>
</compile_context>

<pallas_src>
import functools
import numpy as np
import jax
import jax.numpy as jnp
from jax.experimental import pallas as pl
from jax.experimental.pallas import tpu as pltpu

_MAX_TM = 512
_MAX_TN = 512
_MAX_TK = 4096          # cap K-block so double-buffered bf16 tiles stay well under
                        # the 32 MiB scoped-VMEM budget (portable to v7x's 64 MiB).


def _round_up(x, m):
    return (x + m - 1) // m * m


# ----------------------------------------------------------------------------
# Pallas kernel: tiled matmul, bf16 operands, f32 accumulation directly in the
# VMEM-resident output block, fused bias + optional ReLU epilogue.
# ----------------------------------------------------------------------------
def _matmul_kernel(x_ref, w_ref, b_ref, o_ref, *, activation, nk):
    acc = jnp.dot(x_ref[...], w_ref[...], preferred_element_type=jnp.float32)

    if nk == 1:
        out = acc + b_ref[...]
        if activation == "relu":
            out = jnp.maximum(out, 0.0)
        o_ref[...] = out
    else:
        k = pl.program_id(2)

        @pl.when(k == 0)
        def _():
            o_ref[...] = jnp.zeros_like(o_ref)

        o_ref[...] += acc

        @pl.when(k == nk - 1)
        def _():
            out = o_ref[...] + b_ref[...]
            if activation == "relu":
                out = jnp.maximum(out, 0.0)
            o_ref[...] = out


def pallas_matmul(x, w, bias=None, activation=None):
    """y = act(x @ w + bias); x:(M,K), w:(K,N). bf16 MXU inputs, f32 accumulation."""
    M, K = x.shape
    _, N = w.shape

    # --- adaptive tile selection ---------------------------------------------
    tm = _round_up(M, 8) if M <= _MAX_TM else 128
    tn = min(_round_up(N, 128), _MAX_TN)
    Kp0 = _round_up(K, 128)
    nk = -(-Kp0 // _MAX_TK)
    tk = _round_up(-(-Kp0 // nk), 128)

    Mp = _round_up(M, tm)
    Np = _round_up(N, tn)
    Kp = tk * nk

    # bf16 cast first, then pad (weight pad/cast constant-folds under jit).
    xb = jnp.pad(x.astype(jnp.bfloat16), ((0, Mp - M), (0, Kp - K)))
    wb = jnp.pad(w.astype(jnp.bfloat16), ((0, Kp - K), (0, Np - N)))
    if bias is None:
        bp = jnp.zeros((1, Np), jnp.float32)
    else:
        bp = jnp.pad(bias.astype(jnp.float32), (0, Np - N)).reshape(1, Np)

    grid = (Mp // tm, Np // tn, nk)
    out = pl.pallas_call(
        functools.partial(_matmul_kernel, activation=activation, nk=nk),
        out_shape=jax.ShapeDtypeStruct((Mp, Np), jnp.float32),
        grid_spec=pltpu.PrefetchScalarGridSpec(
            num_scalar_prefetch=0,
            grid=grid,
            in_specs=[
                pl.BlockSpec((tm, tk), lambda i, j, k: (i, k)),
                pl.BlockSpec((tk, tn), lambda i, j, k: (k, j)),
                pl.BlockSpec((1, tn), lambda i, j, k: (0, j)),
            ],
            out_specs=pl.BlockSpec((tm, tn), lambda i, j, k: (i, j)),
        ),
        compiler_params=pltpu.CompilerParams(
            dimension_semantics=("parallel", "parallel", "arbitrary"),
            vmem_limit_bytes=32 * 1024 * 1024,
        ),
    )(xb, wb, bp)

    if Mp == M and Np == N:
        return out
    return out[:M, :N]


def matmul(x, w, bias=None, activation=None):
    """Dispatcher: Pallas MXU kernel for real GEMMs, fused XLA dot for tiny ones."""
    M, K = x.shape
    _, N = w.shape
    if M < 64 or K < 64 or N < 64:          # small-GEMM bypass (PSP bins, decoder 1x1)
        y = jnp.dot(x, w, preferred_element_type=jnp.float32)
        if bias is not None:
            y = y + bias[None, :]
        if activation == "relu":
            y = jnp.maximum(y, 0.0)
        return y
    return pallas_matmul(x, w, bias, activation)


# ----------------------------------------------------------------------------
# Conv / pooling / resampling built on the matmul dispatcher (all NHWC).
# ----------------------------------------------------------------------------
def conv2d(x, w, stride=1, activation=None, bias=None):
    """3x3 conv, padding=1, NHWC input, OIHW weights; im2col (NHWC, no transpose)."""
    # TODO(synk): for large resolutions replace im2col with a fused Pallas conv that
    # DMAs halo (TILE_H+2, TILE_W+2, C) windows and accumulates the 9 taps in-kernel.
    N, H, W, C = x.shape
    O, Ci, KH, KW = w.shape
    assert C == Ci
    xp = jnp.pad(x, ((0, 0), (1, 1), (1, 1), (0, 0)))
    Ho = (H + 2 - KH) // stride + 1
    Wo = (W + 2 - KW) // stride + 1
    cols = []
    for dy in range(KH):
        for dx in range(KW):
            cols.append(xp[:, dy:dy + (Ho - 1) * stride + 1:stride,
                               dx:dx + (Wo - 1) * stride + 1:stride, :])
    patches = jnp.concatenate(cols, axis=-1).reshape(N * Ho * Wo, KH * KW * C)
    wm = w.transpose(2, 3, 1, 0).reshape(KH * KW * C, O)   # (kh, kw, c) -> matches patches
    y = matmul(patches, wm, bias, activation)
    return y.reshape(N, Ho, Wo, O)


def conv2d_1x1(x, w_oi, bias=None, activation=None):
    N, H, W, C = x.shape
    O = w_oi.shape[0]
    y = matmul(x.reshape(N * H * W, C), w_oi.T, bias, activation)
    return y.reshape(N, H, W, O)


def spatial_resample(x, Mh, Mw):
    """y[n,i,j,c] = sum_{h,w} Mh[i,h] * Mw[j,w] * x[n,h,w,c] (tiny; fused XLA einsum)."""
    return jnp.einsum("ih,jw,nhwc->nijc", Mh, Mw, x)


def pixel_shuffle(x, r):
    """torch.nn.PixelShuffle semantics, NHWC layout (channel index = c*r*r + i*r + j)."""
    N, H, W, CRR = x.shape
    C = CRR // (r * r)
    x = x.reshape(N, H, W, C, r, r).transpose(0, 1, 4, 2, 5, 3)
    return x.reshape(N, H * r, W * r, C)


def adaptive_pool_matrix(in_size, out_size):
    """Matches torch AdaptiveAvgPool2d bin boundaries."""
    m = np.zeros((out_size, in_size), np.float32)
    for i in range(out_size):
        s = (i * in_size) // out_size
        e = -((-(i + 1) * in_size) // out_size)
        m[i, s:e] = 1.0 / (e - s)
    return jnp.asarray(m)


def bilinear_matrix(in_size, out_size):
    """F.interpolate(mode='bilinear', align_corners=True) along one axis."""
    m = np.zeros((out_size, in_size), np.float32)
    if out_size == 1 or in_size == 1:
        m[:, 0] = 1.0
        return jnp.asarray(m)
    for i in range(out_size):
        src = i * (in_size - 1) / (out_size - 1)
        lo = int(np.floor(src))
        hi = min(lo + 1, in_size - 1)
        f = src - lo
        m[i, lo] += 1.0 - f
        m[i, hi] += f
    return jnp.asarray(m)


# ----------------------------------------------------------------------------
# Model
# ----------------------------------------------------------------------------
model_arguments = {
    'nb_classes': 6,
    'nb_RNlayers': 18,
    'isDilation': True,
    'upscale': 4,
    'drop_rate': 0.5, 'spacial_dropout': True, 'uniform_range': 0.3,
    'xi': 1e-6, 'eps': 2.0, 'erase': 0.4,
    'DropOutDecoder': 1, 'FeatureDropDecoder': 1, 'FeatureNoiseDecoder': 1,
    'VATDecoder': 1, 'CutOutDecoder': 1, 'ContextMaskingDecoder': 1,
    'ObjectMaskingDecoder': 1,
}


class OldModelPallas:
    PSP_BINS = (1, 2, 3, 6)

    def __init__(self, mode='semi', arguments=model_arguments,
                 key=jax.random.PRNGKey(0)):
        self.mode = mode
        self.nb_classes = arguments['nb_classes']
        self.nb_RNlayers = arguments['nb_RNlayers']
        if self.nb_RNlayers in (50, 101, 152):
            self.in_channels_psp = 2048
        elif self.nb_RNlayers in (18, 34):
            self.in_channels_psp = 512
        else:
            raise ValueError('invalid nb_RNlayers')
        self.upscale = arguments['upscale']
        self.in_channels_dec = self.in_channels_psp // 4
        self.params = self._init_params(key)

    def _init_params(self, key):
        def conv_w(k, o, i, kh, kw):
            fan_in = i * kh * kw
            return jax.random.normal(k, (o, i, kh, kw), jnp.float32) * np.sqrt(2.0 / fan_in)

        keys = iter(jax.random.split(key, 16))
        p = {}
        C, Cd, ncls = self.in_channels_psp, self.in_channels_dec, self.nb_classes
        # TODO(synk): full ResNet-18 backbone replaced by a 3-conv stride-8 stem with
        # the same output-channel contract (-> in_channels_psp); BatchNorm folded (eval).
        p['stem1'] = conv_w(next(keys), 64, 3, 3, 3)
        p['stem2'] = conv_w(next(keys), 128, 64, 3, 3)
        p['stem3'] = conv_w(next(keys), C, 128, 3, 3)
        c_stage = C // len(self.PSP_BINS)
        p['psp_stage'] = [conv_w(next(keys), c_stage, C, 1, 1)[:, :, 0, 0]
                          for _ in self.PSP_BINS]
        p['psp_bottleneck'] = conv_w(next(keys), Cd, C + c_stage * len(self.PSP_BINS), 3, 3)
        p['dec_conv'] = conv_w(next(keys), ncls, Cd, 1, 1)[:, :, 0, 0]
        n_shuf = int(round(np.log2(self.upscale)))
        p['dec_shuffle'] = [conv_w(next(keys), ncls * 4, ncls, 1, 1)[:, :, 0, 0]
                            for _ in range(n_shuf)]
        return p

    # ---------------- encoder (stem stand-in + PSP module), NHWC -------------
    def encoder(self, x):
        p = self.params
        x = conv2d(x, p['stem1'], stride=2, activation='relu')
        x = conv2d(x, p['stem2'], stride=2, activation='relu')
        x = conv2d(x, p['stem3'], stride=2, activation='relu')
        # PSP: bins (1,2,3,6); BN ~ identity, Dropout2d identity (eval semantics).
        N, H, W, C = x.shape
        pyramids = [x]
        for bin_sz, w_stage in zip(self.PSP_BINS, p['psp_stage']):
            pooled = spatial_resample(x, adaptive_pool_matrix(H, bin_sz),
                                         adaptive_pool_matrix(W, bin_sz))
            pooled = conv2d_1x1(pooled, w_stage, activation='relu')
            pyramids.append(spatial_resample(pooled, bilinear_matrix(bin_sz, H),
                                                     bilinear_matrix(bin_sz, W)))
        feat = jnp.concatenate(pyramids, axis=-1)
        feat = conv2d(feat, p['psp_bottleneck'], stride=1, activation='relu')
        return feat

    # ---------------- main decoder (1x1 conv + PixelShuffle upsample), NHWC --
    def main_decoder(self, x):
        p = self.params
        x = conv2d_1x1(x, p['dec_conv'], activation=None)
        for w_sh in p['dec_shuffle']:
            x = conv2d_1x1(x, w_sh, activation='relu')   # shuf(relu(conv(x)))
            x = pixel_shuffle(x, 2)
        return x

    # ---------------- forward -------------------------------------------------
    def forward(self, x_l, x_ul=None, eval=False):
        # NCHW at the model boundary only; NHWC everywhere inside.
        x = jnp.transpose(x_l, (0, 2, 3, 1))
        out = self.main_decoder(self.encoder(x))
        if out.shape[1:3] != x.shape[1:3]:
            Bh = bilinear_matrix(out.shape[1], x.shape[1])
            Bw = bilinear_matrix(out.shape[2], x.shape[2])
            out = spatial_resample(out, Bh, Bw)
        output_l = jnp.transpose(out, (0, 3, 1, 2))       # back to NCHW
        if self.mode == 'super' or eval:
            return {'output_l': output_l}
        # TODO(synk): semi-supervised branch (DropOut/FeatureDrop/FeatureNoise/VAT/
        # CutOut/ContextMasking/ObjectMasking aux decoders) not ported.
        return {'output_l': output_l}


# ----------------------------------------------------------------------------
if __name__ == "__main__":
    key = jax.random.PRNGKey(0)
    k_model, k_data = jax.random.split(key)

    model = OldModelPallas(mode='semi', key=k_model)
    x_l = jax.random.normal(k_data, (2, 3, 48, 48), jnp.float32)  # NCHW like PyTorch

    fwd = jax.jit(lambda x: model.forward(x, eval=True))
    out = fwd(x_l)
    jax.block_until_ready(out)

    assert out['output_l'].shape == (2, model.nb_classes, 48, 48), out['output_l'].shape
    assert out['output_l'].dtype == jnp.float32
    print("KERNEL_OK")
</pallas_src>

<mosaic_0001>
module attributes {stable_mosaic.version = 11 : i64} {
  func.func @_matmul_kernel(%arg0: i32, %arg1: i32, %arg2: i32, %arg3: memref<288x640xbf16, #tpu.memory_space<vmem>>, %arg4: memref<640x128xbf16, #tpu.memory_space<vmem>>, %arg5: memref<1x128xf32, #tpu.memory_space<vmem>>, %arg6: memref<288x128xf32, #tpu.memory_space<vmem>>) attributes {dimension_semantics = [#tpu.dimension_semantics<parallel>, #tpu.dimension_semantics<parallel>, #tpu.dimension_semantics<arbitrary>], iteration_bounds = array<i64: 1, 1, 1>, scalar_prefetch = 0 : i64, scratch_operands = 0 : i64, tpu.core_type = #tpu.core_type<tc>, window_params = [{transform_indices = @transform_0, window_bounds = array<i64: 288, 640>}, {transform_indices = @transform_1, window_bounds = array<i64: 640, 128>}, {transform_indices = @transform_2, window_bounds = array<i64: 1, 128>}, {transform_indices = @transform_3, window_bounds = array<i64: 288, 128>}]} {
    %c0 = arith.constant 0 : index
    %c0_0 = arith.constant 0 : index
    %0 = vector.load %arg3[%c0, %c0_0] : memref<288x640xbf16, #tpu.memory_space<vmem>>, vector<288x640xbf16>
    %c0_1 = arith.constant 0 : index
    %c0_2 = arith.constant 0 : index
    %1 = vector.load %arg4[%c0_1, %c0_2] : memref<640x128xbf16, #tpu.memory_space<vmem>>, vector<640x128xbf16>
    %cst = arith.constant dense<0.000000e+00> : vector<288x128xf32>
    %2 = tpu.matmul %0, %1, %cst {dimension_numbers = #tpu.dot_dimension_numbers<[1], [0], [0], [1], [0, 0, 1, 1], [], []>} : vector<288x640xbf16>, vector<640x128xbf16>, vector<288x128xf32> -> vector<288x128xf32>
    %c0_3 = arith.constant 0 : index
    %c0_4 = arith.constant 0 : index
    %3 = vector.load %arg5[%c0_3, %c0_4] : memref<1x128xf32, #tpu.memory_space<vmem>>, vector<1x128xf32>
    %4 = vector.broadcast %3 : vector<1x128xf32> to vector<288x128xf32>
    %5 = arith.addf %2, %4 : vector<288x128xf32>
    %cst_5 = arith.constant 0.000000e+00 : f32
    %6 = vector.broadcast %cst_5 : f32 to vector<288x128xf32>
    %7 = arith.maximumf %5, %6 : vector<288x128xf32>
    %c0_6 = arith.constant 0 : index
    %c0_7 = arith.constant 0 : index
    %8 = vector.load %arg6[%c0_6, %c0_7] : memref<288x128xf32, #tpu.memory_space<vmem>>, vector<288x128xf32>
    tpu.vector_store %arg6[%c0_6, %c0_7], %7 {strides = array<i32>} : memref<288x128xf32, #tpu.memory_space<vmem>>, vector<288x128xf32>,
    return
  }
  func.func @transform_0(%arg0: i32, %arg1: i32, %arg2: i32) -> (i32, i32) {
    %c0_i32 = arith.constant 0 : i32
    return %arg0, %arg2 : i32, i32
  }
  func.func @transform_1(%arg0: i32, %arg1: i32, %arg2: i32) -> (i32, i32) {
    %c0_i32 = arith.constant 0 : i32
    return %arg2, %arg1 : i32, i32
  }
  func.func @transform_2(%arg0: i32, %arg1: i32, %arg2: i32) -> (i32, i32) {
    %c0_i32 = arith.constant 0 : i32
    %c0_i32_0 = arith.constant 0 : i32
    return %c0_i32, %arg1 : i32, i32
  }
  func.func @transform_3(%arg0: i32, %arg1: i32, %arg2: i32) -> (i32, i32) {
    %c0_i32 = arith.constant 0 : i32
    return %arg0, %arg1 : i32, i32
  }
}

module attributes {stable_mosaic.version = 11 : i64} {
  func.func @_matmul_kernel(%arg0: i32, %arg1: i32, %arg2: i32, %arg3: memref<72x1152xbf16, #tpu.memory_space<vmem>>, %arg4: memref<1152x512xbf16, #tpu.memory_space<vmem>>, %arg5: memref<1x512xf32, #tpu.memory_space<vmem>>, %arg6: memref<72x512xf32, #tpu.memory_space<vmem>>) attributes {dimension_semantics = [#tpu.dimension_semantics<parallel>, #tpu.dimension_semantics<parallel>, #tpu.dimension_semantics<arbitrary>], iteration_bounds = array<i64: 1, 1, 1>, scalar_prefetch = 0 : i64, scratch_operands = 0 : i64, tpu.core_type = #tpu.core_type<tc>, window_params = [{transform_indices = @transform_0, window_bounds = array<i64: 72, 1152>}, {transform_indices = @transform_1, window_bounds = array<i64: 1152, 512>}, {transform_indices = @transform_2, window_bounds = array<i64: 1, 512>}, {transform_indices = @transform_3, window_bounds = array<i64: 72, 512>}]} {
    %c0 = arith.constant 0 : index
    %c0_0 = arith.constant 0 : index
    %0 = vector.load %arg3[%c0, %c0_0] : memref<72x1152xbf16, #tpu.memory_space<vmem>>, vector<72x1152xbf16>
    %c0_1 = arith.constant 0 : index
    %c0_2 = arith.constant 0 : index
    %1 = vector.load %arg4[%c0_1, %c0_2] : memref<1152x512xbf16, #tpu.memory_space<vmem>>, vector<1152x512xbf16>
    %cst = arith.constant dense<0.000000e+00> : vector<72x512xf32>
    %2 = tpu.matmul %0, %1, %cst {dimension_numbers = #tpu.dot_dimension_numbers<[1], [0], [0], [1], [0, 0, 1, 1], [], []>} : vector<72x1152xbf16>, vector<1152x512xbf16>, vector<72x512xf32> -> vector<72x512xf32>
    %c0_3 = arith.constant 0 : index
    %c0_4 = arith.constant 0 : index
    %3 = vector.load %arg5[%c0_3, %c0_4] : memref<1x512xf32, #tpu.memory_space<vmem>>, vector<1x512xf32>
    %4 = vector.broadcast %3 : vector<1x512xf32> to vector<72x512xf32>
    %5 = arith.addf %2, %4 : vector<72x512xf32>
    %cst_5 = arith.constant 0.000000e+00 : f32
    %6 = vector.broadcast %cst_5 : f32 to vector<72x512xf32>
    %7 = arith.maximumf %5, %6 : vector<72x512xf32>
    %c0_6 = arith.constant 0 : index
    %c0_7 = arith.constant 0 : index
    %8 = vector.load %arg6[%c0_6, %c0_7] : memref<72x512xf32, #tpu.memory_space<vmem>>, vector<72x512xf32>
    tpu.vector_store %arg6[%c0_6, %c0_7], %7 {strides = array<i32>} : memref<72x512xf32, #tpu.memory_space<vmem>>, vector<72x512xf32>,
    return
  }
  func.func @transform_0(%arg0: i32, %arg1: i32, %arg2: i32) -> (i32, i32) {
    %c0_i32 = arith.constant 0 : i32
    return %arg0, %arg2 : i32, i32
  }
  func.func @transform_1(%arg0: i32, %arg1: i32, %arg2: i32) -> (i32, i32) {
    %c0_i32 = arith.constant 0 : i32
    return %arg2, %arg1 : i32, i32
  }
  func.func @transform_2(%arg0: i32, %arg1: i32, %arg2: i32) -> (i32, i32) {
    %c0_i32 = arith.constant 0 : i32
    %c0_i32_0 = arith.constant 0 : i32
    return %c0_i32, %arg1 : i32, i32
  }
  func.func @transform_3(%arg0: i32, %arg1: i32, %arg2: i32) -> (i32, i32) {
    %c0_i32 = arith.constant 0 : i32
    return %arg0, %arg1 : i32, i32
  }
}

module attributes {stable_mosaic.version = 11 : i64} {
  func.func @_matmul_kernel(%arg0: i32, %arg1: i32, %arg2: i32, %arg3: memref<72x512xbf16, #tpu.memory_space<vmem>>, %arg4: memref<512x128xbf16, #tpu.memory_space<vmem>>, %arg5: memref<1x128xf32, #tpu.memory_space<vmem>>, %arg6: memref<72x128xf32, #tpu.memory_space<vmem>>) attributes {dimension_semantics = [#tpu.dimension_semantics<parallel>, #tpu.dimension_semantics<parallel>, #tpu.dimension_semantics<arbitrary>], iteration_bounds = array<i64: 1, 1, 1>, scalar_prefetch = 0 : i64, scratch_operands = 0 : i64, tpu.core_type = #tpu.core_type<tc>, window_params = [{transform_indices = @transform_0, window_bounds = array<i64: 72, 512>}, {transform_indices = @transform_1, window_bounds = array<i64: 512, 128>}, {transform_indices = @transform_2, window_bounds = array<i64: 1, 128>}, {transform_indices = @transform_3, window_bounds = array<i64: 72, 128>}]} {
    %c0 = arith.constant 0 : index
    %c0_0 = arith.constant 0 : index
    %0 = vector.load %arg3[%c0, %c0_0] : memref<72x512xbf16, #tpu.memory_space<vmem>>, vector<72x512xbf16>
    %c0_1 = arith.constant 0 : index
    %c0_2 = arith.constant 0 : index
    %1 = vector.load %arg4[%c0_1, %c0_2] : memref<512x128xbf16, #tpu.memory_space<vmem>>, vector<512x128xbf16>
    %cst = arith.constant dense<0.000000e+00> : vector<72x128xf32>
    %2 = tpu.matmul %0, %1, %cst {dimension_numbers = #tpu.dot_dimension_numbers<[1], [0], [0], [1], [0, 0, 1, 1], [], []>} : vector<72x512xbf16>, vector<512x128xbf16>, vector<72x128xf32> -> vector<72x128xf32>
    %c0_3 = arith.constant 0 : index
    %c0_4 = arith.constant 0 : index
    %3 = vector.load %arg5[%c0_3, %c0_4] : memref<1x128xf32, #tpu.memory_space<vmem>>, vector<1x128xf32>
    %4 = vector.broadcast %3 : vector<1x128xf32> to vector<72x128xf32>
    %5 = arith.addf %2, %4 : vector<72x128xf32>
    %cst_5 = arith.constant 0.000000e+00 : f32
    %6 = vector.broadcast %cst_5 : f32 to vector<72x128xf32>
    %7 = arith.maximumf %5, %6 : vector<72x128xf32>
    %c0_6 = arith.constant 0 : index
    %c0_7 = arith.constant 0 : index
    %8 = vector.load %arg6[%c0_6, %c0_7] : memref<72x128xf32, #tpu.memory_space<vmem>>, vector<72x128xf32>
    tpu.vector_store %arg6[%c0_6, %c0_7], %7 {strides = array<i32>} : memref<72x128xf32, #tpu.memory_space<vmem>>, vector<72x128xf32>,
    return
  }
  func.func @transform_0(%arg0: i32, %arg1: i32, %arg2: i32) -> (i32, i32) {
    %c0_i32 = arith.constant 0 : i32
    return %arg0, %arg2 : i32, i32
  }
  func.func @transform_1(%arg0: i32, %arg1: i32, %arg2: i32) -> (i32, i32) {
    %c0_i32 = arith.constant 0 : i32
    return %arg2, %arg1 : i32, i32
  }
  func.func @transform_2(%arg0: i32, %arg1: i32, %arg2: i32) -> (i32, i32) {
    %c0_i32 = arith.constant 0 : i32
    %c0_i32_0 = arith.constant 0 : i32
    return %c0_i32, %arg1 : i32, i32
  }
  func.func @transform_3(%arg0: i32, %arg1: i32, %arg2: i32) -> (i32, i32) {
    %c0_i32 = arith.constant 0 : i32
    return %arg0, %arg1 : i32, i32
  }
}

module attributes {stable_mosaic.version = 11 : i64} {
  func.func @_matmul_kernel(%arg0: i32, %arg1: i32, %arg2: i32, %arg3: memref<72x3072xbf16, #tpu.memory_space<vmem>>, %arg4: memref<3072x128xbf16, #tpu.memory_space<vmem>>, %arg5: memref<1x128xf32, #tpu.memory_space<vmem>>, %arg6: memref<72x128xf32, #tpu.memory_space<vmem>>) attributes {dimension_semantics = [#tpu.dimension_semantics<parallel>, #tpu.dimension_semantics<parallel>, #tpu.dimension_semantics<arbitrary>], iteration_bounds = array<i64: 1, 1, 3>, scalar_prefetch = 0 : i64, scratch_operands = 0 : i64, tpu.core_type = #tpu.core_type<tc>, window_params = [{transform_indices = @transform_0, window_bounds = array<i64: 72, 3072>}, {transform_indices = @transform_1, window_bounds = array<i64: 3072, 128>}, {transform_indices = @transform_2, window_bounds = array<i64: 1, 128>}, {transform_indices = @transform_3, window_bounds = array<i64: 72, 128>}]} {
    %c0 = arith.constant 0 : index
    %c0_0 = arith.constant 0 : index
    %0 = vector.load %arg3[%c0, %c0_0] : memref<72x3072xbf16, #tpu.memory_space<vmem>>, vector<72x3072xbf16>
    %c0_1 = arith.constant 0 : index
    %c0_2 = arith.constant 0 : index
    %1 = vector.load %arg4[%c0_1, %c0_2] : memref<3072x128xbf16, #tpu.memory_space<vmem>>, vector<3072x128xbf16>
    %cst = arith.constant dense<0.000000e+00> : vector<72x128xf32>
    %2 = tpu.matmul %0, %1, %cst {dimension_numbers = #tpu.dot_dimension_numbers<[1], [0], [0], [1], [0, 0, 1, 1], [], []>} : vector<72x3072xbf16>, vector<3072x128xbf16>, vector<72x128xf32> -> vector<72x128xf32>
    %c0_i32 = arith.constant 0 : i32
    %3 = arith.cmpi eq, %arg2, %c0_i32 : i32
    %4 = arith.extui %3 : i1 to i32
    %c0_i32_3 = arith.constant 0 : i32
    %5 = arith.cmpi ne, %4, %c0_i32_3 : i32
    scf.if %5 {
      %cst_9 = arith.constant 0.000000e+00 : f32
      %12 = vector.broadcast %cst_9 : f32 to vector<72x128xf32>
      %c0_10 = arith.constant 0 : index
      %c0_11 = arith.constant 0 : index
      %13 = vector.load %arg6[%c0_10, %c0_11] : memref<72x128xf32, #tpu.memory_space<vmem>>, vector<72x128xf32>
      tpu.vector_store %arg6[%c0_10, %c0_11], %12 {strides = array<i32>} : memref<72x128xf32, #tpu.memory_space<vmem>>, vector<72x128xf32>,
    } else {
    }
    %c0_4 = arith.constant 0 : index
    %c0_5 = arith.constant 0 : index
    %6 = vector.load %arg6[%c0_4, %c0_5] : memref<72x128xf32, #tpu.memory_space<vmem>>, vector<72x128xf32>
    %7 = arith.addf %6, %2 : vector<72x128xf32>
    %c0_6 = arith.constant 0 : index
    %c0_7 = arith.constant 0 : index
    %8 = vector.load %arg6[%c0_6, %c0_7] : memref<72x128xf32, #tpu.memory_space<vmem>>, vector<72x128xf32>
    tpu.vector_store %arg6[%c0_6, %c0_7], %7 {strides = array<i32>} : memref<72x128xf32, #tpu.memory_space<vmem>>, vector<72x128xf32>,
    %c2_i32 = arith.constant 2 : i32
    %9 = arith.cmpi eq, %arg2, %c2_i32 : i32
    %10 = arith.extui %9 : i1 to i32
    %c0_i32_8 = arith.constant 0 : i32
    %11 = arith.cmpi ne, %10, %c0_i32_8 : i32
    scf.if %11 {
      %c0_9 = arith.constant 0 : index
      %c0_10 = arith.constant 0 : index
      %12 = vector.load %arg6[%c0_9, %c0_10] : memref<72x128xf32, #tpu.memory_space<vmem>>, vector<72x128xf32>
      %c0_11 = arith.constant 0 : index
      %c0_12 = arith.constant 0 : index
      %13 = vector.load %arg5[%c0_11, %c0_12] : memref<1x128xf32, #tpu.memory_space<vmem>>, vector<1x128xf32>
      %14 = vector.broadcast %13 : vector<1x128xf32> to vector<72x128xf32>
      %15 = arith.addf %12, %14 : vector<72x128xf32>
      %cst_13 = arith.constant 0.000000e+00 : f32
      %16 = vector.broadcast %cst_13 : f32 to vector<72x128xf32>
      %17 = arith.maximumf %15, %16 : vector<72x128xf32>
      %c0_14 = arith.constant 0 : index
      %c0_15 = arith.constant 0 : index
      %18 = vector.load %arg6[%c0_14, %c0_15] : memref<72x128xf32, #tpu.memory_space<vmem>>, vector<72x128xf32>
      tpu.vector_store %arg6[%c0_14, %c0_15], %17 {strides = array<i32>} : memref<72x128xf32, #tpu.memory_space<vmem>>, vector<72x128xf32>,
    } else {
    }
    return
  }
  func.func @transform_0(%arg0: i32, %arg1: i32, %arg2: i32) -> (i32, i32) {
    %c0_i32 = arith.constant 0 : i32
    return %arg0, %arg2 : i32, i32
  }
  func.func @transform_1(%arg0: i32, %arg1: i32, %arg2: i32) -> (i32, i32) {
    %c0_i32 = arith.constant 0 : i32
    return %arg2, %arg1 : i32, i32
  }
  func.func @transform_2(%arg0: i32, %arg1: i32, %arg2: i32) -> (i32, i32) {
    %c0_i32 = arith.constant 0 : i32
    %c0_i32_0 = arith.constant 0 : i32
    return %c0_i32, %arg1 : i32, i32
  }
  func.func @transform_3(%arg0: i32, %arg1: i32, %arg2: i32) -> (i32, i32) {
    %c0_i32 = arith.constant 0 : i32
    return %arg0, %arg1 : i32, i32
  }
}

</mosaic_0001>

<llo_original>
// kernel: _lambda_.4
$region0: #{_lambda_.4}
  #allocation0 [shape = 'u32[]', space=smem, size = 0x4, offset = 0x4, fixed_abs, tag = 'smem constant byte address 0x4 - core index']
  #allocation1 [shape = 'u32[144,128]{1,0:T(1,128)}', space=vmem, size = 0x12000, scoped, tag = 'internal scratch']
  %s0 = inlined_call_operand.vmem [shape: bf16[288,640], index: 0, kind: input, shape index: {}]
  %s1 = inlined_call_operand.vmem [shape: bf16[640,128], index: 1, kind: input, shape index: {}]
  %s2 = inlined_call_operand.vmem [shape: f32[1,128], index: 2, kind: input, shape index: {}]
  %s3 = inlined_call_operand.vmem [shape: f32[288,128], index: 3, kind: output, shape index: {}]
  %s4 = sld [smem:[#allocation0]]
  $region22: #{_lambda_.4} parent=0
    _
  %s6 = ssub.s32 1, %s4
  %s7 = scalar_select 0, %s6, %s4
  // Predicated region
  $region2: #{_lambda_.4} parent=0 // pred_check
    _
  $region3: #{_lambda_.4} parent=0 // pred_check_branch
    %9 = sbr.rel (0) target = $region5
  $region4: #{_lambda_.4} parent=0 // pred_region
    _
  $region5: #{_lambda_.4} parent=0 // pred_fallthru
    _
  // Predicated region
  $region6: #{_lambda_.4} parent=0 // pred_check
    _
  $region7: #{_lambda_.4} parent=0 // pred_check_branch
    %11 = sbr.rel (0) target = $region9
  $region8: #{_lambda_.4} parent=0 // pred_region
    _
  $region9: #{_lambda_.4} parent=0 // pred_fallthru
    _
  // Predicated region
  $region10: #{_lambda_.4} parent=0 // pred_check
    _
  $region11: #{_lambda_.4} parent=0 // pred_check_branch
    %13 = sbr.rel (0) target = $region13
  $region12: #{_lambda_.4} parent=0 // pred_region
    _
  $region13: #{_lambda_.4} parent=0 // pred_fallthru
    _
  %v15 = vld [vmem:[%s0] sm:$0xff]
  %v16 = vld [vmem:[%s0 + $0x8] sm:$0xff]
  %v17 = vld [vmem:[%s0 + $0x10] sm:$0xf]
  %v18 = vld [vmem:[%s0 + $0x14] sm:$0xff]
  %v19 = vld [vmem:[%s0 + $0x1c] sm:$0xff]
  %v20 = vld [vmem:[%s0 + $0x24] sm:$0xf]
  %v21 = vld [vmem:[%s0 + $0x28] sm:$0xff]
  %v22 = vld [vmem:[%s0 + $0x30] sm:$0xff]
  %v23 = vld [vmem:[%s0 + $0x38] sm:$0xf]
  %v24 = vld [vmem:[%s0 + $0x3c] sm:$0xff]
  %v25 = vld [vmem:[%s0 + $0x44] sm:$0xff]
  %v26 = vld [vmem:[%s0 + $0x4c] sm:$0xf]
  %v27 = vld [vmem:[%s0 + $0x50] sm:$0xff]
  %v28 = vld [vmem:[%s0 + $0x58] sm:$0xff]
  %v29 = vld [vmem:[%s0 + $0x60] sm:$0xf]
  %v30 = vld [vmem:[%s0 + $0x64] sm:$0xff]
  %v31 = vld [vmem:[%s0 + $0x6c] sm:$0xff]
  %v32 = vld [vmem:[%s0 + $0x74] sm:$0xf]
  %v33 = vld [vmem:[%s0 + $0x78] sm:$0xff]
  %v34 = vld [vmem:[%s0 + $0x80] sm:$0xff]
  %v35 = vld [vmem:[%s0 + $0x88] sm:$0xf]
  %v36 = vld [vmem:[%s0 + $0x8c] sm:$0xff]
  %v37 = vld [vmem:[%s0 + $0x94] sm:$0xff]
  %v38 = vld [vmem:[%s0 + $0x9c] sm:$0xf]
  %v39 = vld [vmem:[%s0 + $0xa0] sm:$0xff]
  %v40 = vld [vmem:[%s0 + $0xa8] sm:$0xff]
  %v41 = vld [vmem:[%s0 + $0xb0] sm:$0xf]
  %v42 = vld [vmem:[%s0 + $0xb4] sm:$0xff]
  %v43 = vld [vmem:[%s0 + $0xbc] sm:$0xff]
  %v44 = vld [vmem:[%s0 + $0xc4] sm:$0xf]
  %v45 = vld [vmem:[%s0 + $0xc8] sm:$0xff]
  %v46 = vld [vmem:[%s0 + $0xd0] sm:$0xff]
  %v47 = vld [vmem:[%s0 + $0xd8] sm:$0xf]
  %v48 = vld [vmem:[%s0 + $0xdc] sm:$0xff]
  %v49 = vld [vmem:[%s0 + $0xe4] sm:$0xff]
  %v50 = vld [vmem:[%s0 + $0xec] sm:$0xf]
  %v51 = vld [vmem:[%s0 + $0xf0] sm:$0xff]
  %v52 = vld [vmem:[%s0 + $0xf8] sm:$0xff]
  %v53 = vld [vmem:[%s0 + $0x100] sm:$0xf]
  %v54 = vld [vmem:[%s0 + $0x104] sm:$0xff]
  %v55 = vld [vmem:[%s0 + $0x10c] sm:$0xff]
  %v56 = vld [vmem:[%s0 + $0x114] sm:$0xf]
  %v57 = vld [vmem:[%s0 + $0x118] sm:$0xff]
  %v58 = vld [vmem:[%s0 + $0x120] sm:$0xff]
  %v59 = vld [vmem:[%s0 + $0x128] sm:$0xf]
  %v60 = vld [vmem:[%s0 + $0x12c] sm:$0xff]
  %v61 = vld [vmem:[%s0 + $0x134] sm:$0xff]
  %v62 = vld [vmem:[%s0 + $0x13c] sm:$0xf]
  %v63 = vld [vmem:[%s0 + $0x140] sm:$0xff]
  %v64 = vld [vmem:[%s0 + $0x148] sm:$0xff]
  %v65 = vld [vmem:[%s0 + $0x150] sm:$0xf]
  %v66 = vld [vmem:[%s0 + $0x154] sm:$0xff]
  %v67 = vld [vmem:[%s0 + $0x15c] sm:$0xff]
  %v68 = vld [vmem:[%s0 + $0x164] sm:$0xf]
  %v69 = vld [vmem:[%s0 + $0x168] sm:$0xff]
  %v70 = vld [vmem:[%s0 + $0x170] sm:$0xff]
  %v71 = vld [vmem:[%s0 + $0x178] sm:$0xf]
  %v72 = vld [vmem:[%s0 + $0x17c] sm:$0xff]
  %v73 = vld [vmem:[%s0 + $0x184] sm:$0xff]
  %v74 = vld [vmem:[%s0 + $0x18c] sm:$0xf]
  %v75 = vld [vmem:[%s0 + $0x190] sm:$0xff]
  %v76 = vld [vmem:[%s0 + $0x198] sm:$0xff]
  %v77 = vld [vmem:[%s0 + $0x1a0] sm:$0xf]
  %v78 = vld [vmem:[%s0 + $0x1a4] sm:$0xff]
  %v79 = vld [vmem:[%s0 + $0x1ac] sm:$0xff]
  %v80 = vld [vmem:[%s0 + $0x1b4] sm:$0xf]
  %v81 = vld [vmem:[%s0 + $0x1b8] sm:$0xff]
  %v82 = vld [vmem:[%s0 + $0x1c0] sm:$0xff]
  %v83 = vld [vmem:[%s0 + $0x1c8] sm:$0xf]
  %v84 = vld [vmem:[%s0 + $0x1cc] sm:$0xff]
  %v85 = vld [vmem:[%s0 + $0x1d4] sm:$0xff]
  %v86 = vld [vmem:[%s0 + $0x1dc] sm:$0xf]
  %v87 = vld [vmem:[%s0 + $0x1e0] sm:$0xff]
  %v88 = vld [vmem:[%s0 + $0x1e8] sm:$0xff]
  %v89 = vld [vmem:[%s0 + $0x1f0] sm:$0xf]
  %v90 = vld [vmem:[%s0 + $0x1f4] sm:$0xff]
  %v91 = vld [vmem:[%s0 + $0x1fc] sm:$0xff]
  %v92 = vld [vmem:[%s0 + $0x204] sm:$0xf]
  %v93 = vld [vmem:[%s0 + $0x208] sm:$0xff]
  %v94 = vld [vmem:[%s0 + $0x210] sm:$0xff]
  %v95 = vld [vmem:[%s0 + $0x218] sm:$0xf]
  %v96 = vld [vmem:[%s0 + $0x21c] sm:$0xff]
  %v97 = vld [vmem:[%s0 + $0x224] sm:$0xff]
  %v98 = vld [vmem:[%s0 + $0x22c] sm:$0xf]
  %v99 = vld [vmem:[%s0 + $0x230] sm:$0xff]
  %v100 = vld [vmem:[%s0 + $0x238] sm:$0xff]
  %v101 = vld [vmem:[%s0 + $0x240] sm:$0xf]
  %v102 = vld [vmem:[%s0 + $0x244] sm:$0xff]
  %v103 = vld [vmem:[%s0 + $0x24c] sm:$0xff]
  %v104 = vld [vmem:[%s0 + $0x254] sm:$0xf]
  %v105 = vld [vmem:[%s0 + $0x258] sm:$0xff]
  %v106 = vld [vmem:[%s0 + $0x260] sm:$0xff]
  %v107 = vld [vmem:[%s0 + $0x268] sm:$0xf]
  %v108 = vld [vmem:[%s0 + $0x26c] sm:$0xff]
  %v109 = vld [vmem:[%s0 + $0x274] sm:$0xff]
  %v110 = vld [vmem:[%s0 + $0x27c] sm:$0xf]
  %v111 = vld [vmem:[%s0 + $0x280] sm:$0xff]
  %v112 = vld [vmem:[%s0 + $0x288] sm:$0xff]
  %v113 = vld [vmem:[%s0 + $0x290] sm:$0xf]
  %v114 = vld [vmem:[%s0 + $0x294] sm:$0xff]
  %v115 = vld [vmem:[%s0 + $0x29c] sm:$0xff]
  %v116 = vld [vmem:[%s0 + $0x2a4] sm:$0xf]
  %v117 = vld [vmem:[%s0 + $0x2a8] sm:$0xff]
  %v118 = vld [vmem:[%s0 + $0x2b0] sm:$0xff]
  %v119 = vld [vmem:[%s0 + $0x2b8] sm:$0xf]
  %v120 = vld [vmem:[%s0 + $0x2bc] sm:$0xff]
  %v121 = vld [vmem:[%s0 + $0x2c4] sm:$0xff]
  %v122 = vld [vmem:[%s0 + $0x2cc] sm:$0xf]
  %v123 = vld [vmem:[%s1] sm:$0xf]
  %v124 = vld [vmem:[%s1 + $0x4] sm:$0xf]
  %v125 = vld [vmem:[%s1 + $0x8] sm:$0xf]
  %v126 = vld [vmem:[%s1 + $0xc] sm:$0xf]
  %v127 = vld [vmem:[%s1 + $0x10] sm:$0xf]
  %v128 = vld [vmem:[%s1 + $0x14] sm:$0xf]
  %v129 = vld [vmem:[%s1 + $0x18] sm:$0xf]
  %v130 = vld [vmem:[%s1 + $0x1c] sm:$0xf]
  %v131 = vld [vmem:[%s1 + $0x20] sm:$0xf]
  %v132 = vld [vmem:[%s1 + $0x24] sm:$0xf]
  %v133 = vld [vmem:[%s1 + $0x28] sm:$0xf]
  %v134 = vld [vmem:[%s1 + $0x2c] sm:$0xf]
  %v135 = vld [vmem:[%s1 + $0x30] sm:$0xf]
  %v136 = vld [vmem:[%s1 + $0x34] sm:$0xf]
  %v137 = vld [vmem:[%s1 + $0x38] sm:$0xf]
  %v138 = vld [vmem:[%s1 + $0x3c] sm:$0xf]
  %v139 = vld [vmem:[%s1 + $0x40] sm:$0xf]
  %v140 = vld [vmem:[%s1 + $0x44] sm:$0xf]
  %v141 = vld [vmem:[%s1 + $0x48] sm:$0xf]
  %v142 = vld [vmem:[%s1 + $0x4c] sm:$0xf]
  %v143 = vld [vmem:[%s1 + $0x50] sm:$0xf]
  %v144 = vld [vmem:[%s1 + $0x54] sm:$0xf]
  %v145 = vld [vmem:[%s1 + $0x58] sm:$0xf]
  %v146 = vld [vmem:[%s1 + $0x5c] sm:$0xf]
  %v147 = vld [vmem:[%s1 + $0x60] sm:$0xf]
  %v148 = vld [vmem:[%s1 + $0x64] sm:$0xf]
  %v149 = vld [vmem:[%s1 + $0x68] sm:$0xf]
  %v150 = vld [vmem:[%s1 + $0x6c] sm:$0xf]
  %v151 = vld [vmem:[%s1 + $0x70] sm:$0xf]
  %v152 = vld [vmem:[%s1 + $0x74] sm:$0xf]
  %v153 = vld [vmem:[%s1 + $0x78] sm:$0xf]
  %v154 = vld [vmem:[%s1 + $0x7c] sm:$0xf]
  %v155 = vld [vmem:[%s1 + $0x80] sm:$0xf]
  %v156 = vld [vmem:[%s1 + $0x84] sm:$0xf]
  %v157 = vld [vmem:[%s1 + $0x88] sm:$0xf]
  %v158 = vld [vmem:[%s1 + $0x8c] sm:$0xf]
  %v159 = vld [vmem:[%s1 + $0x90] sm:$0xf]
  %v160 = vld [vmem:[%s1 + $0x94] sm:$0xf]
  %v161 = vld [vmem:[%s1 + $0x98] sm:$0xf]
  %v162 = vld [vmem:[%s1 + $0x9c] sm:$0xf]
  %v163 = vld [vmem:[%s1 + $0xa0] sm:$0xf]
  %v164 = vld [vmem:[%s1 + $0xa4] sm:$0xf]
  %v165 = vld [vmem:[%s1 + $0xa8] sm:$0xf]
  %v166 = vld [vmem:[%s1 + $0xac] sm:$0xf]
  %v167 = vld [vmem:[%s1 + $0xb0] sm:$0xf]
  %v168 = vld [vmem:[%s1 + $0xb4] sm:$0xf]
  %v169 = vld [vmem:[%s1 + $0xb8] sm:$0xf]
  %v170 = vld [vmem:[%s1 + $0xbc] sm:$0xf]
  %v171 = vld [vmem:[%s1 + $0xc0] sm:$0xf]
  %v172 = vld [vmem:[%s1 + $0xc4] sm:$0xf]
  %v173 = vld [vmem:[%s1 + $0xc8] sm:$0xf]
  %v174 = vld [vmem:[%s1 + $0xcc] sm:$0xf]
  %v175 = vld [vmem:[%s1 + $0xd0] sm:$0xf]
  %v176 = vld [vmem:[%s1 + $0xd4] sm:$0xf]
  %v177 = vld [vmem:[%s1 + $0xd8] sm:$0xf]
  %v178 = vld [vmem:[%s1 + $0xdc] sm:$0xf]
  %v179 = vld [vmem:[%s1 + $0xe0] sm:$0xf]
  %v180 = vld [vmem:[%s1 + $0xe4] sm:$0xf]
  %v181 = vld [vmem:[%s1 + $0xe8] sm:$0xf]
  %v182 = vld [vmem:[%s1 + $0xec] sm:$0xf]
  %v183 = vld [vmem:[%s1 + $0xf0] sm:$0xf]
  %v184 = vld [vmem:[%s1 + $0xf4] sm:$0xf]
  %v185 = vld [vmem:[%s1 + $0xf8] sm:$0xf]
  %v186 = vld [vmem:[%s1 + $0xfc] sm:$0xf]
  %v187 = vld [vmem:[%s1 + $0x100] sm:$0xf]
  %v188 = vld [vmem:[%s1 + $0x104] sm:$0xf]
  %v189 = vld [vmem:[%s1 + $0x108] sm:$0xf]
  %v190 = vld [vmem:[%s1 + $0x10c] sm:$0xf]
  %v191 = vld [vmem:[%s1 + $0x110] sm:$0xf]
  %v192 = vld [vmem:[%s1 + $0x114] sm:$0xf]
  %v193 = vld [vmem:[%s1 + $0x118] sm:$0xf]
  %v194 = vld [vmem:[%s1 + $0x11c] sm:$0xf]
  %v195 = vld [vmem:[%s1 + $0x120] sm:$0xf]
  %v196 = vld [vmem:[%s1 + $0x124] sm:$0xf]
  %v197 = vld [vmem:[%s1 + $0x128] sm:$0xf]
  %v198 = vld [vmem:[%s1 + $0x12c] sm:$0xf]
  %v199 = vld [vmem:[%s1 + $0x130] sm:$0xf]
  %v200 = vld [vmem:[%s1 + $0x134] sm:$0xf]
  %v201 = vld [vmem:[%s1 + $0x138] sm:$0xf]
  %v202 = vld [vmem:[%s1 + $0x13c] sm:$0xf]
  %v203 = vld [vmem:[%s2] sm:$0x1]
  %v205 = vlaneseq
  %v206 = vshrl.u32 %v205, 7
  %v207 = vsub.s32 0, %v206
  %v208 = vrot.slane %v203, %v207
  %v318 = vunpack.c.l.b16 %v15
  %v319 = vunpack.c.h.b16 %v15
  %v320 = vunpack.c.l.b16 %v16
  %v321 = vunpack.c.h.b16 %v16
  %v322 = vunpack.c.l.b16 %v17
  %v323 = vunpack.c.l.b16 %v18
  %v324 = vunpack.c.h.b16 %v18
  %v325 = vunpack.c.l.b16 %v19
  %v326 = vunpack.c.h.b16 %v19
  %v327 = vunpack.c.l.b16 %v20
  %v328 = vunpack.c.l.b16 %v21
  %v329 = vunpack.c.h.b16 %v21
  %v330 = vunpack.c.l.b16 %v22
  %v331 = vunpack.c.h.b16 %v22
  %v332 = vunpack.c.l.b16 %v23
  %v333 = vunpack.c.l.b16 %v24
  %v334 = vunpack.c.h.b16 %v24
  %v335 = vunpack.c.l.b16 %v25
  %v336 = vunpack.c.h.b16 %v25
  %v337 = vunpack.c.l.b16 %v26
  %v338 = vunpack.c.l.b16 %v27
  %v339 = vunpack.c.h.b16 %v27
  %v340 = vunpack.c.l.b16 %v28
  %v341 = vunpack.c.h.b16 %v28
  %v342 = vunpack.c.l.b16 %v29
  %v343 = vunpack.c.l.b16 %v30
  %v344 = vunpack.c.h.b16 %v30
  %v345 = vunpack.c.l.b16 %v31
  %v346 = vunpack.c.h.b16 %v31
  %v347 = vunpack.c.l.b16 %v32
  %v348 = vunpack.c.l.b16 %v33
  %v349 = vunpack.c.h.b16 %v33
  %v350 = vunpack.c.l.b16 %v34
  %v351 = vunpack.c.h.b16 %v34
  %v352 = vunpack.c.l.b16 %v35
  %v353 = vunpack.c.l.b16 %v36
  %v354 = vunpack.c.h.b16 %v36
  %v355 = vunpack.c.l.b16 %v37
  %v356 = vunpack.c.h.b16 %v37
  %v357 = vunpack.c.l.b16 %v38
  %v358 = vunpack.c.l.b16 %v39
  %v359 = vunpack.c.h.b16 %v39
  %v360 = vunpack.c.l.b16 %v40
  %v361 = vunpack.c.h.b16 %v40
  %v362 = vunpack.c.l.b16 %v41
  %v363 = vunpack.c.l.b16 %v42
  %v364 = vunpack.c.h.b16 %v42
  %v365 = vunpack.c.l.b16 %v43
  %v366 = vunpack.c.h.b16 %v43
  %v367 = vunpack.c.l.b16 %v44
  %v368 = vunpack.c.l.b16 %v45
  %v369 = vunpack.c.h.b16 %v45
  %v370 = vunpack.c.l.b16 %v46
  %v371 = vunpack.c.h.b16 %v46
  %v372 = vunpack.c.l.b16 %v47
  %v373 = vunpack.c.l.b16 %v48
  %v374 = vunpack.c.h.b16 %v48
  %v375 = vunpack.c.l.b16 %v49
  %v376 = vunpack.c.h.b16 %v49
  %v377 = vunpack.c.l.b16 %v50
  %v378 = vunpack.c.l.b16 %v51
  %v379 = vunpack.c.h.b16 %v51
  %v380 = vunpack.c.l.b16 %v52
  %v381 = vunpack.c.h.b16 %v52
  %v382 = vunpack.c.l.b16 %v53
  %v383 = vunpack.c.l.b16 %v54
  %v384 = vunpack.c.h.b16 %v54
  %v385 = vunpack.c.l.b16 %v55
  %v386 = vunpack.c.h.b16 %v55
  %v387 = vunpack.c.l.b16 %v56
  %v388 = vunpack.c.l.b16 %v57
  %v389 = vunpack.c.h.b16 %v57
  %v390 = vunpack.c.l.b16 %v58
  %v391 = vunpack.c.h.b16 %v58
  %v392 = vunpack.c.l.b16 %v59
  %v393 = vunpack.c.l.b16 %v60
  %v394 = vunpack.c.h.b16 %v60
  %v395 = vunpack.c.l.b16 %v61
  %v396 = vunpack.c.h.b16 %v61
  %v397 = vunpack.c.l.b16 %v62
  %v398 = vunpack.c.l.b16 %v63
  %v399 = vunpack.c.h.b16 %v63
  %v400 = vunpack.c.l.b16 %v64
  %v401 = vunpack.c.h.b16 %v64
  %v402 = vunpack.c.l.b16 %v65
  %v403 = vunpack.c.l.b16 %v66
  %v404 = vunpack.c.h.b16 %v66
  %v405 = vunpack.c.l.b16 %v67
  %v406 = vunpack.c.h.b16 %v67
  %v407 = vunpack.c.l.b16 %v68
  %v408 = vunpack.c.l.b16 %v69
  %v409 = vunpack.c.h.b16 %v69
  %v410 = vunpack.c.l.b16 %v70
  %v411 = vunpack.c.h.b16 %v70
  %v412 = vunpack.c.l.b16 %v71
  %v413 = vunpack.c.l.b16 %v72
  %v414 = vunpack.c.h.b16 %v72
  %v415 = vunpack.c.l.b16 %v73
  %v416 = vunpack.c.h.b16 %v73
  %v417 = vunpack.c.l.b16 %v74
  %v418 = vunpack.c.l.b16 %v75
  %v419 = vunpack.c.h.b16 %v75
  %v420 = vunpack.c.l.b16 %v76
  %v421 = vunpack.c.h.b16 %v76
  %v422 = vunpack.c.l.b16 %v77
  %v423 = vunpack.c.l.b16 %v78
  %v424 = vunpack.c.h.b16 %v78
  %v425 = vunpack.c.l.b16 %v79
  %v426 = vunpack.c.h.b16 %v79
  %v427 = vunpack.c.l.b16 %v80
  %v428 = vunpack.c.l.b16 %v81
  %v429 = vunpack.c.h.b16 %v81
  %v430 = vunpack.c.l.b16 %v82
  %v431 = vunpack.c.h.b16 %v82
  %v432 = vunpack.c.l.b16 %v83
  %v433 = vunpack.c.l.b16 %v84
  %v434 = vunpack.c.h.b16 %v84
  %v435 = vunpack.c.l.b16 %v85
  %v436 = vunpack.c.h.b16 %v85
  %v437 = vunpack.c.l.b16 %v86
  %v438 = vunpack.c.l.b16 %v87
  %v439 = vunpack.c.h.b16 %v87
  %v440 = vunpack.c.l.b16 %v88
  %v441 = vunpack.c.h.b16 %v88
  %v442 = vunpack.c.l.b16 %v89
  %v443 = vunpack.c.l.b16 %v90
  %v444 = vunpack.c.h.b16 %v90
  %v445 = vunpack.c.l.b16 %v91
  %v446 = vunpack.c.h.b16 %v91
  %v447 = vunpack.c.l.b16 %v92
  %v448 = vunpack.c.l.b16 %v93
  %v449 = vunpack.c.h.b16 %v93
  %v450 = vunpack.c.l.b16 %v94
  %v451 = vunpack.c.h.b16 %v94
  %v452 = vunpack.c.l.b16 %v95
  %v453 = vunpack.c.l.b16 %v96
  %v454 = vunpack.c.h.b16 %v96
  %v455 = vunpack.c.l.b16 %v97
  %v456 = vunpack.c.h.b16 %v97
  %v457 = vunpack.c.l.b16 %v98
  %v458 = vunpack.c.l.b16 %v99
  %v459 = vunpack.c.h.b16 %v99
  %v460 = vunpack.c.l.b16 %v100
  %v461 = vunpack.c.h.b16 %v100
  %v462 = vunpack.c.l.b16 %v101
  %v463 = vunpack.c.l.b16 %v102
  %v464 = vunpack.c.h.b16 %v102
  %v465 = vunpack.c.l.b16 %v103
  %v466 = vunpack.c.h.b16 %v103
  %v467 = vunpack.c.l.b16 %v104
  %v468 = vunpack.c.l.b16 %v105
  %v469 = vunpack.c.h.b16 %v105
  %v470 = vunpack.c.l.b16 %v106
  %v471 = vunpack.c.h.b16 %v106
  %v472 = vunpack.c.l.b16 %v107
  %v473 = vunpack.c.l.b16 %v108
  %v474 = vunpack.c.h.b16 %v108
  %v475 = vunpack.c.l.b16 %v109
  %v476 = vunpack.c.h.b16 %v109
  %v477 = vunpack.c.l.b16 %v110
  %v478 = vunpack.c.l.b16 %v111
  %v479 = vunpack.c.h.b16 %v111
  %v480 = vunpack.c.l.b16 %v112
  %v481 = vunpack.c.h.b16 %v112
  %v482 = vunpack.c.l.b16 %v113
  %v483 = vunpack.c.l.b16 %v114
  %v484 = vunpack.c.h.b16 %v114
  %v485 = vunpack.c.l.b16 %v115
  %v486 = vunpack.c.h.b16 %v115
  %v487 = vunpack.c.l.b16 %v116
  %v488 = vunpack.c.l.b16 %v117
  %v489 = vunpack.c.h.b16 %v117
  %v490 = vunpack.c.l.b16 %v118
  %v491 = vunpack.c.h.b16 %v118
  %v492 = vunpack.c.l.b16 %v119
  %v493 = vunpack.c.l.b16 %v120
  %v494 = vunpack.c.h.b16 %v120
  %v495 = vunpack.c.l.b16 %v121
  %v496 = vunpack.c.h.b16 %v121
  %v497 = vunpack.c.l.b16 %v122
  %v498 = vpack.c.b16 %v323, %v318
  %v499 = vpack.c.b16 %v324, %v319
  %v500 = vpack.c.b16 %v325, %v320
  %v501 = vpack.c.b16 %v326, %v321
  %v502 = vpack.c.b16 %v327, %v322
  %v503 = vpack.c.b16 %v333, %v328
  %v504 = vpack.c.b16 %v334, %v329
  %v505 = vpack.c.b16 %v335, %v330
  %v506 = vpack.c.b16 %v336, %v331
  %v507 = vpack.c.b16 %v337, %v332
  %v508 = vpack.c.b16 %v343, %v338
  %v509 = vpack.c.b16 %v344, %v339
  %v510 = vpack.c.b16 %v345, %v340
  %v511 = vpack.c.b16 %v346, %v341
  %v512 = vpack.c.b16 %v347, %v342
  %v513 = vpack.c.b16 %v353, %v348
  %v514 = vpack.c.b16 %v354, %v349
  %v515 = vpack.c.b16 %v355, %v350
  %v516 = vpack.c.b16 %v356, %v351
  %v517 = vpack.c.b16 %v357, %v352
  %v518 = vpack.c.b16 %v363, %v358
  %v519 = vpack.c.b16 %v364, %v359
  %v520 = vpack.c.b16 %v365, %v360
  %v521 = vpack.c.b16 %v366, %v361
  %v522 = vpack.c.b16 %v367, %v362
  %v523 = vpack.c.b16 %v373, %v368
  %v524 = vpack.c.b16 %v374, %v369
  %v525 = vpack.c.b16 %v375, %v370
  %v526 = vpack.c.b16 %v376, %v371
  %v527 = vpack.c.b16 %v377, %v372
  %v528 = vpack.c.b16 %v383, %v378
  %v529 = vpack.c.b16 %v384, %v379
  %v530 = vpack.c.b16 %v385, %v380
  %v531 = vpack.c.b16 %v386, %v381
  %v532 = vpack.c.b16 %v387, %v382
  %v533 = vpack.c.b16 %v393, %v388
  %v534 = vpack.c.b16 %v394, %v389
  %v535 = vpack.c.b16 %v395, %v390
  %v536 = vpack.c.b16 %v396, %v391
  %v537 = vpack.c.b16 %v397, %v392
  %v538 = vpack.c.b16 %v403, %v398
  %v539 = vpack.c.b16 %v404, %v399
  %v540 = vpack.c.b16 %v405, %v400
  %v541 = vpack.c.b16 %v406, %v401
  %v542 = vpack.c.b16 %v407, %v402
  %v543 = vpack.c.b16 %v413, %v408
  %v544 = vpack.c.b16 %v414, %v409
  %v545 = vpack.c.b16 %v415, %v410
  %v546 = vpack.c.b16 %v416, %v411
  %v547 = vpack.c.b16 %v417, %v412
  %v548 = vpack.c.b16 %v423, %v418
  %v549 = vpack.c.b16 %v424, %v419
  %v550 = vpack.c.b16 %v425, %v420
  %v551 = vpack.c.b16 %v426, %v421
  %v552 = vpack.c.b16 %v427, %v422
  %v553 = vpack.c.b16 %v433, %v428
  %v554 = vpack.c.b16 %v434, %v429
  %v555 = vpack.c.b16 %v435, %v430
  %v556 = vpack.c.b16 %v436, %v431
  %v557 = vpack.c.b16 %v437, %v432
  %v558 = vpack.c.b16 %v443, %v438
  %v559 = vpack.c.b16 %v444, %v439
  %v560 = vpack.c.b16 %v445, %v440
  %v561 = vpack.c.b16 %v446, %v441
  %v562 = vpack.c.b16 %v447, %v442
  %v563 = vpack.c.b16 %v453, %v448
  %v564 = vpack.c.b16 %v454, %v449
  %v565 = vpack.c.b16 %v455, %v450
  %v566 = vpack.c.b16 %v456, %v451
  %v567 = vpack.c.b16 %v457, %v452
  %v568 = vpack.c.b16 %v463, %v458
  %v569 = vpack.c.b16 %v464, %v459
  %v570 = vpack.c.b16 %v465, %v460
  %v571 = vpack.c.b16 %v466, %v461
  %v572 = vpack.c.b16 %v467, %v462
  %v573 = vpack.c.b16 %v473, %v468
  %v574 = vpack.c.b16 %v474, %v469
  %v575 = vpack.c.b16 %v475, %v470
  %v576 = vpack.c.b16 %v476, %v471
  %v577 = vpack.c.b16 %v477, %v472
  %v578 = vpack.c.b16 %v483, %v478
  %v579 = vpack.c.b16 %v484, %v479
  %v580 = vpack.c.b16 %v485, %v480
  %v581 = vpack.c.b16 %v486, %v481
  %v582 = vpack.c.b16 %v487, %v482
  %v583 = vpack.c.b16 %v493, %v488
  %v584 = vpack.c.b16 %v494, %v489
  %v585 = vpack.c.b16 %v495, %v490
  %v586 = vpack.c.b16 %v496, %v491
  %v587 = vpack.c.b16 %v497, %v492
  %v758 = vunpack.c.l.b16 %v123
  %v759 = vunpack.c.l.b16 %v124
  %v760 = vunpack.c.l.b16 %v125
  %v761 = vunpack.c.l.b16 %v126
  %v762 = vunpack.c.l.b16 %v127
  %v763 = vunpack.c.l.b16 %v128
  %v764 = vunpack.c.l.b16 %v129
  %v765 = vunpack.c.l.b16 %v130
  %v766 = vunpack.c.l.b16 %v131
  %v767 = vunpack.c.l.b16 %v132
  %v768 = vunpack.c.l.b16 %v133
  %v769 = vunpack.c.l.b16 %v134
  %v770 = vunpack.c.l.b16 %v135
  %v771 = vunpack.c.l.b16 %v136
  %v772 = vunpack.c.l.b16 %v137
  %v773 = vunpack.c.l.b16 %v138
  %v774 = vunpack.c.l.b16 %v139
  %v775 = vunpack.c.l.b16 %v140
  %v776 = vunpack.c.l.b16 %v141
  %v777 = vunpack.c.l.b16 %v142
  %v778 = vunpack.c.l.b16 %v143
  %v779 = vunpack.c.l.b16 %v144
  %v780 = vunpack.c.l.b16 %v145
  %v781 = vunpack.c.l.b16 %v146
  %v782 = vunpack.c.l.b16 %v147
  %v783 = vunpack.c.l.b16 %v148
  %v784 = vunpack.c.l.b16 %v149
  %v785 = vunpack.c.l.b16 %v150
  %v786 = vunpack.c.l.b16 %v151
  %v787 = vunpack.c.l.b16 %v152
  %v788 = vunpack.c.l.b16 %v153
  %v789 = vunpack.c.l.b16 %v154
  %v790 = vunpack.c.l.b16 %v155
  %v791 = vunpack.c.l.b16 %v156
  %v792 = vunpack.c.l.b16 %v157
  %v793 = vunpack.c.l.b16 %v158
  %v794 = vunpack.c.l.b16 %v159
  %v795 = vunpack.c.l.b16 %v160
  %v796 = vunpack.c.l.b16 %v161
  %v797 = vunpack.c.l.b16 %v162
  %v798 = vunpack.c.l.b16 %v163
  %v799 = vunpack.c.l.b16 %v164
  %v800 = vunpack.c.l.b16 %v165
  %v801 = vunpack.c.l.b16 %v166
  %v802 = vunpack.c.l.b16 %v167
  %v803 = vunpack.c.l.b16 %v168
  %v804 = vunpack.c.l.b16 %v169
  %v805 = vunpack.c.l.b16 %v170
  %v806 = vunpack.c.l.b16 %v171
  %v807 = vunpack.c.l.b16 %v172
  %v808 = vunpack.c.l.b16 %v173
  %v809 = vunpack.c.l.b16 %v174
  %v810 = vunpack.c.l.b16 %v175
  %v811 = vunpack.c.l.b16 %v176
  %v812 = vunpack.c.l.b16 %v177
  %v813 = vunpack.c.l.b16 %v178
  %v814 = vunpack.c.l.b16 %v179
  %v815 = vunpack.c.l.b16 %v180
  %v816 = vunpack.c.l.b16 %v181
  %v817 = vunpack.c.l.b16 %v182
  %v818 = vunpack.c.l.b16 %v183
  %v819 = vunpack.c.l.b16 %v184
  %v820 = vunpack.c.l.b16 %v185
  %v821 = vunpack.c.l.b16 %v186
  %v822 = vunpack.c.l.b16 %v187
  %v823 = vunpack.c.l.b16 %v188
  %v824 = vunpack.c.l.b16 %v189
  %v825 = vunpack.c.l.b16 %v190
  %v826 = vunpack.c.l.b16 %v191
  %v827 = vunpack.c.l.b16 %v192
  %v828 = vunpack.c.l.b16 %v193
  %v829 = vunpack.c.l.b16 %v194
  %v830 = vunpack.c.l.b16 %v195
  %v831 = vunpack.c.l.b16 %v196
  %v832 = vunpack.c.l.b16 %v197
  %v833 = vunpack.c.l.b16 %v198
  %v834 = vunpack.c.l.b16 %v199
  %v835 = vunpack.c.l.b16 %v200
  %v836 = vunpack.c.l.b16 %v201
  %v837 = vunpack.c.l.b16 %v202
  %v838 = vpack.c.b16 %v759, %v758
  %v839 = vpack.c.b16 %v761, %v760
  %v840 = vpack.c.b16 %v763, %v762
  %v841 = vpack.c.b16 %v765, %v764
  %v842 = vpack.c.b16 %v767, %v766
  %v843 = vpack.c.b16 %v769, %v768
  %v844 = vpack.c.b16 %v771, %v770
  %v845 = vpack.c.b16 %v773, %v772
  %v846 = vpack.c.b16 %v775, %v774
  %v847 = vpack.c.b16 %v777, %v776
  %v848 = vpack.c.b16 %v779, %v778
  %v849 = vpack.c.b16 %v781, %v780
  %v850 = vpack.c.b16 %v783, %v782
  %v851 = vpack.c.b16 %v785, %v784
  %v852 = vpack.c.b16 %v787, %v786
  %v853 = vpack.c.b16 %v789, %v788
  %v854 = vpack.c.b16 %v791, %v790
  %v855 = vpack.c.b16 %v793, %v792
  %v856 = vpack.c.b16 %v795, %v794
  %v857 = vpack.c.b16 %v797, %v796
  %v858 = vpack.c.b16 %v799, %v798
  %v859 = vpack.c.b16 %v801, %v800
  %v860 = vpack.c.b16 %v803, %v802
  %v861 = vpack.c.b16 %v805, %v804
  %v862 = vpack.c.b16 %v807, %v806
  %v863 = vpack.c.b16 %v809, %v808
  %v864 = vpack.c.b16 %v811, %v810
  %v865 = vpack.c.b16 %v813, %v812
  %v866 = vpack.c.b16 %v815, %v814
  %v867 = vpack.c.b16 %v817, %v816
  %v868 = vpack.c.b16 %v819, %v818
  %v869 = vpack.c.b16 %v821, %v820
  %v870 = vpack.c.b16 %v823, %v822
  %v871 = vpack.c.b16 %v825, %v824
  %v872 = vpack.c.b16 %v827, %v826
  %v873 = vpack.c.b16 %v829, %v828
  %v874 = vpack.c.b16 %v831, %v830
  %v875 = vpack.c.b16 %v833, %v832
  %v876 = vpack.c.b16 %v835, %v834
  %v877 = vpack.c.b16 %v837, %v836
  %918 = vmatprep.subr.bf16.mxu0 0
  %919 = vmatpush1.bf16.msra.mxu0 %v838
  %920 = vmatprep.subr.bf16.mxu0 0
  %921 = vmatpush1.bf16.msra.mxu0 %v839
  %922 = vmatprep.subr.bf16.mxu0 0
  %923 = vmatpush1.bf16.msra.mxu0 %v840
  %924 = vmatprep.subr.bf16.mxu0 0
  %925 = vmatpush1.bf16.msra.mxu0 %v841
  %926 = vmatprep.subr.bf16.mxu0 0
  %927 = vmatpush1.bf16.msra.mxu0 %v842
  %928 = vmatprep.subr.bf16.mxu0 0
  %929 = vmatpush1.bf16.msra.mxu0 %v843
  %930 = vmatprep.subr.bf16.mxu0 0
  %931 = vmatpush1.bf16.msra.mxu0 %v844
  %932 = vmatprep.subr.bf16.mxu0 0
  %933 = vmatpush1.bf16.msra.mxu0 %v845
  %934 = vmatprep.subr.bf16.mxu0 0
  %935 = vmatpush1.bf16.msra.mxu0 %v846
  %936 = vmatprep.subr.bf16.mxu0 0
  %937 = vmatpush1.bf16.msra.mxu0 %v847
  %938 = vmatprep.subr.bf16.mxu0 0
  %939 = vmatpush1.bf16.msra.mxu0 %v848
  %940 = vmatprep.subr.bf16.mxu0 0
  %941 = vmatpush1.bf16.msra.mxu0 %v849
  %942 = vmatprep.subr.bf16.mxu0 0
  %943 = vmatpush1.bf16.msra.mxu0 %v850
  %944 = vmatprep.subr.bf16.mxu0 0
  %945 = vmatpush1.bf16.msra.mxu0 %v851
  %946 = vmatprep.subr.bf16.mxu0 0
  %947 = vmatpush1.bf16.msra.mxu0 %v852
  %948 = vmatprep.subr.bf16.mxu0 0
  %949 = vmatpush1.bf16.msra.mxu0 %v853
  %950 = vmatprep.mubr.bf16.mxu0 %v499
  %951 = vmatmul.mubr.bf16.gmra.mrb[0].mxu0 %v498
  %v952 = vpop.f32.mrb[0].mxu0
  %v953 = vadd.f32 %v208, %v952
  %v954 = vpop.f32.mrb[0].mxu0
  %v955 = vpop.f32.mrb[0].mxu0
  %v956 = vadd.f32 %v208, %v955
  %v957 = vpop.f32.mrb[0].mxu0
  %958 = vmatprep.mubr.bf16.mxu0 %v504
  %959 = vmatmul.mubr.bf16.gmra.mrb[0].mxu0 %v503
  %v960 = vpop.f32.mrb[0].mxu0
  %v961 = vadd.f32 %v208, %v960
  %v962 = vpop.f32.mrb[0].mxu0
  %v963 = vpop.f32.mrb[0].mxu0
  %v964 = vadd.f32 %v208, %v963
  %v965 = vpop.f32.mrb[0].mxu0
  %966 = vmatprep.mubr.bf16.mxu0 %v509
  %967 = vmatmul.mubr.bf16.gmra.mrb[0].mxu0 %v508
  %v968 = vpop.f32.mrb[0].mxu0
  %v969 = vadd.f32 %v208, %v968
  %v970 = vpop.f32.mrb[0].mxu0
  %v971 = vpop.f32.mrb[0].mxu0
  %v972 = vadd.f32 %v208, %v971
  %v973 = vpop.f32.mrb[0].mxu0
  %974 = vmatprep.mubr.bf16.mxu0 %v514
  %975 = vmatmul.mubr.bf16.gmra.mrb[0].mxu0 %v513
  %v976 = vpop.f32.mrb[0].mxu0
  %v977 = vadd.f32 %v208, %v976
  %v978 = vpop.f32.mrb[0].mxu0
  %v979 = vpop.f32.mrb[0].mxu0
  %v980 = vadd.f32 %v208, %v979
  %v981 = vpop.f32.mrb[0].mxu0
  %982 = vmatprep.mubr.bf16.mxu0 %v519
  %983 = vmatmul.mubr.bf16.gmra.mrb[0].mxu0 %v518
  %v984 = vpop.f32.mrb[0].mxu0
  %v985 = vadd.f32 %v208, %v984
  %v986 = vpop.f32.mrb[0].mxu0
  %v987 = vpop.f32.mrb[0].mxu0
  %v988 = vadd.f32 %v208, %v987
  %v989 = vpop.f32.mrb[0].mxu0
  %990 = vmatprep.mubr.bf16.mxu0 %v524
  %991 = vmatmul.mubr.bf16.gmra.mrb[0].mxu0 %v523
  %v992 = vpop.f32.mrb[0].mxu0
  %v993 = vadd.f32 %v208, %v992
  %v994 = vpop.f32.mrb[0].mxu0
  %v995 = vpop.f32.mrb[0].mxu0
  %v996 = vadd.f32 %v208, %v995
  %v997 = vpop.f32.mrb[0].mxu0
  %998 = vmatprep.mubr.bf16.mxu0 %v529
  %999 = vmatmul.mubr.bf16.gmra.mrb[0].mxu0 %v528
  %v1000 = vpop.f32.mrb[0].mxu0
  %v1001 = vadd.f32 %v208, %v1000
  %v1002 = vpop.f32.mrb[0].mxu0
  %v1003 = vpop.f32.mrb[0].mxu0
  %v1004 = vadd.f32 %v208, %v1003
  %v1005 = vpop.f32.mrb[0].mxu0
  %1006 = vmatprep.mubr.bf16.mxu0 %v534
  %1007 = vmatmul.mubr.bf16.gmra.mrb[0].mxu0 %v533
  %v1008 = vpop.f32.mrb[0].mxu0
  %v1009 = vadd.f32 %v208, %v1008
  %v1010 = vpop.f32.mrb[0].mxu0
  %v1011 = vpop.f32.mrb[0].mxu0
  %v1012 = vadd.f32 %v208, %v1011
  %v1013 = vpop.f32.mrb[0].mxu0
  %1014 = vmatprep.mubr.bf16.mxu0 %v539
  %1015 = vmatmul.mubr.bf16.gmra.mrb[0].mxu0 %v538
  %v1016 = vpop.f32.mrb[0].mxu0
  %v1017 = vadd.f32 %v208, %v1016
  %v1018 = vpop.f32.mrb[0].mxu0
  %v1019 = vpop.f32.mrb[0].mxu0
  %v1020 = vadd.f32 %v208, %v1019
  %v1021 = vpop.f32.mrb[0].mxu0
  %1022 = vmatprep.mubr.bf16.mxu0 %v544
  %1023 = vmatmul.mubr.bf16.gmra.mrb[0].mxu0 %v543
  %v1024 = vpop.f32.mrb[0].mxu0
  %v1025 = vadd.f32 %v208, %v1024
  %v1026 = vpop.f32.mrb[0].mxu0
  %v1027 = vpop.f32.mrb[0].mxu0
  %v1028 = vadd.f32 %v208, %v1027
  %v1029 = vpop.f32.mrb[0].mxu0
  %1030 = vmatprep.mubr.bf16.mxu0 %v549
  %1031 = vmatmul.mubr.bf16.gmra.mrb[0].mxu0 %v548
  %v1032 = vpop.f32.mrb[0].mxu0
  %v1033 = vadd.f32 %v208, %v1032
  %v1034 = vpop.f32.mrb[0].mxu0
  %v1035 = vpop.f32.mrb[0].mxu0
  %v1036 = vadd.f32 %v208, %v1035
  %v1037 = vpop.f32.mrb[0].mxu0
  %1038 = vmatprep.mubr.bf16.mxu0 %v554
  %1039 = vmatmul.mubr.bf16.gmra.mrb[0].mxu0 %v553
  %v1040 = vpop.f32.mrb[0].mxu0
  %v1041 = vadd.f32 %v208, %v1040
  %v1042 = vpop.f32.mrb[0].mxu0
  %v1043 = vpop.f32.mrb[0].mxu0
  %v1044 = vadd.f32 %v208, %v1043
  %v1045 = vpop.f32.mrb[0].mxu0
  %1046 = vmatprep.mubr.bf16.mxu0 %v559
  %1047 = vmatmul.mubr.bf16.gmra.mrb[0].mxu0 %v558
  %v1048 = vpop.f32.mrb[0].mxu0
  %v1049 = vadd.f32 %v208, %v1048
  %v1050 = vpop.f32.mrb[0].mxu0
  %v1051 = vpop.f32.mrb[0].mxu0
  %v1052 = vadd.f32 %v208, %v1051
  %v1053 = vpop.f32.mrb[0].mxu0
  %1054 = vmatprep.mubr.bf16.mxu0 %v564
  %1055 = vmatmul.mubr.bf16.gmra.mrb[0].mxu0 %v563
  %v1056 = vpop.f32.mrb[0].mxu0
  %v1057 = vadd.f32 %v208, %v1056
  %v1058 = vpop.f32.mrb[0].mxu0
  %v1059 = vpop.f32.mrb[0].mxu0
  %v1060 = vadd.f32 %v208, %v1059
  %v1061 = vpop.f32.mrb[0].mxu0
  %1062 = vmatprep.mubr.bf16.mxu0 %v569
  %1063 = vmatmul.mubr.bf16.gmra.mrb[0].mxu0 %v568
  %v1064 = vpop.f32.mrb[0].mxu0
  %v1065 = vadd.f32 %v208, %v1064
  %v1066 = vpop.f32.mrb[0].mxu0
  %v1067 = vpop.f32.mrb[0].mxu0
  %v1068 = vadd.f32 %v208, %v1067
  %v1069 = vpop.f32.mrb[0].mxu0
  %1070 = vmatprep.mubr.bf16.mxu0 %v574
  %1071 = vmatmul.mubr.bf16.gmra.mrb[0].mxu0 %v573
  %v1072 = vpop.f32.mrb[0].mxu0
  %v1073 = vadd.f32 %v208, %v1072
  %v1074 = vpop.f32.mrb[0].mxu0
  %v1075 = vpop.f32.mrb[0].mxu0
  %v1076 = vadd.f32 %v208, %v1075
  %v1077 = vpop.f32.mrb[0].mxu0
  %1078 = vmatprep.mubr.bf16.mxu0 %v579
  %1079 = vmatmul.mubr.bf16.gmra.mrb[0].mxu0 %v578
  %v1080 = vpop.f32.mrb[0].mxu0
  %v1081 = vadd.f32 %v208, %v1080
  %v1082 = vpop.f32.mrb[0].mxu0
  %v1083 = vpop.f32.mrb[0].mxu0
  %v1084 = vadd.f32 %v208, %v1083
  %v1085 = vpop.f32.mrb[0].mxu0
  %1086 = vmatprep.mubr.bf16.mxu0 %v584
  %1087 = vmatmul.mubr.bf16.gmra.mrb[0].mxu0 %v583
  %v1088 = vpop.f32.mrb[0].mxu0
  %v1089 = vadd.f32 %v208, %v1088
  %v1090 = vpop.f32.mrb[0].mxu0
  %v1091 = vpop.f32.mrb[0].mxu0
  %v1092 = vadd.f32 %v208, %v1091
  %v1093 = vpop.f32.mrb[0].mxu0
  %1094 = vdwg.mxu0
  %1095 = vmatprep.subr.bf16.mxu0 0
  %1096 = vmatpush1.bf16.msra.mxu0 %v854
  %1097 = vmatprep.subr.bf16.mxu0 0
  %1098 = vmatpush1.bf16.msra.mxu0 %v855
  %1099 = vmatprep.subr.bf16.mxu0 0
  %1100 = vmatpush1.bf16.msra.mxu0 %v856
  %1101 = vmatprep.subr.bf16.mxu0 0
  %1102 = vmatpush1.bf16.msra.mxu0 %v857
  %1103 = vmatprep.subr.bf16.mxu0 0
  %1104 = vmatpush1.bf16.msra.mxu0 %v858
  %1105 = vmatprep.subr.bf16.mxu0 0
  %1106 = vmatpush1.bf16.msra.mxu0 %v859
  %1107 = vmatprep.subr.bf16.mxu0 0
  %1108 = vmatpush1.bf16.msra.mxu0 %v860
  %1109 = vmatprep.subr.bf16.mxu0 0
  %1110 = vmatpush1.bf16.msra.mxu0 %v861
  %1111 = vmatprep.subr.bf16.mxu0 0
  %1112 = vmatpush1.bf16.msra.mxu0 %v862
  %1113 = vmatprep.subr.bf16.mxu0 0
  %1114 = vmatpush1.bf16.msra.mxu0 %v863
  %1115 = vmatprep.subr.bf16.mxu0 0
  %1116 = vmatpush1.bf16.msra.mxu0 %v864
  %1117 = vmatprep.subr.bf16.mxu0 0
  %1118 = vmatpush1.bf16.msra.mxu0 %v865
  %1119 = vmatprep.subr.bf16.mxu0 0
  %1120 = vmatpush1.bf16.msra.mxu0 %v866
  %1121 = vmatprep.subr.bf16.mxu0 0
  %1122 = vmatpush1.bf16.msra.mxu0 %v867
  %1123 = vmatprep.subr.bf16.mxu0 0
  %1124 = vmatpush1.bf16.msra.mxu0 %v868
  %1125 = vmatprep.subr.bf16.mxu0 0
  %1126 = vmatpush1.bf16.msra.mxu0 %v869
  %1127 = vmatprep.mubr.bf16.mxu0 %v501
  %1128 = vmatmul.mubr.bf16.gmra.mrb[0].mxu0 %v500
  %v1129 = vpop.f32.mrb[0].mxu0
  %v1130 = vadd.f32 %v953, %v1129
  %v1131 = vpop.f32.mrb[0].mxu0
  %v1132 = vpop.f32.mrb[0].mxu0
  %v1133 = vadd.f32 %v956, %v1132
  %v1134 = vpop.f32.mrb[0].mxu0
  %1135 = vmatprep.mubr.bf16.mxu0 %v506
  %1136 = vmatmul.mubr.bf16.gmra.mrb[0].mxu0 %v505
  %v1137 = vpop.f32.mrb[0].mxu0
  %v1138 = vadd.f32 %v961, %v1137
  %v1139 = vpop.f32.mrb[0].mxu0
  %v1140 = vpop.f32.mrb[0].mxu0
  %v1141 = vadd.f32 %v964, %v1140
  %v1142 = vpop.f32.mrb[0].mxu0
  %1143 = vmatprep.mubr.bf16.mxu0 %v511
  %1144 = vmatmul.mubr.bf16.gmra.mrb[0].mxu0 %v510
  %v1145 = vpop.f32.mrb[0].mxu0
  %v1146 = vadd.f32 %v969, %v1145
  %v1147 = vpop.f32.mrb[0].mxu0
  %v1148 = vpop.f32.mrb[0].mxu0
  %v1149 = vadd.f32 %v972, %v1148
  %v1150 = vpop.f32.mrb[0].mxu0
  %1151 = vmatprep.mubr.bf16.mxu0 %v516
  %1152 = vmatmul.mubr.bf16.gmra.mrb[0].mxu0 %v515
  %v1153 = vpop.f32.mrb[0].mxu0
  %v1154 = vadd.f32 %v977, %v1153
  %v1155 = vpop.f32.mrb[0].mxu0
  %v1156 = vpop.f32.mrb[0].mxu0
  %v1157 = vadd.f32 %v980, %v1156
  %v1158 = vpop.f32.mrb[0].mxu0
  %1159 = vmatprep.mubr.bf16.mxu0 %v521
  %1160 = vmatmul.mubr.bf16.gmra.mrb[0].mxu0 %v520
  %v1161 = vpop.f32.mrb[0].mxu0
  %v1162 = vadd.f32 %v985, %v1161
  %v1163 = vpop.f32.mrb[0].mxu0
  %v1164 = vpop.f32.mrb[0].mxu0
  %v1165 = vadd.f32 %v988, %v1164
  %v1166 = vpop.f32.mrb[0].mxu0
  %1167 = vmatprep.mubr.bf16.mxu0 %v526
  %1168 = vmatmul.mubr.bf16.gmra.mrb[0].mxu0 %v525
  %v1169 = vpop.f32.mrb[0].mxu0
  %v1170 = vadd.f32 %v993, %v1169
  %v1171 = vpop.f32.mrb[0].mxu0
  %v1172 = vpop.f32.mrb[0].mxu0
  %v1173 = vadd.f32 %v996, %v1172
  %v1174 = vpop.f32.mrb[0].mxu0
  %1175 = vmatprep.mubr.bf16.mxu0 %v531
  %1176 = vmatmul.mubr.bf16.gmra.mrb[0].mxu0 %v530
  %v1177 = vpop.f32.mrb[0].mxu0
  %v1178 = vadd.f32 %v1001, %v1177
  %v1179 = vpop.f32.mrb[0].mxu0
  %v1180 = vpop.f32.mrb[0].mxu0
  %v1181 = vadd.f32 %v1004, %v1180
  %v1182 = vpop.f32.mrb[0].mxu0
  %1183 = vmatprep.mubr.bf16.mxu0 %v536
  %1184 = vmatmul.mubr.bf16.gmra.mrb[0].mxu0 %v535
  %v1185 = vpop.f32.mrb[0].mxu0
  %v1186 = vadd.f32 %v1009, %v1185
  %v1187 = vpop.f32.mrb[0].mxu0
  %v1188 = vpop.f32.mrb[0].mxu0
  %v1189 = vadd.f32 %v1012, %v1188
  %v1190 = vpop.f32.mrb[0].mxu0
  %1191 = vmatprep.mubr.bf16.mxu0 %v541
  %1192 = vmatmul.mubr.bf16.gmra.mrb[0].mxu0 %v540
  %v1193 = vpop.f32.mrb[0].mxu0
  %v1194 = vadd.f32 %v1017, %v1193
  %v1195 = vpop.f32.mrb[0].mxu0
  %v1196 = vpop.f32.mrb[0].mxu0
  %v1197 = vadd.f32 %v1020, %v1196
  %v1198 = vpop.f32.mrb[0].mxu0
  %1199 = vmatprep.mubr.bf16.mxu0 %v546
  %1200 = vmatmul.mubr.bf16.gmra.mrb[0].mxu0 %v545
  %v1201 = vpop.f32.mrb[0].mxu0
  %v1202 = vadd.f32 %v1025, %v1201
  %v1203 = vpop.f32.mrb[0].mxu0
  %v1204 = vpop.f32.mrb[0].mxu0
  %v1205 = vadd.f32 %v1028, %v1204
  %v1206 = vpop.f32.mrb[0].mxu0
  %1207 = vmatprep.mubr.bf16.mxu0 %v551
  %1208 = vmatmul.mubr.bf16.gmra.mrb[0].mxu0 %v550
  %v1209 = vpop.f32.mrb[0].mxu0
  %v1210 = vadd.f32 %v1033, %v1209
  %v1211 = vpop.f32.mrb[0].mxu0
  %v1212 = vpop.f32.mrb[0].mxu0
  %v1213 = vadd.f32 %v1036, %v1212
  %v1214 = vpop.f32.mrb[0].mxu0
  %1215 = vmatprep.mubr.bf16.mxu0 %v556
  %1216 = vmatmul.mubr.bf16.gmra.mrb[0].mxu0 %v555
  %v1217 = vpop.f32.mrb[0].mxu0
  %v1218 = vadd.f32 %v1041, %v1217
  %v1219 = vpop.f32.mrb[0].mxu0
  %v1220 = vpop.f32.mrb[0].mxu0
  %v1221 = vadd.f32 %v1044, %v1220
  %v1222 = vpop.f32.mrb[0].mxu0
  %1223 = vmatprep.mubr.bf16.mxu0 %v561
  %1224 = vmatmul.mubr.bf16.gmra.mrb[0].mxu0 %v560
  %v1225 = vpop.f32.mrb[0].mxu0
  %v1226 = vadd.f32 %v1049, %v1225
  %v1227 = vpop.f32.mrb[0].mxu0
  %v1228 = vpop.f32.mrb[0].mxu0
  %v1229 = vadd.f32 %v1052, %v1228
  %v1230 = vpop.f32.mrb[0].mxu0
  %1231 = vmatprep.mubr.bf16.mxu0 %v566
  %1232 = vmatmul.mubr.bf16.gmra.mrb[0].mxu0 %v565
  %v1233 = vpop.f32.mrb[0].mxu0
  %v1234 = vadd.f32 %v1057, %v1233
  %v1235 = vpop.f32.mrb[0].mxu0
  %v1236 = vpop.f32.mrb[0].mxu0
  %v1237 = vadd.f32 %v1060, %v1236
  %v1238 = vpop.f32.mrb[0].mxu0
  %1239 = vmatprep.mubr.bf16.mxu0 %v571
  %1240 = vmatmul.mubr.bf16.gmra.mrb[0].mxu0 %v570
  %v1241 = vpop.f32.mrb[0].mxu0
  %v1242 = vadd.f32 %v1065, %v1241
  %v1243 = vpop.f32.mrb[0].mxu0
  %v1244 = vpop.f32.mrb[0].mxu0
  %v1245 = vadd.f32 %v1068, %v1244
  %v1246 = vpop.f32.mrb[0].mxu0
  %1247 = vmatprep.mubr.bf16.mxu0 %v576
  %1248 = vmatmul.mubr.bf16.gmra.mrb[0].mxu0 %v575
  %v1249 = vpop.f32.mrb[0].mxu0
  %v1250 = vadd.f32 %v1073, %v1249
  %v1251 = vpop.f32.mrb[0].mxu0
  %v1252 = vpop.f32.mrb[0].mxu0
  %v1253 = vadd.f32 %v1076, %v1252
  %v1254 = vpop.f32.mrb[0].mxu0
  %1255 = vmatprep.mubr.bf16.mxu0 %v581
  %1256 = vmatmul.mubr.bf16.gmra.mrb[0].mxu0 %v580
  %v1257 = vpop.f32.mrb[0].mxu0
  %v1258 = vadd.f32 %v1081, %v1257
  %v1259 = vpop.f32.mrb[0].mxu0
  %v1260 = vpop.f32.mrb[0].mxu0
  %v1261 = vadd.f32 %v1084, %v1260
  %v1262 = vpop.f32.mrb[0].mxu0
  %1263 = vmatprep.mubr.bf16.mxu0 %v586
  %1264 = vmatmul.mubr.bf16.gmra.mrb[0].mxu0 %v585
  %v1265 = vpop.f32.mrb[0].mxu0
  %v1266 = vadd.f32 %v1089, %v1265
  %v1267 = vpop.f32.mrb[0].mxu0
  %v1268 = vpop.f32.mrb[0].mxu0
  %v1269 = vadd.f32 %v1092, %v1268
  %v1270 = vpop.f32.mrb[0].mxu0
  %1271 = vdwg.mxu0
  %1272 = vmatprep.subr.bf16.mxu0 0
  %1273 = vmatpush1.bf16.msra.mxu0 %v870
  %1274 = vmatprep.subr.bf16.mxu0 0
  %1275 = vmatpush1.bf16.msra.mxu0 %v871
  %1276 = vmatprep.subr.bf16.mxu0 0
  %1277 = vmatpush1.bf16.msra.mxu0 %v872
  %1278 = vmatprep.subr.bf16.mxu0 0
  %1279 = vmatpush1.bf16.msra.mxu0 %v873
  %1280 = vmatprep.subr.bf16.mxu0 0
  %1281 = vmatpush1.bf16.msra.mxu0 %v874
  %1282 = vmatprep.subr.bf16.mxu0 0
  %1283 = vmatpush1.bf16.msra.mxu0 %v875
  %1284 = vmatprep.subr.bf16.mxu0 0
  %1285 = vmatpush1.bf16.msra.mxu0 %v876
  %1286 = vmatprep.subr.bf16.mxu0 0
  %1287 = vmatpush1.bf16.msra.mxu0 %v877
  %1288 = vmatprep.subr.bf16.mxu0 0
  %1289 = vmatpush1.bf16.msra.mxu0 0
  %1290 = vmatprep.subr.bf16.mxu0 0
  %1291 = vmatpush1.bf16.msra.mxu0 0
  %1292 = vmatprep.subr.bf16.mxu0 0
  %1293 = vmatpush1.bf16.msra.mxu0 0
  %1294 = vmatprep.subr.bf16.mxu0 0
  %1295 = vmatpush1.bf16.msra.mxu0 0
  %1296 = vmatprep.subr.bf16.mxu0 0
  %1297 = vmatpush1.bf16.msra.mxu0 0
  %1298 = vmatprep.subr.bf16.mxu0 0
  %1299 = vmatpush1.bf16.msra.mxu0 0
  %1300 = vmatprep.subr.bf16.mxu0 0
  %1301 = vmatpush1.bf16.msra.mxu0 0
  %1302 = vmatprep.subr.bf16.mxu0 0
  %1303 = vmatpush1.bf16.msra.mxu0 0
  %1304 = vmatprep.mubr.bf16.mxu0 0
  %1305 = vmatmul.mubr.bf16.gmra.mrb[0].mxu0 %v502
  %v1306 = vpop.f32.mrb[0].mxu0
  %v1307 = vadd.f32 %v1130, %v1306
  %v1308 = vpop.f32.mrb[0].mxu0
  %v1309 = vpop.f32.mrb[0].mxu0
  %v1310 = vadd.f32 %v1133, %v1309
  %v1311 = vpop.f32.mrb[0].mxu0
  %1312 = vmatprep.mubr.bf16.mxu0 0
  %1313 = vmatmul.mubr.bf16.gmra.mrb[0].mxu0 %v507
  %v1314 = vpop.f32.mrb[0].mxu0
  %v1315 = vadd.f32 %v1138, %v1314
  %v1316 = vpop.f32.mrb[0].mxu0
  %v1317 = vpop.f32.mrb[0].mxu0
  %v1318 = vadd.f32 %v1141, %v1317
  %v1319 = vpop.f32.mrb[0].mxu0
  %1320 = vmatprep.mubr.bf16.mxu0 0
  %1321 = vmatmul.mubr.bf16.gmra.mrb[0].mxu0 %v512
  %v1322 = vpop.f32.mrb[0].mxu0
  %v1323 = vadd.f32 %v1146, %v1322
  %v1324 = vpop.f32.mrb[0].mxu0
  %v1325 = vpop.f32.mrb[0].mxu0
  %v1326 = vadd.f32 %v1149, %v1325
  %v1327 = vpop.f32.mrb[0].mxu0
  %1328 = vmatprep.mubr.bf16.mxu0 0
  %1329 = vmatmul.mubr.bf16.gmra.mrb[0].mxu0 %v517
  %v1330 = vpop.f32.mrb[0].mxu0
  %v1331 = vadd.f32 %v1154, %v1330
  %v1332 = vpop.f32.mrb[0].mxu0
  %v1333 = vpop.f32.mrb[0].mxu0
  %v1334 = vadd.f32 %v1157, %v1333
  %v1335 = vpop.f32.mrb[0].mxu0
  %1336 = vmatprep.mubr.bf16.mxu0 0
  %1337 = vmatmul.mubr.bf16.gmra.mrb[0].mxu0 %v522
  %v1338 = vpop.f32.mrb[0].mxu0
  %v1339 = vadd.f32 %v1162, %v1338
  %v1340 = vpop.f32.mrb[0].mxu0
  %v1341 = vpop.f32.mrb[0].mxu0
  %v1342 = vadd.f32 %v1165, %v1341
  %v1343 = vpop.f32.mrb[0].mxu0
  %1344 = vmatprep.mubr.bf16.mxu0 0
  %1345 = vmatmul.mubr.bf16.gmra.mrb[0].mxu0 %v527
  %v1346 = vpop.f32.mrb[0].mxu0
  %v1347 = vadd.f32 %v1170, %v1346
  %v1348 = vpop.f32.mrb[0].mxu0
  %v1349 = vpop.f32.mrb[0].mxu0
  %v1350 = vadd.f32 %v1173, %v1349
  %v1351 = vpop.f32.mrb[0].mxu0
  %1352 = vmatprep.mubr.bf16.mxu0 0
  %1353 = vmatmul.mubr.bf16.gmra.mrb[0].mxu0 %v532
  %v1354 = vpop.f32.mrb[0].mxu0
  %v1355 = vadd.f32 %v1178, %v1354
  %v1356 = vpop.f32.mrb[0].mxu0
  %v1357 = vpop.f32.mrb[0].mxu0
  %v1358 = vadd.f32 %v1181, %v1357
  %v1359 = vpop.f32.mrb[0].mxu0
  %1360 = vmatprep.mubr.bf16.mxu0 0
  %1361 = vmatmul.mubr.bf16.gmra.mrb[0].mxu0 %v537
  %v1362 = vpop.f32.mrb[0].mxu0
  %v1363 = vadd.f32 %v1186, %v1362
  %v1364 = vpop.f32.mrb[0].mxu0
  %v1365 = vpop.f32.mrb[0].mxu0
  %v1366 = vadd.f32 %v1189, %v1365
  %v1367 = vpop.f32.mrb[0].mxu0
  %1368 = vmatprep.mubr.bf16.mxu0 0
  %1369 = vmatmul.mubr.bf16.gmra.mrb[0].mxu0 %v542
  %v1370 = vpop.f32.mrb[0].mxu0
  %v1371 = vadd.f32 %v1194, %v1370
  %v1372 = vpop.f32.mrb[0].mxu0
  %v1373 = vpop.f32.mrb[0].mxu0
  %v1374 = vadd.f32 %v1197, %v1373
  %v1375 = vpop.f32.mrb[0].mxu0
  %1376 = vmatprep.mubr.bf16.mxu0 0
  %1377 = vmatmul.mubr.bf16.gmra.mrb[0].mxu0 %v547
  %v1378 = vpop.f32.mrb[0].mxu0
  %v1379 = vadd.f32 %v1202, %v1378
  %v1380 = vpop.f32.mrb[0].mxu0
  %v1381 = vpop.f32.mrb[0].mxu0
  %v1382 = vadd.f32 %v1205, %v1381
  %v1383 = vpop.f32.mrb[0].mxu0
  %1384 = vmatprep.mubr.bf16.mxu0 0
  %1385 = vmatmul.mubr.bf16.gmra.mrb[0].mxu0 %v552
  %v1386 = vpop.f32.mrb[0].mxu0
  %v1387 = vadd.f32 %v1210, %v1386
  %v1388 = vpop.f32.mrb[0].mxu0
  %v1389 = vpop.f32.mrb[0].mxu0
  %v1390 = vadd.f32 %v1213, %v1389
  %v1391 = vpop.f32.mrb[0].mxu0
  %1392 = vmatprep.mubr.bf16.mxu0 0
  %1393 = vmatmul.mubr.bf16.gmra.mrb[0].mxu0 %v557
  %v1394 = vpop.f32.mrb[0].mxu0
  %v1395 = vadd.f32 %v1218, %v1394
  %v1396 = vpop.f32.mrb[0].mxu0
  %v1397 = vpop.f32.mrb[0].mxu0
  %v1398 = vadd.f32 %v1221, %v1397
  %v1399 = vpop.f32.mrb[0].mxu0
  %1400 = vmatprep.mubr.bf16.mxu0 0
  %1401 = vmatmul.mubr.bf16.gmra.mrb[0].mxu0 %v562
  %v1402 = vpop.f32.mrb[0].mxu0
  %v1403 = vadd.f32 %v1226, %v1402
  %v1404 = vpop.f32.mrb[0].mxu0
  %v1405 = vpop.f32.mrb[0].mxu0
  %v1406 = vadd.f32 %v1229, %v1405
  %v1407 = vpop.f32.mrb[0].mxu0
  %1408 = vmatprep.mubr.bf16.mxu0 0
  %1409 = vmatmul.mubr.bf16.gmra.mrb[0].mxu0 %v567
  %v1410 = vpop.f32.mrb[0].mxu0
  %v1411 = vadd.f32 %v1234, %v1410
  %v1412 = vpop.f32.mrb[0].mxu0
  %v1413 = vpop.f32.mrb[0].mxu0
  %v1414 = vadd.f32 %v1237, %v1413
  %v1415 = vpop.f32.mrb[0].mxu0
  %1416 = vmatprep.mubr.bf16.mxu0 0
  %1417 = vmatmul.mubr.bf16.gmra.mrb[0].mxu0 %v572
  %v1418 = vpop.f32.mrb[0].mxu0
  %v1419 = vadd.f32 %v1242, %v1418
  %v1420 = vpop.f32.mrb[0].mxu0
  %v1421 = vpop.f32.mrb[0].mxu0
  %v1422 = vadd.f32 %v1245, %v1421
  %v1423 = vpop.f32.mrb[0].mxu0
  %1424 = vmatprep.mubr.bf16.mxu0 0
  %1425 = vmatmul.mubr.bf16.gmra.mrb[0].mxu0 %v577
  %v1426 = vpop.f32.mrb[0].mxu0
  %v1427 = vadd.f32 %v1250, %v1426
  %v1428 = vpop.f32.mrb[0].mxu0
  %v1429 = vpop.f32.mrb[0].mxu0
  %v1430 = vadd.f32 %v1253, %v1429
  %v1431 = vpop.f32.mrb[0].mxu0
  %1432 = vmatprep.mubr.bf16.mxu0 0
  %1433 = vmatmul.mubr.bf16.gmra.mrb[0].mxu0 %v582
  %v1434 = vpop.f32.mrb[0].mxu0
  %v1435 = vadd.f32 %v1258, %v1434
  %v1436 = vpop.f32.mrb[0].mxu0
  %v1437 = vpop.f32.mrb[0].mxu0
  %v1438 = vadd.f32 %v1261, %v1437
  %v1439 = vpop.f32.mrb[0].mxu0
  %1440 = vmatprep.mubr.bf16.mxu0 0
  %1441 = vmatmul.mubr.bf16.gmra.mrb[0].mxu0 %v587
  %v1442 = vpop.f32.mrb[0].mxu0
  %v1443 = vadd.f32 %v1266, %v1442
  %v1444 = vpop.f32.mrb[0].mxu0
  %v1445 = vpop.f32.mrb[0].mxu0
  %v1446 = vadd.f32 %v1269, %v1445
  %v1447 = vpop.f32.mrb[0].mxu0
  %1448 = vdwg.mxu0
  %v1449 = vmax.f32 %v1307, 0.0
  %v1450 = vmax.f32 %v1310, 0.0
  %v1451 = vmax.f32 %v1315, 0.0
  %v1452 = vmax.f32 %v1318, 0.0
  %v1453 = vmax.f32 %v1323, 0.0
  %v1454 = vmax.f32 %v1326, 0.0
  %v1455 = vmax.f32 %v1331, 0.0
  %v1456 = vmax.f32 %v1334, 0.0
  %v1457 = vmax.f32 %v1339, 0.0
  %v1458 = vmax.f32 %v1342, 0.0
  %v1459 = vmax.f32 %v1347, 0.0
  %v1460 = vmax.f32 %v1350, 0.0
  %v1461 = vmax.f32 %v1355, 0.0
  %v1462 = vmax.f32 %v1358, 0.0
  %v1463 = vmax.f32 %v1363, 0.0
  %v1464 = vmax.f32 %v1366, 0.0
  %v1465 = vmax.f32 %v1371, 0.0
  %v1466 = vmax.f32 %v1374, 0.0
  %v1467 = vmax.f32 %v1379, 0.0
  %v1468 = vmax.f32 %v1382, 0.0
  %v1469 = vmax.f32 %v1387, 0.0
  %v1470 = vmax.f32 %v1390, 0.0
  %v1471 = vmax.f32 %v1395, 0.0
  %v1472 = vmax.f32 %v1398, 0.0
  %v1473 = vmax.f32 %v1403, 0.0
  %v1474 = vmax.f32 %v1406, 0.0
  %v1475 = vmax.f32 %v1411, 0.0
  %v1476 = vmax.f32 %v1414, 0.0
  %v1477 = vmax.f32 %v1419, 0.0
  %v1478 = vmax.f32 %v1422, 0.0
  %v1479 = vmax.f32 %v1427, 0.0
  %v1480 = vmax.f32 %v1430, 0.0
  %v1481 = vmax.f32 %v1435, 0.0
  %v1482 = vmax.f32 %v1438, 0.0
  %v1483 = vmax.f32 %v1443, 0.0
  %v1484 = vmax.f32 %v1446, 0.0
  %1485 = vst [vmem:[%s3] sm:$0xff] %v1449
  %1486 = vst [vmem:[%s3 + $0x8] sm:$0xff] %v1450
  %1487 = vst [vmem:[%s3 + $0x10] sm:$0xff] %v1451
  %1488 = vst [vmem:[%s3 + $0x18] sm:$0xff] %v1452
  %1489 = vst [vmem:[%s3 + $0x20] sm:$0xff] %v1453
  %1490 = vst [vmem:[%s3 + $0x28] sm:$0xff] %v1454
  %1491 = vst [vmem:[%s3 + $0x30] sm:$0xff] %v1455
  %1492 = vst [vmem:[%s3 + $0x38] sm:$0xff] %v1456
  %1493 = vst [vmem:[%s3 + $0x40] sm:$0xff] %v1457
  %1494 = vst [vmem:[%s3 + $0x48] sm:$0xff] %v1458
  %1495 = vst [vmem:[%s3 + $0x50] sm:$0xff] %v1459
  %1496 = vst [vmem:[%s3 + $0x58] sm:$0xff] %v1460
  %1497 = vst [vmem:[%s3 + $0x60] sm:$0xff] %v1461
  %1498 = vst [vmem:[%s3 + $0x68] sm:$0xff] %v1462
  %1499 = vst [vmem:[%s3 + $0x70] sm:$0xff] %v1463
  %1500 = vst [vmem:[%s3 + $0x78] sm:$0xff] %v1464
  %1501 = vst [vmem:[%s3 + $0x80] sm:$0xff] %v1465
  %1502 = vst [vmem:[%s3 + $0x88] sm:$0xff] %v1466
  %1503 = vst [vmem:[%s3 + $0x90] sm:$0xff] %v1467
  %1504 = vst [vmem:[%s3 + $0x98] sm:$0xff] %v1468
  %1505 = vst [vmem:[%s3 + $0xa0] sm:$0xff] %v1469
  %1506 = vst [vmem:[%s3 + $0xa8] sm:$0xff] %v1470
  %1507 = vst [vmem:[%s3 + $0xb0] sm:$0xff] %v1471
  %1508 = vst [vmem:[%s3 + $0xb8] sm:$0xff] %v1472
  %1509 = vst [vmem:[%s3 + $0xc0] sm:$0xff] %v1473
  %1510 = vst [vmem:[%s3 + $0xc8] sm:$0xff] %v1474
  %1511 = vst [vmem:[%s3 + $0xd0] sm:$0xff] %v1475
  %1512 = vst [vmem:[%s3 + $0xd8] sm:$0xff] %v1476
  %1513 = vst [vmem:[%s3 + $0xe0] sm:$0xff] %v1477
  %1514 = vst [vmem:[%s3 + $0xe8] sm:$0xff] %v1478
  %1515 = vst [vmem:[%s3 + $0xf0] sm:$0xff] %v1479
  %1516 = vst [vmem:[%s3 + $0xf8] sm:$0xff] %v1480
  %1517 = vst [vmem:[%s3 + $0x100] sm:$0xff] %v1481
  %1518 = vst [vmem:[%s3 + $0x108] sm:$0xff] %v1482
  %1519 = vst [vmem:[%s3 + $0x110] sm:$0xff] %v1483
  %1520 = vst [vmem:[%s3 + $0x118] sm:$0xff] %v1484
  // Predicated region
  $region14: #{_lambda_.4} parent=0 // pred_check
    _
  $region15: #{_lambda_.4} parent=0 // pred_check_branch
    %1522 = sbr.rel (0) target = $region17
  $region16: #{_lambda_.4} parent=0 // pred_region
    _
  $region17: #{_lambda_.4} parent=0 // pred_fallthru
    _
  // Predicated region
  $region18: #{_lambda_.4} parent=0 // pred_check
    _
  $region19: #{_lambda_.4} parent=0 // pred_check_branch
    %1524 = sbr.rel (0) target = $region21
  $region20: #{_lambda_.4} parent=0 // pred_region
    _
  $region21: #{_lambda_.4} parent=0 // pred_fallthru
    _

// kernel: _lambda_.5
$region0: #{_lambda_.5}
  #allocation0 [shape = 'u32[]', space=smem, size = 0x4, offset = 0x4, fixed_abs, tag = 'smem constant byte address 0x4 - core index']
  #allocation1 [shape = 'u32[144,128]{1,0:T(1,128)}', space=vmem, size = 0x12000, scoped, tag = 'internal scratch']
  %s0 = inlined_call_operand.vmem [shape: bf16[72,1152], index: 0, kind: input, shape index: {}]
  %s1 = inlined_call_operand.vmem [shape: bf16[1152,512], index: 1, kind: input, shape index: {}]
  %s2 = inlined_call_operand.vmem [shape: f32[1,512], index: 2, kind: input, shape index: {}]
  %s3 = inlined_call_operand.vmem [shape: f32[72,512], index: 3, kind: output, shape index: {}]
  %s4 = sld [smem:[#allocation0]]
  $region22: #{_lambda_.5} parent=0
    _
  %s6 = ssub.s32 1, %s4
  %s7 = scalar_select 0, %s6, %s4
  // Predicated region
  $region2: #{_lambda_.5} parent=0 // pred_check
    _
  $region3: #{_lambda_.5} parent=0 // pred_check_branch
    %9 = sbr.rel (0) target = $region5
  $region4: #{_lambda_.5} parent=0 // pred_region
    _
  $region5: #{_lambda_.5} parent=0 // pred_fallthru
    _
  // Predicated region
  $region6: #{_lambda_.5} parent=0 // pred_check
    _
  $region7: #{_lambda_.5} parent=0 // pred_check_branch
    %11 = sbr.rel (0) target = $region9
  $region8: #{_lambda_.5} parent=0 // pred_region
    _
  $region9: #{_lambda_.5} parent=0 // pred_fallthru
    _
  // Predicated region
  $region10: #{_lambda_.5} parent=0 // pred_check
    _
  $region11: #{_lambda_.5} parent=0 // pred_check_branch
    %13 = sbr.rel (0) target = $region13
  $region12: #{_lambda_.5} parent=0 // pred_region
    _
  $region13: #{_lambda_.5} parent=0 // pred_fallthru
    _
  %v15 = vld [vmem:[%s0] sm:$0xff]
  %v16 = vld [vmem:[%s0 + $0x8] sm:$0xff]
  %v17 = vld [vmem:[%s0 + $0x10] sm:$0xff]
  %v18 = vld [vmem:[%s0 + $0x18] sm:$0xff]
  %v19 = vld [vmem:[%s0 + $0x20] sm:$0xf]
  %v20 = vld [vmem:[%s0 + $0x24] sm:$0xff]
  %v21 = vld [vmem:[%s0 + $0x2c] sm:$0xff]
  %v22 = vld [vmem:[%s0 + $0x34] sm:$0xff]
  %v23 = vld [vmem:[%s0 + $0x3c] sm:$0xff]
  %v24 = vld [vmem:[%s0 + $0x44] sm:$0xf]
  %v25 = vld [vmem:[%s0 + $0x48] sm:$0xff]
  %v26 = vld [vmem:[%s0 + $0x50] sm:$0xff]
  %v27 = vld [vmem:[%s0 + $0x58] sm:$0xff]
  %v28 = vld [vmem:[%s0 + $0x60] sm:$0xff]
  %v29 = vld [vmem:[%s0 + $0x68] sm:$0xf]
  %v30 = vld [vmem:[%s0 + $0x6c] sm:$0xff]
  %v31 = vld [vmem:[%s0 + $0x74] sm:$0xff]
  %v32 = vld [vmem:[%s0 + $0x7c] sm:$0xff]
  %v33 = vld [vmem:[%s0 + $0x84] sm:$0xff]
  %v34 = vld [vmem:[%s0 + $0x8c] sm:$0xf]
  %v35 = vld [vmem:[%s0 + $0x90] sm:$0xff]
  %v36 = vld [vmem:[%s0 + $0x98] sm:$0xff]
  %v37 = vld [vmem:[%s0 + $0xa0] sm:$0xff]
  %v38 = vld [vmem:[%s0 + $0xa8] sm:$0xff]
  %v39 = vld [vmem:[%s0 + $0xb0] sm:$0xf]
  %v40 = vld [vmem:[%s0 + $0xb4] sm:$0xff]
  %v41 = vld [vmem:[%s0 + $0xbc] sm:$0xff]
  %v42 = vld [vmem:[%s0 + $0xc4] sm:$0xff]
  %v43 = vld [vmem:[%s0 + $0xcc] sm:$0xff]
  %v44 = vld [vmem:[%s0 + $0xd4] sm:$0xf]
  %v45 = vld [vmem:[%s0 + $0xd8] sm:$0xff]
  %v46 = vld [vmem:[%s0 + $0xe0] sm:$0xff]
  %v47 = vld [vmem:[%s0 + $0xe8] sm:$0xff]
  %v48 = vld [vmem:[%s0 + $0xf0] sm:$0xff]
  %v49 = vld [vmem:[%s0 + $0xf8] sm:$0xf]
  %v50 = vld [vmem:[%s0 + $0xfc] sm:$0xff]
  %v51 = vld [vmem:[%s0 + $0x104] sm:$0xff]
  %v52 = vld [vmem:[%s0 + $0x10c] sm:$0xff]
  %v53 = vld [vmem:[%s0 + $0x114] sm:$0xff]
  %v54 = vld [vmem:[%s0 + $0x11c] sm:$0xf]
  %v55 = vld [vmem:[%s0 + $0x120] sm:$0xff]
  %v56 = vld [vmem:[%s0 + $0x128] sm:$0xff]
  %v57 = vld [vmem:[%s0 + $0x130] sm:$0xff]
  %v58 = vld [vmem:[%s0 + $0x138] sm:$0xff]
  %v59 = vld [vmem:[%s0 + $0x140] sm:$0xf]
  %v60 = vld [vmem:[%s1] sm:$0xff]
  %v61 = vld [vmem:[%s1 + $0x8] sm:$0xff]
  %v62 = vld [vmem:[%s1 + $0x10] sm:$0xff]
  %v63 = vld [vmem:[%s1 + $0x18] sm:$0xff]
  %v64 = vld [vmem:[%s1 + $0x20] sm:$0xff]
  %v65 = vld [vmem:[%s1 + $0x28] sm:$0xff]
  %v66 = vld [vmem:[%s1 + $0x30] sm:$0xff]
  %v67 = vld [vmem:[%s1 + $0x38] sm:$0xff]
  %v68 = vld [vmem:[%s1 + $0x40] sm:$0xff]
  %v69 = vld [vmem:[%s1 + $0x48] sm:$0xff]
  %v70 = vld [vmem:[%s1 + $0x50] sm:$0xff]
  %v71 = vld [vmem:[%s1 + $0x58] sm:$0xff]
  %v72 = vld [vmem:[%s1 + $0x60] sm:$0xff]
  %v73 = vld [vmem:[%s1 + $0x68] sm:$0xff]
  %v74 = vld [vmem:[%s1 + $0x70] sm:$0xff]
  %v75 = vld [vmem:[%s1 + $0x78] sm:$0xff]
  %v76 = vld [vmem:[%s1 + $0x80] sm:$0xff]
  %v77 = vld [vmem:[%s1 + $0x88] sm:$0xff]
  %v78 = vld [vmem:[%s1 + $0x90] sm:$0xff]
  %v79 = vld [vmem:[%s1 + $0x98] sm:$0xff]
  %v80 = vld [vmem:[%s1 + $0xa0] sm:$0xff]
  %v81 = vld [vmem:[%s1 + $0xa8] sm:$0xff]
  %v82 = vld [vmem:[%s1 + $0xb0] sm:$0xff]
  %v83 = vld [vmem:[%s1 + $0xb8] sm:$0xff]
  %v84 = vld [vmem:[%s1 + $0xc0] sm:$0xff]
  %v85 = vld [vmem:[%s1 + $0xc8] sm:$0xff]
  %v86 = vld [vmem:[%s1 + $0xd0] sm:$0xff]
  %v87 = vld [vmem:[%s1 + $0xd8] sm:$0xff]
  %v88 = vld [vmem:[%s1 + $0xe0] sm:$0xff]
  %v89 = vld [vmem:[%s1 + $0xe8] sm:$0xff]
  %v90 = vld [vmem:[%s1 + $0xf0] sm:$0xff]
  %v91 = vld [vmem:[%s1 + $0xf8] sm:$0xff]
  %v92 = vld [vmem:[%s1 + $0x100] sm:$0xff]
  %v93 = vld [vmem:[%s1 + $0x108] sm:$0xff]
  %v94 = vld [vmem:[%s1 + $0x110] sm:$0xff]
  %v95 = vld [vmem:[%s1 + $0x118] sm:$0xff]
  %v96 = vld [vmem:[%s1 + $0x120] sm:$0xff]
  %v97 = vld [vmem:[%s1 + $0x128] sm:$0xff]
  %v98 = vld [vmem:[%s1 + $0x130] sm:$0xff]
  %v99 = vld [vmem:[%s1 + $0x138] sm:$0xff]
  %v100 = vld [vmem:[%s1 + $0x140] sm:$0xff]
  %v101 = vld [vmem:[%s1 + $0x148] sm:$0xff]
  %v102 = vld [vmem:[%s1 + $0x150] sm:$0xff]
  %v103 = vld [vmem:[%s1 + $0x158] sm:$0xff]
  %v104 = vld [vmem:[%s1 + $0x160] sm:$0xff]
  %v105 = vld [vmem:[%s1 + $0x168] sm:$0xff]
  %v106 = vld [vmem:[%s1 + $0x170] sm:$0xff]
  %v107 = vld [vmem:[%s1 + $0x178] sm:$0xff]
  %v108 = vld [vmem:[%s1 + $0x180] sm:$0xff]
  %v109 = vld [vmem:[%s1 + $0x188] sm:$0xff]
  %v110 = vld [vmem:[%s1 + $0x190] sm:$0xff]
  %v111 = vld [vmem:[%s1 + $0x198] sm:$0xff]
  %v112 = vld [vmem:[%s1 + $0x1a0] sm:$0xff]
  %v113 = vld [vmem:[%s1 + $0x1a8] sm:$0xff]
  %v114 = vld [vmem:[%s1 + $0x1b0] sm:$0xff]
  %v115 = vld [vmem:[%s1 + $0x1b8] sm:$0xff]
  %v116 = vld [vmem:[%s1 + $0x1c0] sm:$0xff]
  %v117 = vld [vmem:[%s1 + $0x1c8] sm:$0xff]
  %v118 = vld [vmem:[%s1 + $0x1d0] sm:$0xff]
  %v119 = vld [vmem:[%s1 + $0x1d8] sm:$0xff]
  %v120 = vld [vmem:[%s1 + $0x1e0] sm:$0xff]
  %v121 = vld [vmem:[%s1 + $0x1e8] sm:$0xff]
  %v122 = vld [vmem:[%s1 + $0x1f0] sm:$0xff]
  %v123 = vld [vmem:[%s1 + $0x1f8] sm:$0xff]
  %v124 = vld [vmem:[%s1 + $0x200] sm:$0xff]
  %v125 = vld [vmem:[%s1 + $0x208] sm:$0xff]
  %v126 = vld [vmem:[%s1 + $0x210] sm:$0xff]
  %v127 = vld [vmem:[%s1 + $0x218] sm:$0xff]
  %v128 = vld [vmem:[%s1 + $0x220] sm:$0xff]
  %v129 = vld [vmem:[%s1 + $0x228] sm:$0xff]
  %v130 = vld [vmem:[%s1 + $0x230] sm:$0xff]
  %v131 = vld [vmem:[%s1 + $0x238] sm:$0xff]
  %v132 = vld [vmem:[%s1 + $0x240] sm:$0xff]
  %v133 = vld [vmem:[%s1 + $0x248] sm:$0xff]
  %v134 = vld [vmem:[%s1 + $0x250] sm:$0xff]
  %v135 = vld [vmem:[%s1 + $0x258] sm:$0xff]
  %v136 = vld [vmem:[%s1 + $0x260] sm:$0xff]
  %v137 = vld [vmem:[%s1 + $0x268] sm:$0xff]
  %v138 = vld [vmem:[%s1 + $0x270] sm:$0xff]
  %v139 = vld [vmem:[%s1 + $0x278] sm:$0xff]
  %v140 = vld [vmem:[%s1 + $0x280] sm:$0xff]
  %v141 = vld [vmem:[%s1 + $0x288] sm:$0xff]
  %v142 = vld [vmem:[%s1 + $0x290] sm:$0xff]
  %v143 = vld [vmem:[%s1 + $0x298] sm:$0xff]
  %v144 = vld [vmem:[%s1 + $0x2a0] sm:$0xff]
  %v145 = vld [vmem:[%s1 + $0x2a8] sm:$0xff]
  %v146 = vld [vmem:[%s1 + $0x2b0] sm:$0xff]
  %v147 = vld [vmem:[%s1 + $0x2b8] sm:$0xff]
  %v148 = vld [vmem:[%s1 + $0x2c0] sm:$0xff]
  %v149 = vld [vmem:[%s1 + $0x2c8] sm:$0xff]
  %v150 = vld [vmem:[%s1 + $0x2d0] sm:$0xff]
  %v151 = vld [vmem:[%s1 + $0x2d8] sm:$0xff]
  %v152 = vld [vmem:[%s1 + $0x2e0] sm:$0xff]
  %v153 = vld [vmem:[%s1 + $0x2e8] sm:$0xff]
  %v154 = vld [vmem:[%s1 + $0x2f0] sm:$0xff]
  %v155 = vld [vmem:[%s1 + $0x2f8] sm:$0xff]
  %v156 = vld [vmem:[%s1 + $0x300] sm:$0xff]
  %v157 = vld [vmem:[%s1 + $0x308] sm:$0xff]
  %v158 = vld [vmem:[%s1 + $0x310] sm:$0xff]
  %v159 = vld [vmem:[%s1 + $0x318] sm:$0xff]
  %v160 = vld [vmem:[%s1 + $0x320] sm:$0xff]
  %v161 = vld [vmem:[%s1 + $0x328] sm:$0xff]
  %v162 = vld [vmem:[%s1 + $0x330] sm:$0xff]
  %v163 = vld [vmem:[%s1 + $0x338] sm:$0xff]
  %v164 = vld [vmem:[%s1 + $0x340] sm:$0xff]
  %v165 = vld [vmem:[%s1 + $0x348] sm:$0xff]
  %v166 = vld [vmem:[%s1 + $0x350] sm:$0xff]
  %v167 = vld [vmem:[%s1 + $0x358] sm:$0xff]
  %v168 = vld [vmem:[%s1 + $0x360] sm:$0xff]
  %v169 = vld [vmem:[%s1 + $0x368] sm:$0xff]
  %v170 = vld [vmem:[%s1 + $0x370] sm:$0xff]
  %v171 = vld [vmem:[%s1 + $0x378] sm:$0xff]
  %v172 = vld [vmem:[%s1 + $0x380] sm:$0xff]
  %v173 = vld [vmem:[%s1 + $0x388] sm:$0xff]
  %v174 = vld [vmem:[%s1 + $0x390] sm:$0xff]
  %v175 = vld [vmem:[%s1 + $0x398] sm:$0xff]
  %v176 = vld [vmem:[%s1 + $0x3a0] sm:$0xff]
  %v177 = vld [vmem:[%s1 + $0x3a8] sm:$0xff]
  %v178 = vld [vmem:[%s1 + $0x3b0] sm:$0xff]
  %v179 = vld [vmem:[%s1 + $0x3b8] sm:$0xff]
  %v180 = vld [vmem:[%s1 + $0x3c0] sm:$0xff]
  %v181 = vld [vmem:[%s1 + $0x3c8] sm:$0xff]
  %v182 = vld [vmem:[%s1 + $0x3d0] sm:$0xff]
  %v183 = vld [vmem:[%s1 + $0x3d8] sm:$0xff]
  %v184 = vld [vmem:[%s1 + $0x3e0] sm:$0xff]
  %v185 = vld [vmem:[%s1 + $0x3e8] sm:$0xff]
  %v186 = vld [vmem:[%s1 + $0x3f0] sm:$0xff]
  %v187 = vld [vmem:[%s1 + $0x3f8] sm:$0xff]
  %v188 = vld [vmem:[%s1 + $0x400] sm:$0xff]
  %v189 = vld [vmem:[%s1 + $0x408] sm:$0xff]
  %v190 = vld [vmem:[%s1 + $0x410] sm:$0xff]
  %v191 = vld [vmem:[%s1 + $0x418] sm:$0xff]
  %v192 = vld [vmem:[%s1 + $0x420] sm:$0xff]
  %v193 = vld [vmem:[%s1 + $0x428] sm:$0xff]
  %v194 = vld [vmem:[%s1 + $0x430] sm:$0xff]
  %v195 = vld [vmem:[%s1 + $0x438] sm:$0xff]
  %v196 = vld [vmem:[%s1 + $0x440] sm:$0xff]
  %v197 = vld [vmem:[%s1 + $0x448] sm:$0xff]
  %v198 = vld [vmem:[%s1 + $0x450] sm:$0xff]
  %v199 = vld [vmem:[%s1 + $0x458] sm:$0xff]
  %v200 = vld [vmem:[%s1 + $0x460] sm:$0xff]
  %v201 = vld [vmem:[%s1 + $0x468] sm:$0xff]
  %v202 = vld [vmem:[%s1 + $0x470] sm:$0xff]
  %v203 = vld [vmem:[%s1 + $0x478] sm:$0xff]
  %v204 = vld [vmem:[%s1 + $0x480] sm:$0xff]
  %v205 = vld [vmem:[%s1 + $0x488] sm:$0xff]
  %v206 = vld [vmem:[%s1 + $0x490] sm:$0xff]
  %v207 = vld [vmem:[%s1 + $0x498] sm:$0xff]
  %v208 = vld [vmem:[%s1 + $0x4a0] sm:$0xff]
  %v209 = vld [vmem:[%s1 + $0x4a8] sm:$0xff]
  %v210 = vld [vmem:[%s1 + $0x4b0] sm:$0xff]
  %v211 = vld [vmem:[%s1 + $0x4b8] sm:$0xff]
  %v212 = vld [vmem:[%s1 + $0x4c0] sm:$0xff]
  %v213 = vld [vmem:[%s1 + $0x4c8] sm:$0xff]
  %v214 = vld [vmem:[%s1 + $0x4d0] sm:$0xff]
  %v215 = vld [vmem:[%s1 + $0x4d8] sm:$0xff]
  %v216 = vld [vmem:[%s1 + $0x4e0] sm:$0xff]
  %v217 = vld [vmem:[%s1 + $0x4e8] sm:$0xff]
  %v218 = vld [vmem:[%s1 + $0x4f0] sm:$0xff]
  %v219 = vld [vmem:[%s1 + $0x4f8] sm:$0xff]
  %v220 = vld [vmem:[%s1 + $0x500] sm:$0xff]
  %v221 = vld [vmem:[%s1 + $0x508] sm:$0xff]
  %v222 = vld [vmem:[%s1 + $0x510] sm:$0xff]
  %v223 = vld [vmem:[%s1 + $0x518] sm:$0xff]
  %v224 = vld [vmem:[%s1 + $0x520] sm:$0xff]
  %v225 = vld [vmem:[%s1 + $0x528] sm:$0xff]
  %v226 = vld [vmem:[%s1 + $0x530] sm:$0xff]
  %v227 = vld [vmem:[%s1 + $0x538] sm:$0xff]
  %v228 = vld [vmem:[%s1 + $0x540] sm:$0xff]
  %v229 = vld [vmem:[%s1 + $0x548] sm:$0xff]
  %v230 = vld [vmem:[%s1 + $0x550] sm:$0xff]
  %v231 = vld [vmem:[%s1 + $0x558] sm:$0xff]
  %v232 = vld [vmem:[%s1 + $0x560] sm:$0xff]
  %v233 = vld [vmem:[%s1 + $0x568] sm:$0xff]
  %v234 = vld [vmem:[%s1 + $0x570] sm:$0xff]
  %v235 = vld [vmem:[%s1 + $0x578] sm:$0xff]
  %v236 = vld [vmem:[%s1 + $0x580] sm:$0xff]
  %v237 = vld [vmem:[%s1 + $0x588] sm:$0xff]
  %v238 = vld [vmem:[%s1 + $0x590] sm:$0xff]
  %v239 = vld [vmem:[%s1 + $0x598] sm:$0xff]
  %v240 = vld [vmem:[%s1 + $0x5a0] sm:$0xff]
  %v241 = vld [vmem:[%s1 + $0x5a8] sm:$0xff]
  %v242 = vld [vmem:[%s1 + $0x5b0] sm:$0xff]
  %v243 = vld [vmem:[%s1 + $0x5b8] sm:$0xff]
  %v244 = vld [vmem:[%s1 + $0x5c0] sm:$0xff]
  %v245 = vld [vmem:[%s1 + $0x5c8] sm:$0xff]
  %v246 = vld [vmem:[%s1 + $0x5d0] sm:$0xff]
  %v247 = vld [vmem:[%s1 + $0x5d8] sm:$0xff]
  %v248 = vld [vmem:[%s1 + $0x5e0] sm:$0xff]
  %v249 = vld [vmem:[%s1 + $0x5e8] sm:$0xff]
  %v250 = vld [vmem:[%s1 + $0x5f0] sm:$0xff]
  %v251 = vld [vmem:[%s1 + $0x5f8] sm:$0xff]
  %v252 = vld [vmem:[%s1 + $0x600] sm:$0xff]
  %v253 = vld [vmem:[%s1 + $0x608] sm:$0xff]
  %v254 = vld [vmem:[%s1 + $0x610] sm:$0xff]
  %v255 = vld [vmem:[%s1 + $0x618] sm:$0xff]
  %v256 = vld [vmem:[%s1 + $0x620] sm:$0xff]
  %v257 = vld [vmem:[%s1 + $0x628] sm:$0xff]
  %v258 = vld [vmem:[%s1 + $0x630] sm:$0xff]
  %v259 = vld [vmem:[%s1 + $0x638] sm:$0xff]
  %v260 = vld [vmem:[%s1 + $0x640] sm:$0xff]
  %v261 = vld [vmem:[%s1 + $0x648] sm:$0xff]
  %v262 = vld [vmem:[%s1 + $0x650] sm:$0xff]
  %v263 = vld [vmem:[%s1 + $0x658] sm:$0xff]
  %v264 = vld [vmem:[%s1 + $0x660] sm:$0xff]
  %v265 = vld [vmem:[%s1 + $0x668] sm:$0xff]
  %v266 = vld [vmem:[%s1 + $0x670] sm:$0xff]
  %v267 = vld [vmem:[%s1 + $0x678] sm:$0xff]
  %v268 = vld [vmem:[%s1 + $0x680] sm:$0xff]
  %v269 = vld [vmem:[%s1 + $0x688] sm:$0xff]
  %v270 = vld [vmem:[%s1 + $0x690] sm:$0xff]
  %v271 = vld [vmem:[%s1 + $0x698] sm:$0xff]
  %v272 = vld [vmem:[%s1 + $0x6a0] sm:$0xff]
  %v273 = vld [vmem:[%s1 + $0x6a8] sm:$0xff]
  %v274 = vld [vmem:[%s1 + $0x6b0] sm:$0xff]
  %v275 = vld [vmem:[%s1 + $0x6b8] sm:$0xff]
  %v276 = vld [vmem:[%s1 + $0x6c0] sm:$0xff]
  %v277 = vld [vmem:[%s1 + $0x6c8] sm:$0xff]
  %v278 = vld [vmem:[%s1 + $0x6d0] sm:$0xff]
  %v279 = vld [vmem:[%s1 + $0x6d8] sm:$0xff]
  %v280 = vld [vmem:[%s1 + $0x6e0] sm:$0xff]
  %v281 = vld [vmem:[%s1 + $0x6e8] sm:$0xff]
  %v282 = vld [vmem:[%s1 + $0x6f0] sm:$0xff]
  %v283 = vld [vmem:[%s1 + $0x6f8] sm:$0xff]
  %v284 = vld [vmem:[%s1 + $0x700] sm:$0xff]
  %v285 = vld [vmem:[%s1 + $0x708] sm:$0xff]
  %v286 = vld [vmem:[%s1 + $0x710] sm:$0xff]
  %v287 = vld [vmem:[%s1 + $0x718] sm:$0xff]
  %v288 = vld [vmem:[%s1 + $0x720] sm:$0xff]
  %v289 = vld [vmem:[%s1 + $0x728] sm:$0xff]
  %v290 = vld [vmem:[%s1 + $0x730] sm:$0xff]
  %v291 = vld [vmem:[%s1 + $0x738] sm:$0xff]
  %v292 = vld [vmem:[%s1 + $0x740] sm:$0xff]
  %v293 = vld [vmem:[%s1 + $0x748] sm:$0xff]
  %v294 = vld [vmem:[%s1 + $0x750] sm:$0xff]
  %v295 = vld [vmem:[%s1 + $0x758] sm:$0xff]
  %v296 = vld [vmem:[%s1 + $0x760] sm:$0xff]
  %v297 = vld [vmem:[%s1 + $0x768] sm:$0xff]
  %v298 = vld [vmem:[%s1 + $0x770] sm:$0xff]
  %v299 = vld [vmem:[%s1 + $0x778] sm:$0xff]
  %v300 = vld [vmem:[%s1 + $0x780] sm:$0xff]
  %v301 = vld [vmem:[%s1 + $0x788] sm:$0xff]
  %v302 = vld [vmem:[%s1 + $0x790] sm:$0xff]
  %v303 = vld [vmem:[%s1 + $0x798] sm:$0xff]
  %v304 = vld [vmem:[%s1 + $0x7a0] sm:$0xff]
  %v305 = vld [vmem:[%s1 + $0x7a8] sm:$0xff]
  %v306 = vld [vmem:[%s1 + $0x7b0] sm:$0xff]
  %v307 = vld [vmem:[%s1 + $0x7b8] sm:$0xff]
  %v308 = vld [vmem:[%s1 + $0x7c0] sm:$0xff]
  %v309 = vld [vmem:[%s1 + $0x7c8] sm:$0xff]
  %v310 = vld [vmem:[%s1 + $0x7d0] sm:$0xff]
  %v311 = vld [vmem:[%s1 + $0x7d8] sm:$0xff]
  %v312 = vld [vmem:[%s1 + $0x7e0] sm:$0xff]
  %v313 = vld [vmem:[%s1 + $0x7e8] sm:$0xff]
  %v314 = vld [vmem:[%s1 + $0x7f0] sm:$0xff]
  %v315 = vld [vmem:[%s1 + $0x7f8] sm:$0xff]
  %v316 = vld [vmem:[%s1 + $0x800] sm:$0xff]
  %v317 = vld [vmem:[%s1 + $0x808] sm:$0xff]
  %v318 = vld [vmem:[%s1 + $0x810] sm:$0xff]
  %v319 = vld [vmem:[%s1 + $0x818] sm:$0xff]
  %v320 = vld [vmem:[%s1 + $0x820] sm:$0xff]
  %v321 = vld [vmem:[%s1 + $0x828] sm:$0xff]
  %v322 = vld [vmem:[%s1 + $0x830] sm:$0xff]
  %v323 = vld [vmem:[%s1 + $0x838] sm:$0xff]
  %v324 = vld [vmem:[%s1 + $0x840] sm:$0xff]
  %v325 = vld [vmem:[%s1 + $0x848] sm:$0xff]
  %v326 = vld [vmem:[%s1 + $0x850] sm:$0xff]
  %v327 = vld [vmem:[%s1 + $0x858] sm:$0xff]
  %v328 = vld [vmem:[%s1 + $0x860] sm:$0xff]
  %v329 = vld [vmem:[%s1 + $0x868] sm:$0xff]
  %v330 = vld [vmem:[%s1 + $0x870] sm:$0xff]
  %v331 = vld [vmem:[%s1 + $0x878] sm:$0xff]
  %v332 = vld [vmem:[%s1 + $0x880] sm:$0xff]
  %v333 = vld [vmem:[%s1 + $0x888] sm:$0xff]
  %v334 = vld [vmem:[%s1 + $0x890] sm:$0xff]
  %v335 = vld [vmem:[%s1 + $0x898] sm:$0xff]
  %v336 = vld [vmem:[%s1 + $0x8a0] sm:$0xff]
  %v337 = vld [vmem:[%s1 + $0x8a8] sm:$0xff]
  %v338 = vld [vmem:[%s1 + $0x8b0] sm:$0xff]
  %v339 = vld [vmem:[%s1 + $0x8b8] sm:$0xff]
  %v340 = vld [vmem:[%s1 + $0x8c0] sm:$0xff]
  %v341 = vld [vmem:[%s1 + $0x8c8] sm:$0xff]
  %v342 = vld [vmem:[%s1 + $0x8d0] sm:$0xff]
  %v343 = vld [vmem:[%s1 + $0x8d8] sm:$0xff]
  %v344 = vld [vmem:[%s1 + $0x8e0] sm:$0xff]
  %v345 = vld [vmem:[%s1 + $0x8e8] sm:$0xff]
  %v346 = vld [vmem:[%s1 + $0x8f0] sm:$0xff]
  %v347 = vld [vmem:[%s1 + $0x8f8] sm:$0xff]
  %v348 = vld [vmem:[%s2] sm:$0xf]
  %v350 = vlaneseq
  %v351 = vshrl.u32 %v350, 7
  %v352 = vsub.s32 0, %v351
  %v353 = vrot.slane %v348, %v352
  %v354 = vlaneseq
  %v355 = vshrl.u32 %v354, 7
  %v356 = vsub.s32 1, %v355
  %v357 = vrot.slane %v348, %v356
  %v358 = vlaneseq
  %v359 = vshrl.u32 %v358, 7
  %v360 = vsub.s32 2, %v359
  %v361 = vrot.slane %v348, %v360
  %v362 = vlaneseq
  %v363 = vshrl.u32 %v362, 7
  %v364 = vsub.s32 3, %v363
  %v365 = vrot.slane %v348, %v364
  %v415 = vunpack.c.l.b16 %v15
  %v416 = vunpack.c.h.b16 %v15
  %v417 = vunpack.c.l.b16 %v16
  %v418 = vunpack.c.h.b16 %v16
  %v419 = vunpack.c.l.b16 %v17
  %v420 = vunpack.c.h.b16 %v17
  %v421 = vunpack.c.l.b16 %v18
  %v422 = vunpack.c.h.b16 %v18
  %v423 = vunpack.c.l.b16 %v19
  %v424 = vunpack.c.l.b16 %v20
  %v425 = vunpack.c.h.b16 %v20
  %v426 = vunpack.c.l.b16 %v21
  %v427 = vunpack.c.h.b16 %v21
  %v428 = vunpack.c.l.b16 %v22
  %v429 = vunpack.c.h.b16 %v22
  %v430 = vunpack.c.l.b16 %v23
  %v431 = vunpack.c.h.b16 %v23
  %v432 = vunpack.c.l.b16 %v24
  %v433 = vunpack.c.l.b16 %v25
  %v434 = vunpack.c.h.b16 %v25
  %v435 = vunpack.c.l.b16 %v26
  %v436 = vunpack.c.h.b16 %v26
  %v437 = vunpack.c.l.b16 %v27
  %v438 = vunpack.c.h.b16 %v27
  %v439 = vunpack.c.l.b16 %v28
  %v440 = vunpack.c.h.b16 %v28
  %v441 = vunpack.c.l.b16 %v29
  %v442 = vunpack.c.l.b16 %v30
  %v443 = vunpack.c.h.b16 %v30
  %v444 = vunpack.c.l.b16 %v31
  %v445 = vunpack.c.h.b16 %v31
  %v446 = vunpack.c.l.b16 %v32
  %v447 = vunpack.c.h.b16 %v32
  %v448 = vunpack.c.l.b16 %v33
  %v449 = vunpack.c.h.b16 %v33
  %v450 = vunpack.c.l.b16 %v34
  %v451 = vunpack.c.l.b16 %v35
  %v452 = vunpack.c.h.b16 %v35
  %v453 = vunpack.c.l.b16 %v36
  %v454 = vunpack.c.h.b16 %v36
  %v455 = vunpack.c.l.b16 %v37
  %v456 = vunpack.c.h.b16 %v37
  %v457 = vunpack.c.l.b16 %v38
  %v458 = vunpack.c.h.b16 %v38
  %v459 = vunpack.c.l.b16 %v39
  %v460 = vunpack.c.l.b16 %v40
  %v461 = vunpack.c.h.b16 %v40
  %v462 = vunpack.c.l.b16 %v41
  %v463 = vunpack.c.h.b16 %v41
  %v464 = vunpack.c.l.b16 %v42
  %v465 = vunpack.c.h.b16 %v42
  %v466 = vunpack.c.l.b16 %v43
  %v467 = vunpack.c.h.b16 %v43
  %v468 = vunpack.c.l.b16 %v44
  %v469 = vunpack.c.l.b16 %v45
  %v470 = vunpack.c.h.b16 %v45
  %v471 = vunpack.c.l.b16 %v46
  %v472 = vunpack.c.h.b16 %v46
  %v473 = vunpack.c.l.b16 %v47
  %v474 = vunpack.c.h.b16 %v47
  %v475 = vunpack.c.l.b16 %v48
  %v476 = vunpack.c.h.b16 %v48
  %v477 = vunpack.c.l.b16 %v49
  %v478 = vunpack.c.l.b16 %v50
  %v479 = vunpack.c.h.b16 %v50
  %v480 = vunpack.c.l.b16 %v51
  %v481 = vunpack.c.h.b16 %v51
  %v482 = vunpack.c.l.b16 %v52
  %v483 = vunpack.c.h.b16 %v52
  %v484 = vunpack.c.l.b16 %v53
  %v485 = vunpack.c.h.b16 %v53
  %v486 = vunpack.c.l.b16 %v54
  %v487 = vunpack.c.l.b16 %v55
  %v488 = vunpack.c.h.b16 %v55
  %v489 = vunpack.c.l.b16 %v56
  %v490 = vunpack.c.h.b16 %v56
  %v491 = vunpack.c.l.b16 %v57
  %v492 = vunpack.c.h.b16 %v57
  %v493 = vunpack.c.l.b16 %v58
  %v494 = vunpack.c.h.b16 %v58
  %v495 = vunpack.c.l.b16 %v59
  %v496 = vpack.c.b16 %v424, %v415
  %v497 = vpack.c.b16 %v425, %v416
  %v498 = vpack.c.b16 %v426, %v417
  %v499 = vpack.c.b16 %v427, %v418
  %v500 = vpack.c.b16 %v428, %v419
  %v501 = vpack.c.b16 %v429, %v420
  %v502 = vpack.c.b16 %v430, %v421
  %v503 = vpack.c.b16 %v431, %v422
  %v504 = vpack.c.b16 %v432, %v423
  %v505 = vpack.c.b16 %v442, %v433
  %v506 = vpack.c.b16 %v443, %v434
  %v507 = vpack.c.b16 %v444, %v435
  %v508 = vpack.c.b16 %v445, %v436
  %v509 = vpack.c.b16 %v446, %v437
  %v510 = vpack.c.b16 %v447, %v438
  %v511 = vpack.c.b16 %v448, %v439
  %v512 = vpack.c.b16 %v449, %v440
  %v513 = vpack.c.b16 %v450, %v441
  %v514 = vpack.c.b16 %v460, %v451
  %v515 = vpack.c.b16 %v461, %v452
  %v516 = vpack.c.b16 %v462, %v453
  %v517 = vpack.c.b16 %v463, %v454
  %v518 = vpack.c.b16 %v464, %v455
  %v519 = vpack.c.b16 %v465, %v456
  %v520 = vpack.c.b16 %v466, %v457
  %v521 = vpack.c.b16 %v467, %v458
  %v522 = vpack.c.b16 %v468, %v459
  %v523 = vpack.c.b16 %v478, %v469
  %v524 = vpack.c.b16 %v479, %v470
  %v525 = vpack.c.b16 %v480, %v471
  %v526 = vpack.c.b16 %v481, %v472
  %v527 = vpack.c.b16 %v482, %v473
  %v528 = vpack.c.b16 %v483, %v474
  %v529 = vpack.c.b16 %v484, %v475
  %v530 = vpack.c.b16 %v485, %v476
  %v531 = vpack.c.b16 %v486, %v477
  %v532 = vpack.c.b16 %v487, %v487
  %v533 = vpack.c.b16 %v488, %v488
  %v534 = vpack.c.b16 %v489, %v489
  %v535 = vpack.c.b16 %v490, %v490
  %v536 = vpack.c.b16 %v491, %v491
  %v537 = vpack.c.b16 %v492, %v492
  %v538 = vpack.c.b16 %v493, %v493
  %v539 = vpack.c.b16 %v494, %v494
  %v540 = vpack.c.b16 %v495, %v495
  %v874 = vunpack.c.l.b16 %v60
  %v875 = vunpack.c.h.b16 %v60
  %v876 = vunpack.c.l.b16 %v61
  %v877 = vunpack.c.h.b16 %v61
  %v878 = vunpack.c.l.b16 %v62
  %v879 = vunpack.c.h.b16 %v62
  %v880 = vunpack.c.l.b16 %v63
  %v881 = vunpack.c.h.b16 %v63
  %v882 = vunpack.c.l.b16 %v64
  %v883 = vunpack.c.h.b16 %v64
  %v884 = vunpack.c.l.b16 %v65
  %v885 = vunpack.c.h.b16 %v65
  %v886 = vunpack.c.l.b16 %v66
  %v887 = vunpack.c.h.b16 %v66
  %v888 = vunpack.c.l.b16 %v67
  %v889 = vunpack.c.h.b16 %v67
  %v890 = vunpack.c.l.b16 %v68
  %v891 = vunpack.c.h.b16 %v68
  %v892 = vunpack.c.l.b16 %v69
  %v893 = vunpack.c.h.b16 %v69
  %v894 = vunpack.c.l.b16 %v70
  %v895 = vunpack.c.h.b16 %v70
  %v896 = vunpack.c.l.b16 %v71
  %v897 = vunpack.c.h.b16 %v71
  %v898 = vunpack.c.l.b16 %v72
  %v899 = vunpack.c.h.b16 %v72
  %v900 = vunpack.c.l.b16 %v73
  %v901 = vunpack.c.h.b16 %v73
  %v902 = vunpack.c.l.b16 %v74
  %v903 = vunpack.c.h.b16 %v74
  %v904 = vunpack.c.l.b16 %v75
  %v905 = vunpack.c.h.b16 %v75
  %v906 = vunpack.c.l.b16 %v76
  %v907 = vunpack.c.h.b16 %v76
  %v908 = vunpack.c.l.b16 %v77
  %v909 = vunpack.c.h.b16 %v77
  %v910 = vunpack.c.l.b16 %v78
  %v911 = vunpack.c.h.b16 %v78
  %v912 = vunpack.c.l.b16 %v79
  %v913 = vunpack.c.h.b16 %v79
  %v914 = vunpack.c.l.b16 %v80
  %v915 = vunpack.c.h.b16 %v80
  %v916 = vunpack.c.l.b16 %v81
  %v917 = vunpack.c.h.b16 %v81
  %v918 = vunpack.c.l.b16 %v82
  %v919 = vunpack.c.h.b16 %v82
  %v920 = vunpack.c.l.b16 %v83
  %v921 = vunpack.c.h.b16 %v83
  %v922 = vunpack.c.l.b16 %v84
  %v923 = vunpack.c.h.b16 %v84
  %v924 = vunpack.c.l.b16 %v85
  %v925 = vunpack.c.h.b16 %v85
  %v926 = vunpack.c.l.b16 %v86
  %v927 = vunpack.c.h.b16 %v86
  %v928 = vunpack.c.l.b16 %v87
  %v929 = vunpack.c.h.b16 %v87
  %v930 = vunpack.c.l.b16 %v88
  %v931 = vunpack.c.h.b16 %v88
  %v932 = vunpack.c.l.b16 %v89
  %v933 = vunpack.c.h.b16 %v89
  %v934 = vunpack.c.l.b16 %v90
  %v935 = vunpack.c.h.b16 %v90
  %v936 = vunpack.c.l.b16 %v91
  %v937 = vunpack.c.h.b16 %v91
  %v938 = vunpack.c.l.b16 %v92
  %v939 = vunpack.c.h.b16 %v92
  %v940 = vunpack.c.l.b16 %v93
  %v941 = vunpack.c.h.b16 %v93
  %v942 = vunpack.c.l.b16 %v94
  %v943 = vunpack.c.h.b16 %v94
  %v944 = vunpack.c.l.b16 %v95
  %v945 = vunpack.c.h.b16 %v95
  %v946 = vunpack.c.l.b16 %v96
  %v947 = vunpack.c.h.b16 %v96
  %v948 = vunpack.c.l.b16 %v97
  %v949 = vunpack.c.h.b16 %v97
  %v950 = vunpack.c.l.b16 %v98
  %v951 = vunpack.c.h.b16 %v98
  %v952 = vunpack.c.l.b16 %v99
  %v953 = vunpack.c.h.b16 %v99
  %v954 = vunpack.c.l.b16 %v100
  %v955 = vunpack.c.h.b16 %v100
  %v956 = vunpack.c.l.b16 %v101
  %v957 = vunpack.c.h.b16 %v101
  %v958 = vunpack.c.l.b16 %v102
  %v959 = vunpack.c.h.b16 %v102
  %v960 = vunpack.c.l.b16 %v103
  %v961 = vunpack.c.h.b16 %v103
  %v962 = vunpack.c.l.b16 %v104
  %v963 = vunpack.c.h.b16 %v104
  %v964 = vunpack.c.l.b16 %v105
  %v965 = vunpack.c.h.b16 %v105
  %v966 = vunpack.c.l.b16 %v106
  %v967 = vunpack.c.h.b16 %v106
  %v968 = vunpack.c.l.b16 %v107
  %v969 = vunpack.c.h.b16 %v107
  %v970 = vunpack.c.l.b16 %v108
  %v971 = vunpack.c.h.b16 %v108
  %v972 = vunpack.c.l.b16 %v109
  %v973 = vunpack.c.h.b16 %v109
  %v974 = vunpack.c.l.b16 %v110
  %v975 = vunpack.c.h.b16 %v110
  %v976 = vunpack.c.l.b16 %v111
  %v977 = vunpack.c.h.b16 %v111
  %v978 = vunpack.c.l.b16 %v112
  %v979 = vunpack.c.h.b16 %v112
  %v980 = vunpack.c.l.b16 %v113
  %v981 = vunpack.c.h.b16 %v113
  %v982 = vunpack.c.l.b16 %v114
  %v983 = vunpack.c.h.b16 %v114
  %v984 = vunpack.c.l.b16 %v115
  %v985 = vunpack.c.h.b16 %v115
  %v986 = vunpack.c.l.b16 %v116
  %v987 = vunpack.c.h.b16 %v116
  %v988 = vunpack.c.l.b16 %v117
  %v989 = vunpack.c.h.b16 %v117
  %v990 = vunpack.c.l.b16 %v118
  %v991 = vunpack.c.h.b16 %v118
  %v992 = vunpack.c.l.b16 %v119
  %v993 = vunpack.c.h.b16 %v119
  %v994 = vunpack.c.l.b16 %v120
  %v995 = vunpack.c.h.b16 %v120
  %v996 = vunpack.c.l.b16 %v121
  %v997 = vunpack.c.h.b16 %v121
  %v998 = vunpack.c.l.b16 %v122
  %v999 = vunpack.c.h.b16 %v122
  %v1000 = vunpack.c.l.b16 %v123
  %v1001 = vunpack.c.h.b16 %v123
  %v1002 = vunpack.c.l.b16 %v124
  %v1003 = vunpack.c.h.b16 %v124
  %v1004 = vunpack.c.l.b16 %v125
  %v1005 = vunpack.c.h.b16 %v125
  %v1006 = vunpack.c.l.b16 %v126
  %v1007 = vunpack.c.h.b16 %v126
  %v1008 = vunpack.c.l.b16 %v127
  %v1009 = vunpack.c.h.b16 %v127
  %v1010 = vunpack.c.l.b16 %v128
  %v1011 = vunpack.c.h.b16 %v128
  %v1012 = vunpack.c.l.b16 %v129
  %v1013 = vunpack.c.h.b16 %v129
  %v1014 = vunpack.c.l.b16 %v130
  %v1015 = vunpack.c.h.b16 %v130
  %v1016 = vunpack.c.l.b16 %v131
  %v1017 = vunpack.c.h.b16 %v131
  %v1018 = vunpack.c.l.b16 %v132
  %v1019 = vunpack.c.h.b16 %v132
  %v1020 = vunpack.c.l.b16 %v133
  %v1021 = vunpack.c.h.b16 %v133
  %v1022 = vunpack.c.l.b16 %v134
  %v1023 = vunpack.c.h.b16 %v134
  %v1024 = vunpack.c.l.b16 %v135
  %v1025 = vunpack.c.h.b16 %v135
  %v1026 = vunpack.c.l.b16 %v136
  %v1027 = vunpack.c.h.b16 %v136
  %v1028 = vunpack.c.l.b16 %v137
  %v1029 = vunpack.c.h.b16 %v137
  %v1030 = vunpack.c.l.b16 %v138
  %v1031 = vunpack.c.h.b16 %v138
  %v1032 = vunpack.c.l.b16 %v139
  %v1033 = vunpack.c.h.b16 %v139
  %v1034 = vunpack.c.l.b16 %v140
  %v1035 = vunpack.c.h.b16 %v140
  %v1036 = vunpack.c.l.b16 %v141
  %v1037 = vunpack.c.h.b16 %v141
  %v1038 = vunpack.c.l.b16 %v142
  %v1039 = vunpack.c.h.b16 %v142
  %v1040 = vunpack.c.l.b16 %v143
  %v1041 = vunpack.c.h.b16 %v143
  %v1042 = vunpack.c.l.b16 %v144
  %v1043 = vunpack.c.h.b16 %v144
  %v1044 = vunpack.c.l.b16 %v145
  %v1045 = vunpack.c.h.b16 %v145
  %v1046 = vunpack.c.l.b16 %v146
  %v1047 = vunpack.c.h.b16 %v146
  %v1048 = vunpack.c.l.b16 %v147
  %v1049 = vunpack.c.h.b16 %v147
  %v1050 = vunpack.c.l.b16 %v148
  %v1051 = vunpack.c.h.b16 %v148
  %v1052 = vunpack.c.l.b16 %v149
  %v1053 = vunpack.c.h.b16 %v149
  %v1054 = vunpack.c.l.b16 %v150
  %v1055 = vunpack.c.h.b16 %v150
  %v1056 = vunpack.c.l.b16 %v151
  %v1057 = vunpack.c.h.b16 %v151
  %v1058 = vunpack.c.l.b16 %v152
  %v1059 = vunpack.c.h.b16 %v152
  %v1060 = vunpack.c.l.b16 %v153
  %v1061 = vunpack.c.h.b16 %v153
  %v1062 = vunpack.c.l.b16 %v154
  %v1063 = vunpack.c.h.b16 %v154
  %v1064 = vunpack.c.l.b16 %v155
  %v1065 = vunpack.c.h.b16 %v155
  %v1066 = vunpack.c.l.b16 %v156
  %v1067 = vunpack.c.h.b16 %v156
  %v1068 = vunpack.c.l.b16 %v157
  %v1069 = vunpack.c.h.b16 %v157
  %v1070 = vunpack.c.l.b16 %v158
  %v1071 = vunpack.c.h.b16 %v158
  %v1072 = vunpack.c.l.b16 %v159
  %v1073 = vunpack.c.h.b16 %v159
  %v1074 = vunpack.c.l.b16 %v160
  %v1075 = vunpack.c.h.b16 %v160
  %v1076 = vunpack.c.l.b16 %v161
  %v1077 = vunpack.c.h.b16 %v161
  %v1078 = vunpack.c.l.b16 %v162
  %v1079 = vunpack.c.h.b16 %v162
  %v1080 = vunpack.c.l.b16 %v163
  %v1081 = vunpack.c.h.b16 %v163
  %v1082 = vunpack.c.l.b16 %v164
  %v1083 = vunpack.c.h.b16 %v164
  %v1084 = vunpack.c.l.b16 %v165
  %v1085 = vunpack.c.h.b16 %v165
  %v1086 = vunpack.c.l.b16 %v166
  %v1087 = vunpack.c.h.b16 %v166
  %v1088 = vunpack.c.l.b16 %v167
  %v1089 = vunpack.c.h.b16 %v167
  %v1090 = vunpack.c.l.b16 %v168
  %v1091 = vunpack.c.h.b16 %v168
  %v1092 = vunpack.c.l.b16 %v169
  %v1093 = vunpack.c.h.b16 %v169
  %v1094 = vunpack.c.l.b16 %v170
  %v1095 = vunpack.c.h.b16 %v170
  %v1096 = vunpack.c.l.b16 %v171
  %v1097 = vunpack.c.h.b16 %v171
  %v1098 = vunpack.c.l.b16 %v172
  %v1099 = vunpack.c.h.b16 %v172
  %v1100 = vunpack.c.l.b16 %v173
  %v1101 = vunpack.c.h.b16 %v173
  %v1102 = vunpack.c.l.b16 %v174
  %v1103 = vunpack.c.h.b16 %v174
  %v1104 = vunpack.c.l.b16 %v175
  %v1105 = vunpack.c.h.b16 %v175
  %v1106 = vunpack.c.l.b16 %v176
  %v1107 = vunpack.c.h.b16 %v176
  %v1108 = vunpack.c.l.b16 %v177
  %v1109 = vunpack.c.h.b16 %v177
  %v1110 = vunpack.c.l.b16 %v178
  %v1111 = vunpack.c.h.b16 %v178
  %v1112 = vunpack.c.l.b16 %v179
  %v1113 = vunpack.c.h.b16 %v179
  %v1114 = vunpack.c.l.b16 %v180
  %v1115 = vunpack.c.h.b16 %v180
  %v1116 = vunpack.c.l.b16 %v181
  %v1117 = vunpack.c.h.b16 %v181
  %v1118 = vunpack.c.l.b16 %v182
  %v1119 = vunpack.c.h.b16 %v182
  %v1120 = vunpack.c.l.b16 %v183
  %v1121 = vunpack.c.h.b16 %v183
  %v1122 = vunpack.c.l.b16 %v184
  %v1123 = vunpack.c.h.b16 %v184
  %v1124 = vunpack.c.l.b16 %v185
  %v1125 = vunpack.c.h.b16 %v185
  %v1126 = vunpack.c.l.b16 %v186
  %v1127 = vunpack.c.h.b16 %v186
  %v1128 = vunpack.c.l.b16 %v187
  %v1129 = vunpack.c.h.b16 %v187
  %v1130 = vunpack.c.l.b16 %v188
  %v1131 = vunpack.c.h.b16 %v188
  %v1132 = vunpack.c.l.b16 %v189
  %v1133 = vunpack.c.h.b16 %v189
  %v1134 = vunpack.c.l.b16 %v190
  %v1135 = vunpack.c.h.b16 %v190
  %v1136 = vunpack.c.l.b16 %v191
  %v1137 = vunpack.c.h.b16 %v191
  %v1138 = vunpack.c.l.b16 %v192
  %v1139 = vunpack.c.h.b16 %v192
  %v1140 = vunpack.c.l.b16 %v193
  %v1141 = vunpack.c.h.b16 %v193
  %v1142 = vunpack.c.l.b16 %v194
  %v1143 = vunpack.c.h.b16 %v194
  %v1144 = vunpack.c.l.b16 %v195
  %v1145 = vunpack.c.h.b16 %v195
  %v1146 = vunpack.c.l.b16 %v196
  %v1147 = vunpack.c.h.b16 %v196
  %v1148 = vunpack.c.l.b16 %v197
  %v1149 = vunpack.c.h.b16 %v197
  %v1150 = vunpack.c.l.b16 %v198
  %v1151 = vunpack.c.h.b16 %v198
  %v1152 = vunpack.c.l.b16 %v199
  %v1153 = vunpack.c.h.b16 %v199
  %v1154 = vunpack.c.l.b16 %v200
  %v1155 = vunpack.c.h.b16 %v200
  %v1156 = vunpack.c.l.b16 %v201
  %v1157 = vunpack.c.h.b16 %v201
  %v1158 = vunpack.c.l.b16 %v202
  %v1159 = vunpack.c.h.b16 %v202
  %v1160 = vunpack.c.l.b16 %v203
  %v1161 = vunpack.c.h.b16 %v203
  %v1162 = vunpack.c.l.b16 %v204
  %v1163 = vunpack.c.h.b16 %v204
  %v1164 = vunpack.c.l.b16 %v205
  %v1165 = vunpack.c.h.b16 %v205
  %v1166 = vunpack.c.l.b16 %v206
  %v1167 = vunpack.c.h.b16 %v206
  %v1168 = vunpack.c.l.b16 %v207
  %v1169 = vunpack.c.h.b16 %v207
  %v1170 = vunpack.c.l.b16 %v208
  %v1171 = vunpack.c.h.b16 %v208
  %v1172 = vunpack.c.l.b16 %v209
  %v1173 = vunpack.c.h.b16 %v209
  %v1174 = vunpack.c.l.b16 %v210
  %v1175 = vunpack.c.h.b16 %v210
  %v1176 = vunpack.c.l.b16 %v211
  %v1177 = vunpack.c.h.b16 %v211
  %v1178 = vunpack.c.l.b16 %v212
  %v1179 = vunpack.c.h.b16 %v212
  %v1180 = vunpack.c.l.b16 %v213
  %v1181 = vunpack.c.h.b16 %v213
  %v1182 = vunpack.c.l.b16 %v214
  %v1183 = vunpack.c.h.b16 %v214
  %v1184 = vunpack.c.l.b16 %v215
  %v1185 = vunpack.c.h.b16 %v215
  %v1186 = vunpack.c.l.b16 %v216
  %v1187 = vunpack.c.h.b16 %v216
  %v1188 = vunpack.c.l.b16 %v217
  %v1189 = vunpack.c.h.b16 %v217
  %v1190 = vunpack.c.l.b16 %v218
  %v1191 = vunpack.c.h.b16 %v218
  %v1192 = vunpack.c.l.b16 %v219
  %v1193 = vunpack.c.h.b16 %v219
  %v1194 = vunpack.c.l.b16 %v220
  %v1195 = vunpack.c.h.b16 %v220
  %v1196 = vunpack.c.l.b16 %v221
  %v1197 = vunpack.c.h.b16 %v221
  %v1198 = vunpack.c.l.b16 %v222
  %v1199 = vunpack.c.h.b16 %v222
  %v1200 = vunpack.c.l.b16 %v223
  %v1201 = vunpack.c.h.b16 %v223
  %v1202 = vunpack.c.l.b16 %v224
  %v1203 = vunpack.c.h.b16 %v224
  %v1204 = vunpack.c.l.b16 %v225
  %v1205 = vunpack.c.h.b16 %v225
  %v1206 = vunpack.c.l.b16 %v226
  %v1207 = vunpack.c.h.b16 %v226
  %v1208 = vunpack.c.l.b16 %v227
  %v1209 = vunpack.c.h.b16 %v227
  %v1210 = vunpack.c.l.b16 %v228
  %v1211 = vunpack.c.h.b16 %v228
  %v1212 = vunpack.c.l.b16 %v229
  %v1213 = vunpack.c.h.b16 %v229
  %v1214 = vunpack.c.l.b16 %v230
  %v1215 = vunpack.c.h.b16 %v230
  %v1216 = vunpack.c.l.b16 %v231
  %v1217 = vunpack.c.h.b16 %v231
  %v1218 = vunpack.c.l.b16 %v232
  %v1219 = vunpack.c.h.b16 %v232
  %v1220 = vunpack.c.l.b16 %v233
  %v1221 = vunpack.c.h.b16 %v233
  %v1222 = vunpack.c.l.b16 %v234
  %v1223 = vunpack.c.h.b16 %v234
  %v1224 = vunpack.c.l.b16 %v235
  %v1225 = vunpack.c.h.b16 %v235
  %v1226 = vunpack.c.l.b16 %v236
  %v1227 = vunpack.c.h.b16 %v236
  %v1228 = vunpack.c.l.b16 %v237
  %v1229 = vunpack.c.h.b16 %v237
  %v1230 = vunpack.c.l.b16 %v238
  %v1231 = vunpack.c.h.b16 %v238
  %v1232 = vunpack.c.l.b16 %v239
  %v1233 = vunpack.c.h.b16 %v239
  %v1234 = vunpack.c.l.b16 %v240
  %v1235 = vunpack.c.h.b16 %v240
  %v1236 = vunpack.c.l.b16 %v241
  %v1237 = vunpack.c.h.b16 %v241
  %v1238 = vunpack.c.l.b16 %v242
  %v1239 = vunpack.c.h.b16 %v242
  %v1240 = vunpack.c.l.b16 %v243
  %v1241 = vunpack.c.h.b16 %v243
  %v1242 = vunpack.c.l.b16 %v244
  %v1243 = vunpack.c.h.b16 %v244
  %v1244 = vunpack.c.l.b16 %v245
  %v1245 = vunpack.c.h.b16 %v245
  %v1246 = vunpack.c.l.b16 %v246
  %v1247 = vunpack.c.h.b16 %v246
  %v1248 = vunpack.c.l.b16 %v247
  %v1249 = vunpack.c.h.b16 %v247
  %v1250 = vunpack.c.l.b16 %v248
  %v1251 = vunpack.c.h.b16 %v248
  %v1252 = vunpack.c.l.b16 %v249
  %v1253 = vunpack.c.h.b16 %v249
  %v1254 = vunpack.c.l.b16 %v250
  %v1255 = vunpack.c.h.b16 %v250
  %v1256 = vunpack.c.l.b16 %v251
  %v1257 = vunpack.c.h.b16 %v251
  %v1258 = vunpack.c.l.b16 %v252
  %v1259 = vunpack.c.h.b16 %v252
  %v1260 = vunpack.c.l.b16 %v253
  %v1261 = vunpack.c.h.b16 %v253
  %v1262 = vunpack.c.l.b16 %v254
  %v1263 = vunpack.c.h.b16 %v254
  %v1264 = vunpack.c.l.b16 %v255
  %v1265 = vunpack.c.h.b16 %v255
  %v1266 = vunpack.c.l.b16 %v256
  %v1267 = vunpack.c.h.b16 %v256
  %v1268 = vunpack.c.l.b16 %v257
  %v1269 = vunpack.c.h.b16 %v257
  %v1270 = vunpack.c.l.b16 %v258
  %v1271 = vunpack.c.h.b16 %v258
  %v1272 = vunpack.c.l.b16 %v259
  %v1273 = vunpack.c.h.b16 %v259
  %v1274 = vunpack.c.l.b16 %v260
  %v1275 = vunpack.c.h.b16 %v260
  %v1276 = vunpack.c.l.b16 %v261
  %v1277 = vunpack.c.h.b16 %v261
  %v1278 = vunpack.c.l.b16 %v262
  %v1279 = vunpack.c.h.b16 %v262
  %v1280 = vunpack.c.l.b16 %v263
  %v1281 = vunpack.c.h.b16 %v263
  %v1282 = vunpack.c.l.b16 %v264
  %v1283 = vunpack.c.h.b16 %v264
  %v1284 = vunpack.c.l.b16 %v265
  %v1285 = vunpack.c.h.b16 %v265
  %v1286 = vunpack.c.l.b16 %v266
  %v1287 = vunpack.c.h.b16 %v266
  %v1288 = vunpack.c.l.b16 %v267
  %v1289 = vunpack.c.h.b16 %v267
  %v1290 = vunpack.c.l.b16 %v268
  %v1291 = vunpack.c.h.b16 %v268
  %v1292 = vunpack.c.l.b16 %v269
  %v1293 = vunpack.c.h.b16 %v269
  %v1294 = vunpack.c.l.b16 %v270
  %v1295 = vunpack.c.h.b16 %v270
  %v1296 = vunpack.c.l.b16 %v271
  %v1297 = vunpack.c.h.b16 %v271
  %v1298 = vunpack.c.l.b16 %v272
  %v1299 = vunpack.c.h.b16 %v272
  %v1300 = vunpack.c.l.b16 %v273
  %v1301 = vunpack.c.h.b16 %v273
  %v1302 = vunpack.c.l.b16 %v274
  %v1303 = vunpack.c.h.b16 %v274
  %v1304 = vunpack.c.l.b16 %v275
  %v1305 = vunpack.c.h.b16 %v275
  %v1306 = vunpack.c.l.b16 %v276
  %v1307 = vunpack.c.h.b16 %v276
  %v1308 = vunpack.c.l.b16 %v277
  %v1309 = vunpack.c.h.b16 %v277
  %v1310 = vunpack.c.l.b16 %v278
  %v1311 = vunpack.c.h.b16 %v278
  %v1312 = vunpack.c.l.b16 %v279
  %v1313 = vunpack.c.h.b16 %v279
  %v1314 = vunpack.c.l.b16 %v280
  %v1315 = vunpack.c.h.b16 %v280
  %v1316 = vunpack.c.l.b16 %v281
  %v1317 = vunpack.c.h.b16 %v281
  %v1318 = vunpack.c.l.b16 %v282
  %v1319 = vunpack.c.h.b16 %v282
  %v1320 = vunpack.c.l.b16 %v283
  %v1321 = vunpack.c.h.b16 %v283
  %v1322 = vunpack.c.l.b16 %v284
  %v1323 = vunpack.c.h.b16 %v284
  %v1324 = vunpack.c.l.b16 %v285
  %v1325 = vunpack.c.h.b16 %v285
  %v1326 = vunpack.c.l.b16 %v286
  %v1327 = vunpack.c.h.b16 %v286
  %v1328 = vunpack.c.l.b16 %v287
  %v1329 = vunpack.c.h.b16 %v287
  %v1330 = vunpack.c.l.b16 %v288
  %v1331 = vunpack.c.h.b16 %v288
  %v1332 = vunpack.c.l.b16 %v289
  %v1333 = vunpack.c.h.b16 %v289
  %v1334 = vunpack.c.l.b16 %v290
  %v1335 = vunpack.c.h.b16 %v290
  %v1336 = vunpack.c.l.b16 %v291
  %v1337 = vunpack.c.h.b16 %v291
  %v1338 = vunpack.c.l.b16 %v292
  %v1339 = vunpack.c.h.b16 %v292
  %v1340 = vunpack.c.l.b16 %v293
  %v1341 = vunpack.c.h.b16 %v293
  %v1342 = vunpack.c.l.b16 %v294
  %v1343 = vunpack.c.h.b16 %v294
  %v1344 = vunpack.c.l.b16 %v295
  %v1345 = vunpack.c.h.b16 %v295
  %v1346 = vunpack.c.l.b16 %v296
  %v1347 = vunpack.c.h.b16 %v296
  %v1348 = vunpack.c.l.b16 %v297
  %v1349 = vunpack.c.h.b16 %v297
  %v1350 = vunpack.c.l.b16 %v298
  %v1351 = vunpack.c.h.b16 %v298
  %v1352 = vunpack.c.l.b16 %v299
  %v1353 = vunpack.c.h.b16 %v299
  %v1354 = vunpack.c.l.b16 %v300
  %v1355 = vunpack.c.h.b16 %v300
  %v1356 = vunpack.c.l.b16 %v301
  %v1357 = vunpack.c.h.b16 %v301
  %v1358 = vunpack.c.l.b16 %v302
  %v1359 = vunpack.c.h.b16 %v302
  %v1360 = vunpack.c.l.b16 %v303
  %v1361 = vunpack.c.h.b16 %v303
  %v1362 = vunpack.c.l.b16 %v304
  %v1363 = vunpack.c.h.b16 %v304
  %v1364 = vunpack.c.l.b16 %v305
  %v1365 = vunpack.c.h.b16 %v305
  %v1366 = vunpack.c.l.b16 %v306
  %v1367 = vunpack.c.h.b16 %v306
  %v1368 = vunpack.c.l.b16 %v307
  %v1369 = vunpack.c.h.b16 %v307
  %v1370 = vunpack.c.l.b16 %v308
  %v1371 = vunpack.c.h.b16 %v308
  %v1372 = vunpack.c.l.b16 %v309
  %v1373 = vunpack.c.h.b16 %v309
  %v1374 = vunpack.c.l.b16 %v310
  %v1375 = vunpack.c.h.b16 %v310
  %v1376 = vunpack.c.l.b16 %v311
  %v1377 = vunpack.c.h.b16 %v311
  %v1378 = vunpack.c.l.b16 %v312
  %v1379 = vunpack.c.h.b16 %v312
  %v1380 = vunpack.c.l.b16 %v313
  %v1381 = vunpack.c.h.b16 %v313
  %v1382 = vunpack.c.l.b16 %v314
  %v1383 = vunpack.c.h.b16 %v314
  %v1384 = vunpack.c.l.b16 %v315
  %v1385 = vunpack.c.h.b16 %v315
  %v1386 = vunpack.c.l.b16 %v316
  %v1387 = vunpack.c.h.b16 %v316
  %v1388 = vunpack.c.l.b16 %v317
  %v1389 = vunpack.c.h.b16 %v317
  %v1390 = vunpack.c.l.b16 %v318
  %v1391 = vunpack.c.h.b16 %v318
  %v1392 = vunpack.c.l.b16 %v319
  %v1393 = vunpack.c.h.b16 %v319
  %v1394 = vunpack.c.l.b16 %v320
  %v1395 = vunpack.c.h.b16 %v320
  %v1396 = vunpack.c.l.b16 %v321
  %v1397 = vunpack.c.h.b16 %v321
  %v1398 = vunpack.c.l.b16 %v322
  %v1399 = vunpack.c.h.b16 %v322
  %v1400 = vunpack.c.l.b16 %v323
  %v1401 = vunpack.c.h.b16 %v323
  %v1402 = vunpack.c.l.b16 %v324
  %v1403 = vunpack.c.h.b16 %v324
  %v1404 = vunpack.c.l.b16 %v325
  %v1405 = vunpack.c.h.b16 %v325
  %v1406 = vunpack.c.l.b16 %v326
  %v1407 = vunpack.c.h.b16 %v326
  %v1408 = vunpack.c.l.b16 %v327
  %v1409 = vunpack.c.h.b16 %v327
  %v1410 = vunpack.c.l.b16 %v328
  %v1411 = vunpack.c.h.b16 %v328
  %v1412 = vunpack.c.l.b16 %v329
  %v1413 = vunpack.c.h.b16 %v329
  %v1414 = vunpack.c.l.b16 %v330
  %v1415 = vunpack.c.h.b16 %v330
  %v1416 = vunpack.c.l.b16 %v331
  %v1417 = vunpack.c.h.b16 %v331
  %v1418 = vunpack.c.l.b16 %v332
  %v1419 = vunpack.c.h.b16 %v332
  %v1420 = vunpack.c.l.b16 %v333
  %v1421 = vunpack.c.h.b16 %v333
  %v1422 = vunpack.c.l.b16 %v334
  %v1423 = vunpack.c.h.b16 %v334
  %v1424 = vunpack.c.l.b16 %v335
  %v1425 = vunpack.c.h.b16 %v335
  %v1426 = vunpack.c.l.b16 %v336
  %v1427 = vunpack.c.h.b16 %v336
  %v1428 = vunpack.c.l.b16 %v337
  %v1429 = vunpack.c.h.b16 %v337
  %v1430 = vunpack.c.l.b16 %v338
  %v1431 = vunpack.c.h.b16 %v338
  %v1432 = vunpack.c.l.b16 %v339
  %v1433 = vunpack.c.h.b16 %v339
  %v1434 = vunpack.c.l.b16 %v340
  %v1435 = vunpack.c.h.b16 %v340
  %v1436 = vunpack.c.l.b16 %v341
  %v1437 = vunpack.c.h.b16 %v341
  %v1438 = vunpack.c.l.b16 %v342
  %v1439 = vunpack.c.h.b16 %v342
  %v1440 = vunpack.c.l.b16 %v343
  %v1441 = vunpack.c.h.b16 %v343
  %v1442 = vunpack.c.l.b16 %v344
  %v1443 = vunpack.c.h.b16 %v344
  %v1444 = vunpack.c.l.b16 %v345
  %v1445 = vunpack.c.h.b16 %v345
  %v1446 = vunpack.c.l.b16 %v346
  %v1447 = vunpack.c.h.b16 %v346
  %v1448 = vunpack.c.l.b16 %v347
  %v1449 = vunpack.c.h.b16 %v347
  %v1450 = vpack.c.b16 %v878, %v874
  %v1451 = vpack.c.b16 %v879, %v875
  %v1452 = vpack.c.b16 %v880, %v876
  %v1453 = vpack.c.b16 %v881, %v877
  %v1454 = vpack.c.b16 %v886, %v882
  %v1455 = vpack.c.b16 %v887, %v883
  %v1456 = vpack.c.b16 %v888, %v884
  %v1457 = vpack.c.b16 %v889, %v885
  %v1458 = vpack.c.b16 %v894, %v890
  %v1459 = vpack.c.b16 %v895, %v891
  %v1460 = vpack.c.b16 %v896, %v892
  %v1461 = vpack.c.b16 %v897, %v893
  %v1462 = vpack.c.b16 %v902, %v898
  %v1463 = vpack.c.b16 %v903, %v899
  %v1464 = vpack.c.b16 %v904, %v900
  %v1465 = vpack.c.b16 %v905, %v901
  %v1466 = vpack.c.b16 %v910, %v906
  %v1467 = vpack.c.b16 %v911, %v907
  %v1468 = vpack.c.b16 %v912, %v908
  %v1469 = vpack.c.b16 %v913, %v909
  %v1470 = vpack.c.b16 %v918, %v914
  %v1471 = vpack.c.b16 %v919, %v915
  %v1472 = vpack.c.b16 %v920, %v916
  %v1473 = vpack.c.b16 %v921, %v917
  %v1474 = vpack.c.b16 %v926, %v922
  %v1475 = vpack.c.b16 %v927, %v923
  %v1476 = vpack.c.b16 %v928, %v924
  %v1477 = vpack.c.b16 %v929, %v925
  %v1478 = vpack.c.b16 %v934, %v930
  %v1479 = vpack.c.b16 %v935, %v931
  %v1480 = vpack.c.b16 %v936, %v932
  %v1481 = vpack.c.b16 %v937, %v933
  %v1482 = vpack.c.b16 %v942, %v938
  %v1483 = vpack.c.b16 %v943, %v939
  %v1484 = vpack.c.b16 %v944, %v940
  %v1485 = vpack.c.b16 %v945, %v941
  %v1486 = vpack.c.b16 %v950, %v946
  %v1487 = vpack.c.b16 %v951, %v947
  %v1488 = vpack.c.b16 %v952, %v948
  %v1489 = vpack.c.b16 %v953, %v949
  %v1490 = vpack.c.b16 %v958, %v954
  %v1491 = vpack.c.b16 %v959, %v955
  %v1492 = vpack.c.b16 %v960, %v956
  %v1493 = vpack.c.b16 %v961, %v957
  %v1494 = vpack.c.b16 %v966, %v962
  %v1495 = vpack.c.b16 %v967, %v963
  %v1496 = vpack.c.b16 %v968, %v964
  %v1497 = vpack.c.b16 %v969, %v965
  %v1498 = vpack.c.b16 %v974, %v970
  %v1499 = vpack.c.b16 %v975, %v971
  %v1500 = vpack.c.b16 %v976, %v972
  %v1501 = vpack.c.b16 %v977, %v973
  %v1502 = vpack.c.b16 %v982, %v978
  %v1503 = vpack.c.b16 %v983, %v979
  %v1504 = vpack.c.b16 %v984, %v980
  %v1505 = vpack.c.b16 %v985, %v981
  %v1506 = vpack.c.b16 %v990, %v986
  %v1507 = vpack.c.b16 %v991, %v987
  %v1508 = vpack.c.b16 %v992, %v988
  %v1509 = vpack.c.b16 %v993, %v989
  %v1510 = vpack.c.b16 %v998, %v994
  %v1511 = vpack.c.b16 %v999, %v995
  %v1512 = vpack.c.b16 %v1000, %v996
  %v1513 = vpack.c.b16 %v1001, %v997
  %v1514 = vpack.c.b16 %v1006, %v1002
  %v1515 = vpack.c.b16 %v1007, %v1003
  %v1516 = vpack.c.b16 %v1008, %v1004
  %v1517 = vpack.c.b16 %v1009, %v1005
  %v1518 = vpack.c.b16 %v1014, %v1010
  %v1519 = vpack.c.b16 %v1015, %v1011
  %v1520 = vpack.c.b16 %v1016, %v1012
  %v1521 = vpack.c.b16 %v1017, %v1013
  %v1522 = vpack.c.b16 %v1022, %v1018
  %v1523 = vpack.c.b16 %v1023, %v1019
  %v1524 = vpack.c.b16 %v1024, %v1020
  %v1525 = vpack.c.b16 %v1025, %v1021
  %v1526 = vpack.c.b16 %v1030, %v1026
  %v1527 = vpack.c.b16 %v1031, %v1027
  %v1528 = vpack.c.b16 %v1032, %v1028
  %v1529 = vpack.c.b16 %v1033, %v1029
  %v1530 = vpack.c.b16 %v1038, %v1034
  %v1531 = vpack.c.b16 %v1039, %v1035
  %v1532 = vpack.c.b16 %v1040, %v1036
  %v1533 = vpack.c.b16 %v1041, %v1037
  %v1534 = vpack.c.b16 %v1046, %v1042
  %v1535 = vpack.c.b16 %v1047, %v1043
  %v1536 = vpack.c.b16 %v1048, %v1044
  %v1537 = vpack.c.b16 %v1049, %v1045
  %v1538 = vpack.c.b16 %v1054, %v1050
  %v1539 = vpack.c.b16 %v1055, %v1051
  %v1540 = vpack.c.b16 %v1056, %v1052
  %v1541 = vpack.c.b16 %v1057, %v1053
  %v1542 = vpack.c.b16 %v1062, %v1058
  %v1543 = vpack.c.b16 %v1063, %v1059
  %v1544 = vpack.c.b16 %v1064, %v1060
  %v1545 = vpack.c.b16 %v1065, %v1061
  %v1546 = vpack.c.b16 %v1070, %v1066
  %v1547 = vpack.c.b16 %v1071, %v1067
  %v1548 = vpack.c.b16 %v1072, %v1068
  %v1549 = vpack.c.b16 %v1073, %v1069
  %v1550 = vpack.c.b16 %v1078, %v1074
  %v1551 = vpack.c.b16 %v1079, %v1075
  %v1552 = vpack.c.b16 %v1080, %v1076
  %v1553 = vpack.c.b16 %v1081, %v1077
  %v1554 = vpack.c.b16 %v1086, %v1082
  %v1555 = vpack.c.b16 %v1087, %v1083
  %v1556 = vpack.c.b16 %v1088, %v1084
  %v1557 = vpack.c.b16 %v1089, %v1085
  %v1558 = vpack.c.b16 %v1094, %v1090
  %v1559 = vpack.c.b16 %v1095, %v1091
  %v1560 = vpack.c.b16 %v1096, %v1092
  %v1561 = vpack.c.b16 %v1097, %v1093
  %v1562 = vpack.c.b16 %v1102, %v1098
  %v1563 = vpack.c.b16 %v1103, %v1099
  %v1564 = vpack.c.b16 %v1104, %v1100
  %v1565 = vpack.c.b16 %v1105, %v1101
  %v1566 = vpack.c.b16 %v1110, %v1106
  %v1567 = vpack.c.b16 %v1111, %v1107
  %v1568 = vpack.c.b16 %v1112, %v1108
  %v1569 = vpack.c.b16 %v1113, %v1109
  %v1570 = vpack.c.b16 %v1118, %v1114
  %v1571 = vpack.c.b16 %v1119, %v1115
  %v1572 = vpack.c.b16 %v1120, %v1116
  %v1573 = vpack.c.b16 %v1121, %v1117
  %v1574 = vpack.c.b16 %v1126, %v1122
  %v1575 = vpack.c.b16 %v1127, %v1123
  %v1576 = vpack.c.b16 %v1128, %v1124
  %v1577 = vpack.c.b16 %v1129, %v1125
  %v1578 = vpack.c.b16 %v1134, %v1130
  %v1579 = vpack.c.b16 %v1135, %v1131
  %v1580 = vpack.c.b16 %v1136, %v1132
  %v1581 = vpack.c.b16 %v1137, %v1133
  %v1582 = vpack.c.b16 %v1142, %v1138
  %v1583 = vpack.c.b16 %v1143, %v1139
  %v1584 = vpack.c.b16 %v1144, %v1140
  %v1585 = vpack.c.b16 %v1145, %v1141
  %v1586 = vpack.c.b16 %v1150, %v1146
  %v1587 = vpack.c.b16 %v1151, %v1147
  %v1588 = vpack.c.b16 %v1152, %v1148
  %v1589 = vpack.c.b16 %v1153, %v1149
  %v1590 = vpack.c.b16 %v1158, %v1154
  %v1591 = vpack.c.b16 %v1159, %v1155
  %v1592 = vpack.c.b16 %v1160, %v1156
  %v1593 = vpack.c.b16 %v1161, %v1157
  %v1594 = vpack.c.b16 %v1166, %v1162
  %v1595 = vpack.c.b16 %v1167, %v1163
  %v1596 = vpack.c.b16 %v1168, %v1164
  %v1597 = vpack.c.b16 %v1169, %v1165
  %v1598 = vpack.c.b16 %v1174, %v1170
  %v1599 = vpack.c.b16 %v1175, %v1171
  %v1600 = vpack.c.b16 %v1176, %v1172
  %v1601 = vpack.c.b16 %v1177, %v1173
  %v1602 = vpack.c.b16 %v1182, %v1178
  %v1603 = vpack.c.b16 %v1183, %v1179
  %v1604 = vpack.c.b16 %v1184, %v1180
  %v1605 = vpack.c.b16 %v1185, %v1181
  %v1606 = vpack.c.b16 %v1190, %v1186
  %v1607 = vpack.c.b16 %v1191, %v1187
  %v1608 = vpack.c.b16 %v1192, %v1188
  %v1609 = vpack.c.b16 %v1193, %v1189
  %v1610 = vpack.c.b16 %v1198, %v1194
  %v1611 = vpack.c.b16 %v1199, %v1195
  %v1612 = vpack.c.b16 %v1200, %v1196
  %v1613 = vpack.c.b16 %v1201, %v1197
  %v1614 = vpack.c.b16 %v1206, %v1202
  %v1615 = vpack.c.b16 %v1207, %v1203
  %v1616 = vpack.c.b16 %v1208, %v1204
  %v1617 = vpack.c.b16 %v1209, %v1205
  %v1618 = vpack.c.b16 %v1214, %v1210
  %v1619 = vpack.c.b16 %v1215, %v1211
  %v1620 = vpack.c.b16 %v1216, %v1212
  %v1621 = vpack.c.b16 %v1217, %v1213
  %v1622 = vpack.c.b16 %v1222, %v1218
  %v1623 = vpack.c.b16 %v1223, %v1219
  %v1624 = vpack.c.b16 %v1224, %v1220
  %v1625 = vpack.c.b16 %v1225, %v1221
  %v1626 = vpack.c.b16 %v1230, %v1226
  %v1627 = vpack.c.b16 %v1231, %v1227
  %v1628 = vpack.c.b16 %v1232, %v1228
  %v1629 = vpack.c.b16 %v1233, %v1229
  %v1630 = vpack.c.b16 %v1238, %v1234
  %v1631 = vpack.c.b16 %v1239, %v1235
  %v1632 = vpack.c.b16 %v1240, %v1236
  %v1633 = vpack.c.b16 %v1241, %v1237
  %v1634 = vpack.c.b16 %v1246, %v1242
  %v1635 = vpack.c.b16 %v1247, %v1243
  %v1636 = vpack.c.b16 %v1248, %v1244
  %v1637 = vpack.c.b16 %v1249, %v1245
  %v1638 = vpack.c.b16 %v1254, %v1250
  %v1639 = vpack.c.b16 %v1255, %v1251
  %v1640 = vpack.c.b16 %v1256, %v1252
  %v1641 = vpack.c.b16 %v1257, %v1253
  %v1642 = vpack.c.b16 %v1262, %v1258
  %v1643 = vpack.c.b16 %v1263, %v1259
  %v1644 = vpack.c.b16 %v1264, %v1260
  %v1645 = vpack.c.b16 %v1265, %v1261
  %v1646 = vpack.c.b16 %v1270, %v1266
  %v1647 = vpack.c.b16 %v1271, %v1267
  %v1648 = vpack.c.b16 %v1272, %v1268
  %v1649 = vpack.c.b16 %v1273, %v1269
  %v1650 = vpack.c.b16 %v1278, %v1274
  %v1651 = vpack.c.b16 %v1279, %v1275
  %v1652 = vpack.c.b16 %v1280, %v1276
  %v1653 = vpack.c.b16 %v1281, %v1277
  %v1654 = vpack.c.b16 %v1286, %v1282
  %v1655 = vpack.c.b16 %v1287, %v1283
  %v1656 = vpack.c.b16 %v1288, %v1284
  %v1657 = vpack.c.b16 %v1289, %v1285
  %v1658 = vpack.c.b16 %v1294, %v1290
  %v1659 = vpack.c.b16 %v1295, %v1291
  %v1660 = vpack.c.b16 %v1296, %v1292
  %v1661 = vpack.c.b16 %v1297, %v1293
  %v1662 = vpack.c.b16 %v1302, %v1298
  %v1663 = vpack.c.b16 %v1303, %v1299
  %v1664 = vpack.c.b16 %v1304, %v1300
  %v1665 = vpack.c.b16 %v1305, %v1301
  %v1666 = vpack.c.b16 %v1310, %v1306
  %v1667 = vpack.c.b16 %v1311, %v1307
  %v1668 = vpack.c.b16 %v1312, %v1308
  %v1669 = vpack.c.b16 %v1313, %v1309
  %v1670 = vpack.c.b16 %v1318, %v1314
  %v1671 = vpack.c.b16 %v1319, %v1315
  %v1672 = vpack.c.b16 %v1320, %v1316
  %v1673 = vpack.c.b16 %v1321, %v1317
  %v1674 = vpack.c.b16 %v1326, %v1322
  %v1675 = vpack.c.b16 %v1327, %v1323
  %v1676 = vpack.c.b16 %v1328, %v1324
  %v1677 = vpack.c.b16 %v1329, %v1325
  %v1678 = vpack.c.b16 %v1334, %v1330
  %v1679 = vpack.c.b16 %v1335, %v1331
  %v1680 = vpack.c.b16 %v1336, %v1332
  %v1681 = vpack.c.b16 %v1337, %v1333
  %v1682 = vpack.c.b16 %v1342, %v1338
  %v1683 = vpack.c.b16 %v1343, %v1339
  %v1684 = vpack.c.b16 %v1344, %v1340
  %v1685 = vpack.c.b16 %v1345, %v1341
  %v1686 = vpack.c.b16 %v1350, %v1346
  %v1687 = vpack.c.b16 %v1351, %v1347
  %v1688 = vpack.c.b16 %v1352, %v1348
  %v1689 = vpack.c.b16 %v1353, %v1349
  %v1690 = vpack.c.b16 %v1358, %v1354
  %v1691 = vpack.c.b16 %v1359, %v1355
  %v1692 = vpack.c.b16 %v1360, %v1356
  %v1693 = vpack.c.b16 %v1361, %v1357
  %v1694 = vpack.c.b16 %v1366, %v1362
  %v1695 = vpack.c.b16 %v1367, %v1363
  %v1696 = vpack.c.b16 %v1368, %v1364
  %v1697 = vpack.c.b16 %v1369, %v1365
  %v1698 = vpack.c.b16 %v1374, %v1370
  %v1699 = vpack.c.b16 %v1375, %v1371
  %v1700 = vpack.c.b16 %v1376, %v1372
  %v1701 = vpack.c.b16 %v1377, %v1373
  %v1702 = vpack.c.b16 %v1382, %v1378
  %v1703 = vpack.c.b16 %v1383, %v1379
  %v1704 = vpack.c.b16 %v1384, %v1380
  %v1705 = vpack.c.b16 %v1385, %v1381
  %v1706 = vpack.c.b16 %v1390, %v1386
  %v1707 = vpack.c.b16 %v1391, %v1387
  %v1708 = vpack.c.b16 %v1392, %v1388
  %v1709 = vpack.c.b16 %v1393, %v1389
  %v1710 = vpack.c.b16 %v1398, %v1394
  %v1711 = vpack.c.b16 %v1399, %v1395
  %v1712 = vpack.c.b16 %v1400, %v1396
  %v1713 = vpack.c.b16 %v1401, %v1397
  %v1714 = vpack.c.b16 %v1406, %v1402
  %v1715 = vpack.c.b16 %v1407, %v1403
  %v1716 = vpack.c.b16 %v1408, %v1404
  %v1717 = vpack.c.b16 %v1409, %v1405
  %v1718 = vpack.c.b16 %v1414, %v1410
  %v1719 = vpack.c.b16 %v1415, %v1411
  %v1720 = vpack.c.b16 %v1416, %v1412
  %v1721 = vpack.c.b16 %v1417, %v1413
  %v1722 = vpack.c.b16 %v1422, %v1418
  %v1723 = vpack.c.b16 %v1423, %v1419
  %v1724 = vpack.c.b16 %v1424, %v1420
  %v1725 = vpack.c.b16 %v1425, %v1421
  %v1726 = vpack.c.b16 %v1430, %v1426
  %v1727 = vpack.c.b16 %v1431, %v1427
  %v1728 = vpack.c.b16 %v1432, %v1428
  %v1729 = vpack.c.b16 %v1433, %v1429
  %v1730 = vpack.c.b16 %v1438, %v1434
  %v1731 = vpack.c.b16 %v1439, %v1435
  %v1732 = vpack.c.b16 %v1440, %v1436
  %v1733 = vpack.c.b16 %v1441, %v1437
  %v1734 = vpack.c.b16 %v1446, %v1442
  %v1735 = vpack.c.b16 %v1447, %v1443
  %v1736 = vpack.c.b16 %v1448, %v1444
  %v1737 = vpack.c.b16 %v1449, %v1445
  %2026 = vmatprep.subr.bf16.mxu0 %v1451
  %2027 = vmatpush1.bf16.msra.mxu0 %v1450
  %2028 = vmatprep.subr.bf16.mxu0 %v1455
  %2029 = vmatpush1.bf16.msra.mxu0 %v1454
  %2030 = vmatprep.subr.bf16.mxu0 %v1459
  %2031 = vmatpush1.bf16.msra.mxu0 %v1458
  %2032 = vmatprep.subr.bf16.mxu0 %v1463
  %2033 = vmatpush1.bf16.msra.mxu0 %v1462
  %2034 = vmatprep.subr.bf16.mxu0 %v1467
  %2035 = vmatpush1.bf16.msra.mxu0 %v1466
  %2036 = vmatprep.subr.bf16.mxu0 %v1471
  %2037 = vmatpush1.bf16.msra.mxu0 %v1470
  %2038 = vmatprep.subr.bf16.mxu0 %v1475
  %2039 = vmatpush1.bf16.msra.mxu0 %v1474
  %2040 = vmatprep.subr.bf16.mxu0 %v1479
  %2041 = vmatpush1.bf16.msra.mxu0 %v1478
  %2042 = vmatprep.subr.bf16.mxu0 %v1483
  %2043 = vmatpush1.bf16.msra.mxu0 %v1482
  %2044 = vmatprep.subr.bf16.mxu0 %v1487
  %2045 = vmatpush1.bf16.msra.mxu0 %v1486
  %2046 = vmatprep.subr.bf16.mxu0 %v1491
  %2047 = vmatpush1.bf16.msra.mxu0 %v1490
  %2048 = vmatprep.subr.bf16.mxu0 %v1495
  %2049 = vmatpush1.bf16.msra.mxu0 %v1494
  %2050 = vmatprep.subr.bf16.mxu0 %v1499
  %2051 = vmatpush1.bf16.msra.mxu0 %v1498
  %2052 = vmatprep.subr.bf16.mxu0 %v1503
  %2053 = vmatpush1.bf16.msra.mxu0 %v1502
  %2054 = vmatprep.subr.bf16.mxu0 %v1507
  %2055 = vmatpush1.bf16.msra.mxu0 %v1506
  %2056 = vmatprep.subr.bf16.mxu0 %v1511
  %2057 = vmatpush1.bf16.msra.mxu0 %v1510
  %2058 = vmatprep.mubr.bf16.mxu0 %v497
  %2059 = vmatmul.mubr.bf16.gmra.mrb[0].mxu0 %v496
  %v2060 = vpop.f32.mrb[0].mxu0
  %v2061 = vadd.f32 %v353, %v2060
  %v2062 = vpop.f32.mrb[0].mxu0
  %v2063 = vadd.f32 %v357, %v2062
  %v2064 = vpop.f32.mrb[0].mxu0
  %v2065 = vadd.f32 %v353, %v2064
  %v2066 = vpop.f32.mrb[0].mxu0
  %v2067 = vadd.f32 %v357, %v2066
  %2068 = vmatprep.mubr.bf16.mxu0 %v506
  %2069 = vmatmul.mubr.bf16.gmra.mrb[0].mxu0 %v505
  %v2070 = vpop.f32.mrb[0].mxu0
  %v2071 = vadd.f32 %v353, %v2070
  %v2072 = vpop.f32.mrb[0].mxu0
  %v2073 = vadd.f32 %v357, %v2072
  %v2074 = vpop.f32.mrb[0].mxu0
  %v2075 = vadd.f32 %v353, %v2074
  %v2076 = vpop.f32.mrb[0].mxu0
  %v2077 = vadd.f32 %v357, %v2076
  %2078 = vmatprep.mubr.bf16.mxu0 %v515
  %2079 = vmatmul.mubr.bf16.gmra.mrb[0].mxu0 %v514
  %v2080 = vpop.f32.mrb[0].mxu0
  %v2081 = vadd.f32 %v353, %v2080
  %v2082 = vpop.f32.mrb[0].mxu0
  %v2083 = vadd.f32 %v357, %v2082
  %v2084 = vpop.f32.mrb[0].mxu0
  %v2085 = vadd.f32 %v353, %v2084
  %v2086 = vpop.f32.mrb[0].mxu0
  %v2087 = vadd.f32 %v357, %v2086
  %2088 = vmatprep.mubr.bf16.mxu0 %v524
  %2089 = vmatmul.mubr.bf16.gmra.mrb[0].mxu0 %v523
  %v2090 = vpop.f32.mrb[0].mxu0
  %v2091 = vadd.f32 %v353, %v2090
  %v2092 = vpop.f32.mrb[0].mxu0
  %v2093 = vadd.f32 %v357, %v2092
  %v2094 = vpop.f32.mrb[0].mxu0
  %v2095 = vadd.f32 %v353, %v2094
  %v2096 = vpop.f32.mrb[0].mxu0
  %v2097 = vadd.f32 %v357, %v2096
  %2098 = vmatprep.mubr.bf16.mxu0 %v533
  %2099 = vmatmul.mubr.bf16.gmra.mrb[0].mxu0 %v532
  %v2100 = vpop.f32.mrb[0].mxu0
  %v2101 = vadd.f32 %v353, %v2100
  %v2102 = vpop.f32.mrb[0].mxu0
  %v2103 = vadd.f32 %v357, %v2102
  %v2104 = vpop.f32.mrb[0].mxu0
  %v2105 = vpop.f32.mrb[0].mxu0
  %2106 = vdwg.mxu0
  %2107 = vmatprep.subr.bf16.mxu0 %v1515
  %2108 = vmatpush1.bf16.msra.mxu0 %v1514
  %2109 = vmatprep.subr.bf16.mxu0 %v1519
  %2110 = vmatpush1.bf16.msra.mxu0 %v1518
  %2111 = vmatprep.subr.bf16.mxu0 %v1523
  %2112 = vmatpush1.bf16.msra.mxu0 %v1522
  %2113 = vmatprep.subr.bf16.mxu0 %v1527
  %2114 = vmatpush1.bf16.msra.mxu0 %v1526
  %2115 = vmatprep.subr.bf16.mxu0 %v1531
  %2116 = vmatpush1.bf16.msra.mxu0 %v1530
  %2117 = vmatprep.subr.bf16.mxu0 %v1535
  %2118 = vmatpush1.bf16.msra.mxu0 %v1534
  %2119 = vmatprep.subr.bf16.mxu0 %v1539
  %2120 = vmatpush1.bf16.msra.mxu0 %v1538
  %2121 = vmatprep.subr.bf16.mxu0 %v1543
  %2122 = vmatpush1.bf16.msra.mxu0 %v1542
  %2123 = vmatprep.subr.bf16.mxu0 %v1547
  %2124 = vmatpush1.bf16.msra.mxu0 %v1546
  %2125 = vmatprep.subr.bf16.mxu0 %v1551
  %2126 = vmatpush1.bf16.msra.mxu0 %v1550
  %2127 = vmatprep.subr.bf16.mxu0 %v1555
  %2128 = vmatpush1.bf16.msra.mxu0 %v1554
  %2129 = vmatprep.subr.bf16.mxu0 %v1559
  %2130 = vmatpush1.bf16.msra.mxu0 %v1558
  %2131 = vmatprep.subr.bf16.mxu0 %v1563
  %2132 = vmatpush1.bf16.msra.mxu0 %v1562
  %2133 = vmatprep.subr.bf16.mxu0 %v1567
  %2134 = vmatpush1.bf16.msra.mxu0 %v1566
  %2135 = vmatprep.subr.bf16.mxu0 %v1571
  %2136 = vmatpush1.bf16.msra.mxu0 %v1570
  %2137 = vmatprep.subr.bf16.mxu0 %v1575
  %2138 = vmatpush1.bf16.msra.mxu0 %v1574
  %2139 = vmatprep.mubr.bf16.mxu0 %v499
  %2140 = vmatmul.mubr.bf16.gmra.mrb[0].mxu0 %v498
  %v2141 = vpop.f32.mrb[0].mxu0
  %v2142 = vadd.f32 %v2061, %v2141
  %v2143 = vpop.f32.mrb[0].mxu0
  %v2144 = vadd.f32 %v2063, %v2143
  %v2145 = vpop.f32.mrb[0].mxu0
  %v2146 = vadd.f32 %v2065, %v2145
  %v2147 = vpop.f32.mrb[0].mxu0
  %v2148 = vadd.f32 %v2067, %v2147
  %2149 = vmatprep.mubr.bf16.mxu0 %v508
  %2150 = vmatmul.mubr.bf16.gmra.mrb[0].mxu0 %v507
  %v2151 = vpop.f32.mrb[0].mxu0
  %v2152 = vadd.f32 %v2071, %v2151
  %v2153 = vpop.f32.mrb[0].mxu0
  %v2154 = vadd.f32 %v2073, %v2153
  %v2155 = vpop.f32.mrb[0].mxu0
  %v2156 = vadd.f32 %v2075, %v2155
  %v2157 = vpop.f32.mrb[0].mxu0
  %v2158 = vadd.f32 %v2077, %v2157
  %2159 = vmatprep.mubr.bf16.mxu0 %v517
  %2160 = vmatmul.mubr.bf16.gmra.mrb[0].mxu0 %v516
  %v2161 = vpop.f32.mrb[0].mxu0
  %v2162 = vadd.f32 %v2081, %v2161
  %v2163 = vpop.f32.mrb[0].mxu0
  %v2164 = vadd.f32 %v2083, %v2163
  %v2165 = vpop.f32.mrb[0].mxu0
  %v2166 = vadd.f32 %v2085, %v2165
  %v2167 = vpop.f32.mrb[0].mxu0
  %v2168 = vadd.f32 %v2087, %v2167
  %2169 = vmatprep.mubr.bf16.mxu0 %v526
  %2170 = vmatmul.mubr.bf16.gmra.mrb[0].mxu0 %v525
  %v2171 = vpop.f32.mrb[0].mxu0
  %v2172 = vadd.f32 %v2091, %v2171
  %v2173 = vpop.f32.mrb[0].mxu0
  %v2174 = vadd.f32 %v2093, %v2173
  %v2175 = vpop.f32.mrb[0].mxu0
  %v2176 = vadd.f32 %v2095, %v2175
  %v2177 = vpop.f32.mrb[0].mxu0
  %v2178 = vadd.f32 %v2097, %v2177
  %2179 = vmatprep.mubr.bf16.mxu0 %v535
  %2180 = vmatmul.mubr.bf16.gmra.mrb[0].mxu0 %v534
  %v2181 = vpop.f32.mrb[0].mxu0
  %v2182 = vadd.f32 %v2101, %v2181
  %v2183 = vpop.f32.mrb[0].mxu0
  %v2184 = vadd.f32 %v2103, %v2183
  %v2185 = vpop.f32.mrb[0].mxu0
  %v2186 = vpop.f32.mrb[0].mxu0
  %2187 = vdwg.mxu0
  %2188 = vmatprep.subr.bf16.mxu0 %v1579
  %2189 = vmatpush1.bf16.msra.mxu0 %v1578
  %2190 = vmatprep.subr.bf16.mxu0 %v1583
  %2191 = vmatpush1.bf16.msra.mxu0 %v1582
  %2192 = vmatprep.subr.bf16.mxu0 %v1587
  %2193 = vmatpush1.bf16.msra.mxu0 %v1586
  %2194 = vmatprep.subr.bf16.mxu0 %v1591
  %2195 = vmatpush1.bf16.msra.mxu0 %v1590
  %2196 = vmatprep.subr.bf16.mxu0 %v1595
  %2197 = vmatpush1.bf16.msra.mxu0 %v1594
  %2198 = vmatprep.subr.bf16.mxu0 %v1599
  %2199 = vmatpush1.bf16.msra.mxu0 %v1598
  %2200 = vmatprep.subr.bf16.mxu0 %v1603
  %2201 = vmatpush1.bf16.msra.mxu0 %v1602
  %2202 = vmatprep.subr.bf16.mxu0 %v1607
  %2203 = vmatpush1.bf16.msra.mxu0 %v1606
  %2204 = vmatprep.subr.bf16.mxu0 %v1611
  %2205 = vmatpush1.bf16.msra.mxu0 %v1610
  %2206 = vmatprep.subr.bf16.mxu0 %v1615
  %2207 = vmatpush1.bf16.msra.mxu0 %v1614
  %2208 = vmatprep.subr.bf16.mxu0 %v1619
  %2209 = vmatpush1.bf16.msra.mxu0 %v1618
  %2210 = vmatprep.subr.bf16.mxu0 %v1623
  %2211 = vmatpush1.bf16.msra.mxu0 %v1622
  %2212 = vmatprep.subr.bf16.mxu0 %v1627
  %2213 = vmatpush1.bf16.msra.mxu0 %v1626
  %2214 = vmatprep.subr.bf16.mxu0 %v1631
  %2215 = vmatpush1.bf16.msra.mxu0 %v1630
  %2216 = vmatprep.subr.bf16.mxu0 %v1635
  %2217 = vmatpush1.bf16.msra.mxu0 %v1634
  %2218 = vmatprep.subr.bf16.mxu0 %v1639
  %2219 = vmatpush1.bf16.msra.mxu0 %v1638
  %2220 = vmatprep.mubr.bf16.mxu0 %v501
  %2221 = vmatmul.mubr.bf16.gmra.mrb[0].mxu0 %v500
  %v2222 = vpop.f32.mrb[0].mxu0
  %v2223 = vadd.f32 %v2142, %v2222
  %v2224 = vpop.f32.mrb[0].mxu0
  %v2225 = vadd.f32 %v2144, %v2224
  %v2226 = vpop.f32.mrb[0].mxu0
  %v2227 = vadd.f32 %v2146, %v2226
  %v2228 = vpop.f32.mrb[0].mxu0
  %v2229 = vadd.f32 %v2148, %v2228
  %2230 = vmatprep.mubr.bf16.mxu0 %v510
  %2231 = vmatmul.mubr.bf16.gmra.mrb[0].mxu0 %v509
  %v2232 = vpop.f32.mrb[0].mxu0
  %v2233 = vadd.f32 %v2152, %v2232
  %v2234 = vpop.f32.mrb[0].mxu0
  %v2235 = vadd.f32 %v2154, %v2234
  %v2236 = vpop.f32.mrb[0].mxu0
  %v2237 = vadd.f32 %v2156, %v2236
  %v2238 = vpop.f32.mrb[0].mxu0
  %v2239 = vadd.f32 %v2158, %v2238
  %2240 = vmatprep.mubr.bf16.mxu0 %v519
  %2241 = vmatmul.mubr.bf16.gmra.mrb[0].mxu0 %v518
  %v2242 = vpop.f32.mrb[0].mxu0
  %v2243 = vadd.f32 %v2162, %v2242
  %v2244 = vpop.f32.mrb[0].mxu0
  %v2245 = vadd.f32 %v2164, %v2244
  %v2246 = vpop.f32.mrb[0].mxu0
  %v2247 = vadd.f32 %v2166, %v2246
  %v2248 = vpop.f32.mrb[0].mxu0
  %v2249 = vadd.f32 %v2168, %v2248
  %2250 = vmatprep.mubr.bf16.mxu0 %v528
  %2251 = vmatmul.mubr.bf16.gmra.mrb[0].mxu0 %v527
  %v2252 = vpop.f32.mrb[0].mxu0
  %v2253 = vadd.f32 %v2172, %v2252
  %v2254 = vpop.f32.mrb[0].mxu0
  %v2255 = vadd.f32 %v2174, %v2254
  %v2256 = vpop.f32.mrb[0].mxu0
  %v2257 = vadd.f32 %v2176, %v2256
  %v2258 = vpop.f32.mrb[0].mxu0
  %v2259 = vadd.f32 %v2178, %v2258
  %2260 = vmatprep.mubr.bf16.mxu0 %v537
  %2261 = vmatmul.mubr.bf16.gmra.mrb[0].mxu0 %v536
  %v2262 = vpop.f32.mrb[0].mxu0
  %v2263 = vadd.f32 %v2182, %v2262
  %v2264 = vpop.f32.mrb[0].mxu0
  %v2265 = vadd.f32 %v2184, %v2264
  %v2266 = vpop.f32.mrb[0].mxu0
  %v2267 = vpop.f32.mrb[0].mxu0
  %2268 = vdwg.mxu0
  %2269 = vmatprep.subr.bf16.mxu0 %v1643
  %2270 = vmatpush1.bf16.msra.mxu0 %v1642
  %2271 = vmatprep.subr.bf16.mxu0 %v1647
  %2272 = vmatpush1.bf16.msra.mxu0 %v1646
  %2273 = vmatprep.subr.bf16.mxu0 %v1651
  %2274 = vmatpush1.bf16.msra.mxu0 %v1650
  %2275 = vmatprep.subr.bf16.mxu0 %v1655
  %2276 = vmatpush1.bf16.msra.mxu0 %v1654
  %2277 = vmatprep.subr.bf16.mxu0 %v1659
  %2278 = vmatpush1.bf16.msra.mxu0 %v1658
  %2279 = vmatprep.subr.bf16.mxu0 %v1663
  %2280 = vmatpush1.bf16.msra.mxu0 %v1662
  %2281 = vmatprep.subr.bf16.mxu0 %v1667
  %2282 = vmatpush1.bf16.msra.mxu0 %v1666
  %2283 = vmatprep.subr.bf16.mxu0 %v1671
  %2284 = vmatpush1.bf16.msra.mxu0 %v1670
  %2285 = vmatprep.subr.bf16.mxu0 %v1675
  %2286 = vmatpush1.bf16.msra.mxu0 %v1674
  %2287 = vmatprep.subr.bf16.mxu0 %v1679
  %2288 = vmatpush1.bf16.msra.mxu0 %v1678
  %2289 = vmatprep.subr.bf16.mxu0 %v1683
  %2290 = vmatpush1.bf16.msra.mxu0 %v1682
  %2291 = vmatprep.subr.bf16.mxu0 %v1687
  %2292 = vmatpush1.bf16.msra.mxu0 %v1686
  %2293 = vmatprep.subr.bf16.mxu0 %v1691
  %2294 = vmatpush1.bf16.msra.mxu0 %v1690
  %2295 = vmatprep.subr.bf16.mxu0 %v1695
  %2296 = vmatpush1.bf16.msra.mxu0 %v1694
  %2297 = vmatprep.subr.bf16.mxu0 %v1699
  %2298 = vmatpush1.bf16.msra.mxu0 %v1698
  %2299 = vmatprep.subr.bf16.mxu0 %v1703
  %2300 = vmatpush1.bf16.msra.mxu0 %v1702
  %2301 = vmatprep.mubr.bf16.mxu0 %v503
  %2302 = vmatmul.mubr.bf16.gmra.mrb[0].mxu0 %v502
  %v2303 = vpop.f32.mrb[0].mxu0
  %v2304 = vadd.f32 %v2223, %v2303
  %v2305 = vpop.f32.mrb[0].mxu0
  %v2306 = vadd.f32 %v2225, %v2305
  %v2307 = vpop.f32.mrb[0].mxu0
  %v2308 = vadd.f32 %v2227, %v2307
  %v2309 = vpop.f32.mrb[0].mxu0
  %v2310 = vadd.f32 %v2229, %v2309
  %2311 = vmatprep.mubr.bf16.mxu0 %v512
  %2312 = vmatmul.mubr.bf16.gmra.mrb[0].mxu0 %v511
  %v2313 = vpop.f32.mrb[0].mxu0
  %v2314 = vadd.f32 %v2233, %v2313
  %v2315 = vpop.f32.mrb[0].mxu0
  %v2316 = vadd.f32 %v2235, %v2315
  %v2317 = vpop.f32.mrb[0].mxu0
  %v2318 = vadd.f32 %v2237, %v2317
  %v2319 = vpop.f32.mrb[0].mxu0
  %v2320 = vadd.f32 %v2239, %v2319
  %2321 = vmatprep.mubr.bf16.mxu0 %v521
  %2322 = vmatmul.mubr.bf16.gmra.mrb[0].mxu0 %v520
  %v2323 = vpop.f32.mrb[0].mxu0
  %v2324 = vadd.f32 %v2243, %v2323
  %v2325 = vpop.f32.mrb[0].mxu0
  %v2326 = vadd.f32 %v2245, %v2325
  %v2327 = vpop.f32.mrb[0].mxu0
  %v2328 = vadd.f32 %v2247, %v2327
  %v2329 = vpop.f32.mrb[0].mxu0
  %v2330 = vadd.f32 %v2249, %v2329
  %2331 = vmatprep.mubr.bf16.mxu0 %v530
  %2332 = vmatmul.mubr.bf16.gmra.mrb[0].mxu0 %v529
  %v2333 = vpop.f32.mrb[0].mxu0
  %v2334 = vadd.f32 %v2253, %v2333
  %v2335 = vpop.f32.mrb[0].mxu0
  %v2336 = vadd.f32 %v2255, %v2335
  %v2337 = vpop.f32.mrb[0].mxu0
  %v2338 = vadd.f32 %v2257, %v2337
  %v2339 = vpop.f32.mrb[0].mxu0
  %v2340 = vadd.f32 %v2259, %v2339
  %2341 = vmatprep.mubr.bf16.mxu0 %v539
  %2342 = vmatmul.mubr.bf16.gmra.mrb[0].mxu0 %v538
  %v2343 = vpop.f32.mrb[0].mxu0
  %v2344 = vadd.f32 %v2263, %v2343
  %v2345 = vpop.f32.mrb[0].mxu0
  %v2346 = vadd.f32 %v2265, %v2345
  %v2347 = vpop.f32.mrb[0].mxu0
  %v2348 = vpop.f32.mrb[0].mxu0
  %2349 = vdwg.mxu0
  %2350 = vmatprep.subr.bf16.mxu0 %v1707
  %2351 = vmatpush1.bf16.msra.mxu0 %v1706
  %2352 = vmatprep.subr.bf16.mxu0 %v1711
  %2353 = vmatpush1.bf16.msra.mxu0 %v1710
  %2354 = vmatprep.subr.bf16.mxu0 %v1715
  %2355 = vmatpush1.bf16.msra.mxu0 %v1714
  %2356 = vmatprep.subr.bf16.mxu0 %v1719
  %2357 = vmatpush1.bf16.msra.mxu0 %v1718
  %2358 = vmatprep.subr.bf16.mxu0 %v1723
  %2359 = vmatpush1.bf16.msra.mxu0 %v1722
  %2360 = vmatprep.subr.bf16.mxu0 %v1727
  %2361 = vmatpush1.bf16.msra.mxu0 %v1726
  %2362 = vmatprep.subr.bf16.mxu0 %v1731
  %2363 = vmatpush1.bf16.msra.mxu0 %v1730
  %2364 = vmatprep.subr.bf16.mxu0 %v1735
  %2365 = vmatpush1.bf16.msra.mxu0 %v1734
  %2366 = vmatprep.subr.bf16.mxu0 0
  %2367 = vmatpush1.bf16.msra.mxu0 0
  %2368 = vmatprep.subr.bf16.mxu0 0
  %2369 = vmatpush1.bf16.msra.mxu0 0
  %2370 = vmatprep.subr.bf16.mxu0 0
  %2371 = vmatpush1.bf16.msra.mxu0 0
  %2372 = vmatprep.subr.bf16.mxu0 0
  %2373 = vmatpush1.bf16.msra.mxu0 0
  %2374 = vmatprep.subr.bf16.mxu0 0
  %2375 = vmatpush1.bf16.msra.mxu0 0
  %2376 = vmatprep.subr.bf16.mxu0 0
  %2377 = vmatpush1.bf16.msra.mxu0 0
  %2378 = vmatprep.subr.bf16.mxu0 0
  %2379 = vmatpush1.bf16.msra.mxu0 0
  %2380 = vmatprep.subr.bf16.mxu0 0
  %2381 = vmatpush1.bf16.msra.mxu0 0
  %2382 = vmatprep.mubr.bf16.mxu0 0
  %2383 = vmatmul.mubr.bf16.gmra.mrb[0].mxu0 %v504
  %v2384 = vpop.f32.mrb[0].mxu0
  %v2385 = vadd.f32 %v2304, %v2384
  %v2386 = vpop.f32.mrb[0].mxu0
  %v2387 = vadd.f32 %v2306, %v2386
  %v2388 = vpop.f32.mrb[0].mxu0
  %v2389 = vadd.f32 %v2308, %v2388
  %v2390 = vpop.f32.mrb[0].mxu0
  %v2391 = vadd.f32 %v2310, %v2390
  %2392 = vmatprep.mubr.bf16.mxu0 0
  %2393 = vmatmul.mubr.bf16.gmra.mrb[0].mxu0 %v513
  %v2394 = vpop.f32.mrb[0].mxu0
  %v2395 = vadd.f32 %v2314, %v2394
  %v2396 = vpop.f32.mrb[0].mxu0
  %v2397 = vadd.f32 %v2316, %v2396
  %v2398 = vpop.f32.mrb[0].mxu0
  %v2399 = vadd.f32 %v2318, %v2398
  %v2400 = vpop.f32.mrb[0].mxu0
  %v2401 = vadd.f32 %v2320, %v2400
  %2402 = vmatprep.mubr.bf16.mxu0 0
  %2403 = vmatmul.mubr.bf16.gmra.mrb[0].mxu0 %v522
  %v2404 = vpop.f32.mrb[0].mxu0
  %v2405 = vadd.f32 %v2324, %v2404
  %v2406 = vpop.f32.mrb[0].mxu0
  %v2407 = vadd.f32 %v2326, %v2406
  %v2408 = vpop.f32.mrb[0].mxu0
  %v2409 = vadd.f32 %v2328, %v2408
  %v2410 = vpop.f32.mrb[0].mxu0
  %v2411 = vadd.f32 %v2330, %v2410
  %2412 = vmatprep.mubr.bf16.mxu0 0
  %2413 = vmatmul.mubr.bf16.gmra.mrb[0].mxu0 %v531
  %v2414 = vpop.f32.mrb[0].mxu0
  %v2415 = vadd.f32 %v2334, %v2414
  %v2416 = vpop.f32.mrb[0].mxu0
  %v2417 = vadd.f32 %v2336, %v2416
  %v2418 = vpop.f32.mrb[0].mxu0
  %v2419 = vadd.f32 %v2338, %v2418
  %v2420 = vpop.f32.mrb[0].mxu0
  %v2421 = vadd.f32 %v2340, %v2420
  %2422 = vmatprep.mubr.bf16.mxu0 0
  %2423 = vmatmul.mubr.bf16.gmra.mrb[0].mxu0 %v540
  %v2424 = vpop.f32.mrb[0].mxu0
  %v2425 = vadd.f32 %v2344, %v2424
  %v2426 = vpop.f32.mrb[0].mxu0
  %v2427 = vadd.f32 %v2346, %v2426
  %v2428 = vpop.f32.mrb[0].mxu0
  %v2429 = vpop.f32.mrb[0].mxu0
  %2430 = vdwg.mxu0
  %2431 = vmatprep.subr.bf16.mxu0 %v1453
  %2432 = vmatpush1.bf16.msra.mxu0 %v1452
  %2433 = vmatprep.subr.bf16.mxu0 %v1457
  %2434 = vmatpush1.bf16.msra.mxu0 %v1456
  %2435 = vmatprep.subr.bf16.mxu0 %v1461
  %2436 = vmatpush1.bf16.msra.mxu0 %v1460
  %2437 = vmatprep.subr.bf16.mxu0 %v1465
  %2438 = vmatpush1.bf16.msra.mxu0 %v1464
  %2439 = vmatprep.subr.bf16.mxu0 %v1469
  %2440 = vmatpush1.bf16.msra.mxu0 %v1468
  %2441 = vmatprep.subr.bf16.mxu0 %v1473
  %2442 = vmatpush1.bf16.msra.mxu0 %v1472
  %2443 = vmatprep.subr.bf16.mxu0 %v1477
  %2444 = vmatpush1.bf16.msra.mxu0 %v1476
  %2445 = vmatprep.subr.bf16.mxu0 %v1481
  %2446 = vmatpush1.bf16.msra.mxu0 %v1480
  %2447 = vmatprep.subr.bf16.mxu0 %v1485
  %2448 = vmatpush1.bf16.msra.mxu0 %v1484
  %2449 = vmatprep.subr.bf16.mxu0 %v1489
  %2450 = vmatpush1.bf16.msra.mxu0 %v1488
  %2451 = vmatprep.subr.bf16.mxu0 %v1493
  %2452 = vmatpush1.bf16.msra.mxu0 %v1492
  %2453 = vmatprep.subr.bf16.mxu0 %v1497
  %2454 = vmatpush1.bf16.msra.mxu0 %v1496
  %2455 = vmatprep.subr.bf16.mxu0 %v1501
  %2456 = vmatpush1.bf16.msra.mxu0 %v1500
  %2457 = vmatprep.subr.bf16.mxu0 %v1505
  %2458 = vmatpush1.bf16.msra.mxu0 %v1504
  %2459 = vmatprep.subr.bf16.mxu0 %v1509
  %2460 = vmatpush1.bf16.msra.mxu0 %v1508
  %2461 = vmatprep.subr.bf16.mxu0 %v1513
  %2462 = vmatpush1.bf16.msra.mxu0 %v1512
  %2463 = vmatprep.mubr.bf16.mxu0 %v497
  %2464 = vmatmul.mubr.bf16.gmra.mrb[0].mxu0 %v496
  %v2465 = vpop.f32.mrb[0].mxu0
  %v2466 = vadd.f32 %v361, %v2465
  %v2467 = vpop.f32.mrb[0].mxu0
  %v2468 = vadd.f32 %v365, %v2467
  %v2469 = vpop.f32.mrb[0].mxu0
  %v2470 = vadd.f32 %v361, %v2469
  %v2471 = vpop.f32.mrb[0].mxu0
  %v2472 = vadd.f32 %v365, %v2471
  %2473 = vmatprep.mubr.bf16.mxu0 %v506
  %2474 = vmatmul.mubr.bf16.gmra.mrb[0].mxu0 %v505
  %v2475 = vpop.f32.mrb[0].mxu0
  %v2476 = vadd.f32 %v361, %v2475
  %v2477 = vpop.f32.mrb[0].mxu0
  %v2478 = vadd.f32 %v365, %v2477
  %v2479 = vpop.f32.mrb[0].mxu0
  %v2480 = vadd.f32 %v361, %v2479
  %v2481 = vpop.f32.mrb[0].mxu0
  %v2482 = vadd.f32 %v365, %v2481
  %2483 = vmatprep.mubr.bf16.mxu0 %v515
  %2484 = vmatmul.mubr.bf16.gmra.mrb[0].mxu0 %v514
  %v2485 = vpop.f32.mrb[0].mxu0
  %v2486 = vadd.f32 %v361, %v2485
  %v2487 = vpop.f32.mrb[0].mxu0
  %v2488 = vadd.f32 %v365, %v2487
  %v2489 = vpop.f32.mrb[0].mxu0
  %v2490 = vadd.f32 %v361, %v2489
  %v2491 = vpop.f32.mrb[0].mxu0
  %v2492 = vadd.f32 %v365, %v2491
  %2493 = vmatprep.mubr.bf16.mxu0 %v524
  %2494 = vmatmul.mubr.bf16.gmra.mrb[0].mxu0 %v523
  %v2495 = vpop.f32.mrb[0].mxu0
  %v2496 = vadd.f32 %v361, %v2495
  %v2497 = vpop.f32.mrb[0].mxu0
  %v2498 = vadd.f32 %v365, %v2497
  %v2499 = vpop.f32.mrb[0].mxu0
  %v2500 = vadd.f32 %v361, %v2499
  %v2501 = vpop.f32.mrb[0].mxu0
  %v2502 = vadd.f32 %v365, %v2501
  %2503 = vmatprep.mubr.bf16.mxu0 %v533
  %2504 = vmatmul.mubr.bf16.gmra.mrb[0].mxu0 %v532
  %v2505 = vpop.f32.mrb[0].mxu0
  %v2506 = vadd.f32 %v361, %v2505
  %v2507 = vpop.f32.mrb[0].mxu0
  %v2508 = vadd.f32 %v365, %v2507
  %v2509 = vpop.f32.mrb[0].mxu0
  %v2510 = vpop.f32.mrb[0].mxu0
  %2511 = vdwg.mxu0
  %2512 = vmatprep.subr.bf16.mxu0 %v1517
  %2513 = vmatpush1.bf16.msra.mxu0 %v1516
  %2514 = vmatprep.subr.bf16.mxu0 %v1521
  %2515 = vmatpush1.bf16.msra.mxu0 %v1520
  %2516 = vmatprep.subr.bf16.mxu0 %v1525
  %2517 = vmatpush1.bf16.msra.mxu0 %v1524
  %2518 = vmatprep.subr.bf16.mxu0 %v1529
  %2519 = vmatpush1.bf16.msra.mxu0 %v1528
  %2520 = vmatprep.subr.bf16.mxu0 %v1533
  %2521 = vmatpush1.bf16.msra.mxu0 %v1532
  %2522 = vmatprep.subr.bf16.mxu0 %v1537
  %2523 = vmatpush1.bf16.msra.mxu0 %v1536
  %2524 = vmatprep.subr.bf16.mxu0 %v1541
  %2525 = vmatpush1.bf16.msra.mxu0 %v1540
  %2526 = vmatprep.subr.bf16.mxu0 %v1545
  %2527 = vmatpush1.bf16.msra.mxu0 %v1544
  %2528 = vmatprep.subr.bf16.mxu0 %v1549
  %2529 = vmatpush1.bf16.msra.mxu0 %v1548
  %2530 = vmatprep.subr.bf16.mxu0 %v1553
  %2531 = vmatpush1.bf16.msra.mxu0 %v1552
  %2532 = vmatprep.subr.bf16.mxu0 %v1557
  %2533 = vmatpush1.bf16.msra.mxu0 %v1556
  %2534 = vmatprep.subr.bf16.mxu0 %v1561
  %2535 = vmatpush1.bf16.msra.mxu0 %v1560
  %2536 = vmatprep.subr.bf16.mxu0 %v1565
  %2537 = vmatpush1.bf16.msra.mxu0 %v1564
  %2538 = vmatprep.subr.bf16.mxu0 %v1569
  %2539 = vmatpush1.bf16.msra.mxu0 %v1568
  %2540 = vmatprep.subr.bf16.mxu0 %v1573
  %2541 = vmatpush1.bf16.msra.mxu0 %v1572
  %2542 = vmatprep.subr.bf16.mxu0 %v1577
  %2543 = vmatpush1.bf16.msra.mxu0 %v1576
  %2544 = vmatprep.mubr.bf16.mxu0 %v499
  %2545 = vmatmul.mubr.bf16.gmra.mrb[0].mxu0 %v498
  %v2546 = vpop.f32.mrb[0].mxu0
  %v2547 = vadd.f32 %v2466, %v2546
  %v2548 = vpop.f32.mrb[0].mxu0
  %v2549 = vadd.f32 %v2468, %v2548
  %v2550 = vpop.f32.mrb[0].mxu0
  %v2551 = vadd.f32 %v2470, %v2550
  %v2552 = vpop.f32.mrb[0].mxu0
  %v2553 = vadd.f32 %v2472, %v2552
  %2554 = vmatprep.mubr.bf16.mxu0 %v508
  %2555 = vmatmul.mubr.bf16.gmra.mrb[0].mxu0 %v507
  %v2556 = vpop.f32.mrb[0].mxu0
  %v2557 = vadd.f32 %v2476, %v2556
  %v2558 = vpop.f32.mrb[0].mxu0
  %v2559 = vadd.f32 %v2478, %v2558
  %v2560 = vpop.f32.mrb[0].mxu0
  %v2561 = vadd.f32 %v2480, %v2560
  %v2562 = vpop.f32.mrb[0].mxu0
  %v2563 = vadd.f32 %v2482, %v2562
  %2564 = vmatprep.mubr.bf16.mxu0 %v517
  %2565 = vmatmul.mubr.bf16.gmra.mrb[0].mxu0 %v516
  %v2566 = vpop.f32.mrb[0].mxu0
  %v2567 = vadd.f32 %v2486, %v2566
  %v2568 = vpop.f32.mrb[0].mxu0
  %v2569 = vadd.f32 %v2488, %v2568
  %v2570 = vpop.f32.mrb[0].mxu0
  %v2571 = vadd.f32 %v2490, %v2570
  %v2572 = vpop.f32.mrb[0].mxu0
  %v2573 = vadd.f32 %v2492, %v2572
  %2574 = vmatprep.mubr.bf16.mxu0 %v526
  %2575 = vmatmul.mubr.bf16.gmra.mrb[0].mxu0 %v525
  %v2576 = vpop.f32.mrb[0].mxu0
  %v2577 = vadd.f32 %v2496, %v2576
  %v2578 = vpop.f32.mrb[0].mxu0
  %v2579 = vadd.f32 %v2498, %v2578
  %v2580 = vpop.f32.mrb[0].mxu0
  %v2581 = vadd.f32 %v2500, %v2580
  %v2582 = vpop.f32.mrb[0].mxu0
  %v2583 = vadd.f32 %v2502, %v2582
  %2584 = vmatprep.mubr.bf16.mxu0 %v535
  %2585 = vmatmul.mubr.bf16.gmra.mrb[0].mxu0 %v534
  %v2586 = vpop.f32.mrb[0].mxu0
  %v2587 = vadd.f32 %v2506, %v2586
  %v2588 = vpop.f32.mrb[0].mxu0
  %v2589 = vadd.f32 %v2508, %v2588
  %v2590 = vpop.f32.mrb[0].mxu0
  %v2591 = vpop.f32.mrb[0].mxu0
  %2592 = vdwg.mxu0
  %2593 = vmatprep.subr.bf16.mxu0 %v1581
  %2594 = vmatpush1.bf16.msra.mxu0 %v1580
  %2595 = vmatprep.subr.bf16.mxu0 %v1585
  %2596 = vmatpush1.bf16.msra.mxu0 %v1584
  %2597 = vmatprep.subr.bf16.mxu0 %v1589
  %2598 = vmatpush1.bf16.msra.mxu0 %v1588
  %2599 = vmatprep.subr.bf16.mxu0 %v1593
  %2600 = vmatpush1.bf16.msra.mxu0 %v1592
  %2601 = vmatprep.subr.bf16.mxu0 %v1597
  %2602 = vmatpush1.bf16.msra.mxu0 %v1596
  %2603 = vmatprep.subr.bf16.mxu0 %v1601
  %2604 = vmatpush1.bf16.msra.mxu0 %v1600
  %2605 = vmatprep.subr.bf16.mxu0 %v1605
  %2606 = vmatpush1.bf16.msra.mxu0 %v1604
  %2607 = vmatprep.subr.bf16.mxu0 %v1609
  %2608 = vmatpush1.bf16.msra.mxu0 %v1608
  %2609 = vmatprep.subr.bf16.mxu0 %v1613
  %2610 = vmatpush1.bf16.msra.mxu0 %v1612
  %2611 = vmatprep.subr.bf16.mxu0 %v1617
  %2612 = vmatpush1.bf16.msra.mxu0 %v1616
  %2613 = vmatprep.subr.bf16.mxu0 %v1621
  %2614 = vmatpush1.bf16.msra.mxu0 %v1620
  %2615 = vmatprep.subr.bf16.mxu0 %v1625
  %2616 = vmatpush1.bf16.msra.mxu0 %v1624
  %2617 = vmatprep.subr.bf16.mxu0 %v1629
  %2618 = vmatpush1.bf16.msra.mxu0 %v1628
  %2619 = vmatprep.subr.bf16.mxu0 %v1633
  %2620 = vmatpush1.bf16.msra.mxu0 %v1632
  %2621 = vmatprep.subr.bf16.mxu0 %v1637
  %2622 = vmatpush1.bf16.msra.mxu0 %v1636
  %2623 = vmatprep.subr.bf16.mxu0 %v1641
  %2624 = vmatpush1.bf16.msra.mxu0 %v1640
  %2625 = vmatprep.mubr.bf16.mxu0 %v501
  %2626 = vmatmul.mubr.bf16.gmra.mrb[0].mxu0 %v500
  %v2627 = vpop.f32.mrb[0].mxu0
  %v2628 = vadd.f32 %v2547, %v2627
  %v2629 = vpop.f32.mrb[0].mxu0
  %v2630 = vadd.f32 %v2549, %v2629
  %v2631 = vpop.f32.mrb[0].mxu0
  %v2632 = vadd.f32 %v2551, %v2631
  %v2633 = vpop.f32.mrb[0].mxu0
  %v2634 = vadd.f32 %v2553, %v2633
  %2635 = vmatprep.mubr.bf16.mxu0 %v510
  %2636 = vmatmul.mubr.bf16.gmra.mrb[0].mxu0 %v509
  %v2637 = vpop.f32.mrb[0].mxu0
  %v2638 = vadd.f32 %v2557, %v2637
  %v2639 = vpop.f32.mrb[0].mxu0
  %v2640 = vadd.f32 %v2559, %v2639
  %v2641 = vpop.f32.mrb[0].mxu0
  %v2642 = vadd.f32 %v2561, %v2641
  %v2643 = vpop.f32.mrb[0].mxu0
  %v2644 = vadd.f32 %v2563, %v2643
  %2645 = vmatprep.mubr.bf16.mxu0 %v519
  %2646 = vmatmul.mubr.bf16.gmra.mrb[0].mxu0 %v518
  %v2647 = vpop.f32.mrb[0].mxu0
  %v2648 = vadd.f32 %v2567, %v2647
  %v2649 = vpop.f32.mrb[0].mxu0
  %v2650 = vadd.f32 %v2569, %v2649
  %v2651 = vpop.f32.mrb[0].mxu0
  %v2652 = vadd.f32 %v2571, %v2651
  %v2653 = vpop.f32.mrb[0].mxu0
  %v2654 = vadd.f32 %v2573, %v2653
  %2655 = vmatprep.mubr.bf16.mxu0 %v528
  %2656 = vmatmul.mubr.bf16.gmra.mrb[0].mxu0 %v527
  %v2657 = vpop.f32.mrb[0].mxu0
  %v2658 = vadd.f32 %v2577, %v2657
  %v2659 = vpop.f32.mrb[0].mxu0
  %v2660 = vadd.f32 %v2579, %v2659
  %v2661 = vpop.f32.mrb[0].mxu0
  %v2662 = vadd.f32 %v2581, %v2661
  %v2663 = vpop.f32.mrb[0].mxu0
  %v2664 = vadd.f32 %v2583, %v2663
  %2665 = vmatprep.mubr.bf16.mxu0 %v537
  %2666 = vmatmul.mubr.bf16.gmra.mrb[0].mxu0 %v536
  %v2667 = vpop.f32.mrb[0].mxu0
  %v2668 = vadd.f32 %v2587, %v2667
  %v2669 = vpop.f32.mrb[0].mxu0
  %v2670 = vadd.f32 %v2589, %v2669
  %v2671 = vpop.f32.mrb[0].mxu0
  %v2672 = vpop.f32.mrb[0].mxu0
  %2673 = vdwg.mxu0
  %2674 = vmatprep.subr.bf16.mxu0 %v1645
  %2675 = vmatpush1.bf16.msra.mxu0 %v1644
  %2676 = vmatprep.subr.bf16.mxu0 %v1649
  %2677 = vmatpush1.bf16.msra.mxu0 %v1648
  %2678 = vmatprep.subr.bf16.mxu0 %v1653
  %2679 = vmatpush1.bf16.msra.mxu0 %v1652
  %2680 = vmatprep.subr.bf16.mxu0 %v1657
  %2681 = vmatpush1.bf16.msra.mxu0 %v1656
  %2682 = vmatprep.subr.bf16.mxu0 %v1661
  %2683 = vmatpush1.bf16.msra.mxu0 %v1660
  %2684 = vmatprep.subr.bf16.mxu0 %v1665
  %2685 = vmatpush1.bf16.msra.mxu0 %v1664
  %2686 = vmatprep.subr.bf16.mxu0 %v1669
  %2687 = vmatpush1.bf16.msra.mxu0 %v1668
  %2688 = vmatprep.subr.bf16.mxu0 %v1673
  %2689 = vmatpush1.bf16.msra.mxu0 %v1672
  %2690 = vmatprep.subr.bf16.mxu0 %v1677
  %2691 = vmatpush1.bf16.msra.mxu0 %v1676
  %2692 = vmatprep.subr.bf16.mxu0 %v1681
  %2693 = vmatpush1.bf16.msra.mxu0 %v1680
  %2694 = vmatprep.subr.bf16.mxu0 %v1685
  %2695 = vmatpush1.bf16.msra.mxu0 %v1684
  %2696 = vmatprep.subr.bf16.mxu0 %v1689
  %2697 = vmatpush1.bf16.msra.mxu0 %v1688
  %2698 = vmatprep.subr.bf16.mxu0 %v1693
  %2699 = vmatpush1.bf16.msra.mxu0 %v1692
  %2700 = vmatprep.subr.bf16.mxu0 %v1697
  %2701 = vmatpush1.bf16.msra.mxu0 %v1696
  %2702 = vmatprep.subr.bf16.mxu0 %v1701
  %2703 = vmatpush1.bf16.msra.mxu0 %v1700
  %2704 = vmatprep.subr.bf16.mxu0 %v1705
  %2705 = vmatpush1.bf16.msra.mxu0 %v1704
  %2706 = vmatprep.mubr.bf16.mxu0 %v503
  %2707 = vmatmul.mubr.bf16.gmra.mrb[0].mxu0 %v502
  %v2708 = vpop.f32.mrb[0].mxu0
  %v2709 = vadd.f32 %v2628, %v2708
  %v2710 = vpop.f32.mrb[0].mxu0
  %v2711 = vadd.f32 %v2630, %v2710
  %v2712 = vpop.f32.mrb[0].mxu0
  %v2713 = vadd.f32 %v2632, %v2712
  %v2714 = vpop.f32.mrb[0].mxu0
  %v2715 = vadd.f32 %v2634, %v2714
  %2716 = vmatprep.mubr.bf16.mxu0 %v512
  %2717 = vmatmul.mubr.bf16.gmra.mrb[0].mxu0 %v511
  %v2718 = vpop.f32.mrb[0].mxu0
  %v2719 = vadd.f32 %v2638, %v2718
  %v2720 = vpop.f32.mrb[0].mxu0
  %v2721 = vadd.f32 %v2640, %v2720
  %v2722 = vpop.f32.mrb[0].mxu0
  %v2723 = vadd.f32 %v2642, %v2722
  %v2724 = vpop.f32.mrb[0].mxu0
  %v2725 = vadd.f32 %v2644, %v2724
  %2726 = vmatprep.mubr.bf16.mxu0 %v521
  %2727 = vmatmul.mubr.bf16.gmra.mrb[0].mxu0 %v520
  %v2728 = vpop.f32.mrb[0].mxu0
  %v2729 = vadd.f32 %v2648, %v2728
  %v2730 = vpop.f32.mrb[0].mxu0
  %v2731 = vadd.f32 %v2650, %v2730
  %v2732 = vpop.f32.mrb[0].mxu0
  %v2733 = vadd.f32 %v2652, %v2732
  %v2734 = vpop.f32.mrb[0].mxu0
  %v2735 = vadd.f32 %v2654, %v2734
  %2736 = vmatprep.mubr.bf16.mxu0 %v530
  %2737 = vmatmul.mubr.bf16.gmra.mrb[0].mxu0 %v529
  %v2738 = vpop.f32.mrb[0].mxu0
  %v2739 = vadd.f32 %v2658, %v2738
  %v2740 = vpop.f32.mrb[0].mxu0
  %v2741 = vadd.f32 %v2660, %v2740
  %v2742 = vpop.f32.mrb[0].mxu0
  %v2743 = vadd.f32 %v2662, %v2742
  %v2744 = vpop.f32.mrb[0].mxu0
  %v2745 = vadd.f32 %v2664, %v2744
  %2746 = vmatprep.mubr.bf16.mxu0 %v539
  %2747 = vmatmul.mubr.bf16.gmra.mrb[0].mxu0 %v538
  %v2748 = vpop.f32.mrb[0].mxu0
  %v2749 = vadd.f32 %v2668, %v2748
  %v2750 = vpop.f32.mrb[0].mxu0
  %v2751 = vadd.f32 %v2670, %v2750
  %v2752 = vpop.f32.mrb[0].mxu0
  %v2753 = vpop.f32.mrb[0].mxu0
  %2754 = vdwg.mxu0
  %2755 = vmatprep.subr.bf16.mxu0 %v1709
  %2756 = vmatpush1.bf16.msra.mxu0 %v1708
  %2757 = vmatprep.subr.bf16.mxu0 %v1713
  %2758 = vmatpush1.bf16.msra.mxu0 %v1712
  %2759 = vmatprep.subr.bf16.mxu0 %v1717
  %2760 = vmatpush1.bf16.msra.mxu0 %v1716
  %2761 = vmatprep.subr.bf16.mxu0 %v1721
  %2762 = vmatpush1.bf16.msra.mxu0 %v1720
  %2763 = vmatprep.subr.bf16.mxu0 %v1725
  %2764 = vmatpush1.bf16.msra.mxu0 %v1724
  %2765 = vmatprep.subr.bf16.mxu0 %v1729
  %2766 = vmatpush1.bf16.msra.mxu0 %v1728
  %2767 = vmatprep.subr.bf16.mxu0 %v1733
  %2768 = vmatpush1.bf16.msra.mxu0 %v1732
  %2769 = vmatprep.subr.bf16.mxu0 %v1737
  %2770 = vmatpush1.bf16.msra.mxu0 %v1736
  %2771 = vmatprep.subr.bf16.mxu0 0
  %2772 = vmatpush1.bf16.msra.mxu0 0
  %2773 = vmatprep.subr.bf16.mxu0 0
  %2774 = vmatpush1.bf16.msra.mxu0 0
  %2775 = vmatprep.subr.bf16.mxu0 0
  %2776 = vmatpush1.bf16.msra.mxu0 0
  %2777 = vmatprep.subr.bf16.mxu0 0
  %2778 = vmatpush1.bf16.msra.mxu0 0
  %2779 = vmatprep.subr.bf16.mxu0 0
  %2780 = vmatpush1.bf16.msra.mxu0 0
  %2781 = vmatprep.subr.bf16.mxu0 0
  %2782 = vmatpush1.bf16.msra.mxu0 0
  %2783 = vmatprep.subr.bf16.mxu0 0
  %2784 = vmatpush1.bf16.msra.mxu0 0
  %2785 = vmatprep.subr.bf16.mxu0 0
  %2786 = vmatpush1.bf16.msra.mxu0 0
  %2787 = vmatprep.mubr.bf16.mxu0 0
  %2788 = vmatmul.mubr.bf16.gmra.mrb[0].mxu0 %v504
  %v2789 = vpop.f32.mrb[0].mxu0
  %v2790 = vadd.f32 %v2709, %v2789
  %v2791 = vpop.f32.mrb[0].mxu0
  %v2792 = vadd.f32 %v2711, %v2791
  %v2793 = vpop.f32.mrb[0].mxu0
  %v2794 = vadd.f32 %v2713, %v2793
  %v2795 = vpop.f32.mrb[0].mxu0
  %v2796 = vadd.f32 %v2715, %v2795
  %2797 = vmatprep.mubr.bf16.mxu0 0
  %2798 = vmatmul.mubr.bf16.gmra.mrb[0].mxu0 %v513
  %v2799 = vpop.f32.mrb[0].mxu0
  %v2800 = vadd.f32 %v2719, %v2799
  %v2801 = vpop.f32.mrb[0].mxu0
  %v2802 = vadd.f32 %v2721, %v2801
  %v2803 = vpop.f32.mrb[0].mxu0
  %v2804 = vadd.f32 %v2723, %v2803
  %v2805 = vpop.f32.mrb[0].mxu0
  %v2806 = vadd.f32 %v2725, %v2805
  %2807 = vmatprep.mubr.bf16.mxu0 0
  %2808 = vmatmul.mubr.bf16.gmra.mrb[0].mxu0 %v522
  %v2809 = vpop.f32.mrb[0].mxu0
  %v2810 = vadd.f32 %v2729, %v2809
  %v2811 = vpop.f32.mrb[0].mxu0
  %v2812 = vadd.f32 %v2731, %v2811
  %v2813 = vpop.f32.mrb[0].mxu0
  %v2814 = vadd.f32 %v2733, %v2813
  %v2815 = vpop.f32.mrb[0].mxu0
  %v2816 = vadd.f32 %v2735, %v2815
  %2817 = vmatprep.mubr.bf16.mxu0 0
  %2818 = vmatmul.mubr.bf16.gmra.mrb[0].mxu0 %v531
  %v2819 = vpop.f32.mrb[0].mxu0
  %v2820 = vadd.f32 %v2739, %v2819
  %v2821 = vpop.f32.mrb[0].mxu0
  %v2822 = vadd.f32 %v2741, %v2821
  %v2823 = vpop.f32.mrb[0].mxu0
  %v2824 = vadd.f32 %v2743, %v2823
  %v2825 = vpop.f32.mrb[0].mxu0
  %v2826 = vadd.f32 %v2745, %v2825
  %2827 = vmatprep.mubr.bf16.mxu0 0
  %2828 = vmatmul.mubr.bf16.gmra.mrb[0].mxu0 %v540
  %v2829 = vpop.f32.mrb[0].mxu0
  %v2830 = vadd.f32 %v2749, %v2829
  %v2831 = vpop.f32.mrb[0].mxu0
  %v2832 = vadd.f32 %v2751, %v2831
  %v2833 = vpop.f32.mrb[0].mxu0
  %v2834 = vpop.f32.mrb[0].mxu0
  %2835 = vdwg.mxu0
  %v2836 = vmax.f32 %v2385, 0.0
  %v2837 = vmax.f32 %v2387, 0.0
  %v2838 = vmax.f32 %v2790, 0.0
  %v2839 = vmax.f32 %v2792, 0.0
  %v2840 = vmax.f32 %v2389, 0.0
  %v2841 = vmax.f32 %v2391, 0.0
  %v2842 = vmax.f32 %v2794, 0.0
  %v2843 = vmax.f32 %v2796, 0.0
  %v2844 = vmax.f32 %v2395, 0.0
  %v2845 = vmax.f32 %v2397, 0.0
  %v2846 = vmax.f32 %v2800, 0.0
  %v2847 = vmax.f32 %v2802, 0.0
  %v2848 = vmax.f32 %v2399, 0.0
  %v2849 = vmax.f32 %v2401, 0.0
  %v2850 = vmax.f32 %v2804, 0.0
  %v2851 = vmax.f32 %v2806, 0.0
  %v2852 = vmax.f32 %v2405, 0.0
  %v2853 = vmax.f32 %v2407, 0.0
  %v2854 = vmax.f32 %v2810, 0.0
  %v2855 = vmax.f32 %v2812, 0.0
  %v2856 = vmax.f32 %v2409, 0.0
  %v2857 = vmax.f32 %v2411, 0.0
  %v2858 = vmax.f32 %v2814, 0.0
  %v2859 = vmax.f32 %v2816, 0.0
  %v2860 = vmax.f32 %v2415, 0.0
  %v2861 = vmax.f32 %v2417, 0.0
  %v2862 = vmax.f32 %v2820, 0.0
  %v2863 = vmax.f32 %v2822, 0.0
  %v2864 = vmax.f32 %v2419, 0.0
  %v2865 = vmax.f32 %v2421, 0.0
  %v2866 = vmax.f32 %v2824, 0.0
  %v2867 = vmax.f32 %v2826, 0.0
  %v2868 = vmax.f32 %v2425, 0.0
  %v2869 = vmax.f32 %v2427, 0.0
  %v2870 = vmax.f32 %v2830, 0.0
  %v2871 = vmax.f32 %v2832, 0.0
  %2872 = vst [vmem:[%s3] sm:$0xff] %v2836
  %2873 = vst [vmem:[%s3 + $0x8] sm:$0xff] %v2837
  %2874 = vst [vmem:[%s3 + $0x10] sm:$0xff] %v2838
  %2875 = vst [vmem:[%s3 + $0x18] sm:$0xff] %v2839
  %2876 = vst [vmem:[%s3 + $0x20] sm:$0xff] %v2840
  %2877 = vst [vmem:[%s3 + $0x28] sm:$0xff] %v2841
  %2878 = vst [vmem:[%s3 + $0x30] sm:$0xff] %v2842
  %2879 = vst [vmem:[%s3 + $0x38] sm:$0xff] %v2843
  %2880 = vst [vmem:[%s3 + $0x40] sm:$0xff] %v2844
  %2881 = vst [vmem:[%s3 + $0x48] sm:$0xff] %v2845
  %2882 = vst [vmem:[%s3 + $0x50] sm:$0xff] %v2846
  %2883 = vst [vmem:[%s3 + $0x58] sm:$0xff] %v2847
  %2884 = vst [vmem:[%s3 + $0x60] sm:$0xff] %v2848
  %2885 = vst [vmem:[%s3 + $0x68] sm:$0xff] %v2849
  %2886 = vst [vmem:[%s3 + $0x70] sm:$0xff] %v2850
  %2887 = vst [vmem:[%s3 + $0x78] sm:$0xff] %v2851
  %2888 = vst [vmem:[%s3 + $0x80] sm:$0xff] %v2852
  %2889 = vst [vmem:[%s3 + $0x88] sm:$0xff] %v2853
  %2890 = vst [vmem:[%s3 + $0x90] sm:$0xff] %v2854
  %2891 = vst [vmem:[%s3 + $0x98] sm:$0xff] %v2855
  %2892 = vst [vmem:[%s3 + $0xa0] sm:$0xff] %v2856
  %2893 = vst [vmem:[%s3 + $0xa8] sm:$0xff] %v2857
  %2894 = vst [vmem:[%s3 + $0xb0] sm:$0xff] %v2858
  %2895 = vst [vmem:[%s3 + $0xb8] sm:$0xff] %v2859
  %2896 = vst [vmem:[%s3 + $0xc0] sm:$0xff] %v2860
  %2897 = vst [vmem:[%s3 + $0xc8] sm:$0xff] %v2861
  %2898 = vst [vmem:[%s3 + $0xd0] sm:$0xff] %v2862
  %2899 = vst [vmem:[%s3 + $0xd8] sm:$0xff] %v2863
  %2900 = vst [vmem:[%s3 + $0xe0] sm:$0xff] %v2864
  %2901 = vst [vmem:[%s3 + $0xe8] sm:$0xff] %v2865
  %2902 = vst [vmem:[%s3 + $0xf0] sm:$0xff] %v2866
  %2903 = vst [vmem:[%s3 + $0xf8] sm:$0xff] %v2867
  %2904 = vst [vmem:[%s3 + $0x100] sm:$0xff] %v2868
  %2905 = vst [vmem:[%s3 + $0x108] sm:$0xff] %v2869
  %2906 = vst [vmem:[%s3 + $0x110] sm:$0xff] %v2870
  %2907 = vst [vmem:[%s3 + $0x118] sm:$0xff] %v2871
  // Predicated region
  $region14: #{_lambda_.5} parent=0 // pred_check
    _
  $region15: #{_lambda_.5} parent=0 // pred_check_branch
    %2909 = sbr.rel (0) target = $region17
  $region16: #{_lambda_.5} parent=0 // pred_region
    _
  $region17: #{_lambda_.5} parent=0 // pred_fallthru
    _
  // Predicated region
  $region18: #{_lambda_.5} parent=0 // pred_check
    _
  $region19: #{_lambda_.5} parent=0 // pred_check_branch
    %2911 = sbr.rel (0) target = $region21
  $region20: #{_lambda_.5} parent=0 // pred_region
    _
  $region21: #{_lambda_.5} parent=0 // pred_fallthru
    _

// kernel: _lambda_.6
$region0: #{_lambda_.6}
  #allocation0 [shape = 'u32[]', space=smem, size = 0x4, offset = 0x4, fixed_abs, tag = 'smem constant byte address 0x4 - core index']
  #allocation1 [shape = 'u32[144,128]{1,0:T(1,128)}', space=vmem, size = 0x12000, scoped, tag = 'internal scratch']
  %s0 = inlined_call_operand.vmem [shape: bf16[72,512], index: 0, kind: input, shape index: {}]
  %s1 = inlined_call_operand.vmem [shape: bf16[512,128], index: 1, kind: input, shape index: {}]
  %s2 = inlined_call_operand.vmem [shape: f32[1,128], index: 2, kind: input, shape index: {}]
  %s3 = inlined_call_operand.vmem [shape: f32[72,128], index: 3, kind: output, shape index: {}]
  %s4 = sld [smem:[#allocation0]]
  $region22: #{_lambda_.6} parent=0
    _
  %s6 = ssub.s32 1, %s4
  %s7 = scalar_select 0, %s6, %s4
  // Predicated region
  $region2: #{_lambda_.6} parent=0 // pred_check
    _
  $region3: #{_lambda_.6} parent=0 // pred_check_branch
    %9 = sbr.rel (0) target = $region5
  $region4: #{_lambda_.6} parent=0 // pred_region
    _
  $region5: #{_lambda_.6} parent=0 // pred_fallthru
    _
  // Predicated region
  $region6: #{_lambda_.6} parent=0 // pred_check
    _
  $region7: #{_lambda_.6} parent=0 // pred_check_branch
    %11 = sbr.rel (0) target = $region9
  $region8: #{_lambda_.6} parent=0 // pred_region
    _
  $region9: #{_lambda_.6} parent=0 // pred_fallthru
    _
  // Predicated region
  $region10: #{_lambda_.6} parent=0 // pred_check
    _
  $region11: #{_lambda_.6} parent=0 // pred_check_branch
    %13 = sbr.rel (0) target = $region13
  $region12: #{_lambda_.6} parent=0 // pred_region
    _
  $region13: #{_lambda_.6} parent=0 // pred_fallthru
    _
  %v15 = vld [vmem:[%s0] sm:$0xff]
  %v16 = vld [vmem:[%s0 + $0x8] sm:$0xff]
  %v17 = vld [vmem:[%s0 + $0x10] sm:$0xff]
  %v18 = vld [vmem:[%s0 + $0x18] sm:$0xff]
  %v19 = vld [vmem:[%s0 + $0x20] sm:$0xff]
  %v20 = vld [vmem:[%s0 + $0x28] sm:$0xff]
  %v21 = vld [vmem:[%s0 + $0x30] sm:$0xff]
  %v22 = vld [vmem:[%s0 + $0x38] sm:$0xff]
  %v23 = vld [vmem:[%s0 + $0x40] sm:$0xff]
  %v24 = vld [vmem:[%s0 + $0x48] sm:$0xff]
  %v25 = vld [vmem:[%s0 + $0x50] sm:$0xff]
  %v26 = vld [vmem:[%s0 + $0x58] sm:$0xff]
  %v27 = vld [vmem:[%s0 + $0x60] sm:$0xff]
  %v28 = vld [vmem:[%s0 + $0x68] sm:$0xff]
  %v29 = vld [vmem:[%s0 + $0x70] sm:$0xff]
  %v30 = vld [vmem:[%s0 + $0x78] sm:$0xff]
  %v31 = vld [vmem:[%s0 + $0x80] sm:$0xff]
  %v32 = vld [vmem:[%s0 + $0x88] sm:$0xff]
  %v33 = vld [vmem:[%s1] sm:$0xf]
  %v34 = vld [vmem:[%s1 + $0x4] sm:$0xf]
  %v35 = vld [vmem:[%s1 + $0x8] sm:$0xf]
  %v36 = vld [vmem:[%s1 + $0xc] sm:$0xf]
  %v37 = vld [vmem:[%s1 + $0x10] sm:$0xf]
  %v38 = vld [vmem:[%s1 + $0x14] sm:$0xf]
  %v39 = vld [vmem:[%s1 + $0x18] sm:$0xf]
  %v40 = vld [vmem:[%s1 + $0x1c] sm:$0xf]
  %v41 = vld [vmem:[%s1 + $0x20] sm:$0xf]
  %v42 = vld [vmem:[%s1 + $0x24] sm:$0xf]
  %v43 = vld [vmem:[%s1 + $0x28] sm:$0xf]
  %v44 = vld [vmem:[%s1 + $0x2c] sm:$0xf]
  %v45 = vld [vmem:[%s1 + $0x30] sm:$0xf]
  %v46 = vld [vmem:[%s1 + $0x34] sm:$0xf]
  %v47 = vld [vmem:[%s1 + $0x38] sm:$0xf]
  %v48 = vld [vmem:[%s1 + $0x3c] sm:$0xf]
  %v49 = vld [vmem:[%s1 + $0x40] sm:$0xf]
  %v50 = vld [vmem:[%s1 + $0x44] sm:$0xf]
  %v51 = vld [vmem:[%s1 + $0x48] sm:$0xf]
  %v52 = vld [vmem:[%s1 + $0x4c] sm:$0xf]
  %v53 = vld [vmem:[%s1 + $0x50] sm:$0xf]
  %v54 = vld [vmem:[%s1 + $0x54] sm:$0xf]
  %v55 = vld [vmem:[%s1 + $0x58] sm:$0xf]
  %v56 = vld [vmem:[%s1 + $0x5c] sm:$0xf]
  %v57 = vld [vmem:[%s1 + $0x60] sm:$0xf]
  %v58 = vld [vmem:[%s1 + $0x64] sm:$0xf]
  %v59 = vld [vmem:[%s1 + $0x68] sm:$0xf]
  %v60 = vld [vmem:[%s1 + $0x6c] sm:$0xf]
  %v61 = vld [vmem:[%s1 + $0x70] sm:$0xf]
  %v62 = vld [vmem:[%s1 + $0x74] sm:$0xf]
  %v63 = vld [vmem:[%s1 + $0x78] sm:$0xf]
  %v64 = vld [vmem:[%s1 + $0x7c] sm:$0xf]
  %v65 = vld [vmem:[%s1 + $0x80] sm:$0xf]
  %v66 = vld [vmem:[%s1 + $0x84] sm:$0xf]
  %v67 = vld [vmem:[%s1 + $0x88] sm:$0xf]
  %v68 = vld [vmem:[%s1 + $0x8c] sm:$0xf]
  %v69 = vld [vmem:[%s1 + $0x90] sm:$0xf]
  %v70 = vld [vmem:[%s1 + $0x94] sm:$0xf]
  %v71 = vld [vmem:[%s1 + $0x98] sm:$0xf]
  %v72 = vld [vmem:[%s1 + $0x9c] sm:$0xf]
  %v73 = vld [vmem:[%s1 + $0xa0] sm:$0xf]
  %v74 = vld [vmem:[%s1 + $0xa4] sm:$0xf]
  %v75 = vld [vmem:[%s1 + $0xa8] sm:$0xf]
  %v76 = vld [vmem:[%s1 + $0xac] sm:$0xf]
  %v77 = vld [vmem:[%s1 + $0xb0] sm:$0xf]
  %v78 = vld [vmem:[%s1 + $0xb4] sm:$0xf]
  %v79 = vld [vmem:[%s1 + $0xb8] sm:$0xf]
  %v80 = vld [vmem:[%s1 + $0xbc] sm:$0xf]
  %v81 = vld [vmem:[%s1 + $0xc0] sm:$0xf]
  %v82 = vld [vmem:[%s1 + $0xc4] sm:$0xf]
  %v83 = vld [vmem:[%s1 + $0xc8] sm:$0xf]
  %v84 = vld [vmem:[%s1 + $0xcc] sm:$0xf]
  %v85 = vld [vmem:[%s1 + $0xd0] sm:$0xf]
  %v86 = vld [vmem:[%s1 + $0xd4] sm:$0xf]
  %v87 = vld [vmem:[%s1 + $0xd8] sm:$0xf]
  %v88 = vld [vmem:[%s1 + $0xdc] sm:$0xf]
  %v89 = vld [vmem:[%s1 + $0xe0] sm:$0xf]
  %v90 = vld [vmem:[%s1 + $0xe4] sm:$0xf]
  %v91 = vld [vmem:[%s1 + $0xe8] sm:$0xf]
  %v92 = vld [vmem:[%s1 + $0xec] sm:$0xf]
  %v93 = vld [vmem:[%s1 + $0xf0] sm:$0xf]
  %v94 = vld [vmem:[%s1 + $0xf4] sm:$0xf]
  %v95 = vld [vmem:[%s1 + $0xf8] sm:$0xf]
  %v96 = vld [vmem:[%s1 + $0xfc] sm:$0xf]
  %v97 = vld [vmem:[%s2] sm:$0x1]
  %v99 = vlaneseq
  %v100 = vshrl.u32 %v99, 7
  %v101 = vsub.s32 0, %v100
  %v102 = vrot.slane %v97, %v101
  %v122 = vunpack.c.l.b16 %v15
  %v123 = vunpack.c.h.b16 %v15
  %v124 = vunpack.c.l.b16 %v16
  %v125 = vunpack.c.h.b16 %v16
  %v126 = vunpack.c.l.b16 %v17
  %v127 = vunpack.c.h.b16 %v17
  %v128 = vunpack.c.l.b16 %v18
  %v129 = vunpack.c.h.b16 %v18
  %v130 = vunpack.c.l.b16 %v19
  %v131 = vunpack.c.h.b16 %v19
  %v132 = vunpack.c.l.b16 %v20
  %v133 = vunpack.c.h.b16 %v20
  %v134 = vunpack.c.l.b16 %v21
  %v135 = vunpack.c.h.b16 %v21
  %v136 = vunpack.c.l.b16 %v22
  %v137 = vunpack.c.h.b16 %v22
  %v138 = vunpack.c.l.b16 %v23
  %v139 = vunpack.c.h.b16 %v23
  %v140 = vunpack.c.l.b16 %v24
  %v141 = vunpack.c.h.b16 %v24
  %v142 = vunpack.c.l.b16 %v25
  %v143 = vunpack.c.h.b16 %v25
  %v144 = vunpack.c.l.b16 %v26
  %v145 = vunpack.c.h.b16 %v26
  %v146 = vunpack.c.l.b16 %v27
  %v147 = vunpack.c.h.b16 %v27
  %v148 = vunpack.c.l.b16 %v28
  %v149 = vunpack.c.h.b16 %v28
  %v150 = vunpack.c.l.b16 %v29
  %v151 = vunpack.c.h.b16 %v29
  %v152 = vunpack.c.l.b16 %v30
  %v153 = vunpack.c.h.b16 %v30
  %v154 = vunpack.c.l.b16 %v31
  %v155 = vunpack.c.h.b16 %v31
  %v156 = vunpack.c.l.b16 %v32
  %v157 = vunpack.c.h.b16 %v32
  %v158 = vpack.c.b16 %v126, %v122
  %v159 = vpack.c.b16 %v127, %v123
  %v160 = vpack.c.b16 %v128, %v124
  %v161 = vpack.c.b16 %v129, %v125
  %v162 = vpack.c.b16 %v134, %v130
  %v163 = vpack.c.b16 %v135, %v131
  %v164 = vpack.c.b16 %v136, %v132
  %v165 = vpack.c.b16 %v137, %v133
  %v166 = vpack.c.b16 %v142, %v138
  %v167 = vpack.c.b16 %v143, %v139
  %v168 = vpack.c.b16 %v144, %v140
  %v169 = vpack.c.b16 %v145, %v141
  %v170 = vpack.c.b16 %v150, %v146
  %v171 = vpack.c.b16 %v151, %v147
  %v172 = vpack.c.b16 %v152, %v148
  %v173 = vpack.c.b16 %v153, %v149
  %v174 = vpack.c.b16 %v154, %v154
  %v175 = vpack.c.b16 %v155, %v155
  %v176 = vpack.c.b16 %v156, %v156
  %v177 = vpack.c.b16 %v157, %v157
  %v262 = vunpack.c.l.b16 %v33
  %v263 = vunpack.c.l.b16 %v34
  %v264 = vunpack.c.l.b16 %v35
  %v265 = vunpack.c.l.b16 %v36
  %v266 = vunpack.c.l.b16 %v37
  %v267 = vunpack.c.l.b16 %v38
  %v268 = vunpack.c.l.b16 %v39
  %v269 = vunpack.c.l.b16 %v40
  %v270 = vunpack.c.l.b16 %v41
  %v271 = vunpack.c.l.b16 %v42
  %v272 = vunpack.c.l.b16 %v43
  %v273 = vunpack.c.l.b16 %v44
  %v274 = vunpack.c.l.b16 %v45
  %v275 = vunpack.c.l.b16 %v46
  %v276 = vunpack.c.l.b16 %v47
  %v277 = vunpack.c.l.b16 %v48
  %v278 = vunpack.c.l.b16 %v49
  %v279 = vunpack.c.l.b16 %v50
  %v280 = vunpack.c.l.b16 %v51
  %v281 = vunpack.c.l.b16 %v52
  %v282 = vunpack.c.l.b16 %v53
  %v283 = vunpack.c.l.b16 %v54
  %v284 = vunpack.c.l.b16 %v55
  %v285 = vunpack.c.l.b16 %v56
  %v286 = vunpack.c.l.b16 %v57
  %v287 = vunpack.c.l.b16 %v58
  %v288 = vunpack.c.l.b16 %v59
  %v289 = vunpack.c.l.b16 %v60
  %v290 = vunpack.c.l.b16 %v61
  %v291 = vunpack.c.l.b16 %v62
  %v292 = vunpack.c.l.b16 %v63
  %v293 = vunpack.c.l.b16 %v64
  %v294 = vunpack.c.l.b16 %v65
  %v295 = vunpack.c.l.b16 %v66
  %v296 = vunpack.c.l.b16 %v67
  %v297 = vunpack.c.l.b16 %v68
  %v298 = vunpack.c.l.b16 %v69
  %v299 = vunpack.c.l.b16 %v70
  %v300 = vunpack.c.l.b16 %v71
  %v301 = vunpack.c.l.b16 %v72
  %v302 = vunpack.c.l.b16 %v73
  %v303 = vunpack.c.l.b16 %v74
  %v304 = vunpack.c.l.b16 %v75
  %v305 = vunpack.c.l.b16 %v76
  %v306 = vunpack.c.l.b16 %v77
  %v307 = vunpack.c.l.b16 %v78
  %v308 = vunpack.c.l.b16 %v79
  %v309 = vunpack.c.l.b16 %v80
  %v310 = vunpack.c.l.b16 %v81
  %v311 = vunpack.c.l.b16 %v82
  %v312 = vunpack.c.l.b16 %v83
  %v313 = vunpack.c.l.b16 %v84
  %v314 = vunpack.c.l.b16 %v85
  %v315 = vunpack.c.l.b16 %v86
  %v316 = vunpack.c.l.b16 %v87
  %v317 = vunpack.c.l.b16 %v88
  %v318 = vunpack.c.l.b16 %v89
  %v319 = vunpack.c.l.b16 %v90
  %v320 = vunpack.c.l.b16 %v91
  %v321 = vunpack.c.l.b16 %v92
  %v322 = vunpack.c.l.b16 %v93
  %v323 = vunpack.c.l.b16 %v94
  %v324 = vunpack.c.l.b16 %v95
  %v325 = vunpack.c.l.b16 %v96
  %v326 = vpack.c.b16 %v263, %v262
  %v327 = vpack.c.b16 %v265, %v264
  %v328 = vpack.c.b16 %v267, %v266
  %v329 = vpack.c.b16 %v269, %v268
  %v330 = vpack.c.b16 %v271, %v270
  %v331 = vpack.c.b16 %v273, %v272
  %v332 = vpack.c.b16 %v275, %v274
  %v333 = vpack.c.b16 %v277, %v276
  %v334 = vpack.c.b16 %v279, %v278
  %v335 = vpack.c.b16 %v281, %v280
  %v336 = vpack.c.b16 %v283, %v282
  %v337 = vpack.c.b16 %v285, %v284
  %v338 = vpack.c.b16 %v287, %v286
  %v339 = vpack.c.b16 %v289, %v288
  %v340 = vpack.c.b16 %v291, %v290
  %v341 = vpack.c.b16 %v293, %v292
  %v342 = vpack.c.b16 %v295, %v294
  %v343 = vpack.c.b16 %v297, %v296
  %v344 = vpack.c.b16 %v299, %v298
  %v345 = vpack.c.b16 %v301, %v300
  %v346 = vpack.c.b16 %v303, %v302
  %v347 = vpack.c.b16 %v305, %v304
  %v348 = vpack.c.b16 %v307, %v306
  %v349 = vpack.c.b16 %v309, %v308
  %v350 = vpack.c.b16 %v311, %v310
  %v351 = vpack.c.b16 %v313, %v312
  %v352 = vpack.c.b16 %v315, %v314
  %v353 = vpack.c.b16 %v317, %v316
  %v354 = vpack.c.b16 %v319, %v318
  %v355 = vpack.c.b16 %v321, %v320
  %v356 = vpack.c.b16 %v323, %v322
  %v357 = vpack.c.b16 %v325, %v324
  %390 = vmatprep.subr.bf16.mxu0 0
  %391 = vmatpush1.bf16.msra.mxu0 %v326
  %392 = vmatprep.subr.bf16.mxu0 0
  %393 = vmatpush1.bf16.msra.mxu0 %v327
  %394 = vmatprep.subr.bf16.mxu0 0
  %395 = vmatpush1.bf16.msra.mxu0 %v328
  %396 = vmatprep.subr.bf16.mxu0 0
  %397 = vmatpush1.bf16.msra.mxu0 %v329
  %398 = vmatprep.subr.bf16.mxu0 0
  %399 = vmatpush1.bf16.msra.mxu0 %v330
  %400 = vmatprep.subr.bf16.mxu0 0
  %401 = vmatpush1.bf16.msra.mxu0 %v331
  %402 = vmatprep.subr.bf16.mxu0 0
  %403 = vmatpush1.bf16.msra.mxu0 %v332
  %404 = vmatprep.subr.bf16.mxu0 0
  %405 = vmatpush1.bf16.msra.mxu0 %v333
  %406 = vmatprep.subr.bf16.mxu0 0
  %407 = vmatpush1.bf16.msra.mxu0 %v334
  %408 = vmatprep.subr.bf16.mxu0 0
  %409 = vmatpush1.bf16.msra.mxu0 %v335
  %410 = vmatprep.subr.bf16.mxu0 0
  %411 = vmatpush1.bf16.msra.mxu0 %v336
  %412 = vmatprep.subr.bf16.mxu0 0
  %413 = vmatpush1.bf16.msra.mxu0 %v337
  %414 = vmatprep.subr.bf16.mxu0 0
  %415 = vmatpush1.bf16.msra.mxu0 %v338
  %416 = vmatprep.subr.bf16.mxu0 0
  %417 = vmatpush1.bf16.msra.mxu0 %v339
  %418 = vmatprep.subr.bf16.mxu0 0
  %419 = vmatpush1.bf16.msra.mxu0 %v340
  %420 = vmatprep.subr.bf16.mxu0 0
  %421 = vmatpush1.bf16.msra.mxu0 %v341
  %422 = vmatprep.mubr.bf16.mxu0 %v159
  %423 = vmatmul.mubr.bf16.gmra.mrb[0].mxu0 %v158
  %v424 = vpop.f32.mrb[0].mxu0
  %v425 = vadd.f32 %v102, %v424
  %v426 = vpop.f32.mrb[0].mxu0
  %v427 = vpop.f32.mrb[0].mxu0
  %v428 = vadd.f32 %v102, %v427
  %v429 = vpop.f32.mrb[0].mxu0
  %430 = vmatprep.mubr.bf16.mxu0 %v163
  %431 = vmatmul.mubr.bf16.gmra.mrb[0].mxu0 %v162
  %v432 = vpop.f32.mrb[0].mxu0
  %v433 = vadd.f32 %v102, %v432
  %v434 = vpop.f32.mrb[0].mxu0
  %v435 = vpop.f32.mrb[0].mxu0
  %v436 = vadd.f32 %v102, %v435
  %v437 = vpop.f32.mrb[0].mxu0
  %438 = vmatprep.mubr.bf16.mxu0 %v167
  %439 = vmatmul.mubr.bf16.gmra.mrb[0].mxu0 %v166
  %v440 = vpop.f32.mrb[0].mxu0
  %v441 = vadd.f32 %v102, %v440
  %v442 = vpop.f32.mrb[0].mxu0
  %v443 = vpop.f32.mrb[0].mxu0
  %v444 = vadd.f32 %v102, %v443
  %v445 = vpop.f32.mrb[0].mxu0
  %446 = vmatprep.mubr.bf16.mxu0 %v171
  %447 = vmatmul.mubr.bf16.gmra.mrb[0].mxu0 %v170
  %v448 = vpop.f32.mrb[0].mxu0
  %v449 = vadd.f32 %v102, %v448
  %v450 = vpop.f32.mrb[0].mxu0
  %v451 = vpop.f32.mrb[0].mxu0
  %v452 = vadd.f32 %v102, %v451
  %v453 = vpop.f32.mrb[0].mxu0
  %454 = vmatprep.mubr.bf16.mxu0 %v175
  %455 = vmatmul.mubr.bf16.gmra.mrb[0].mxu0 %v174
  %v456 = vpop.f32.mrb[0].mxu0
  %v457 = vadd.f32 %v102, %v456
  %v458 = vpop.f32.mrb[0].mxu0
  %v459 = vpop.f32.mrb[0].mxu0
  %v460 = vpop.f32.mrb[0].mxu0
  %461 = vdwg.mxu0
  %462 = vmatprep.subr.bf16.mxu0 0
  %463 = vmatpush1.bf16.msra.mxu0 %v342
  %464 = vmatprep.subr.bf16.mxu0 0
  %465 = vmatpush1.bf16.msra.mxu0 %v343
  %466 = vmatprep.subr.bf16.mxu0 0
  %467 = vmatpush1.bf16.msra.mxu0 %v344
  %468 = vmatprep.subr.bf16.mxu0 0
  %469 = vmatpush1.bf16.msra.mxu0 %v345
  %470 = vmatprep.subr.bf16.mxu0 0
  %471 = vmatpush1.bf16.msra.mxu0 %v346
  %472 = vmatprep.subr.bf16.mxu0 0
  %473 = vmatpush1.bf16.msra.mxu0 %v347
  %474 = vmatprep.subr.bf16.mxu0 0
  %475 = vmatpush1.bf16.msra.mxu0 %v348
  %476 = vmatprep.subr.bf16.mxu0 0
  %477 = vmatpush1.bf16.msra.mxu0 %v349
  %478 = vmatprep.subr.bf16.mxu0 0
  %479 = vmatpush1.bf16.msra.mxu0 %v350
  %480 = vmatprep.subr.bf16.mxu0 0
  %481 = vmatpush1.bf16.msra.mxu0 %v351
  %482 = vmatprep.subr.bf16.mxu0 0
  %483 = vmatpush1.bf16.msra.mxu0 %v352
  %484 = vmatprep.subr.bf16.mxu0 0
  %485 = vmatpush1.bf16.msra.mxu0 %v353
  %486 = vmatprep.subr.bf16.mxu0 0
  %487 = vmatpush1.bf16.msra.mxu0 %v354
  %488 = vmatprep.subr.bf16.mxu0 0
  %489 = vmatpush1.bf16.msra.mxu0 %v355
  %490 = vmatprep.subr.bf16.mxu0 0
  %491 = vmatpush1.bf16.msra.mxu0 %v356
  %492 = vmatprep.subr.bf16.mxu0 0
  %493 = vmatpush1.bf16.msra.mxu0 %v357
  %494 = vmatprep.mubr.bf16.mxu0 %v161
  %495 = vmatmul.mubr.bf16.gmra.mrb[0].mxu0 %v160
  %v496 = vpop.f32.mrb[0].mxu0
  %v497 = vadd.f32 %v425, %v496
  %v498 = vpop.f32.mrb[0].mxu0
  %v499 = vpop.f32.mrb[0].mxu0
  %v500 = vadd.f32 %v428, %v499
  %v501 = vpop.f32.mrb[0].mxu0
  %502 = vmatprep.mubr.bf16.mxu0 %v165
  %503 = vmatmul.mubr.bf16.gmra.mrb[0].mxu0 %v164
  %v504 = vpop.f32.mrb[0].mxu0
  %v505 = vadd.f32 %v433, %v504
  %v506 = vpop.f32.mrb[0].mxu0
  %v507 = vpop.f32.mrb[0].mxu0
  %v508 = vadd.f32 %v436, %v507
  %v509 = vpop.f32.mrb[0].mxu0
  %510 = vmatprep.mubr.bf16.mxu0 %v169
  %511 = vmatmul.mubr.bf16.gmra.mrb[0].mxu0 %v168
  %v512 = vpop.f32.mrb[0].mxu0
  %v513 = vadd.f32 %v441, %v512
  %v514 = vpop.f32.mrb[0].mxu0
  %v515 = vpop.f32.mrb[0].mxu0
  %v516 = vadd.f32 %v444, %v515
  %v517 = vpop.f32.mrb[0].mxu0
  %518 = vmatprep.mubr.bf16.mxu0 %v173
  %519 = vmatmul.mubr.bf16.gmra.mrb[0].mxu0 %v172
  %v520 = vpop.f32.mrb[0].mxu0
  %v521 = vadd.f32 %v449, %v520
  %v522 = vpop.f32.mrb[0].mxu0
  %v523 = vpop.f32.mrb[0].mxu0
  %v524 = vadd.f32 %v452, %v523
  %v525 = vpop.f32.mrb[0].mxu0
  %526 = vmatprep.mubr.bf16.mxu0 %v177
  %527 = vmatmul.mubr.bf16.gmra.mrb[0].mxu0 %v176
  %v528 = vpop.f32.mrb[0].mxu0
  %v529 = vadd.f32 %v457, %v528
  %v530 = vpop.f32.mrb[0].mxu0
  %v531 = vpop.f32.mrb[0].mxu0
  %v532 = vpop.f32.mrb[0].mxu0
  %533 = vdwg.mxu0
  %v534 = vmax.f32 %v497, 0.0
  %v535 = vmax.f32 %v500, 0.0
  %v536 = vmax.f32 %v505, 0.0
  %v537 = vmax.f32 %v508, 0.0
  %v538 = vmax.f32 %v513, 0.0
  %v539 = vmax.f32 %v516, 0.0
  %v540 = vmax.f32 %v521, 0.0
  %v541 = vmax.f32 %v524, 0.0
  %v542 = vmax.f32 %v529, 0.0
  %543 = vst [vmem:[%s3] sm:$0xff] %v534
  %544 = vst [vmem:[%s3 + $0x8] sm:$0xff] %v535
  %545 = vst [vmem:[%s3 + $0x10] sm:$0xff] %v536
  %546 = vst [vmem:[%s3 + $0x18] sm:$0xff] %v537
  %547 = vst [vmem:[%s3 + $0x20] sm:$0xff] %v538
  %548 = vst [vmem:[%s3 + $0x28] sm:$0xff] %v539
  %549 = vst [vmem:[%s3 + $0x30] sm:$0xff] %v540
  %550 = vst [vmem:[%s3 + $0x38] sm:$0xff] %v541
  %551 = vst [vmem:[%s3 + $0x40] sm:$0xff] %v542
  // Predicated region
  $region14: #{_lambda_.6} parent=0 // pred_check
    _
  $region15: #{_lambda_.6} parent=0 // pred_check_branch
    %553 = sbr.rel (0) target = $region17
  $region16: #{_lambda_.6} parent=0 // pred_region
    _
  $region17: #{_lambda_.6} parent=0 // pred_fallthru
    _
  // Predicated region
  $region18: #{_lambda_.6} parent=0 // pred_check
    _
  $region19: #{_lambda_.6} parent=0 // pred_check_branch
    %555 = sbr.rel (0) target = $region21
  $region20: #{_lambda_.6} parent=0 // pred_region
    _
  $region21: #{_lambda_.6} parent=0 // pred_fallthru
    _

// kernel: _lambda_.7
$region0: #{_lambda_.7}
  #allocation0 [shape = 'u32[]', space=smem, size = 0x4, offset = 0x4, fixed_abs, tag = 'smem constant byte address 0x4 - core index']
  #allocation1 [shape = 'u32[144,128]{1,0:T(1,128)}', space=vmem, size = 0x12000, scoped, tag = 'internal scratch']
  %s0 = inlined_call_operand.vmem [shape: bf16[72,9216], index: 0, kind: input, shape index: {}]
  %s1 = inlined_call_operand.vmem [shape: bf16[9216,128], index: 1, kind: input, shape index: {}]
  %s2 = inlined_call_operand.vmem [shape: f32[1,128], index: 2, kind: input, shape index: {}]
  %s3 = inlined_call_operand.vmem [shape: f32[72,128], index: 3, kind: output, shape index: {}]
  %s4 = sld [smem:[#allocation0]]
  $region76: #{_lambda_.7} parent=0
    _
  %s6 = ssub.s32 1, %s4
  %s7 = scalar_select 0, %s6, %s4
  $region1: #{_lambda_.7} parent=0
    #allocation2 [shape = 'u8[884736]{0}', space=vmem, size = 0xd8000, scoped, tag = 'input window, operand 0']
    loop: start=0, step=1, limit=5
    $region2: #{_lambda_.7} parent=1 // loop_pre_header
      _
    $region3: #{_lambda_.7} parent=1 // loop_header
      %s9 = sphi 0, %s13
      %p10 = scmp.ge.s32.totalorder %s9, 5
      %s16 = sphi 0, %s35
      %s17 = sphi 0, %s31
      %s18 = sphi 0, %s27
      %s19 = sphi 0, %s16
      %s20 = sphi 0, %s17
      %s21 = sphi 0, %s18
      %s22 = sphi 0, %s19
      %s23 = sphi 0, %s20
      %s24 = sphi 0, %s21
      %s40 = sphi 0, %s42
      %s43 = sphi 0, %s40
      %s44 = sphi 0, %s43
      %s60 = sphi 0, %s44
      %s68 = sphi 0, %s70
      %s71 = sphi 0, %s68
      %s72 = sphi 0, %s71
      %s88 = sphi 0, %s72
      %s94 = sphi 0, %s96
      %s97 = sphi 0, %s94
      %s98 = sphi 0, %s97
      %s114 = sphi 0, %s98
      %s122 = sphi 0, %s124
      %s125 = sphi 0, %s122
      %s126 = sphi 0, %s125
      %s142 = sphi 0, %s126
    $region4: #{_lambda_.7} parent=1 // loop_header_branch
      %12 = sbr.rel (%p10) target = $region8
    $region5: #{_lambda_.7} parent=1 // loop_body
      %s14 = ssub.s32 %s9, 1
      %s15 = ssub.s32 %s9, 2
      %s25 = sadd.s32 1, %s18
      %p26 = scmp.ge.s32.totalorder %s25, 3
      %s27 = scalar_select %p26, 0, %s25
      %s28 = sadd.s32 1, %s17
      %s29 = scalar_select %p26, %s28, %s17
      %p30 = scmp.ge.s32.totalorder %s29, 1
      %s31 = scalar_select %p30, 0, %s29
      %s32 = sadd.s32 1, %s16
      %s33 = scalar_select %p30, %s32, %s16
      %p34 = scmp.ge.s32.totalorder %s33, 1
      %s35 = scalar_select %p34, 0, %s33
      %s36 = ssub.s32 %s16, %s35
      %s37 = ssub.s32 %s18, %s27
      %s38 = sor.u32 %s36, %s37
      %p39 = scmp.eq.s32.totalorder %s38, 0
      %s41 = sadd.s32 %s40, 1
      %s42 = scalar_select %p39, %s40, %s41
      %p45 = pneg %p39
      %p46 = scmp.eq.s32.totalorder %s9, 2
      %p47 = por %p45, %p46
      %p48 = scmp.ne.s32.totalorder %s40, %s43
      %p49 = scmp.eq.s32.totalorder %s9, 0
      %p50 = por %p48, %p49
      %p51 = scmp.ne.s32.totalorder %s40, %s43
      %p52 = scmp.eq.s32.totalorder %s14, 2
      %p53 = por %p51, %p52
      %p54 = scmp.ne.s32.totalorder %s43, %s44
      %p55 = scmp.eq.s32.totalorder %s14, 0
      %p56 = por %p54, %p55
      %p57 = scmp.ne.s32.totalorder %s43, %s44
      %p58 = scmp.eq.s32.totalorder %s15, 2
      %p59 = por %p57, %p58
      %p61 = scmp.ne.s32.totalorder %s44, %s60
      %p62 = scmp.eq.s32.totalorder %s15, 0
      %p63 = por %p61, %p62
      %s64 = ssub.s32 %s18, %s27
      %s65 = ssub.s32 %s17, %s31
      %s66 = sor.u32 %s64, %s65
      %p67 = scmp.eq.s32.totalorder %s66, 0
      %s69 = sadd.s32 %s68, 1
      %s70 = scalar_select %p67, %s68, %s69
      %p73 = pneg %p67
      %p74 = scmp.eq.s32.totalorder %s9, 2
      %p75 = por %p73, %p74
      %p76 = scmp.ne.s32.totalorder %s68, %s71
      %p77 = scmp.eq.s32.totalorder %s9, 0
      %p78 = por %p76, %p77
      %p79 = scmp.ne.s32.totalorder %s68, %s71
      %p80 = scmp.eq.s32.totalorder %s14, 2
      %p81 = por %p79, %p80
      %p82 = scmp.ne.s32.totalorder %s71, %s72
      %p83 = scmp.eq.s32.totalorder %s14, 0
      %p84 = por %p82, %p83
      %p85 = scmp.ne.s32.totalorder %s71, %s72
      %p86 = scmp.eq.s32.totalorder %s15, 2
      %p87 = por %p85, %p86
      %p89 = scmp.ne.s32.totalorder %s72, %s88
      %p90 = scmp.eq.s32.totalorder %s15, 0
      %p91 = por %p89, %p90
      %s92 = ssub.s32 %s17, %s31
      %p93 = scmp.eq.s32.totalorder %s92, 0
      %s95 = sadd.s32 %s94, 1
      %s96 = scalar_select %p93, %s94, %s95
      %p99 = pneg %p93
      %p100 = scmp.eq.s32.totalorder %s9, 2
      %p101 = por %p99, %p100
      %p102 = scmp.ne.s32.totalorder %s94, %s97
      %p103 = scmp.eq.s32.totalorder %s9, 0
      %p104 = por %p102, %p103
      %p105 = scmp.ne.s32.totalorder %s94, %s97
      %p106 = scmp.eq.s32.totalorder %s14, 2
      %p107 = por %p105, %p106
      %p108 = scmp.ne.s32.totalorder %s97, %s98
      %p109 = scmp.eq.s32.totalorder %s14, 0
      %p110 = por %p108, %p109
      %p111 = scmp.ne.s32.totalorder %s97, %s98
      %p112 = scmp.eq.s32.totalorder %s15, 2
      %p113 = por %p111, %p112
      %p115 = scmp.ne.s32.totalorder %s98, %s114
      %p116 = scmp.eq.s32.totalorder %s15, 0
      %p117 = por %p115, %p116
      %s118 = ssub.s32 %s16, %s35
      %s119 = ssub.s32 %s17, %s31
      %s120 = sor.u32 %s118, %s119
      %p121 = scmp.eq.s32.totalorder %s120, 0
      %s123 = sadd.s32 %s122, 1
      %s124 = scalar_select %p121, %s122, %s123
      %p127 = pneg %p121
      %p128 = scmp.eq.s32.totalorder %s9, 2
      %p129 = por %p127, %p128
      %p130 = scmp.ne.s32.totalorder %s122, %s125
      %p131 = scmp.eq.s32.totalorder %s9, 0
      %p132 = por %p130, %p131
      %p133 = scmp.ne.s32.totalorder %s122, %s125
      %p134 = scmp.eq.s32.totalorder %s14, 2
      %p135 = por %p133, %p134
      %p136 = scmp.ne.s32.totalorder %s125, %s126
      %p137 = scmp.eq.s32.totalorder %s14, 0
      %p138 = por %p136, %p137
      %p139 = scmp.ne.s32.totalorder %s125, %s126
      %p140 = scmp.eq.s32.totalorder %s15, 2
      %p141 = por %p139, %p140
      %p143 = scmp.ne.s32.totalorder %s126, %s142
      %p144 = scmp.eq.s32.totalorder %s15, 0
      %p145 = por %p143, %p144
      %p146 = scmp.le.s32.totalorder 1, %s9
      %p147 = scmp.lt.s32.totalorder %s9, 4
      %p148 = pnand %p146, %p147
      %p149 = pneg %p148
      // Predicated region
      $region9: #{_lambda_.7} parent=5 // pred_check
        _
      $region10: #{_lambda_.7} parent=5 // pred_check_branch
        %151 = sbr.rel (%p148) target = $region12
      $region11: #{_lambda_.7} parent=5 // pred_region
        %s152 = ssub.s32 %s9, 1
        // Predicated region
        $region13: #{_lambda_.7} parent=11 // pred_check
          %p153 = pneg %p110
        $region14: #{_lambda_.7} parent=11 // pred_check_branch
          %155 = sbr.rel (%p153) target = $region16
        $region15: #{_lambda_.7} parent=11 // pred_region
          %p156 = scmp.lt.s32.totalorder %s20, 0
          %s157 = scalar_select %p156, %s20, 0
          %s158 = scalar_lea.vmem %s2, %s157
        $region16: #{_lambda_.7} parent=11 // pred_fallthru
          _
      $region12: #{_lambda_.7} parent=5 // pred_fallthru
        _
      %p159 = scmp.lt.s32.totalorder %s9, 3
      // Predicated region
      $region17: #{_lambda_.7} parent=5 // pred_check
        %p160 = pneg %p159
      $region18: #{_lambda_.7} parent=5 // pred_check_branch
        %162 = sbr.rel (%p160) target = $region20
      $region19: #{_lambda_.7} parent=5 // pred_region
        // Predicated region
        $region21: #{_lambda_.7} parent=19 // pred_check
          %p163 = pneg %p50
        $region22: #{_lambda_.7} parent=19 // pred_check_branch
          %165 = sbr.rel (%p163) target = $region24
        $region23: #{_lambda_.7} parent=19 // pred_region
          %s166 = sand.u32 %s40, 1
          %s167 = sand.u32 %s40, 1
          %s168 = smul.addr %s167, 864
          %s169 = scalar_lea.vmem [#allocation2], %s168
          %s170 = smul.u32 9, %s16
          %s171 = smul.u32 24, %s18
          %s172 = smul.addr %s170, 72
          %s173 = sadd.s32 %s171, %s172
          %s174 = smul.addr %s173, 4
          %s175 = scalar_lea.vmem %s0, %s174
          // Predicated region
          $region25: #{_lambda_.7} parent=23 // pred_check
            _
          $region26: #{_lambda_.7} parent=23 // pred_check_branch
            %177 = sbr.rel (0) target = $region28
          $region27: #{_lambda_.7} parent=23 // pred_region
            // Predicated region
            $region29: #{_lambda_.7} parent=27 // pred_check
              _
            $region30: #{_lambda_.7} parent=27 // pred_check_branch
              %179 = sbr.rel (0) target = $region32
            $region31: #{_lambda_.7} parent=27 // pred_region
              loop: start=0, step=1, limit=1
              $region33: #{_lambda_.7} parent=31 // loop_pre_header
                _
              $region34: #{_lambda_.7} parent=31 // loop_header
                %s181 = sphi 0, %s185
                %p182 = scmp.ge.s32.totalorder %s181, 1
                %s186 = sphi %s175, %s175
                %s187 = sphi %s169, %s169
              $region35: #{_lambda_.7} parent=31 // loop_header_branch
                %184 = sbr.rel (%p182) target = $region39
              $region36: #{_lambda_.7} parent=31 // loop_body
                %v188 = vld [vmem:[%s186] sm:$0xff]
                %189 = vst [vmem:[%s187] sm:$0xff] %v188
                %v190 = vld [vmem:[%s186 + $0x8] sm:$0xff]
                %191 = vst [vmem:[%s187 + $0x8] sm:$0xff] %v190
                %v192 = vld [vmem:[%s186 + $0x10] sm:$0xff]
                %193 = vst [vmem:[%s187 + $0x10] sm:$0xff] %v192
                %v194 = vld [vmem:[%s186 + $0x18] sm:$0xff]
                %195 = vst [vmem:[%s187 + $0x18] sm:$0xff] %v194
                %v196 = vld [vmem:[%s186 + $0x20] sm:$0xff]
                %197 = vst [vmem:[%s187 + $0x20] sm:$0xff] %v196
                %v198 = vld [vmem:[%s186 + $0x28] sm:$0xff]
                %199 = vst [vmem:[%s187 + $0x28] sm:$0xff] %v198
                %v200 = vld [vmem:[%s186 + $0x30] sm:$0xff]
                %201 = vst [vmem:[%s187 + $0x30] sm:$0xff] %v200
                %v202 = vld [vmem:[%s186 + $0x38] sm:$0xff]
                %203 = vst [vmem:[%s187 + $0x38] sm:$0xff] %v202
                %v204 = vld [vmem:[%s186 + $0x40] sm:$0xff]
                %205 = vst [vmem:[%s187 + $0x40] sm:$0xff] %v204
                %v206 = vld [vmem:[%s186 + $0x48] sm:$0xff]
                %207 = vst [vmem:[%s187 + $0x48] sm:$0xff] %v206
                %v208 = vld [vmem:[%s186 + $0x50] sm:$0xff]
                %209 = vst [vmem:[%s187 + $0x50] sm:$0xff] %v208
                %v210 = vld [vmem:[%s186 + $0x58] sm:$0xff]
                %211 = vst [vmem:[%s187 + $0x58] sm:$0xff] %v210
                %v212 = vld [vmem:[%s186 + $0x120] sm:$0xff]
                %213 = vst [vmem:[%s187 + $0x60] sm:$0xff] %v212
                %v214 = vld [vmem:[%s186 + $0x128] sm:$0xff]
                %215 = vst [vmem:[%s187 + $0x68] sm:$0xff] %v214
                %v216 = vld [vmem:[%s186 + $0x130] sm:$0xff]
                %217 = vst [vmem:[%s187 + $0x70] sm:$0xff] %v216
                %v218 = vld [vmem:[%s186 + $0x138] sm:$0xff]
                %219 = vst [vmem:[%s187 + $0x78] sm:$0xff] %v218
                %v220 = vld [vmem:[%s186 + $0x140] sm:$0xff]
                %221 = vst [vmem:[%s187 + $0x80] sm:$0xff] %v220
                %v222 = vld [vmem:[%s186 + $0x148] sm:$0xff]
                %223 = vst [vmem:[%s187 + $0x88] sm:$0xff] %v222
                %v224 = vld [vmem:[%s186 + $0x150] sm:$0xff]
                %225 = vst [vmem:[%s187 + $0x90] sm:$0xff] %v224
                %v226 = vld [vmem:[%s186 + $0x158] sm:$0xff]
                %227 = vst [vmem:[%s187 + $0x98] sm:$0xff] %v226
                %v228 = vld [vmem:[%s186 + $0x160] sm:$0xff]
                %229 = vst [vmem:[%s187 + $0xa0] sm:$0xff] %v228
                %v230 = vld [vmem:[%s186 + $0x168] sm:$0xff]
                %231 = vst [vmem:[%s187 + $0xa8] sm:$0xff] %v230
                %v232 = vld [vmem:[%s186 + $0x170] sm:$0xff]
                %233 = vst [vmem:[%s187 + $0xb0] sm:$0xff] %v232
                %v234 = vld [vmem:[%s186 + $0x178] sm:$0xff]
                %235 = vst [vmem:[%s187 + $0xb8] sm:$0xff] %v234
                %v236 = vld [vmem:[%s186 + $0x240] sm:$0xff]
                %237 = vst [vmem:[%s187 + $0xc0] sm:$0xff] %v236
                %v238 = vld [vmem:[%s186 + $0x248] sm:$0xff]
                %239 = vst [vmem:[%s187 + $0xc8] sm:$0xff] %v238
                %v240 = vld [vmem:[%s186 + $0x250] sm:$0xff]
                %241 = vst [vmem:[%s187 + $0xd0] sm:$0xff] %v240
                %v242 = vld [vmem:[%s186 + $0x258] sm:$0xff]
                %243 = vst [vmem:[%s187 + $0xd8] sm:$0xff] %v242
                %v244 = vld [vmem:[%s186 + $0x260] sm:$0xff]
                %245 = vst [vmem:[%s187 + $0xe0] sm:$0xff] %v244
                %v246 = vld [vmem:[%s186 + $0x268] sm:$0xff]
                %247 = vst [vmem:[%s187 + $0xe8] sm:$0xff] %v246
                %v248 = vld [vmem:[%s186 + $0x270] sm:$0xff]
                %249 = vst [vmem:[%s187 + $0xf0] sm:$0xff] %v248
                %v250 = vld [vmem:[%s186 + $0x278] sm:$0xff]
                %251 = vst [vmem:[%s187 + $0xf8] sm:$0xff] %v250
                %v252 = vld [vmem:[%s186 + $0x280] sm:$0xff]
                %253 = vst [vmem:[%s187 + $0x100] sm:$0xff] %v252
                %v254 = vld [vmem:[%s186 + $0x288] sm:$0xff]
                %255 = vst [vmem:[%s187 + $0x108] sm:$0xff] %v254
                %v256 = vld [vmem:[%s186 + $0x290] sm:$0xff]
                %257 = vst [vmem:[%s187 + $0x110] sm:$0xff] %v256
                %v258 = vld [vmem:[%s186 + $0x298] sm:$0xff]
                %259 = vst [vmem:[%s187 + $0x118] sm:$0xff] %v258
                %v260 = vld [vmem:[%s186 + $0x360] sm:$0xff]
                %261 = vst [vmem:[%s187 + $0x120] sm:$0xff] %v260
                %v262 = vld [vmem:[%s186 + $0x368] sm:$0xff]
                %263 = vst [vmem:[%s187 + $0x128] sm:$0xff] %v262
                %v264 = vld [vmem:[%s186 + $0x370] sm:$0xff]
                %265 = vst [vmem:[%s187 + $0x130] sm:$0xff] %v264
                %v266 = vld [vmem:[%s186 + $0x378] sm:$0xff]
                %267 = vst [vmem:[%s187 + $0x138] sm:$0xff] %v266
                %v268 = vld [vmem:[%s186 + $0x380] sm:$0xff]
                %269 = vst [vmem:[%s187 + $0x140] sm:$0xff] %v268
                %v270 = vld [vmem:[%s186 + $0x388] sm:$0xff]
                %271 = vst [vmem:[%s187 + $0x148] sm:$0xff] %v270
                %v272 = vld [vmem:[%s186 + $0x390] sm:$0xff]
                %273 = vst [vmem:[%s187 + $0x150] sm:$0xff] %v272
                %v274 = vld [vmem:[%s186 + $0x398] sm:$0xff]
                %275 = vst [vmem:[%s187 + $0x158] sm:$0xff] %v274
                %v276 = vld [vmem:[%s186 + $0x3a0] sm:$0xff]
                %277 = vst [vmem:[%s187 + $0x160] sm:$0xff] %v276
                %v278 = vld [vmem:[%s186 + $0x3a8] sm:$0xff]
                %279 = vst [vmem:[%s187 + $0x168] sm:$0xff] %v278
                %v280 = vld [vmem:[%s186 + $0x3b0] sm:$0xff]
                %281 = vst [vmem:[%s187 + $0x170] sm:$0xff] %v280
                %v282 = vld [vmem:[%s186 + $0x3b8] sm:$0xff]
                %283 = vst [vmem:[%s187 + $0x178] sm:$0xff] %v282
                %v284 = vld [vmem:[%s186 + $0x480] sm:$0xff]
                %285 = vst [vmem:[%s187 + $0x180] sm:$0xff] %v284
                %v286 = vld [vmem:[%s186 + $0x488] sm:$0xff]
                %287 = vst [vmem:[%s187 + $0x188] sm:$0xff] %v286
                %v288 = vld [vmem:[%s186 + $0x490] sm:$0xff]
                %289 = vst [vmem:[%s187 + $0x190] sm:$0xff] %v288
                %v290 = vld [vmem:[%s186 + $0x498] sm:$0xff]
                %291 = vst [vmem:[%s187 + $0x198] sm:$0xff] %v290
                %v292 = vld [vmem:[%s186 + $0x4a0] sm:$0xff]
                %293 = vst [vmem:[%s187 + $0x1a0] sm:$0xff] %v292
                %v294 = vld [vmem:[%s186 + $0x4a8] sm:$0xff]
                %295 = vst [vmem:[%s187 + $0x1a8] sm:$0xff] %v294
                %v296 = vld [vmem:[%s186 + $0x4b0] sm:$0xff]
                %297 = vst [vmem:[%s187 + $0x1b0] sm:$0xff] %v296
                %v298 = vld [vmem:[%s186 + $0x4b8] sm:$0xff]
                %299 = vst [vmem:[%s187 + $0x1b8] sm:$0xff] %v298
                %v300 = vld [vmem:[%s186 + $0x4c0] sm:$0xff]
                %301 = vst [vmem:[%s187 + $0x1c0] sm:$0xff] %v300
                %v302 = vld [vmem:[%s186 + $0x4c8] sm:$0xff]
                %303 = vst [vmem:[%s187 + $0x1c8] sm:$0xff] %v302
                %v304 = vld [vmem:[%s186 + $0x4d0] sm:$0xff]
                %305 = vst [vmem:[%s187 + $0x1d0] sm:$0xff] %v304
                %v306 = vld [vmem:[%s186 + $0x4d8] sm:$0xff]
                %307 = vst [vmem:[%s187 + $0x1d8] sm:$0xff] %v306
                %v308 = vld [vmem:[%s186 + $0x5a0] sm:$0xff]
                %309 = vst [vmem:[%s187 + $0x1e0] sm:$0xff] %v308
                %v310 = vld [vmem:[%s186 + $0x5a8] sm:$0xff]
                %311 = vst [vmem:[%s187 + $0x1e8] sm:$0xff] %v310
                %v312 = vld [vmem:[%s186 + $0x5b0] sm:$0xff]
                %313 = vst [vmem:[%s187 + $0x1f0] sm:$0xff] %v312
                %v314 = vld [vmem:[%s186 + $0x5b8] sm:$0xff]
                %315 = vst [vmem:[%s187 + $0x1f8] sm:$0xff] %v314
                %v316 = vld [vmem:[%s186 + $0x5c0] sm:$0xff]
                %317 = vst [vmem:[%s187 + $0x200] sm:$0xff] %v316
                %v318 = vld [vmem:[%s186 + $0x5c8] sm:$0xff]
                %319 = vst [vmem:[%s187 + $0x208] sm:$0xff] %v318
                %v320 = vld [vmem:[%s186 + $0x5d0] sm:$0xff]
                %321 = vst [vmem:[%s187 + $0x210] sm:$0xff] %v320
                %v322 = vld [vmem:[%s186 + $0x5d8] sm:$0xff]
                %323 = vst [vmem:[%s187 + $0x218] sm:$0xff] %v322
                %v324 = vld [vmem:[%s186 + $0x5e0] sm:$0xff]
                %325 = vst [vmem:[%s187 + $0x220] sm:$0xff] %v324
                %v326 = vld [vmem:[%s186 + $0x5e8] sm:$0xff]
                %327 = vst [vmem:[%s187 + $0x228] sm:$0xff] %v326
                %v328 = vld [vmem:[%s186 + $0x5f0] sm:$0xff]
                %329 = vst [vmem:[%s187 + $0x230] sm:$0xff] %v328
                %v330 = vld [vmem:[%s186 + $0x5f8] sm:$0xff]
                %331 = vst [vmem:[%s187 + $0x238] sm:$0xff] %v330
                %v332 = vld [vmem:[%s186 + $0x6c0] sm:$0xff]
                %333 = vst [vmem:[%s187 + $0x240] sm:$0xff] %v332
                %v334 = vld [vmem:[%s186 + $0x6c8] sm:$0xff]
                %335 = vst [vmem:[%s187 + $0x248] sm:$0xff] %v334
                %v336 = vld [vmem:[%s186 + $0x6d0] sm:$0xff]
                %337 = vst [vmem:[%s187 + $0x250] sm:$0xff] %v336
                %v338 = vld [vmem:[%s186 + $0x6d8] sm:$0xff]
                %339 = vst [vmem:[%s187 + $0x258] sm:$0xff] %v338
                %v340 = vld [vmem:[%s186 + $0x6e0] sm:$0xff]
                %341 = vst [vmem:[%s187 + $0x260] sm:$0xff] %v340
                %v342 = vld [vmem:[%s186 + $0x6e8] sm:$0xff]
                %343 = vst [vmem:[%s187 + $0x268] sm:$0xff] %v342
                %v344 = vld [vmem:[%s186 + $0x6f0] sm:$0xff]
                %345 = vst [vmem:[%s187 + $0x270] sm:$0xff] %v344
                %v346 = vld [vmem:[%s186 + $0x6f8] sm:$0xff]
                %347 = vst [vmem:[%s187 + $0x278] sm:$0xff] %v346
                %v348 = vld [vmem:[%s186 + $0x700] sm:$0xff]
                %349 = vst [vmem:[%s187 + $0x280] sm:$0xff] %v348
                %v350 = vld [vmem:[%s186 + $0x708] sm:$0xff]
                %351 = vst [vmem:[%s187 + $0x288] sm:$0xff] %v350
                %v352 = vld [vmem:[%s186 + $0x710] sm:$0xff]
                %353 = vst [vmem:[%s187 + $0x290] sm:$0xff] %v352
                %v354 = vld [vmem:[%s186 + $0x718] sm:$0xff]
                %355 = vst [vmem:[%s187 + $0x298] sm:$0xff] %v354
                %v356 = vld [vmem:[%s186 + $0x7e0] sm:$0xff]
                %357 = vst [vmem:[%s187 + $0x2a0] sm:$0xff] %v356
                %v358 = vld [vmem:[%s186 + $0x7e8] sm:$0xff]
                %359 = vst [vmem:[%s187 + $0x2a8] sm:$0xff] %v358
                %v360 = vld [vmem:[%s186 + $0x7f0] sm:$0xff]
                %361 = vst [vmem:[%s187 + $0x2b0] sm:$0xff] %v360
                %v362 = vld [vmem:[%s186 + $0x7f8] sm:$0xff]
                %363 = vst [vmem:[%s187 + $0x2b8] sm:$0xff] %v362
                %v364 = vld [vmem:[%s186 + $0x800] sm:$0xff]
                %365 = vst [vmem:[%s187 + $0x2c0] sm:$0xff] %v364
                %v366 = vld [vmem:[%s186 + $0x808] sm:$0xff]
                %367 = vst [vmem:[%s187 + $0x2c8] sm:$0xff] %v366
                %v368 = vld [vmem:[%s186 + $0x810] sm:$0xff]
                %369 = vst [vmem:[%s187 + $0x2d0] sm:$0xff] %v368
                %v370 = vld [vmem:[%s186 + $0x818] sm:$0xff]
                %371 = vst [vmem:[%s187 + $0x2d8] sm:$0xff] %v370
                %v372 = vld [vmem:[%s186 + $0x820] sm:$0xff]
                %373 = vst [vmem:[%s187 + $0x2e0] sm:$0xff] %v372
                %v374 = vld [vmem:[%s186 + $0x828] sm:$0xff]
                %375 = vst [vmem:[%s187 + $0x2e8] sm:$0xff] %v374
                %v376 = vld [vmem:[%s186 + $0x830] sm:$0xff]
                %377 = vst [vmem:[%s187 + $0x2f0] sm:$0xff] %v376
                %v378 = vld [vmem:[%s186 + $0x838] sm:$0xff]
                %379 = vst [vmem:[%s187 + $0x2f8] sm:$0xff] %v378
                %v380 = vld [vmem:[%s186 + $0x900] sm:$0xff]
                %381 = vst [vmem:[%s187 + $0x300] sm:$0xff] %v380
                %v382 = vld [vmem:[%s186 + $0x908] sm:$0xff]
                %383 = vst [vmem:[%s187 + $0x308] sm:$0xff] %v382
                %v384 = vld [vmem:[%s186 + $0x910] sm:$0xff]
                %385 = vst [vmem:[%s187 + $0x310] sm:$0xff] %v384
                %v386 = vld [vmem:[%s186 + $0x918] sm:$0xff]
                %387 = vst [vmem:[%s187 + $0x318] sm:$0xff] %v386
                %v388 = vld [vmem:[%s186 + $0x920] sm:$0xff]
                %389 = vst [vmem:[%s187 + $0x320] sm:$0xff] %v388
                %v390 = vld [vmem:[%s186 + $0x928] sm:$0xff]
                %391 = vst [vmem:[%s187 + $0x328] sm:$0xff] %v390
                %v392 = vld [vmem:[%s186 + $0x930] sm:$0xff]
                %393 = vst [vmem:[%s187 + $0x330] sm:$0xff] %v392
                %v394 = vld [vmem:[%s186 + $0x938] sm:$0xff]
                %395 = vst [vmem:[%s187 + $0x338] sm:$0xff] %v394
                %v396 = vld [vmem:[%s186 + $0x940] sm:$0xff]
                %397 = vst [vmem:[%s187 + $0x340] sm:$0xff] %v396
                %v398 = vld [vmem:[%s186 + $0x948] sm:$0xff]
                %399 = vst [vmem:[%s187 + $0x348] sm:$0xff] %v398
                %v400 = vld [vmem:[%s186 + $0x950] sm:$0xff]
                %401 = vst [vmem:[%s187 + $0x350] sm:$0xff] %v400
                %v402 = vld [vmem:[%s186 + $0x958] sm:$0xff]
                %403 = vst [vmem:[%s187 + $0x358] sm:$0xff] %v402
              $region37: #{_lambda_.7} parent=31 // loop_footer
                %s185 = sadd.s32 1, %s181
              $region38: #{_lambda_.7} parent=31 // loop_footer_branch
                %180 = sbr.rel target = $region34
              $region39: #{_lambda_.7} parent=31 // loop_exit
                _
            $region32: #{_lambda_.7} parent=27 // pred_fallthru
              _
            // Predicated region
            $region40: #{_lambda_.7} parent=27 // pred_check
              _
            $region41: #{_lambda_.7} parent=27 // pred_check_branch
              %405 = sbr.rel target = $region43
            $region42: #{_lambda_.7} parent=27 // pred_region
              _
            $region43: #{_lambda_.7} parent=27 // pred_fallthru
              _
          $region28: #{_lambda_.7} parent=23 // pred_fallthru
            _
          %406 = vnop
        $region24: #{_lambda_.7} parent=19 // pred_fallthru
          _
        // Predicated region
        $region44: #{_lambda_.7} parent=19 // pred_check
          %p407 = pneg %p78
        $region45: #{_lambda_.7} parent=19 // pred_check_branch
          %409 = sbr.rel (%p407) target = $region47
        $region46: #{_lambda_.7} parent=19 // pred_region
          %s410 = smul.u32 384, %s18
          %p411 = scmp.lt.s32.totalorder %s410, 1151
          %s412 = scalar_select %p411, %s410, 1151
          %p413 = scmp.lt.s32.totalorder %s17, 0
          %s414 = scalar_select %p413, %s17, 0
          %s415 = sadd.s32 %s414, %s412
          %s416 = smul.addr %s415, 4
          %s417 = scalar_lea.vmem %s1, %s416
          %s418 = smul.u32 384, %s18
        $region47: #{_lambda_.7} parent=19 // pred_fallthru
          _
      $region20: #{_lambda_.7} parent=5 // pred_fallthru
        _
      %p419 = scmp.le.s32.totalorder 1, %s9
      %p420 = scmp.lt.s32.totalorder %s9, 4
      %p421 = pnand %p419, %p420
      %p422 = pneg %p421
      // Predicated region
      $region48: #{_lambda_.7} parent=5 // pred_check
        _
      $region49: #{_lambda_.7} parent=5 // pred_check_branch
        %424 = sbr.rel (%p421) target = $region51
      $region50: #{_lambda_.7} parent=5 // pred_region
        %s425 = ssub.s32 %s9, 1
        %s426 = sand.u32 %s43, 1
        %s427 = sand.u32 %s43, 1
        %s428 = smul.addr %s427, 864
        %s429 = scalar_lea.vmem [#allocation2], %s428
        // Predicated region
        $region52: #{_lambda_.7} parent=50 // pred_check
          %p430 = pneg %p56
        $region53: #{_lambda_.7} parent=50 // pred_check_branch
          %432 = sbr.rel (%p430) target = $region55
        $region54: #{_lambda_.7} parent=50 // pred_region
          _
        $region55: #{_lambda_.7} parent=50 // pred_fallthru
          _
        %s433 = sand.u32 %s43, 1
        %s434 = sand.u32 %s43, 1
        %s435 = smul.addr %s434, 864
        %s436 = scalar_lea.vmem [#allocation2], %s435
        %p437 = pneg %p56
        %p438 = pneg %p53
        %s439 = smul.u32 384, %s21
        %p440 = scmp.lt.s32.totalorder %s439, 1151
        %s441 = scalar_select %p440, %s439, 1151
        %p442 = scmp.lt.s32.totalorder %s20, 0
        %s443 = scalar_select %p442, %s20, 0
        %s444 = sadd.s32 %s443, %s441
        %s445 = smul.addr %s444, 4
        %s446 = scalar_lea.vmem %s1, %s445
        %p447 = pneg %p84
        %p448 = pneg %p81
        %p449 = scmp.lt.s32.totalorder %s20, 0
        %s450 = scalar_select %p449, %s20, 0
        %s451 = scalar_lea.vmem %s2, %s450
        %p452 = pneg %p110
        %p453 = pneg %p107
        %p454 = pneg %p138
        %p455 = pneg %p135
        %s456 = smul.u32 9, %s19
        %p457 = scmp.lt.s32.totalorder %s456, 8
        %s458 = scalar_select %p457, %s456, 8
        %p459 = scmp.lt.s32.totalorder %s20, 0
        %s460 = scalar_select %p459, %s20, 0
        %s461 = sadd.s32 %s460, %s458
        %s462 = smul.addr %s461, 8
        %s463 = scalar_lea.vmem %s3, %s462
        %s464 = smul.u32 9, %s19
        %s465 = smul.u32 24, %s21
        %s466 = smul.u32 384, %s21
        %p467 = scmp.lt.s32.totalorder %s466, 1151
        %s468 = scalar_select %p467, %s466, 1151
        %p469 = scmp.lt.s32.totalorder %s20, 0
        %s470 = scalar_select %p469, %s20, 0
        %s471 = sadd.s32 %s470, %s468
        %s472 = smul.addr %s471, 4
        %s473 = scalar_lea.vmem %s1, %s472
        %s474 = smul.u32 384, %s21
        %p475 = scmp.lt.s32.totalorder %s20, 0
        %s476 = scalar_select %p475, %s20, 0
        %s477 = scalar_lea.vmem %s2, %s476
        %s478 = smul.u32 9, %s19
        %p479 = scmp.lt.s32.totalorder %s478, 8
        %s480 = scalar_select %p479, %s478, 8
        %p481 = scmp.lt.s32.totalorder %s20, 0
        %s482 = scalar_select %p481, %s20, 0
        %s483 = sadd.s32 %s482, %s480
        %s484 = smul.addr %s483, 8
        %s485 = scalar_lea.vmem %s3, %s484
        %s486 = smul.u32 9, %s19
        %v488 = vld [vmem:[%s429] sm:$0xff]
        %v489 = vld [vmem:[%s429 + $0x8] sm:$0xff]
        %v490 = vld [vmem:[%s429 + $0x10] sm:$0xff]
        %v491 = vld [vmem:[%s429 + $0x18] sm:$0xff]
        %v492 = vld [vmem:[%s429 + $0x20] sm:$0xff]
        %v493 = vld [vmem:[%s429 + $0x28] sm:$0xff]
        %v494 = vld [vmem:[%s429 + $0x30] sm:$0xff]
        %v495 = vld [vmem:[%s429 + $0x38] sm:$0xff]
        %v496 = vld [vmem:[%s429 + $0x40] sm:$0xff]
        %v497 = vld [vmem:[%s429 + $0x48] sm:$0xff]
        %v498 = vld [vmem:[%s429 + $0x50] sm:$0xff]
        %v499 = vld [vmem:[%s429 + $0x58] sm:$0xff]
        %v500 = vld [vmem:[%s429 + $0x60] sm:$0xff]
        %v501 = vld [vmem:[%s429 + $0x68] sm:$0xff]
        %v502 = vld [vmem:[%s429 + $0x70] sm:$0xff]
        %v503 = vld [vmem:[%s429 + $0x78] sm:$0xff]
        %v504 = vld [vmem:[%s429 + $0x80] sm:$0xff]
        %v505 = vld [vmem:[%s429 + $0x88] sm:$0xff]
        %v506 = vld [vmem:[%s429 + $0x90] sm:$0xff]
        %v507 = vld [vmem:[%s429 + $0x98] sm:$0xff]
        %v508 = vld [vmem:[%s429 + $0xa0] sm:$0xff]
        %v509 = vld [vmem:[%s429 + $0xa8] sm:$0xff]
        %v510 = vld [vmem:[%s429 + $0xb0] sm:$0xff]
        %v511 = vld [vmem:[%s429 + $0xb8] sm:$0xff]
        %v512 = vld [vmem:[%s429 + $0xc0] sm:$0xff]
        %v513 = vld [vmem:[%s429 + $0xc8] sm:$0xff]
        %v514 = vld [vmem:[%s429 + $0xd0] sm:$0xff]
        %v515 = vld [vmem:[%s429 + $0xd8] sm:$0xff]
        %v516 = vld [vmem:[%s429 + $0xe0] sm:$0xff]
        %v517 = vld [vmem:[%s429 + $0xe8] sm:$0xff]
        %v518 = vld [vmem:[%s429 + $0xf0] sm:$0xff]
        %v519 = vld [vmem:[%s429 + $0xf8] sm:$0xff]
        %v520 = vld [vmem:[%s429 + $0x100] sm:$0xff]
        %v521 = vld [vmem:[%s429 + $0x108] sm:$0xff]
        %v522 = vld [vmem:[%s429 + $0x110] sm:$0xff]
        %v523 = vld [vmem:[%s429 + $0x118] sm:$0xff]
        %v524 = vld [vmem:[%s429 + $0x120] sm:$0xff]
        %v525 = vld [vmem:[%s429 + $0x128] sm:$0xff]
        %v526 = vld [vmem:[%s429 + $0x130] sm:$0xff]
        %v527 = vld [vmem:[%s429 + $0x138] sm:$0xff]
        %v528 = vld [vmem:[%s429 + $0x140] sm:$0xff]
        %v529 = vld [vmem:[%s429 + $0x148] sm:$0xff]
        %v530 = vld [vmem:[%s429 + $0x150] sm:$0xff]
        %v531 = vld [vmem:[%s429 + $0x158] sm:$0xff]
        %v532 = vld [vmem:[%s429 + $0x160] sm:$0xff]
        %v533 = vld [vmem:[%s429 + $0x168] sm:$0xff]
        %v534 = vld [vmem:[%s429 + $0x170] sm:$0xff]
        %v535 = vld [vmem:[%s429 + $0x178] sm:$0xff]
        %v536 = vld [vmem:[%s429 + $0x180] sm:$0xff]
        %v537 = vld [vmem:[%s429 + $0x188] sm:$0xff]
        %v538 = vld [vmem:[%s429 + $0x190] sm:$0xff]
        %v539 = vld [vmem:[%s429 + $0x198] sm:$0xff]
        %v540 = vld [vmem:[%s429 + $0x1a0] sm:$0xff]
        %v541 = vld [vmem:[%s429 + $0x1a8] sm:$0xff]
        %v542 = vld [vmem:[%s429 + $0x1b0] sm:$0xff]
        %v543 = vld [vmem:[%s429 + $0x1b8] sm:$0xff]
        %v544 = vld [vmem:[%s429 + $0x1c0] sm:$0xff]
        %v545 = vld [vmem:[%s429 + $0x1c8] sm:$0xff]
        %v546 = vld [vmem:[%s429 + $0x1d0] sm:$0xff]
        %v547 = vld [vmem:[%s429 + $0x1d8] sm:$0xff]
        %v548 = vld [vmem:[%s429 + $0x1e0] sm:$0xff]
        %v549 = vld [vmem:[%s429 + $0x1e8] sm:$0xff]
        %v550 = vld [vmem:[%s429 + $0x1f0] sm:$0xff]
        %v551 = vld [vmem:[%s429 + $0x1f8] sm:$0xff]
        %v552 = vld [vmem:[%s429 + $0x200] sm:$0xff]
        %v553 = vld [vmem:[%s429 + $0x208] sm:$0xff]
        %v554 = vld [vmem:[%s429 + $0x210] sm:$0xff]
        %v555 = vld [vmem:[%s429 + $0x218] sm:$0xff]
        %v556 = vld [vmem:[%s429 + $0x220] sm:$0xff]
        %v557 = vld [vmem:[%s429 + $0x228] sm:$0xff]
        %v558 = vld [vmem:[%s429 + $0x230] sm:$0xff]
        %v559 = vld [vmem:[%s429 + $0x238] sm:$0xff]
        %v560 = vld [vmem:[%s429 + $0x240] sm:$0xff]
        %v561 = vld [vmem:[%s429 + $0x248] sm:$0xff]
        %v562 = vld [vmem:[%s429 + $0x250] sm:$0xff]
        %v563 = vld [vmem:[%s429 + $0x258] sm:$0xff]
        %v564 = vld [vmem:[%s429 + $0x260] sm:$0xff]
        %v565 = vld [vmem:[%s429 + $0x268] sm:$0xff]
        %v566 = vld [vmem:[%s429 + $0x270] sm:$0xff]
        %v567 = vld [vmem:[%s429 + $0x278] sm:$0xff]
        %v568 = vld [vmem:[%s429 + $0x280] sm:$0xff]
        %v569 = vld [vmem:[%s429 + $0x288] sm:$0xff]
        %v570 = vld [vmem:[%s429 + $0x290] sm:$0xff]
        %v571 = vld [vmem:[%s429 + $0x298] sm:$0xff]
        %v572 = vld [vmem:[%s429 + $0x2a0] sm:$0xff]
        %v573 = vld [vmem:[%s429 + $0x2a8] sm:$0xff]
        %v574 = vld [vmem:[%s429 + $0x2b0] sm:$0xff]
        %v575 = vld [vmem:[%s429 + $0x2b8] sm:$0xff]
        %v576 = vld [vmem:[%s429 + $0x2c0] sm:$0xff]
        %v577 = vld [vmem:[%s429 + $0x2c8] sm:$0xff]
        %v578 = vld [vmem:[%s429 + $0x2d0] sm:$0xff]
        %v579 = vld [vmem:[%s429 + $0x2d8] sm:$0xff]
        %v580 = vld [vmem:[%s429 + $0x2e0] sm:$0xff]
        %v581 = vld [vmem:[%s429 + $0x2e8] sm:$0xff]
        %v582 = vld [vmem:[%s429 + $0x2f0] sm:$0xff]
        %v583 = vld [vmem:[%s429 + $0x2f8] sm:$0xff]
        %v584 = vld [vmem:[%s429 + $0x300] sm:$0xff]
        %v585 = vld [vmem:[%s429 + $0x308] sm:$0xff]
        %v586 = vld [vmem:[%s429 + $0x310] sm:$0xff]
        %v587 = vld [vmem:[%s429 + $0x318] sm:$0xff]
        %v588 = vld [vmem:[%s429 + $0x320] sm:$0xff]
        %v589 = vld [vmem:[%s429 + $0x328] sm:$0xff]
        %v590 = vld [vmem:[%s429 + $0x330] sm:$0xff]
        %v591 = vld [vmem:[%s429 + $0x338] sm:$0xff]
        %v592 = vld [vmem:[%s429 + $0x340] sm:$0xff]
        %v593 = vld [vmem:[%s429 + $0x348] sm:$0xff]
        %v594 = vld [vmem:[%s429 + $0x350] sm:$0xff]
        %v595 = vld [vmem:[%s429 + $0x358] sm:$0xff]
        %v596 = vld [vmem:[%s473] sm:$0xf]
        %v597 = vld [vmem:[%s473 + $0x4] sm:$0xf]
        %v598 = vld [vmem:[%s473 + $0x8] sm:$0xf]
        %v599 = vld [vmem:[%s473 + $0xc] sm:$0xf]
        %v600 = vld [vmem:[%s473 + $0x10] sm:$0xf]
        %v601 = vld [vmem:[%s473 + $0x14] sm:$0xf]
        %v602 = vld [vmem:[%s473 + $0x18] sm:$0xf]
        %v603 = vld [vmem:[%s473 + $0x1c] sm:$0xf]
        %v604 = vld [vmem:[%s473 + $0x20] sm:$0xf]
        %v605 = vld [vmem:[%s473 + $0x24] sm:$0xf]
        %v606 = vld [vmem:[%s473 + $0x28] sm:$0xf]
        %v607 = vld [vmem:[%s473 + $0x2c] sm:$0xf]
        %v608 = vld [vmem:[%s473 + $0x30] sm:$0xf]
        %v609 = vld [vmem:[%s473 + $0x34] sm:$0xf]
        %v610 = vld [vmem:[%s473 + $0x38] sm:$0xf]
        %v611 = vld [vmem:[%s473 + $0x3c] sm:$0xf]
        %v612 = vld [vmem:[%s473 + $0x40] sm:$0xf]
        %v613 = vld [vmem:[%s473 + $0x44] sm:$0xf]
        %v614 = vld [vmem:[%s473 + $0x48] sm:$0xf]
        %v615 = vld [vmem:[%s473 + $0x4c] sm:$0xf]
        %v616 = vld [vmem:[%s473 + $0x50] sm:$0xf]
        %v617 = vld [vmem:[%s473 + $0x54] sm:$0xf]
        %v618 = vld [vmem:[%s473 + $0x58] sm:$0xf]
        %v619 = vld [vmem:[%s473 + $0x5c] sm:$0xf]
        %v620 = vld [vmem:[%s473 + $0x60] sm:$0xf]
        %v621 = vld [vmem:[%s473 + $0x64] sm:$0xf]
        %v622 = vld [vmem:[%s473 + $0x68] sm:$0xf]
        %v623 = vld [vmem:[%s473 + $0x6c] sm:$0xf]
        %v624 = vld [vmem:[%s473 + $0x70] sm:$0xf]
        %v625 = vld [vmem:[%s473 + $0x74] sm:$0xf]
        %v626 = vld [vmem:[%s473 + $0x78] sm:$0xf]
        %v627 = vld [vmem:[%s473 + $0x7c] sm:$0xf]
        %v628 = vld [vmem:[%s473 + $0x80] sm:$0xf]
        %v629 = vld [vmem:[%s473 + $0x84] sm:$0xf]
        %v630 = vld [vmem:[%s473 + $0x88] sm:$0xf]
        %v631 = vld [vmem:[%s473 + $0x8c] sm:$0xf]
        %v632 = vld [vmem:[%s473 + $0x90] sm:$0xf]
        %v633 = vld [vmem:[%s473 + $0x94] sm:$0xf]
        %v634 = vld [vmem:[%s473 + $0x98] sm:$0xf]
        %v635 = vld [vmem:[%s473 + $0x9c] sm:$0xf]
        %v636 = vld [vmem:[%s473 + $0xa0] sm:$0xf]
        %v637 = vld [vmem:[%s473 + $0xa4] sm:$0xf]
        %v638 = vld [vmem:[%s473 + $0xa8] sm:$0xf]
        %v639 = vld [vmem:[%s473 + $0xac] sm:$0xf]
        %v640 = vld [vmem:[%s473 + $0xb0] sm:$0xf]
        %v641 = vld [vmem:[%s473 + $0xb4] sm:$0xf]
        %v642 = vld [vmem:[%s473 + $0xb8] sm:$0xf]
        %v643 = vld [vmem:[%s473 + $0xbc] sm:$0xf]
        %v644 = vld [vmem:[%s473 + $0xc0] sm:$0xf]
        %v645 = vld [vmem:[%s473 + $0xc4] sm:$0xf]
        %v646 = vld [vmem:[%s473 + $0xc8] sm:$0xf]
        %v647 = vld [vmem:[%s473 + $0xcc] sm:$0xf]
        %v648 = vld [vmem:[%s473 + $0xd0] sm:$0xf]
        %v649 = vld [vmem:[%s473 + $0xd4] sm:$0xf]
        %v650 = vld [vmem:[%s473 + $0xd8] sm:$0xf]
        %v651 = vld [vmem:[%s473 + $0xdc] sm:$0xf]
        %v652 = vld [vmem:[%s473 + $0xe0] sm:$0xf]
        %v653 = vld [vmem:[%s473 + $0xe4] sm:$0xf]
        %v654 = vld [vmem:[%s473 + $0xe8] sm:$0xf]
        %v655 = vld [vmem:[%s473 + $0xec] sm:$0xf]
        %v656 = vld [vmem:[%s473 + $0xf0] sm:$0xf]
        %v657 = vld [vmem:[%s473 + $0xf4] sm:$0xf]
        %v658 = vld [vmem:[%s473 + $0xf8] sm:$0xf]
        %v659 = vld [vmem:[%s473 + $0xfc] sm:$0xf]
        %v660 = vld [vmem:[%s473 + $0x100] sm:$0xf]
        %v661 = vld [vmem:[%s473 + $0x104] sm:$0xf]
        %v662 = vld [vmem:[%s473 + $0x108] sm:$0xf]
        %v663 = vld [vmem:[%s473 + $0x10c] sm:$0xf]
        %v664 = vld [vmem:[%s473 + $0x110] sm:$0xf]
        %v665 = vld [vmem:[%s473 + $0x114] sm:$0xf]
        %v666 = vld [vmem:[%s473 + $0x118] sm:$0xf]
        %v667 = vld [vmem:[%s473 + $0x11c] sm:$0xf]
        %v668 = vld [vmem:[%s473 + $0x120] sm:$0xf]
        %v669 = vld [vmem:[%s473 + $0x124] sm:$0xf]
        %v670 = vld [vmem:[%s473 + $0x128] sm:$0xf]
        %v671 = vld [vmem:[%s473 + $0x12c] sm:$0xf]
        %v672 = vld [vmem:[%s473 + $0x130] sm:$0xf]
        %v673 = vld [vmem:[%s473 + $0x134] sm:$0xf]
        %v674 = vld [vmem:[%s473 + $0x138] sm:$0xf]
        %v675 = vld [vmem:[%s473 + $0x13c] sm:$0xf]
        %v676 = vld [vmem:[%s473 + $0x140] sm:$0xf]
        %v677 = vld [vmem:[%s473 + $0x144] sm:$0xf]
        %v678 = vld [vmem:[%s473 + $0x148] sm:$0xf]
        %v679 = vld [vmem:[%s473 + $0x14c] sm:$0xf]
        %v680 = vld [vmem:[%s473 + $0x150] sm:$0xf]
        %v681 = vld [vmem:[%s473 + $0x154] sm:$0xf]
        %v682 = vld [vmem:[%s473 + $0x158] sm:$0xf]
        %v683 = vld [vmem:[%s473 + $0x15c] sm:$0xf]
        %v684 = vld [vmem:[%s473 + $0x160] sm:$0xf]
        %v685 = vld [vmem:[%s473 + $0x164] sm:$0xf]
        %v686 = vld [vmem:[%s473 + $0x168] sm:$0xf]
        %v687 = vld [vmem:[%s473 + $0x16c] sm:$0xf]
        %v688 = vld [vmem:[%s473 + $0x170] sm:$0xf]
        %v689 = vld [vmem:[%s473 + $0x174] sm:$0xf]
        %v690 = vld [vmem:[%s473 + $0x178] sm:$0xf]
        %v691 = vld [vmem:[%s473 + $0x17c] sm:$0xf]
        %v692 = vld [vmem:[%s473 + $0x180] sm:$0xf]
        %v693 = vld [vmem:[%s473 + $0x184] sm:$0xf]
        %v694 = vld [vmem:[%s473 + $0x188] sm:$0xf]
        %v695 = vld [vmem:[%s473 + $0x18c] sm:$0xf]
        %v696 = vld [vmem:[%s473 + $0x190] sm:$0xf]
        %v697 = vld [vmem:[%s473 + $0x194] sm:$0xf]
        %v698 = vld [vmem:[%s473 + $0x198] sm:$0xf]
        %v699 = vld [vmem:[%s473 + $0x19c] sm:$0xf]
        %v700 = vld [vmem:[%s473 + $0x1a0] sm:$0xf]
        %v701 = vld [vmem:[%s473 + $0x1a4] sm:$0xf]
        %v702 = vld [vmem:[%s473 + $0x1a8] sm:$0xf]
        %v703 = vld [vmem:[%s473 + $0x1ac] sm:$0xf]
        %v704 = vld [vmem:[%s473 + $0x1b0] sm:$0xf]
        %v705 = vld [vmem:[%s473 + $0x1b4] sm:$0xf]
        %v706 = vld [vmem:[%s473 + $0x1b8] sm:$0xf]
        %v707 = vld [vmem:[%s473 + $0x1bc] sm:$0xf]
        %v708 = vld [vmem:[%s473 + $0x1c0] sm:$0xf]
        %v709 = vld [vmem:[%s473 + $0x1c4] sm:$0xf]
        %v710 = vld [vmem:[%s473 + $0x1c8] sm:$0xf]
        %v711 = vld [vmem:[%s473 + $0x1cc] sm:$0xf]
        %v712 = vld [vmem:[%s473 + $0x1d0] sm:$0xf]
        %v713 = vld [vmem:[%s473 + $0x1d4] sm:$0xf]
        %v714 = vld [vmem:[%s473 + $0x1d8] sm:$0xf]
        %v715 = vld [vmem:[%s473 + $0x1dc] sm:$0xf]
        %v716 = vld [vmem:[%s473 + $0x1e0] sm:$0xf]
        %v717 = vld [vmem:[%s473 + $0x1e4] sm:$0xf]
        %v718 = vld [vmem:[%s473 + $0x1e8] sm:$0xf]
        %v719 = vld [vmem:[%s473 + $0x1ec] sm:$0xf]
        %v720 = vld [vmem:[%s473 + $0x1f0] sm:$0xf]
        %v721 = vld [vmem:[%s473 + $0x1f4] sm:$0xf]
        %v722 = vld [vmem:[%s473 + $0x1f8] sm:$0xf]
        %v723 = vld [vmem:[%s473 + $0x1fc] sm:$0xf]
        %v724 = vld [vmem:[%s473 + $0x200] sm:$0xf]
        %v725 = vld [vmem:[%s473 + $0x204] sm:$0xf]
        %v726 = vld [vmem:[%s473 + $0x208] sm:$0xf]
        %v727 = vld [vmem:[%s473 + $0x20c] sm:$0xf]
        %v728 = vld [vmem:[%s473 + $0x210] sm:$0xf]
        %v729 = vld [vmem:[%s473 + $0x214] sm:$0xf]
        %v730 = vld [vmem:[%s473 + $0x218] sm:$0xf]
        %v731 = vld [vmem:[%s473 + $0x21c] sm:$0xf]
        %v732 = vld [vmem:[%s473 + $0x220] sm:$0xf]
        %v733 = vld [vmem:[%s473 + $0x224] sm:$0xf]
        %v734 = vld [vmem:[%s473 + $0x228] sm:$0xf]
        %v735 = vld [vmem:[%s473 + $0x22c] sm:$0xf]
        %v736 = vld [vmem:[%s473 + $0x230] sm:$0xf]
        %v737 = vld [vmem:[%s473 + $0x234] sm:$0xf]
        %v738 = vld [vmem:[%s473 + $0x238] sm:$0xf]
        %v739 = vld [vmem:[%s473 + $0x23c] sm:$0xf]
        %v740 = vld [vmem:[%s473 + $0x240] sm:$0xf]
        %v741 = vld [vmem:[%s473 + $0x244] sm:$0xf]
        %v742 = vld [vmem:[%s473 + $0x248] sm:$0xf]
        %v743 = vld [vmem:[%s473 + $0x24c] sm:$0xf]
        %v744 = vld [vmem:[%s473 + $0x250] sm:$0xf]
        %v745 = vld [vmem:[%s473 + $0x254] sm:$0xf]
        %v746 = vld [vmem:[%s473 + $0x258] sm:$0xf]
        %v747 = vld [vmem:[%s473 + $0x25c] sm:$0xf]
        %v748 = vld [vmem:[%s473 + $0x260] sm:$0xf]
        %v749 = vld [vmem:[%s473 + $0x264] sm:$0xf]
        %v750 = vld [vmem:[%s473 + $0x268] sm:$0xf]
        %v751 = vld [vmem:[%s473 + $0x26c] sm:$0xf]
        %v752 = vld [vmem:[%s473 + $0x270] sm:$0xf]
        %v753 = vld [vmem:[%s473 + $0x274] sm:$0xf]
        %v754 = vld [vmem:[%s473 + $0x278] sm:$0xf]
        %v755 = vld [vmem:[%s473 + $0x27c] sm:$0xf]
        %v756 = vld [vmem:[%s473 + $0x280] sm:$0xf]
        %v757 = vld [vmem:[%s473 + $0x284] sm:$0xf]
        %v758 = vld [vmem:[%s473 + $0x288] sm:$0xf]
        %v759 = vld [vmem:[%s473 + $0x28c] sm:$0xf]
        %v760 = vld [vmem:[%s473 + $0x290] sm:$0xf]
        %v761 = vld [vmem:[%s473 + $0x294] sm:$0xf]
        %v762 = vld [vmem:[%s473 + $0x298] sm:$0xf]
        %v763 = vld [vmem:[%s473 + $0x29c] sm:$0xf]
        %v764 = vld [vmem:[%s473 + $0x2a0] sm:$0xf]
        %v765 = vld [vmem:[%s473 + $0x2a4] sm:$0xf]
        %v766 = vld [vmem:[%s473 + $0x2a8] sm:$0xf]
        %v767 = vld [vmem:[%s473 + $0x2ac] sm:$0xf]
        %v768 = vld [vmem:[%s473 + $0x2b0] sm:$0xf]
        %v769 = vld [vmem:[%s473 + $0x2b4] sm:$0xf]
        %v770 = vld [vmem:[%s473 + $0x2b8] sm:$0xf]
        %v771 = vld [vmem:[%s473 + $0x2bc] sm:$0xf]
        %v772 = vld [vmem:[%s473 + $0x2c0] sm:$0xf]
        %v773 = vld [vmem:[%s473 + $0x2c4] sm:$0xf]
        %v774 = vld [vmem:[%s473 + $0x2c8] sm:$0xf]
        %v775 = vld [vmem:[%s473 + $0x2cc] sm:$0xf]
        %v776 = vld [vmem:[%s473 + $0x2d0] sm:$0xf]
        %v777 = vld [vmem:[%s473 + $0x2d4] sm:$0xf]
        %v778 = vld [vmem:[%s473 + $0x2d8] sm:$0xf]
        %v779 = vld [vmem:[%s473 + $0x2dc] sm:$0xf]
        %v780 = vld [vmem:[%s473 + $0x2e0] sm:$0xf]
        %v781 = vld [vmem:[%s473 + $0x2e4] sm:$0xf]
        %v782 = vld [vmem:[%s473 + $0x2e8] sm:$0xf]
        %v783 = vld [vmem:[%s473 + $0x2ec] sm:$0xf]
        %v784 = vld [vmem:[%s473 + $0x2f0] sm:$0xf]
        %v785 = vld [vmem:[%s473 + $0x2f4] sm:$0xf]
        %v786 = vld [vmem:[%s473 + $0x2f8] sm:$0xf]
        %v787 = vld [vmem:[%s473 + $0x2fc] sm:$0xf]
        %v788 = vld [vmem:[%s473 + $0x300] sm:$0xf]
        %v789 = vld [vmem:[%s473 + $0x304] sm:$0xf]
        %v790 = vld [vmem:[%s473 + $0x308] sm:$0xf]
        %v791 = vld [vmem:[%s473 + $0x30c] sm:$0xf]
        %v792 = vld [vmem:[%s473 + $0x310] sm:$0xf]
        %v793 = vld [vmem:[%s473 + $0x314] sm:$0xf]
        %v794 = vld [vmem:[%s473 + $0x318] sm:$0xf]
        %v795 = vld [vmem:[%s473 + $0x31c] sm:$0xf]
        %v796 = vld [vmem:[%s473 + $0x320] sm:$0xf]
        %v797 = vld [vmem:[%s473 + $0x324] sm:$0xf]
        %v798 = vld [vmem:[%s473 + $0x328] sm:$0xf]
        %v799 = vld [vmem:[%s473 + $0x32c] sm:$0xf]
        %v800 = vld [vmem:[%s473 + $0x330] sm:$0xf]
        %v801 = vld [vmem:[%s473 + $0x334] sm:$0xf]
        %v802 = vld [vmem:[%s473 + $0x338] sm:$0xf]
        %v803 = vld [vmem:[%s473 + $0x33c] sm:$0xf]
        %v804 = vld [vmem:[%s473 + $0x340] sm:$0xf]
        %v805 = vld [vmem:[%s473 + $0x344] sm:$0xf]
        %v806 = vld [vmem:[%s473 + $0x348] sm:$0xf]
        %v807 = vld [vmem:[%s473 + $0x34c] sm:$0xf]
        %v808 = vld [vmem:[%s473 + $0x350] sm:$0xf]
        %v809 = vld [vmem:[%s473 + $0x354] sm:$0xf]
        %v810 = vld [vmem:[%s473 + $0x358] sm:$0xf]
        %v811 = vld [vmem:[%s473 + $0x35c] sm:$0xf]
        %v812 = vld [vmem:[%s473 + $0x360] sm:$0xf]
        %v813 = vld [vmem:[%s473 + $0x364] sm:$0xf]
        %v814 = vld [vmem:[%s473 + $0x368] sm:$0xf]
        %v815 = vld [vmem:[%s473 + $0x36c] sm:$0xf]
        %v816 = vld [vmem:[%s473 + $0x370] sm:$0xf]
        %v817 = vld [vmem:[%s473 + $0x374] sm:$0xf]
        %v818 = vld [vmem:[%s473 + $0x378] sm:$0xf]
        %v819 = vld [vmem:[%s473 + $0x37c] sm:$0xf]
        %v820 = vld [vmem:[%s473 + $0x380] sm:$0xf]
        %v821 = vld [vmem:[%s473 + $0x384] sm:$0xf]
        %v822 = vld [vmem:[%s473 + $0x388] sm:$0xf]
        %v823 = vld [vmem:[%s473 + $0x38c] sm:$0xf]
        %v824 = vld [vmem:[%s473 + $0x390] sm:$0xf]
        %v825 = vld [vmem:[%s473 + $0x394] sm:$0xf]
        %v826 = vld [vmem:[%s473 + $0x398] sm:$0xf]
        %v827 = vld [vmem:[%s473 + $0x39c] sm:$0xf]
        %v828 = vld [vmem:[%s473 + $0x3a0] sm:$0xf]
        %v829 = vld [vmem:[%s473 + $0x3a4] sm:$0xf]
        %v830 = vld [vmem:[%s473 + $0x3a8] sm:$0xf]
        %v831 = vld [vmem:[%s473 + $0x3ac] sm:$0xf]
        %v832 = vld [vmem:[%s473 + $0x3b0] sm:$0xf]
        %v833 = vld [vmem:[%s473 + $0x3b4] sm:$0xf]
        %v834 = vld [vmem:[%s473 + $0x3b8] sm:$0xf]
        %v835 = vld [vmem:[%s473 + $0x3bc] sm:$0xf]
        %v836 = vld [vmem:[%s473 + $0x3c0] sm:$0xf]
        %v837 = vld [vmem:[%s473 + $0x3c4] sm:$0xf]
        %v838 = vld [vmem:[%s473 + $0x3c8] sm:$0xf]
        %v839 = vld [vmem:[%s473 + $0x3cc] sm:$0xf]
        %v840 = vld [vmem:[%s473 + $0x3d0] sm:$0xf]
        %v841 = vld [vmem:[%s473 + $0x3d4] sm:$0xf]
        %v842 = vld [vmem:[%s473 + $0x3d8] sm:$0xf]
        %v843 = vld [vmem:[%s473 + $0x3dc] sm:$0xf]
        %v844 = vld [vmem:[%s473 + $0x3e0] sm:$0xf]
        %v845 = vld [vmem:[%s473 + $0x3e4] sm:$0xf]
        %v846 = vld [vmem:[%s473 + $0x3e8] sm:$0xf]
        %v847 = vld [vmem:[%s473 + $0x3ec] sm:$0xf]
        %v848 = vld [vmem:[%s473 + $0x3f0] sm:$0xf]
        %v849 = vld [vmem:[%s473 + $0x3f4] sm:$0xf]
        %v850 = vld [vmem:[%s473 + $0x3f8] sm:$0xf]
        %v851 = vld [vmem:[%s473 + $0x3fc] sm:$0xf]
        %v852 = vld [vmem:[%s473 + $0x400] sm:$0xf]
        %v853 = vld [vmem:[%s473 + $0x404] sm:$0xf]
        %v854 = vld [vmem:[%s473 + $0x408] sm:$0xf]
        %v855 = vld [vmem:[%s473 + $0x40c] sm:$0xf]
        %v856 = vld [vmem:[%s473 + $0x410] sm:$0xf]
        %v857 = vld [vmem:[%s473 + $0x414] sm:$0xf]
        %v858 = vld [vmem:[%s473 + $0x418] sm:$0xf]
        %v859 = vld [vmem:[%s473 + $0x41c] sm:$0xf]
        %v860 = vld [vmem:[%s473 + $0x420] sm:$0xf]
        %v861 = vld [vmem:[%s473 + $0x424] sm:$0xf]
        %v862 = vld [vmem:[%s473 + $0x428] sm:$0xf]
        %v863 = vld [vmem:[%s473 + $0x42c] sm:$0xf]
        %v864 = vld [vmem:[%s473 + $0x430] sm:$0xf]
        %v865 = vld [vmem:[%s473 + $0x434] sm:$0xf]
        %v866 = vld [vmem:[%s473 + $0x438] sm:$0xf]
        %v867 = vld [vmem:[%s473 + $0x43c] sm:$0xf]
        %v868 = vld [vmem:[%s473 + $0x440] sm:$0xf]
        %v869 = vld [vmem:[%s473 + $0x444] sm:$0xf]
        %v870 = vld [vmem:[%s473 + $0x448] sm:$0xf]
        %v871 = vld [vmem:[%s473 + $0x44c] sm:$0xf]
        %v872 = vld [vmem:[%s473 + $0x450] sm:$0xf]
        %v873 = vld [vmem:[%s473 + $0x454] sm:$0xf]
        %v874 = vld [vmem:[%s473 + $0x458] sm:$0xf]
        %v875 = vld [vmem:[%s473 + $0x45c] sm:$0xf]
        %v876 = vld [vmem:[%s473 + $0x460] sm:$0xf]
        %v877 = vld [vmem:[%s473 + $0x464] sm:$0xf]
        %v878 = vld [vmem:[%s473 + $0x468] sm:$0xf]
        %v879 = vld [vmem:[%s473 + $0x46c] sm:$0xf]
        %v880 = vld [vmem:[%s473 + $0x470] sm:$0xf]
        %v881 = vld [vmem:[%s473 + $0x474] sm:$0xf]
        %v882 = vld [vmem:[%s473 + $0x478] sm:$0xf]
        %v883 = vld [vmem:[%s473 + $0x47c] sm:$0xf]
        %v884 = vld [vmem:[%s473 + $0x480] sm:$0xf]
        %v885 = vld [vmem:[%s473 + $0x484] sm:$0xf]
        %v886 = vld [vmem:[%s473 + $0x488] sm:$0xf]
        %v887 = vld [vmem:[%s473 + $0x48c] sm:$0xf]
        %v888 = vld [vmem:[%s473 + $0x490] sm:$0xf]
        %v889 = vld [vmem:[%s473 + $0x494] sm:$0xf]
        %v890 = vld [vmem:[%s473 + $0x498] sm:$0xf]
        %v891 = vld [vmem:[%s473 + $0x49c] sm:$0xf]
        %v892 = vld [vmem:[%s473 + $0x4a0] sm:$0xf]
        %v893 = vld [vmem:[%s473 + $0x4a4] sm:$0xf]
        %v894 = vld [vmem:[%s473 + $0x4a8] sm:$0xf]
        %v895 = vld [vmem:[%s473 + $0x4ac] sm:$0xf]
        %v896 = vld [vmem:[%s473 + $0x4b0] sm:$0xf]
        %v897 = vld [vmem:[%s473 + $0x4b4] sm:$0xf]
        %v898 = vld [vmem:[%s473 + $0x4b8] sm:$0xf]
        %v899 = vld [vmem:[%s473 + $0x4bc] sm:$0xf]
        %v900 = vld [vmem:[%s473 + $0x4c0] sm:$0xf]
        %v901 = vld [vmem:[%s473 + $0x4c4] sm:$0xf]
        %v902 = vld [vmem:[%s473 + $0x4c8] sm:$0xf]
        %v903 = vld [vmem:[%s473 + $0x4cc] sm:$0xf]
        %v904 = vld [vmem:[%s473 + $0x4d0] sm:$0xf]
        %v905 = vld [vmem:[%s473 + $0x4d4] sm:$0xf]
        %v906 = vld [vmem:[%s473 + $0x4d8] sm:$0xf]
        %v907 = vld [vmem:[%s473 + $0x4dc] sm:$0xf]
        %v908 = vld [vmem:[%s473 + $0x4e0] sm:$0xf]
        %v909 = vld [vmem:[%s473 + $0x4e4] sm:$0xf]
        %v910 = vld [vmem:[%s473 + $0x4e8] sm:$0xf]
        %v911 = vld [vmem:[%s473 + $0x4ec] sm:$0xf]
        %v912 = vld [vmem:[%s473 + $0x4f0] sm:$0xf]
        %v913 = vld [vmem:[%s473 + $0x4f4] sm:$0xf]
        %v914 = vld [vmem:[%s473 + $0x4f8] sm:$0xf]
        %v915 = vld [vmem:[%s473 + $0x4fc] sm:$0xf]
        %v916 = vld [vmem:[%s473 + $0x500] sm:$0xf]
        %v917 = vld [vmem:[%s473 + $0x504] sm:$0xf]
        %v918 = vld [vmem:[%s473 + $0x508] sm:$0xf]
        %v919 = vld [vmem:[%s473 + $0x50c] sm:$0xf]
        %v920 = vld [vmem:[%s473 + $0x510] sm:$0xf]
        %v921 = vld [vmem:[%s473 + $0x514] sm:$0xf]
        %v922 = vld [vmem:[%s473 + $0x518] sm:$0xf]
        %v923 = vld [vmem:[%s473 + $0x51c] sm:$0xf]
        %v924 = vld [vmem:[%s473 + $0x520] sm:$0xf]
        %v925 = vld [vmem:[%s473 + $0x524] sm:$0xf]
        %v926 = vld [vmem:[%s473 + $0x528] sm:$0xf]
        %v927 = vld [vmem:[%s473 + $0x52c] sm:$0xf]
        %v928 = vld [vmem:[%s473 + $0x530] sm:$0xf]
        %v929 = vld [vmem:[%s473 + $0x534] sm:$0xf]
        %v930 = vld [vmem:[%s473 + $0x538] sm:$0xf]
        %v931 = vld [vmem:[%s473 + $0x53c] sm:$0xf]
        %v932 = vld [vmem:[%s473 + $0x540] sm:$0xf]
        %v933 = vld [vmem:[%s473 + $0x544] sm:$0xf]
        %v934 = vld [vmem:[%s473 + $0x548] sm:$0xf]
        %v935 = vld [vmem:[%s473 + $0x54c] sm:$0xf]
        %v936 = vld [vmem:[%s473 + $0x550] sm:$0xf]
        %v937 = vld [vmem:[%s473 + $0x554] sm:$0xf]
        %v938 = vld [vmem:[%s473 + $0x558] sm:$0xf]
        %v939 = vld [vmem:[%s473 + $0x55c] sm:$0xf]
        %v940 = vld [vmem:[%s473 + $0x560] sm:$0xf]
        %v941 = vld [vmem:[%s473 + $0x564] sm:$0xf]
        %v942 = vld [vmem:[%s473 + $0x568] sm:$0xf]
        %v943 = vld [vmem:[%s473 + $0x56c] sm:$0xf]
        %v944 = vld [vmem:[%s473 + $0x570] sm:$0xf]
        %v945 = vld [vmem:[%s473 + $0x574] sm:$0xf]
        %v946 = vld [vmem:[%s473 + $0x578] sm:$0xf]
        %v947 = vld [vmem:[%s473 + $0x57c] sm:$0xf]
        %v948 = vld [vmem:[%s473 + $0x580] sm:$0xf]
        %v949 = vld [vmem:[%s473 + $0x584] sm:$0xf]
        %v950 = vld [vmem:[%s473 + $0x588] sm:$0xf]
        %v951 = vld [vmem:[%s473 + $0x58c] sm:$0xf]
        %v952 = vld [vmem:[%s473 + $0x590] sm:$0xf]
        %v953 = vld [vmem:[%s473 + $0x594] sm:$0xf]
        %v954 = vld [vmem:[%s473 + $0x598] sm:$0xf]
        %v955 = vld [vmem:[%s473 + $0x59c] sm:$0xf]
        %v956 = vld [vmem:[%s473 + $0x5a0] sm:$0xf]
        %v957 = vld [vmem:[%s473 + $0x5a4] sm:$0xf]
        %v958 = vld [vmem:[%s473 + $0x5a8] sm:$0xf]
        %v959 = vld [vmem:[%s473 + $0x5ac] sm:$0xf]
        %v960 = vld [vmem:[%s473 + $0x5b0] sm:$0xf]
        %v961 = vld [vmem:[%s473 + $0x5b4] sm:$0xf]
        %v962 = vld [vmem:[%s473 + $0x5b8] sm:$0xf]
        %v963 = vld [vmem:[%s473 + $0x5bc] sm:$0xf]
        %v964 = vld [vmem:[%s473 + $0x5c0] sm:$0xf]
        %v965 = vld [vmem:[%s473 + $0x5c4] sm:$0xf]
        %v966 = vld [vmem:[%s473 + $0x5c8] sm:$0xf]
        %v967 = vld [vmem:[%s473 + $0x5cc] sm:$0xf]
        %v968 = vld [vmem:[%s473 + $0x5d0] sm:$0xf]
        %v969 = vld [vmem:[%s473 + $0x5d4] sm:$0xf]
        %v970 = vld [vmem:[%s473 + $0x5d8] sm:$0xf]
        %v971 = vld [vmem:[%s473 + $0x5dc] sm:$0xf]
        %v972 = vld [vmem:[%s473 + $0x5e0] sm:$0xf]
        %v973 = vld [vmem:[%s473 + $0x5e4] sm:$0xf]
        %v974 = vld [vmem:[%s473 + $0x5e8] sm:$0xf]
        %v975 = vld [vmem:[%s473 + $0x5ec] sm:$0xf]
        %v976 = vld [vmem:[%s473 + $0x5f0] sm:$0xf]
        %v977 = vld [vmem:[%s473 + $0x5f4] sm:$0xf]
        %v978 = vld [vmem:[%s473 + $0x5f8] sm:$0xf]
        %v979 = vld [vmem:[%s473 + $0x5fc] sm:$0xf]
        %v1088 = vunpack.c.l.b16 %v488
        %v1089 = vunpack.c.h.b16 %v488
        %v1090 = vunpack.c.l.b16 %v489
        %v1091 = vunpack.c.h.b16 %v489
        %v1092 = vunpack.c.l.b16 %v490
        %v1093 = vunpack.c.h.b16 %v490
        %v1094 = vunpack.c.l.b16 %v491
        %v1095 = vunpack.c.h.b16 %v491
        %v1096 = vunpack.c.l.b16 %v492
        %v1097 = vunpack.c.h.b16 %v492
        %v1098 = vunpack.c.l.b16 %v493
        %v1099 = vunpack.c.h.b16 %v493
        %v1100 = vunpack.c.l.b16 %v494
        %v1101 = vunpack.c.h.b16 %v494
        %v1102 = vunpack.c.l.b16 %v495
        %v1103 = vunpack.c.h.b16 %v495
        %v1104 = vunpack.c.l.b16 %v496
        %v1105 = vunpack.c.h.b16 %v496
        %v1106 = vunpack.c.l.b16 %v497
        %v1107 = vunpack.c.h.b16 %v497
        %v1108 = vunpack.c.l.b16 %v498
        %v1109 = vunpack.c.h.b16 %v498
        %v1110 = vunpack.c.l.b16 %v499
        %v1111 = vunpack.c.h.b16 %v499
        %v1112 = vunpack.c.l.b16 %v500
        %v1113 = vunpack.c.h.b16 %v500
        %v1114 = vunpack.c.l.b16 %v501
        %v1115 = vunpack.c.h.b16 %v501
        %v1116 = vunpack.c.l.b16 %v502
        %v1117 = vunpack.c.h.b16 %v502
        %v1118 = vunpack.c.l.b16 %v503
        %v1119 = vunpack.c.h.b16 %v503
        %v1120 = vunpack.c.l.b16 %v504
        %v1121 = vunpack.c.h.b16 %v504
        %v1122 = vunpack.c.l.b16 %v505
        %v1123 = vunpack.c.h.b16 %v505
        %v1124 = vunpack.c.l.b16 %v506
        %v1125 = vunpack.c.h.b16 %v506
        %v1126 = vunpack.c.l.b16 %v507
        %v1127 = vunpack.c.h.b16 %v507
        %v1128 = vunpack.c.l.b16 %v508
        %v1129 = vunpack.c.h.b16 %v508
        %v1130 = vunpack.c.l.b16 %v509
        %v1131 = vunpack.c.h.b16 %v509
        %v1132 = vunpack.c.l.b16 %v510
        %v1133 = vunpack.c.h.b16 %v510
        %v1134 = vunpack.c.l.b16 %v511
        %v1135 = vunpack.c.h.b16 %v511
        %v1136 = vunpack.c.l.b16 %v512
        %v1137 = vunpack.c.h.b16 %v512
        %v1138 = vunpack.c.l.b16 %v513
        %v1139 = vunpack.c.h.b16 %v513
        %v1140 = vunpack.c.l.b16 %v514
        %v1141 = vunpack.c.h.b16 %v514
        %v1142 = vunpack.c.l.b16 %v515
        %v1143 = vunpack.c.h.b16 %v515
        %v1144 = vunpack.c.l.b16 %v516
        %v1145 = vunpack.c.h.b16 %v516
        %v1146 = vunpack.c.l.b16 %v517
        %v1147 = vunpack.c.h.b16 %v517
        %v1148 = vunpack.c.l.b16 %v518
        %v1149 = vunpack.c.h.b16 %v518
        %v1150 = vunpack.c.l.b16 %v519
        %v1151 = vunpack.c.h.b16 %v519
        %v1152 = vunpack.c.l.b16 %v520
        %v1153 = vunpack.c.h.b16 %v520
        %v1154 = vunpack.c.l.b16 %v521
        %v1155 = vunpack.c.h.b16 %v521
        %v1156 = vunpack.c.l.b16 %v522
        %v1157 = vunpack.c.h.b16 %v522
        %v1158 = vunpack.c.l.b16 %v523
        %v1159 = vunpack.c.h.b16 %v523
        %v1160 = vunpack.c.l.b16 %v524
        %v1161 = vunpack.c.h.b16 %v524
        %v1162 = vunpack.c.l.b16 %v525
        %v1163 = vunpack.c.h.b16 %v525
        %v1164 = vunpack.c.l.b16 %v526
        %v1165 = vunpack.c.h.b16 %v526
        %v1166 = vunpack.c.l.b16 %v527
        %v1167 = vunpack.c.h.b16 %v527
        %v1168 = vunpack.c.l.b16 %v528
        %v1169 = vunpack.c.h.b16 %v528
        %v1170 = vunpack.c.l.b16 %v529
        %v1171 = vunpack.c.h.b16 %v529
        %v1172 = vunpack.c.l.b16 %v530
        %v1173 = vunpack.c.h.b16 %v530
        %v1174 = vunpack.c.l.b16 %v531
        %v1175 = vunpack.c.h.b16 %v531
        %v1176 = vunpack.c.l.b16 %v532
        %v1177 = vunpack.c.h.b16 %v532
        %v1178 = vunpack.c.l.b16 %v533
        %v1179 = vunpack.c.h.b16 %v533
        %v1180 = vunpack.c.l.b16 %v534
        %v1181 = vunpack.c.h.b16 %v534
        %v1182 = vunpack.c.l.b16 %v535
        %v1183 = vunpack.c.h.b16 %v535
        %v1184 = vunpack.c.l.b16 %v536
        %v1185 = vunpack.c.h.b16 %v536
        %v1186 = vunpack.c.l.b16 %v537
        %v1187 = vunpack.c.h.b16 %v537
        %v1188 = vunpack.c.l.b16 %v538
        %v1189 = vunpack.c.h.b16 %v538
        %v1190 = vunpack.c.l.b16 %v539
        %v1191 = vunpack.c.h.b16 %v539
        %v1192 = vunpack.c.l.b16 %v540
        %v1193 = vunpack.c.h.b16 %v540
        %v1194 = vunpack.c.l.b16 %v541
        %v1195 = vunpack.c.h.b16 %v541
        %v1196 = vunpack.c.l.b16 %v542
        %v1197 = vunpack.c.h.b16 %v542
        %v1198 = vunpack.c.l.b16 %v543
        %v1199 = vunpack.c.h.b16 %v543
        %v1200 = vunpack.c.l.b16 %v544
        %v1201 = vunpack.c.h.b16 %v544
        %v1202 = vunpack.c.l.b16 %v545
        %v1203 = vunpack.c.h.b16 %v545
        %v1204 = vunpack.c.l.b16 %v546
        %v1205 = vunpack.c.h.b16 %v546
        %v1206 = vunpack.c.l.b16 %v547
        %v1207 = vunpack.c.h.b16 %v547
        %v1208 = vunpack.c.l.b16 %v548
        %v1209 = vunpack.c.h.b16 %v548
        %v1210 = vunpack.c.l.b16 %v549
        %v1211 = vunpack.c.h.b16 %v549
        %v1212 = vunpack.c.l.b16 %v550
        %v1213 = vunpack.c.h.b16 %v550
        %v1214 = vunpack.c.l.b16 %v551
        %v1215 = vunpack.c.h.b16 %v551
        %v1216 = vunpack.c.l.b16 %v552
        %v1217 = vunpack.c.h.b16 %v552
        %v1218 = vunpack.c.l.b16 %v553
        %v1219 = vunpack.c.h.b16 %v553
        %v1220 = vunpack.c.l.b16 %v554
        %v1221 = vunpack.c.h.b16 %v554
        %v1222 = vunpack.c.l.b16 %v555
        %v1223 = vunpack.c.h.b16 %v555
        %v1224 = vunpack.c.l.b16 %v556
        %v1225 = vunpack.c.h.b16 %v556
        %v1226 = vunpack.c.l.b16 %v557
        %v1227 = vunpack.c.h.b16 %v557
        %v1228 = vunpack.c.l.b16 %v558
        %v1229 = vunpack.c.h.b16 %v558
        %v1230 = vunpack.c.l.b16 %v559
        %v1231 = vunpack.c.h.b16 %v559
        %v1232 = vunpack.c.l.b16 %v560
        %v1233 = vunpack.c.h.b16 %v560
        %v1234 = vunpack.c.l.b16 %v561
        %v1235 = vunpack.c.h.b16 %v561
        %v1236 = vunpack.c.l.b16 %v562
        %v1237 = vunpack.c.h.b16 %v562
        %v1238 = vunpack.c.l.b16 %v563
        %v1239 = vunpack.c.h.b16 %v563
        %v1240 = vunpack.c.l.b16 %v564
        %v1241 = vunpack.c.h.b16 %v564
        %v1242 = vunpack.c.l.b16 %v565
        %v1243 = vunpack.c.h.b16 %v565
        %v1244 = vunpack.c.l.b16 %v566
        %v1245 = vunpack.c.h.b16 %v566
        %v1246 = vunpack.c.l.b16 %v567
        %v1247 = vunpack.c.h.b16 %v567
        %v1248 = vunpack.c.l.b16 %v568
        %v1249 = vunpack.c.h.b16 %v568
        %v1250 = vunpack.c.l.b16 %v569
        %v1251 = vunpack.c.h.b16 %v569
        %v1252 = vunpack.c.l.b16 %v570
        %v1253 = vunpack.c.h.b16 %v570
        %v1254 = vunpack.c.l.b16 %v571
        %v1255 = vunpack.c.h.b16 %v571
        %v1256 = vunpack.c.l.b16 %v572
        %v1257 = vunpack.c.h.b16 %v572
        %v1258 = vunpack.c.l.b16 %v573
        %v1259 = vunpack.c.h.b16 %v573
        %v1260 = vunpack.c.l.b16 %v574
        %v1261 = vunpack.c.h.b16 %v574
        %v1262 = vunpack.c.l.b16 %v575
        %v1263 = vunpack.c.h.b16 %v575
        %v1264 = vunpack.c.l.b16 %v576
        %v1265 = vunpack.c.h.b16 %v576
        %v1266 = vunpack.c.l.b16 %v577
        %v1267 = vunpack.c.h.b16 %v577
        %v1268 = vunpack.c.l.b16 %v578
        %v1269 = vunpack.c.h.b16 %v578
        %v1270 = vunpack.c.l.b16 %v579
        %v1271 = vunpack.c.h.b16 %v579
        %v1272 = vunpack.c.l.b16 %v580
        %v1273 = vunpack.c.h.b16 %v580
        %v1274 = vunpack.c.l.b16 %v581
        %v1275 = vunpack.c.h.b16 %v581
        %v1276 = vunpack.c.l.b16 %v582
        %v1277 = vunpack.c.h.b16 %v582
        %v1278 = vunpack.c.l.b16 %v583
        %v1279 = vunpack.c.h.b16 %v583
        %v1280 = vunpack.c.l.b16 %v584
        %v1281 = vunpack.c.h.b16 %v584
        %v1282 = vunpack.c.l.b16 %v585
        %v1283 = vunpack.c.h.b16 %v585
        %v1284 = vunpack.c.l.b16 %v586
        %v1285 = vunpack.c.h.b16 %v586
        %v1286 = vunpack.c.l.b16 %v587
        %v1287 = vunpack.c.h.b16 %v587
        %v1288 = vunpack.c.l.b16 %v588
        %v1289 = vunpack.c.h.b16 %v588
        %v1290 = vunpack.c.l.b16 %v589
        %v1291 = vunpack.c.h.b16 %v589
        %v1292 = vunpack.c.l.b16 %v590
        %v1293 = vunpack.c.h.b16 %v590
        %v1294 = vunpack.c.l.b16 %v591
        %v1295 = vunpack.c.h.b16 %v591
        %v1296 = vunpack.c.l.b16 %v592
        %v1297 = vunpack.c.h.b16 %v592
        %v1298 = vunpack.c.l.b16 %v593
        %v1299 = vunpack.c.h.b16 %v593
        %v1300 = vunpack.c.l.b16 %v594
        %v1301 = vunpack.c.h.b16 %v594
        %v1302 = vunpack.c.l.b16 %v595
        %v1303 = vunpack.c.h.b16 %v595
        %v1304 = vpack.c.b16 %v1112, %v1088
        %v1305 = vpack.c.b16 %v1113, %v1089
        %v1306 = vpack.c.b16 %v1114, %v1090
        %v1307 = vpack.c.b16 %v1115, %v1091
        %v1308 = vpack.c.b16 %v1116, %v1092
        %v1309 = vpack.c.b16 %v1117, %v1093
        %v1310 = vpack.c.b16 %v1118, %v1094
        %v1311 = vpack.c.b16 %v1119, %v1095
        %v1312 = vpack.c.b16 %v1120, %v1096
        %v1313 = vpack.c.b16 %v1121, %v1097
        %v1314 = vpack.c.b16 %v1122, %v1098
        %v1315 = vpack.c.b16 %v1123, %v1099
        %v1316 = vpack.c.b16 %v1124, %v1100
        %v1317 = vpack.c.b16 %v1125, %v1101
        %v1318 = vpack.c.b16 %v1126, %v1102
        %v1319 = vpack.c.b16 %v1127, %v1103
        %v1320 = vpack.c.b16 %v1128, %v1104
        %v1321 = vpack.c.b16 %v1129, %v1105
        %v1322 = vpack.c.b16 %v1130, %v1106
        %v1323 = vpack.c.b16 %v1131, %v1107
        %v1324 = vpack.c.b16 %v1132, %v1108
        %v1325 = vpack.c.b16 %v1133, %v1109
        %v1326 = vpack.c.b16 %v1134, %v1110
        %v1327 = vpack.c.b16 %v1135, %v1111
        %v1328 = vpack.c.b16 %v1160, %v1136
        %v1329 = vpack.c.b16 %v1161, %v1137
        %v1330 = vpack.c.b16 %v1162, %v1138
        %v1331 = vpack.c.b16 %v1163, %v1139
        %v1332 = vpack.c.b16 %v1164, %v1140
        %v1333 = vpack.c.b16 %v1165, %v1141
        %v1334 = vpack.c.b16 %v1166, %v1142
        %v1335 = vpack.c.b16 %v1167, %v1143
        %v1336 = vpack.c.b16 %v1168, %v1144
        %v1337 = vpack.c.b16 %v1169, %v1145
        %v1338 = vpack.c.b16 %v1170, %v1146
        %v1339 = vpack.c.b16 %v1171, %v1147
        %v1340 = vpack.c.b16 %v1172, %v1148
        %v1341 = vpack.c.b16 %v1173, %v1149
        %v1342 = vpack.c.b16 %v1174, %v1150
        %v1343 = vpack.c.b16 %v1175, %v1151
        %v1344 = vpack.c.b16 %v1176, %v1152
        %v1345 = vpack.c.b16 %v1177, %v1153
        %v1346 = vpack.c.b16 %v1178, %v1154
        %v1347 = vpack.c.b16 %v1179, %v1155
        %v1348 = vpack.c.b16 %v1180, %v1156
        %v1349 = vpack.c.b16 %v1181, %v1157
        %v1350 = vpack.c.b16 %v1182, %v1158
        %v1351 = vpack.c.b16 %v1183, %v1159
        %v1352 = vpack.c.b16 %v1208, %v1184
        %v1353 = vpack.c.b16 %v1209, %v1185
        %v1354 = vpack.c.b16 %v1210, %v1186
        %v1355 = vpack.c.b16 %v1211, %v1187
        %v1356 = vpack.c.b16 %v1212, %v1188
        %v1357 = vpack.c.b16 %v1213, %v1189
        %v1358 = vpack.c.b16 %v1214, %v1190
        %v1359 = vpack.c.b16 %v1215, %v1191
        %v1360 = vpack.c.b16 %v1216, %v1192
        %v1361 = vpack.c.b16 %v1217, %v1193
        %v1362 = vpack.c.b16 %v1218, %v1194
        %v1363 = vpack.c.b16 %v1219, %v1195
        %v1364 = vpack.c.b16 %v1220, %v1196
        %v1365 = vpack.c.b16 %v1221, %v1197
        %v1366 = vpack.c.b16 %v1222, %v1198
        %v1367 = vpack.c.b16 %v1223, %v1199
        %v1368 = vpack.c.b16 %v1224, %v1200
        %v1369 = vpack.c.b16 %v1225, %v1201
        %v1370 = vpack.c.b16 %v1226, %v1202
        %v1371 = vpack.c.b16 %v1227, %v1203
        %v1372 = vpack.c.b16 %v1228, %v1204
        %v1373 = vpack.c.b16 %v1229, %v1205
        %v1374 = vpack.c.b16 %v1230, %v1206
        %v1375 = vpack.c.b16 %v1231, %v1207
        %v1376 = vpack.c.b16 %v1256, %v1232
        %v1377 = vpack.c.b16 %v1257, %v1233
        %v1378 = vpack.c.b16 %v1258, %v1234
        %v1379 = vpack.c.b16 %v1259, %v1235
        %v1380 = vpack.c.b16 %v1260, %v1236
        %v1381 = vpack.c.b16 %v1261, %v1237
        %v1382 = vpack.c.b16 %v1262, %v1238
        %v1383 = vpack.c.b16 %v1263, %v1239
        %v1384 = vpack.c.b16 %v1264, %v1240
        %v1385 = vpack.c.b16 %v1265, %v1241
        %v1386 = vpack.c.b16 %v1266, %v1242
        %v1387 = vpack.c.b16 %v1267, %v1243
        %v1388 = vpack.c.b16 %v1268, %v1244
        %v1389 = vpack.c.b16 %v1269, %v1245
        %v1390 = vpack.c.b16 %v1270, %v1246
        %v1391 = vpack.c.b16 %v1271, %v1247
        %v1392 = vpack.c.b16 %v1272, %v1248
        %v1393 = vpack.c.b16 %v1273, %v1249
        %v1394 = vpack.c.b16 %v1274, %v1250
        %v1395 = vpack.c.b16 %v1275, %v1251
        %v1396 = vpack.c.b16 %v1276, %v1252
        %v1397 = vpack.c.b16 %v1277, %v1253
        %v1398 = vpack.c.b16 %v1278, %v1254
        %v1399 = vpack.c.b16 %v1279, %v1255
        %v1400 = vpack.c.b16 %v1280, %v1280
        %v1401 = vpack.c.b16 %v1281, %v1281
        %v1402 = vpack.c.b16 %v1282, %v1282
        %v1403 = vpack.c.b16 %v1283, %v1283
        %v1404 = vpack.c.b16 %v1284, %v1284
        %v1405 = vpack.c.b16 %v1285, %v1285
        %v1406 = vpack.c.b16 %v1286, %v1286
        %v1407 = vpack.c.b16 %v1287, %v1287
        %v1408 = vpack.c.b16 %v1288, %v1288
        %v1409 = vpack.c.b16 %v1289, %v1289
        %v1410 = vpack.c.b16 %v1290, %v1290
        %v1411 = vpack.c.b16 %v1291, %v1291
        %v1412 = vpack.c.b16 %v1292, %v1292
        %v1413 = vpack.c.b16 %v1293, %v1293
        %v1414 = vpack.c.b16 %v1294, %v1294
        %v1415 = vpack.c.b16 %v1295, %v1295
        %v1416 = vpack.c.b16 %v1296, %v1296
        %v1417 = vpack.c.b16 %v1297, %v1297
        %v1418 = vpack.c.b16 %v1298, %v1298
        %v1419 = vpack.c.b16 %v1299, %v1299
        %v1420 = vpack.c.b16 %v1300, %v1300
        %v1421 = vpack.c.b16 %v1301, %v1301
        %v1422 = vpack.c.b16 %v1302, %v1302
        %v1423 = vpack.c.b16 %v1303, %v1303
        %v1928 = vunpack.c.l.b16 %v596
        %v1929 = vunpack.c.l.b16 %v597
        %v1930 = vunpack.c.l.b16 %v598
        %v1931 = vunpack.c.l.b16 %v599
        %v1932 = vunpack.c.l.b16 %v600
        %v1933 = vunpack.c.l.b16 %v601
        %v1934 = vunpack.c.l.b16 %v602
        %v1935 = vunpack.c.l.b16 %v603
        %v1936 = vunpack.c.l.b16 %v604
        %v1937 = vunpack.c.l.b16 %v605
        %v1938 = vunpack.c.l.b16 %v606
        %v1939 = vunpack.c.l.b16 %v607
        %v1940 = vunpack.c.l.b16 %v608
        %v1941 = vunpack.c.l.b16 %v609
        %v1942 = vunpack.c.l.b16 %v610
        %v1943 = vunpack.c.l.b16 %v611
        %v1944 = vunpack.c.l.b16 %v612
        %v1945 = vunpack.c.l.b16 %v613
        %v1946 = vunpack.c.l.b16 %v614
        %v1947 = vunpack.c.l.b16 %v615
        %v1948 = vunpack.c.l.b16 %v616
        %v1949 = vunpack.c.l.b16 %v617
        %v1950 = vunpack.c.l.b16 %v618
        %v1951 = vunpack.c.l.b16 %v619
        %v1952 = vunpack.c.l.b16 %v620
        %v1953 = vunpack.c.l.b16 %v621
        %v1954 = vunpack.c.l.b16 %v622
        %v1955 = vunpack.c.l.b16 %v623
        %v1956 = vunpack.c.l.b16 %v624
        %v1957 = vunpack.c.l.b16 %v625
        %v1958 = vunpack.c.l.b16 %v626
        %v1959 = vunpack.c.l.b16 %v627
        %v1960 = vunpack.c.l.b16 %v628
        %v1961 = vunpack.c.l.b16 %v629
        %v1962 = vunpack.c.l.b16 %v630
        %v1963 = vunpack.c.l.b16 %v631
        %v1964 = vunpack.c.l.b16 %v632
        %v1965 = vunpack.c.l.b16 %v633
        %v1966 = vunpack.c.l.b16 %v634
        %v1967 = vunpack.c.l.b16 %v635
        %v1968 = vunpack.c.l.b16 %v636
        %v1969 = vunpack.c.l.b16 %v637
        %v1970 = vunpack.c.l.b16 %v638
        %v1971 = vunpack.c.l.b16 %v639
        %v1972 = vunpack.c.l.b16 %v640
        %v1973 = vunpack.c.l.b16 %v641
        %v1974 = vunpack.c.l.b16 %v642
        %v1975 = vunpack.c.l.b16 %v643
        %v1976 = vunpack.c.l.b16 %v644
        %v1977 = vunpack.c.l.b16 %v645
        %v1978 = vunpack.c.l.b16 %v646
        %v1979 = vunpack.c.l.b16 %v647
        %v1980 = vunpack.c.l.b16 %v648
        %v1981 = vunpack.c.l.b16 %v649
        %v1982 = vunpack.c.l.b16 %v650
        %v1983 = vunpack.c.l.b16 %v651
        %v1984 = vunpack.c.l.b16 %v652
        %v1985 = vunpack.c.l.b16 %v653
        %v1986 = vunpack.c.l.b16 %v654
        %v1987 = vunpack.c.l.b16 %v655
        %v1988 = vunpack.c.l.b16 %v656
        %v1989 = vunpack.c.l.b16 %v657
        %v1990 = vunpack.c.l.b16 %v658
        %v1991 = vunpack.c.l.b16 %v659
        %v1992 = vunpack.c.l.b16 %v660
        %v1993 = vunpack.c.l.b16 %v661
        %v1994 = vunpack.c.l.b16 %v662
        %v1995 = vunpack.c.l.b16 %v663
        %v1996 = vunpack.c.l.b16 %v664
        %v1997 = vunpack.c.l.b16 %v665
        %v1998 = vunpack.c.l.b16 %v666
        %v1999 = vunpack.c.l.b16 %v667
        %v2000 = vunpack.c.l.b16 %v668
        %v2001 = vunpack.c.l.b16 %v669
        %v2002 = vunpack.c.l.b16 %v670
        %v2003 = vunpack.c.l.b16 %v671
        %v2004 = vunpack.c.l.b16 %v672
        %v2005 = vunpack.c.l.b16 %v673
        %v2006 = vunpack.c.l.b16 %v674
        %v2007 = vunpack.c.l.b16 %v675
        %v2008 = vunpack.c.l.b16 %v676
        %v2009 = vunpack.c.l.b16 %v677
        %v2010 = vunpack.c.l.b16 %v678
        %v2011 = vunpack.c.l.b16 %v679
        %v2012 = vunpack.c.l.b16 %v680
        %v2013 = vunpack.c.l.b16 %v681
        %v2014 = vunpack.c.l.b16 %v682
        %v2015 = vunpack.c.l.b16 %v683
        %v2016 = vunpack.c.l.b16 %v684
        %v2017 = vunpack.c.l.b16 %v685
        %v2018 = vunpack.c.l.b16 %v686
        %v2019 = vunpack.c.l.b16 %v687
        %v2020 = vunpack.c.l.b16 %v688
        %v2021 = vunpack.c.l.b16 %v689
        %v2022 = vunpack.c.l.b16 %v690
        %v2023 = vunpack.c.l.b16 %v691
        %v2024 = vunpack.c.l.b16 %v692
        %v2025 = vunpack.c.l.b16 %v693
        %v2026 = vunpack.c.l.b16 %v694
        %v2027 = vunpack.c.l.b16 %v695
        %v2028 = vunpack.c.l.b16 %v696
        %v2029 = vunpack.c.l.b16 %v697
        %v2030 = vunpack.c.l.b16 %v698
        %v2031 = vunpack.c.l.b16 %v699
        %v2032 = vunpack.c.l.b16 %v700
        %v2033 = vunpack.c.l.b16 %v701
        %v2034 = vunpack.c.l.b16 %v702
        %v2035 = vunpack.c.l.b16 %v703
        %v2036 = vunpack.c.l.b16 %v704
        %v2037 = vunpack.c.l.b16 %v705
        %v2038 = vunpack.c.l.b16 %v706
        %v2039 = vunpack.c.l.b16 %v707
        %v2040 = vunpack.c.l.b16 %v708
        %v2041 = vunpack.c.l.b16 %v709
        %v2042 = vunpack.c.l.b16 %v710
        %v2043 = vunpack.c.l.b16 %v711
        %v2044 = vunpack.c.l.b16 %v712
        %v2045 = vunpack.c.l.b16 %v713
        %v2046 = vunpack.c.l.b16 %v714
        %v2047 = vunpack.c.l.b16 %v715
        %v2048 = vunpack.c.l.b16 %v716
        %v2049 = vunpack.c.l.b16 %v717
        %v2050 = vunpack.c.l.b16 %v718
        %v2051 = vunpack.c.l.b16 %v719
        %v2052 = vunpack.c.l.b16 %v720
        %v2053 = vunpack.c.l.b16 %v721
        %v2054 = vunpack.c.l.b16 %v722
        %v2055 = vunpack.c.l.b16 %v723
        %v2056 = vunpack.c.l.b16 %v724
        %v2057 = vunpack.c.l.b16 %v725
        %v2058 = vunpack.c.l.b16 %v726
        %v2059 = vunpack.c.l.b16 %v727
        %v2060 = vunpack.c.l.b16 %v728
        %v2061 = vunpack.c.l.b16 %v729
        %v2062 = vunpack.c.l.b16 %v730
        %v2063 = vunpack.c.l.b16 %v731
        %v2064 = vunpack.c.l.b16 %v732
        %v2065 = vunpack.c.l.b16 %v733
        %v2066 = vunpack.c.l.b16 %v734
        %v2067 = vunpack.c.l.b16 %v735
        %v2068 = vunpack.c.l.b16 %v736
        %v2069 = vunpack.c.l.b16 %v737
        %v2070 = vunpack.c.l.b16 %v738
        %v2071 = vunpack.c.l.b16 %v739
        %v2072 = vunpack.c.l.b16 %v740
        %v2073 = vunpack.c.l.b16 %v741
        %v2074 = vunpack.c.l.b16 %v742
        %v2075 = vunpack.c.l.b16 %v743
        %v2076 = vunpack.c.l.b16 %v744
        %v2077 = vunpack.c.l.b16 %v745
        %v2078 = vunpack.c.l.b16 %v746
        %v2079 = vunpack.c.l.b16 %v747
        %v2080 = vunpack.c.l.b16 %v748
        %v2081 = vunpack.c.l.b16 %v749
        %v2082 = vunpack.c.l.b16 %v750
        %v2083 = vunpack.c.l.b16 %v751
        %v2084 = vunpack.c.l.b16 %v752
        %v2085 = vunpack.c.l.b16 %v753
        %v2086 = vunpack.c.l.b16 %v754
        %v2087 = vunpack.c.l.b16 %v755
        %v2088 = vunpack.c.l.b16 %v756
        %v2089 = vunpack.c.l.b16 %v757
        %v2090 = vunpack.c.l.b16 %v758
        %v2091 = vunpack.c.l.b16 %v759
        %v2092 = vunpack.c.l.b16 %v760
        %v2093 = vunpack.c.l.b16 %v761
        %v2094 = vunpack.c.l.b16 %v762
        %v2095 = vunpack.c.l.b16 %v763
        %v2096 = vunpack.c.l.b16 %v764
        %v2097 = vunpack.c.l.b16 %v765
        %v2098 = vunpack.c.l.b16 %v766
        %v2099 = vunpack.c.l.b16 %v767
        %v2100 = vunpack.c.l.b16 %v768
        %v2101 = vunpack.c.l.b16 %v769
        %v2102 = vunpack.c.l.b16 %v770
        %v2103 = vunpack.c.l.b16 %v771
        %v2104 = vunpack.c.l.b16 %v772
        %v2105 = vunpack.c.l.b16 %v773
        %v2106 = vunpack.c.l.b16 %v774
        %v2107 = vunpack.c.l.b16 %v775
        %v2108 = vunpack.c.l.b16 %v776
        %v2109 = vunpack.c.l.b16 %v777
        %v2110 = vunpack.c.l.b16 %v778
        %v2111 = vunpack.c.l.b16 %v779
        %v2112 = vunpack.c.l.b16 %v780
        %v2113 = vunpack.c.l.b16 %v781
        %v2114 = vunpack.c.l.b16 %v782
        %v2115 = vunpack.c.l.b16 %v783
        %v2116 = vunpack.c.l.b16 %v784
        %v2117 = vunpack.c.l.b16 %v785
        %v2118 = vunpack.c.l.b16 %v786
        %v2119 = vunpack.c.l.b16 %v787
        %v2120 = vunpack.c.l.b16 %v788
        %v2121 = vunpack.c.l.b16 %v789
        %v2122 = vunpack.c.l.b16 %v790
        %v2123 = vunpack.c.l.b16 %v791
        %v2124 = vunpack.c.l.b16 %v792
        %v2125 = vunpack.c.l.b16 %v793
        %v2126 = vunpack.c.l.b16 %v794
        %v2127 = vunpack.c.l.b16 %v795
        %v2128 = vunpack.c.l.b16 %v796
        %v2129 = vunpack.c.l.b16 %v797
        %v2130 = vunpack.c.l.b16 %v798
        %v2131 = vunpack.c.l.b16 %v799
        %v2132 = vunpack.c.l.b16 %v800
        %v2133 = vunpack.c.l.b16 %v801
        %v2134 = vunpack.c.l.b16 %v802
        %v2135 = vunpack.c.l.b16 %v803
        %v2136 = vunpack.c.l.b16 %v804
        %v2137 = vunpack.c.l.b16 %v805
        %v2138 = vunpack.c.l.b16 %v806
        %v2139 = vunpack.c.l.b16 %v807
        %v2140 = vunpack.c.l.b16 %v808
        %v2141 = vunpack.c.l.b16 %v809
        %v2142 = vunpack.c.l.b16 %v810
        %v2143 = vunpack.c.l.b16 %v811
        %v2144 = vunpack.c.l.b16 %v812
        %v2145 = vunpack.c.l.b16 %v813
        %v2146 = vunpack.c.l.b16 %v814
        %v2147 = vunpack.c.l.b16 %v815
        %v2148 = vunpack.c.l.b16 %v816
        %v2149 = vunpack.c.l.b16 %v817
        %v2150 = vunpack.c.l.b16 %v818
        %v2151 = vunpack.c.l.b16 %v819
        %v2152 = vunpack.c.l.b16 %v820
        %v2153 = vunpack.c.l.b16 %v821
        %v2154 = vunpack.c.l.b16 %v822
        %v2155 = vunpack.c.l.b16 %v823
        %v2156 = vunpack.c.l.b16 %v824
        %v2157 = vunpack.c.l.b16 %v825
        %v2158 = vunpack.c.l.b16 %v826
        %v2159 = vunpack.c.l.b16 %v827
        %v2160 = vunpack.c.l.b16 %v828
        %v2161 = vunpack.c.l.b16 %v829
        %v2162 = vunpack.c.l.b16 %v830
        %v2163 = vunpack.c.l.b16 %v831
        %v2164 = vunpack.c.l.b16 %v832
        %v2165 = vunpack.c.l.b16 %v833
        %v2166 = vunpack.c.l.b16 %v834
        %v2167 = vunpack.c.l.b16 %v835
        %v2168 = vunpack.c.l.b16 %v836
        %v2169 = vunpack.c.l.b16 %v837
        %v2170 = vunpack.c.l.b16 %v838
        %v2171 = vunpack.c.l.b16 %v839
        %v2172 = vunpack.c.l.b16 %v840
        %v2173 = vunpack.c.l.b16 %v841
        %v2174 = vunpack.c.l.b16 %v842
        %v2175 = vunpack.c.l.b16 %v843
        %v2176 = vunpack.c.l.b16 %v844
        %v2177 = vunpack.c.l.b16 %v845
        %v2178 = vunpack.c.l.b16 %v846
        %v2179 = vunpack.c.l.b16 %v847
        %v2180 = vunpack.c.l.b16 %v848
        %v2181 = vunpack.c.l.b16 %v849
        %v2182 = vunpack.c.l.b16 %v850
        %v2183 = vunpack.c.l.b16 %v851
        %v2184 = vunpack.c.l.b16 %v852
        %v2185 = vunpack.c.l.b16 %v853
        %v2186 = vunpack.c.l.b16 %v854
        %v2187 = vunpack.c.l.b16 %v855
        %v2188 = vunpack.c.l.b16 %v856
        %v2189 = vunpack.c.l.b16 %v857
        %v2190 = vunpack.c.l.b16 %v858
        %v2191 = vunpack.c.l.b16 %v859
        %v2192 = vunpack.c.l.b16 %v860
        %v2193 = vunpack.c.l.b16 %v861
        %v2194 = vunpack.c.l.b16 %v862
        %v2195 = vunpack.c.l.b16 %v863
        %v2196 = vunpack.c.l.b16 %v864
        %v2197 = vunpack.c.l.b16 %v865
        %v2198 = vunpack.c.l.b16 %v866
        %v2199 = vunpack.c.l.b16 %v867
        %v2200 = vunpack.c.l.b16 %v868
        %v2201 = vunpack.c.l.b16 %v869
        %v2202 = vunpack.c.l.b16 %v870
        %v2203 = vunpack.c.l.b16 %v871
        %v2204 = vunpack.c.l.b16 %v872
        %v2205 = vunpack.c.l.b16 %v873
        %v2206 = vunpack.c.l.b16 %v874
        %v2207 = vunpack.c.l.b16 %v875
        %v2208 = vunpack.c.l.b16 %v876
        %v2209 = vunpack.c.l.b16 %v877
        %v2210 = vunpack.c.l.b16 %v878
        %v2211 = vunpack.c.l.b16 %v879
        %v2212 = vunpack.c.l.b16 %v880
        %v2213 = vunpack.c.l.b16 %v881
        %v2214 = vunpack.c.l.b16 %v882
        %v2215 = vunpack.c.l.b16 %v883
        %v2216 = vunpack.c.l.b16 %v884
        %v2217 = vunpack.c.l.b16 %v885
        %v2218 = vunpack.c.l.b16 %v886
        %v2219 = vunpack.c.l.b16 %v887
        %v2220 = vunpack.c.l.b16 %v888
        %v2221 = vunpack.c.l.b16 %v889
        %v2222 = vunpack.c.l.b16 %v890
        %v2223 = vunpack.c.l.b16 %v891
        %v2224 = vunpack.c.l.b16 %v892
        %v2225 = vunpack.c.l.b16 %v893
        %v2226 = vunpack.c.l.b16 %v894
        %v2227 = vunpack.c.l.b16 %v895
        %v2228 = vunpack.c.l.b16 %v896
        %v2229 = vunpack.c.l.b16 %v897
        %v2230 = vunpack.c.l.b16 %v898
        %v2231 = vunpack.c.l.b16 %v899
        %v2232 = vunpack.c.l.b16 %v900
        %v2233 = vunpack.c.l.b16 %v901
        %v2234 = vunpack.c.l.b16 %v902
        %v2235 = vunpack.c.l.b16 %v903
        %v2236 = vunpack.c.l.b16 %v904
        %v2237 = vunpack.c.l.b16 %v905
        %v2238 = vunpack.c.l.b16 %v906
        %v2239 = vunpack.c.l.b16 %v907
        %v2240 = vunpack.c.l.b16 %v908
        %v2241 = vunpack.c.l.b16 %v909
        %v2242 = vunpack.c.l.b16 %v910
        %v2243 = vunpack.c.l.b16 %v911
        %v2244 = vunpack.c.l.b16 %v912
        %v2245 = vunpack.c.l.b16 %v913
        %v2246 = vunpack.c.l.b16 %v914
        %v2247 = vunpack.c.l.b16 %v915
        %v2248 = vunpack.c.l.b16 %v916
        %v2249 = vunpack.c.l.b16 %v917
        %v2250 = vunpack.c.l.b16 %v918
        %v2251 = vunpack.c.l.b16 %v919
        %v2252 = vunpack.c.l.b16 %v920
        %v2253 = vunpack.c.l.b16 %v921
        %v2254 = vunpack.c.l.b16 %v922
        %v2255 = vunpack.c.l.b16 %v923
        %v2256 = vunpack.c.l.b16 %v924
        %v2257 = vunpack.c.l.b16 %v925
        %v2258 = vunpack.c.l.b16 %v926
        %v2259 = vunpack.c.l.b16 %v927
        %v2260 = vunpack.c.l.b16 %v928
        %v2261 = vunpack.c.l.b16 %v929
        %v2262 = vunpack.c.l.b16 %v930
        %v2263 = vunpack.c.l.b16 %v931
        %v2264 = vunpack.c.l.b16 %v932
        %v2265 = vunpack.c.l.b16 %v933
        %v2266 = vunpack.c.l.b16 %v934
        %v2267 = vunpack.c.l.b16 %v935
        %v2268 = vunpack.c.l.b16 %v936
        %v2269 = vunpack.c.l.b16 %v937
        %v2270 = vunpack.c.l.b16 %v938
        %v2271 = vunpack.c.l.b16 %v939
        %v2272 = vunpack.c.l.b16 %v940
        %v2273 = vunpack.c.l.b16 %v941
        %v2274 = vunpack.c.l.b16 %v942
        %v2275 = vunpack.c.l.b16 %v943
        %v2276 = vunpack.c.l.b16 %v944
        %v2277 = vunpack.c.l.b16 %v945
        %v2278 = vunpack.c.l.b16 %v946
        %v2279 = vunpack.c.l.b16 %v947
        %v2280 = vunpack.c.l.b16 %v948
        %v2281 = vunpack.c.l.b16 %v949
        %v2282 = vunpack.c.l.b16 %v950
        %v2283 = vunpack.c.l.b16 %v951
        %v2284 = vunpack.c.l.b16 %v952
        %v2285 = vunpack.c.l.b16 %v953
        %v2286 = vunpack.c.l.b16 %v954
        %v2287 = vunpack.c.l.b16 %v955
        %v2288 = vunpack.c.l.b16 %v956
        %v2289 = vunpack.c.l.b16 %v957
        %v2290 = vunpack.c.l.b16 %v958
        %v2291 = vunpack.c.l.b16 %v959
        %v2292 = vunpack.c.l.b16 %v960
        %v2293 = vunpack.c.l.b16 %v961
        %v2294 = vunpack.c.l.b16 %v962
        %v2295 = vunpack.c.l.b16 %v963
        %v2296 = vunpack.c.l.b16 %v964
        %v2297 = vunpack.c.l.b16 %v965
        %v2298 = vunpack.c.l.b16 %v966
        %v2299 = vunpack.c.l.b16 %v967
        %v2300 = vunpack.c.l.b16 %v968
        %v2301 = vunpack.c.l.b16 %v969
        %v2302 = vunpack.c.l.b16 %v970
        %v2303 = vunpack.c.l.b16 %v971
        %v2304 = vunpack.c.l.b16 %v972
        %v2305 = vunpack.c.l.b16 %v973
        %v2306 = vunpack.c.l.b16 %v974
        %v2307 = vunpack.c.l.b16 %v975
        %v2308 = vunpack.c.l.b16 %v976
        %v2309 = vunpack.c.l.b16 %v977
        %v2310 = vunpack.c.l.b16 %v978
        %v2311 = vunpack.c.l.b16 %v979
        %v2312 = vpack.c.b16 %v1929, %v1928
        %v2313 = vpack.c.b16 %v1931, %v1930
        %v2314 = vpack.c.b16 %v1933, %v1932
        %v2315 = vpack.c.b16 %v1935, %v1934
        %v2316 = vpack.c.b16 %v1937, %v1936
        %v2317 = vpack.c.b16 %v1939, %v1938
        %v2318 = vpack.c.b16 %v1941, %v1940
        %v2319 = vpack.c.b16 %v1943, %v1942
        %v2320 = vpack.c.b16 %v1945, %v1944
        %v2321 = vpack.c.b16 %v1947, %v1946
        %v2322 = vpack.c.b16 %v1949, %v1948
        %v2323 = vpack.c.b16 %v1951, %v1950
        %v2324 = vpack.c.b16 %v1953, %v1952
        %v2325 = vpack.c.b16 %v1955, %v1954
        %v2326 = vpack.c.b16 %v1957, %v1956
        %v2327 = vpack.c.b16 %v1959, %v1958
        %v2328 = vpack.c.b16 %v1961, %v1960
        %v2329 = vpack.c.b16 %v1963, %v1962
        %v2330 = vpack.c.b16 %v1965, %v1964
        %v2331 = vpack.c.b16 %v1967, %v1966
        %v2332 = vpack.c.b16 %v1969, %v1968
        %v2333 = vpack.c.b16 %v1971, %v1970
        %v2334 = vpack.c.b16 %v1973, %v1972
        %v2335 = vpack.c.b16 %v1975, %v1974
        %v2336 = vpack.c.b16 %v1977, %v1976
        %v2337 = vpack.c.b16 %v1979, %v1978
        %v2338 = vpack.c.b16 %v1981, %v1980
        %v2339 = vpack.c.b16 %v1983, %v1982
        %v2340 = vpack.c.b16 %v1985, %v1984
        %v2341 = vpack.c.b16 %v1987, %v1986
        %v2342 = vpack.c.b16 %v1989, %v1988
        %v2343 = vpack.c.b16 %v1991, %v1990
        %v2344 = vpack.c.b16 %v1993, %v1992
        %v2345 = vpack.c.b16 %v1995, %v1994
        %v2346 = vpack.c.b16 %v1997, %v1996
        %v2347 = vpack.c.b16 %v1999, %v1998
        %v2348 = vpack.c.b16 %v2001, %v2000
        %v2349 = vpack.c.b16 %v2003, %v2002
        %v2350 = vpack.c.b16 %v2005, %v2004
        %v2351 = vpack.c.b16 %v2007, %v2006
        %v2352 = vpack.c.b16 %v2009, %v2008
        %v2353 = vpack.c.b16 %v2011, %v2010
        %v2354 = vpack.c.b16 %v2013, %v2012
        %v2355 = vpack.c.b16 %v2015, %v2014
        %v2356 = vpack.c.b16 %v2017, %v2016
        %v2357 = vpack.c.b16 %v2019, %v2018
        %v2358 = vpack.c.b16 %v2021, %v2020
        %v2359 = vpack.c.b16 %v2023, %v2022
        %v2360 = vpack.c.b16 %v2025, %v2024
        %v2361 = vpack.c.b16 %v2027, %v2026
        %v2362 = vpack.c.b16 %v2029, %v2028
        %v2363 = vpack.c.b16 %v2031, %v2030
        %v2364 = vpack.c.b16 %v2033, %v2032
        %v2365 = vpack.c.b16 %v2035, %v2034
        %v2366 = vpack.c.b16 %v2037, %v2036
        %v2367 = vpack.c.b16 %v2039, %v2038
        %v2368 = vpack.c.b16 %v2041, %v2040
        %v2369 = vpack.c.b16 %v2043, %v2042
        %v2370 = vpack.c.b16 %v2045, %v2044
        %v2371 = vpack.c.b16 %v2047, %v2046
        %v2372 = vpack.c.b16 %v2049, %v2048
        %v2373 = vpack.c.b16 %v2051, %v2050
        %v2374 = vpack.c.b16 %v2053, %v2052
        %v2375 = vpack.c.b16 %v2055, %v2054
        %v2376 = vpack.c.b16 %v2057, %v2056
        %v2377 = vpack.c.b16 %v2059, %v2058
        %v2378 = vpack.c.b16 %v2061, %v2060
        %v2379 = vpack.c.b16 %v2063, %v2062
        %v2380 = vpack.c.b16 %v2065, %v2064
        %v2381 = vpack.c.b16 %v2067, %v2066
        %v2382 = vpack.c.b16 %v2069, %v2068
        %v2383 = vpack.c.b16 %v2071, %v2070
        %v2384 = vpack.c.b16 %v2073, %v2072
        %v2385 = vpack.c.b16 %v2075, %v2074
        %v2386 = vpack.c.b16 %v2077, %v2076
        %v2387 = vpack.c.b16 %v2079, %v2078
        %v2388 = vpack.c.b16 %v2081, %v2080
        %v2389 = vpack.c.b16 %v2083, %v2082
        %v2390 = vpack.c.b16 %v2085, %v2084
        %v2391 = vpack.c.b16 %v2087, %v2086
        %v2392 = vpack.c.b16 %v2089, %v2088
        %v2393 = vpack.c.b16 %v2091, %v2090
        %v2394 = vpack.c.b16 %v2093, %v2092
        %v2395 = vpack.c.b16 %v2095, %v2094
        %v2396 = vpack.c.b16 %v2097, %v2096
        %v2397 = vpack.c.b16 %v2099, %v2098
        %v2398 = vpack.c.b16 %v2101, %v2100
        %v2399 = vpack.c.b16 %v2103, %v2102
        %v2400 = vpack.c.b16 %v2105, %v2104
        %v2401 = vpack.c.b16 %v2107, %v2106
        %v2402 = vpack.c.b16 %v2109, %v2108
        %v2403 = vpack.c.b16 %v2111, %v2110
        %v2404 = vpack.c.b16 %v2113, %v2112
        %v2405 = vpack.c.b16 %v2115, %v2114
        %v2406 = vpack.c.b16 %v2117, %v2116
        %v2407 = vpack.c.b16 %v2119, %v2118
        %v2408 = vpack.c.b16 %v2121, %v2120
        %v2409 = vpack.c.b16 %v2123, %v2122
        %v2410 = vpack.c.b16 %v2125, %v2124
        %v2411 = vpack.c.b16 %v2127, %v2126
        %v2412 = vpack.c.b16 %v2129, %v2128
        %v2413 = vpack.c.b16 %v2131, %v2130
        %v2414 = vpack.c.b16 %v2133, %v2132
        %v2415 = vpack.c.b16 %v2135, %v2134
        %v2416 = vpack.c.b16 %v2137, %v2136
        %v2417 = vpack.c.b16 %v2139, %v2138
        %v2418 = vpack.c.b16 %v2141, %v2140
        %v2419 = vpack.c.b16 %v2143, %v2142
        %v2420 = vpack.c.b16 %v2145, %v2144
        %v2421 = vpack.c.b16 %v2147, %v2146
        %v2422 = vpack.c.b16 %v2149, %v2148
        %v2423 = vpack.c.b16 %v2151, %v2150
        %v2424 = vpack.c.b16 %v2153, %v2152
        %v2425 = vpack.c.b16 %v2155, %v2154
        %v2426 = vpack.c.b16 %v2157, %v2156
        %v2427 = vpack.c.b16 %v2159, %v2158
        %v2428 = vpack.c.b16 %v2161, %v2160
        %v2429 = vpack.c.b16 %v2163, %v2162
        %v2430 = vpack.c.b16 %v2165, %v2164
        %v2431 = vpack.c.b16 %v2167, %v2166
        %v2432 = vpack.c.b16 %v2169, %v2168
        %v2433 = vpack.c.b16 %v2171, %v2170
        %v2434 = vpack.c.b16 %v2173, %v2172
        %v2435 = vpack.c.b16 %v2175, %v2174
        %v2436 = vpack.c.b16 %v2177, %v2176
        %v2437 = vpack.c.b16 %v2179, %v2178
        %v2438 = vpack.c.b16 %v2181, %v2180
        %v2439 = vpack.c.b16 %v2183, %v2182
        %v2440 = vpack.c.b16 %v2185, %v2184
        %v2441 = vpack.c.b16 %v2187, %v2186
        %v2442 = vpack.c.b16 %v2189, %v2188
        %v2443 = vpack.c.b16 %v2191, %v2190
        %v2444 = vpack.c.b16 %v2193, %v2192
        %v2445 = vpack.c.b16 %v2195, %v2194
        %v2446 = vpack.c.b16 %v2197, %v2196
        %v2447 = vpack.c.b16 %v2199, %v2198
        %v2448 = vpack.c.b16 %v2201, %v2200
        %v2449 = vpack.c.b16 %v2203, %v2202
        %v2450 = vpack.c.b16 %v2205, %v2204
        %v2451 = vpack.c.b16 %v2207, %v2206
        %v2452 = vpack.c.b16 %v2209, %v2208
        %v2453 = vpack.c.b16 %v2211, %v2210
        %v2454 = vpack.c.b16 %v2213, %v2212
        %v2455 = vpack.c.b16 %v2215, %v2214
        %v2456 = vpack.c.b16 %v2217, %v2216
        %v2457 = vpack.c.b16 %v2219, %v2218
        %v2458 = vpack.c.b16 %v2221, %v2220
        %v2459 = vpack.c.b16 %v2223, %v2222
        %v2460 = vpack.c.b16 %v2225, %v2224
        %v2461 = vpack.c.b16 %v2227, %v2226
        %v2462 = vpack.c.b16 %v2229, %v2228
        %v2463 = vpack.c.b16 %v2231, %v2230
        %v2464 = vpack.c.b16 %v2233, %v2232
        %v2465 = vpack.c.b16 %v2235, %v2234
        %v2466 = vpack.c.b16 %v2237, %v2236
        %v2467 = vpack.c.b16 %v2239, %v2238
        %v2468 = vpack.c.b16 %v2241, %v2240
        %v2469 = vpack.c.b16 %v2243, %v2242
        %v2470 = vpack.c.b16 %v2245, %v2244
        %v2471 = vpack.c.b16 %v2247, %v2246
        %v2472 = vpack.c.b16 %v2249, %v2248
        %v2473 = vpack.c.b16 %v2251, %v2250
        %v2474 = vpack.c.b16 %v2253, %v2252
        %v2475 = vpack.c.b16 %v2255, %v2254
        %v2476 = vpack.c.b16 %v2257, %v2256
        %v2477 = vpack.c.b16 %v2259, %v2258
        %v2478 = vpack.c.b16 %v2261, %v2260
        %v2479 = vpack.c.b16 %v2263, %v2262
        %v2480 = vpack.c.b16 %v2265, %v2264
        %v2481 = vpack.c.b16 %v2267, %v2266
        %v2482 = vpack.c.b16 %v2269, %v2268
        %v2483 = vpack.c.b16 %v2271, %v2270
        %v2484 = vpack.c.b16 %v2273, %v2272
        %v2485 = vpack.c.b16 %v2275, %v2274
        %v2486 = vpack.c.b16 %v2277, %v2276
        %v2487 = vpack.c.b16 %v2279, %v2278
        %v2488 = vpack.c.b16 %v2281, %v2280
        %v2489 = vpack.c.b16 %v2283, %v2282
        %v2490 = vpack.c.b16 %v2285, %v2284
        %v2491 = vpack.c.b16 %v2287, %v2286
        %v2492 = vpack.c.b16 %v2289, %v2288
        %v2493 = vpack.c.b16 %v2291, %v2290
        %v2494 = vpack.c.b16 %v2293, %v2292
        %v2495 = vpack.c.b16 %v2295, %v2294
        %v2496 = vpack.c.b16 %v2297, %v2296
        %v2497 = vpack.c.b16 %v2299, %v2298
        %v2498 = vpack.c.b16 %v2301, %v2300
        %v2499 = vpack.c.b16 %v2303, %v2302
        %v2500 = vpack.c.b16 %v2305, %v2304
        %v2501 = vpack.c.b16 %v2307, %v2306
        %v2502 = vpack.c.b16 %v2309, %v2308
        %v2503 = vpack.c.b16 %v2311, %v2310
        %2696 = vmatprep.subr.bf16.mxu0 0
        %2697 = vmatpush1.bf16.msra.mxu0 %v2312
        %2698 = vmatprep.subr.bf16.mxu0 0
        %2699 = vmatpush1.bf16.msra.mxu0 %v2313
        %2700 = vmatprep.subr.bf16.mxu0 0
        %2701 = vmatpush1.bf16.msra.mxu0 %v2314
        %2702 = vmatprep.subr.bf16.mxu0 0
        %2703 = vmatpush1.bf16.msra.mxu0 %v2315
        %2704 = vmatprep.subr.bf16.mxu0 0
        %2705 = vmatpush1.bf16.msra.mxu0 %v2316
        %2706 = vmatprep.subr.bf16.mxu0 0
        %2707 = vmatpush1.bf16.msra.mxu0 %v2317
        %2708 = vmatprep.subr.bf16.mxu0 0
        %2709 = vmatpush1.bf16.msra.mxu0 %v2318
        %2710 = vmatprep.subr.bf16.mxu0 0
        %2711 = vmatpush1.bf16.msra.mxu0 %v2319
        %2712 = vmatprep.subr.bf16.mxu0 0
        %2713 = vmatpush1.bf16.msra.mxu0 %v2320
        %2714 = vmatprep.subr.bf16.mxu0 0
        %2715 = vmatpush1.bf16.msra.mxu0 %v2321
        %2716 = vmatprep.subr.bf16.mxu0 0
        %2717 = vmatpush1.bf16.msra.mxu0 %v2322
        %2718 = vmatprep.subr.bf16.mxu0 0
        %2719 = vmatpush1.bf16.msra.mxu0 %v2323
        %2720 = vmatprep.subr.bf16.mxu0 0
        %2721 = vmatpush1.bf16.msra.mxu0 %v2324
        %2722 = vmatprep.subr.bf16.mxu0 0
        %2723 = vmatpush1.bf16.msra.mxu0 %v2325
        %2724 = vmatprep.subr.bf16.mxu0 0
        %2725 = vmatpush1.bf16.msra.mxu0 %v2326
        %2726 = vmatprep.subr.bf16.mxu0 0
        %2727 = vmatpush1.bf16.msra.mxu0 %v2327
        %2728 = vmatprep.mubr.bf16.mxu0 %v1305
        %2729 = vmatmul.mubr.bf16.gmra.mrb[0].mxu0 %v1304
        %v2730 = vpop.f32.mrb[0].mxu0
        %v2731 = vadd.f32 0.0, %v2730
        %v2732 = vpop.f32.mrb[0].mxu0
        %v2733 = vpop.f32.mrb[0].mxu0
        %v2734 = vadd.f32 0.0, %v2733
        %v2735 = vpop.f32.mrb[0].mxu0
        %2736 = vmatprep.mubr.bf16.mxu0 %v1329
        %2737 = vmatmul.mubr.bf16.gmra.mrb[0].mxu0 %v1328
        %v2738 = vpop.f32.mrb[0].mxu0
        %v2739 = vadd.f32 0.0, %v2738
        %v2740 = vpop.f32.mrb[0].mxu0
        %v2741 = vpop.f32.mrb[0].mxu0
        %v2742 = vadd.f32 0.0, %v2741
        %v2743 = vpop.f32.mrb[0].mxu0
        %2744 = vmatprep.mubr.bf16.mxu0 %v1353
        %2745 = vmatmul.mubr.bf16.gmra.mrb[0].mxu0 %v1352
        %v2746 = vpop.f32.mrb[0].mxu0
        %v2747 = vadd.f32 0.0, %v2746
        %v2748 = vpop.f32.mrb[0].mxu0
        %v2749 = vpop.f32.mrb[0].mxu0
        %v2750 = vadd.f32 0.0, %v2749
        %v2751 = vpop.f32.mrb[0].mxu0
        %2752 = vmatprep.mubr.bf16.mxu0 %v1377
        %2753 = vmatmul.mubr.bf16.gmra.mrb[0].mxu0 %v1376
        %v2754 = vpop.f32.mrb[0].mxu0
        %v2755 = vadd.f32 0.0, %v2754
        %v2756 = vpop.f32.mrb[0].mxu0
        %v2757 = vpop.f32.mrb[0].mxu0
        %v2758 = vadd.f32 0.0, %v2757
        %v2759 = vpop.f32.mrb[0].mxu0
        %2760 = vmatprep.mubr.bf16.mxu0 %v1401
        %2761 = vmatmul.mubr.bf16.gmra.mrb[0].mxu0 %v1400
        %v2762 = vpop.f32.mrb[0].mxu0
        %v2763 = vadd.f32 0.0, %v2762
        %v2764 = vpop.f32.mrb[0].mxu0
        %v2765 = vpop.f32.mrb[0].mxu0
        %v2766 = vpop.f32.mrb[0].mxu0
        %2767 = vdwg.mxu0
        %2768 = vmatprep.subr.bf16.mxu0 0
        %2769 = vmatpush1.bf16.msra.mxu0 %v2328
        %2770 = vmatprep.subr.bf16.mxu0 0
        %2771 = vmatpush1.bf16.msra.mxu0 %v2329
        %2772 = vmatprep.subr.bf16.mxu0 0
        %2773 = vmatpush1.bf16.msra.mxu0 %v2330
        %2774 = vmatprep.subr.bf16.mxu0 0
        %2775 = vmatpush1.bf16.msra.mxu0 %v2331
        %2776 = vmatprep.subr.bf16.mxu0 0
        %2777 = vmatpush1.bf16.msra.mxu0 %v2332
        %2778 = vmatprep.subr.bf16.mxu0 0
        %2779 = vmatpush1.bf16.msra.mxu0 %v2333
        %2780 = vmatprep.subr.bf16.mxu0 0
        %2781 = vmatpush1.bf16.msra.mxu0 %v2334
        %2782 = vmatprep.subr.bf16.mxu0 0
        %2783 = vmatpush1.bf16.msra.mxu0 %v2335
        %2784 = vmatprep.subr.bf16.mxu0 0
        %2785 = vmatpush1.bf16.msra.mxu0 %v2336
        %2786 = vmatprep.subr.bf16.mxu0 0
        %2787 = vmatpush1.bf16.msra.mxu0 %v2337
        %2788 = vmatprep.subr.bf16.mxu0 0
        %2789 = vmatpush1.bf16.msra.mxu0 %v2338
        %2790 = vmatprep.subr.bf16.mxu0 0
        %2791 = vmatpush1.bf16.msra.mxu0 %v2339
        %2792 = vmatprep.subr.bf16.mxu0 0
        %2793 = vmatpush1.bf16.msra.mxu0 %v2340
        %2794 = vmatprep.subr.bf16.mxu0 0
        %2795 = vmatpush1.bf16.msra.mxu0 %v2341
        %2796 = vmatprep.subr.bf16.mxu0 0
        %2797 = vmatpush1.bf16.msra.mxu0 %v2342
        %2798 = vmatprep.subr.bf16.mxu0 0
        %2799 = vmatpush1.bf16.msra.mxu0 %v2343
        %2800 = vmatprep.mubr.bf16.mxu0 %v1307
        %2801 = vmatmul.mubr.bf16.gmra.mrb[0].mxu0 %v1306
        %v2802 = vpop.f32.mrb[0].mxu0
        %v2803 = vadd.f32 %v2731, %v2802
        %v2804 = vpop.f32.mrb[0].mxu0
        %v2805 = vpop.f32.mrb[0].mxu0
        %v2806 = vadd.f32 %v2734, %v2805
        %v2807 = vpop.f32.mrb[0].mxu0
        %2808 = vmatprep.mubr.bf16.mxu0 %v1331
        %2809 = vmatmul.mubr.bf16.gmra.mrb[0].mxu0 %v1330
        %v2810 = vpop.f32.mrb[0].mxu0
        %v2811 = vadd.f32 %v2739, %v2810
        %v2812 = vpop.f32.mrb[0].mxu0
        %v2813 = vpop.f32.mrb[0].mxu0
        %v2814 = vadd.f32 %v2742, %v2813
        %v2815 = vpop.f32.mrb[0].mxu0
        %2816 = vmatprep.mubr.bf16.mxu0 %v1355
        %2817 = vmatmul.mubr.bf16.gmra.mrb[0].mxu0 %v1354
        %v2818 = vpop.f32.mrb[0].mxu0
        %v2819 = vadd.f32 %v2747, %v2818
        %v2820 = vpop.f32.mrb[0].mxu0
        %v2821 = vpop.f32.mrb[0].mxu0
        %v2822 = vadd.f32 %v2750, %v2821
        %v2823 = vpop.f32.mrb[0].mxu0
        %2824 = vmatprep.mubr.bf16.mxu0 %v1379
        %2825 = vmatmul.mubr.bf16.gmra.mrb[0].mxu0 %v1378
        %v2826 = vpop.f32.mrb[0].mxu0
        %v2827 = vadd.f32 %v2755, %v2826
        %v2828 = vpop.f32.mrb[0].mxu0
        %v2829 = vpop.f32.mrb[0].mxu0
        %v2830 = vadd.f32 %v2758, %v2829
        %v2831 = vpop.f32.mrb[0].mxu0
        %2832 = vmatprep.mubr.bf16.mxu0 %v1403
        %2833 = vmatmul.mubr.bf16.gmra.mrb[0].mxu0 %v1402
        %v2834 = vpop.f32.mrb[0].mxu0
        %v2835 = vadd.f32 %v2763, %v2834
        %v2836 = vpop.f32.mrb[0].mxu0
        %v2837 = vpop.f32.mrb[0].mxu0
        %v2838 = vpop.f32.mrb[0].mxu0
        %2839 = vdwg.mxu0
        %2840 = vmatprep.subr.bf16.mxu0 0
        %2841 = vmatpush1.bf16.msra.mxu0 %v2344
        %2842 = vmatprep.subr.bf16.mxu0 0
        %2843 = vmatpush1.bf16.msra.mxu0 %v2345
        %2844 = vmatprep.subr.bf16.mxu0 0
        %2845 = vmatpush1.bf16.msra.mxu0 %v2346
        %2846 = vmatprep.subr.bf16.mxu0 0
        %2847 = vmatpush1.bf16.msra.mxu0 %v2347
        %2848 = vmatprep.subr.bf16.mxu0 0
        %2849 = vmatpush1.bf16.msra.mxu0 %v2348
        %2850 = vmatprep.subr.bf16.mxu0 0
        %2851 = vmatpush1.bf16.msra.mxu0 %v2349
        %2852 = vmatprep.subr.bf16.mxu0 0
        %2853 = vmatpush1.bf16.msra.mxu0 %v2350
        %2854 = vmatprep.subr.bf16.mxu0 0
        %2855 = vmatpush1.bf16.msra.mxu0 %v2351
        %2856 = vmatprep.subr.bf16.mxu0 0
        %2857 = vmatpush1.bf16.msra.mxu0 %v2352
        %2858 = vmatprep.subr.bf16.mxu0 0
        %2859 = vmatpush1.bf16.msra.mxu0 %v2353
        %2860 = vmatprep.subr.bf16.mxu0 0
        %2861 = vmatpush1.bf16.msra.mxu0 %v2354
        %2862 = vmatprep.subr.bf16.mxu0 0
        %2863 = vmatpush1.bf16.msra.mxu0 %v2355
        %2864 = vmatprep.subr.bf16.mxu0 0
        %2865 = vmatpush1.bf16.msra.mxu0 %v2356
        %2866 = vmatprep.subr.bf16.mxu0 0
        %2867 = vmatpush1.bf16.msra.mxu0 %v2357
        %2868 = vmatprep.subr.bf16.mxu0 0
        %2869 = vmatpush1.bf16.msra.mxu0 %v2358
        %2870 = vmatprep.subr.bf16.mxu0 0
        %2871 = vmatpush1.bf16.msra.mxu0 %v2359
        %2872 = vmatprep.mubr.bf16.mxu0 %v1309
        %2873 = vmatmul.mubr.bf16.gmra.mrb[0].mxu0 %v1308
        %v2874 = vpop.f32.mrb[0].mxu0
        %v2875 = vadd.f32 %v2803, %v2874
        %v2876 = vpop.f32.mrb[0].mxu0
        %v2877 = vpop.f32.mrb[0].mxu0
        %v2878 = vadd.f32 %v2806, %v2877
        %v2879 = vpop.f32.mrb[0].mxu0
        %2880 = vmatprep.mubr.bf16.mxu0 %v1333
        %2881 = vmatmul.mubr.bf16.gmra.mrb[0].mxu0 %v1332
        %v2882 = vpop.f32.mrb[0].mxu0
        %v2883 = vadd.f32 %v2811, %v2882
        %v2884 = vpop.f32.mrb[0].mxu0
        %v2885 = vpop.f32.mrb[0].mxu0
        %v2886 = vadd.f32 %v2814, %v2885
        %v2887 = vpop.f32.mrb[0].mxu0
        %2888 = vmatprep.mubr.bf16.mxu0 %v1357
        %2889 = vmatmul.mubr.bf16.gmra.mrb[0].mxu0 %v1356
        %v2890 = vpop.f32.mrb[0].mxu0
        %v2891 = vadd.f32 %v2819, %v2890
        %v2892 = vpop.f32.mrb[0].mxu0
        %v2893 = vpop.f32.mrb[0].mxu0
        %v2894 = vadd.f32 %v2822, %v2893
        %v2895 = vpop.f32.mrb[0].mxu0
        %2896 = vmatprep.mubr.bf16.mxu0 %v1381
        %2897 = vmatmul.mubr.bf16.gmra.mrb[0].mxu0 %v1380
        %v2898 = vpop.f32.mrb[0].mxu0
        %v2899 = vadd.f32 %v2827, %v2898
        %v2900 = vpop.f32.mrb[0].mxu0
        %v2901 = vpop.f32.mrb[0].mxu0
        %v2902 = vadd.f32 %v2830, %v2901
        %v2903 = vpop.f32.mrb[0].mxu0
        %2904 = vmatprep.mubr.bf16.mxu0 %v1405
        %2905 = vmatmul.mubr.bf16.gmra.mrb[0].mxu0 %v1404
        %v2906 = vpop.f32.mrb[0].mxu0
        %v2907 = vadd.f32 %v2835, %v2906
        %v2908 = vpop.f32.mrb[0].mxu0
        %v2909 = vpop.f32.mrb[0].mxu0
        %v2910 = vpop.f32.mrb[0].mxu0
        %2911 = vdwg.mxu0
        %2912 = vmatprep.subr.bf16.mxu0 0
        %2913 = vmatpush1.bf16.msra.mxu0 %v2360
        %2914 = vmatprep.subr.bf16.mxu0 0
        %2915 = vmatpush1.bf16.msra.mxu0 %v2361
        %2916 = vmatprep.subr.bf16.mxu0 0
        %2917 = vmatpush1.bf16.msra.mxu0 %v2362
        %2918 = vmatprep.subr.bf16.mxu0 0
        %2919 = vmatpush1.bf16.msra.mxu0 %v2363
        %2920 = vmatprep.subr.bf16.mxu0 0
        %2921 = vmatpush1.bf16.msra.mxu0 %v2364
        %2922 = vmatprep.subr.bf16.mxu0 0
        %2923 = vmatpush1.bf16.msra.mxu0 %v2365
        %2924 = vmatprep.subr.bf16.mxu0 0
        %2925 = vmatpush1.bf16.msra.mxu0 %v2366
        %2926 = vmatprep.subr.bf16.mxu0 0
        %2927 = vmatpush1.bf16.msra.mxu0 %v2367
        %2928 = vmatprep.subr.bf16.mxu0 0
        %2929 = vmatpush1.bf16.msra.mxu0 %v2368
        %2930 = vmatprep.subr.bf16.mxu0 0
        %2931 = vmatpush1.bf16.msra.mxu0 %v2369
        %2932 = vmatprep.subr.bf16.mxu0 0
        %2933 = vmatpush1.bf16.msra.mxu0 %v2370
        %2934 = vmatprep.subr.bf16.mxu0 0
        %2935 = vmatpush1.bf16.msra.mxu0 %v2371
        %2936 = vmatprep.subr.bf16.mxu0 0
        %2937 = vmatpush1.bf16.msra.mxu0 %v2372
        %2938 = vmatprep.subr.bf16.mxu0 0
        %2939 = vmatpush1.bf16.msra.mxu0 %v2373
        %2940 = vmatprep.subr.bf16.mxu0 0
        %2941 = vmatpush1.bf16.msra.mxu0 %v2374
        %2942 = vmatprep.subr.bf16.mxu0 0
        %2943 = vmatpush1.bf16.msra.mxu0 %v2375
        %2944 = vmatprep.mubr.bf16.mxu0 %v1311
        %2945 = vmatmul.mubr.bf16.gmra.mrb[0].mxu0 %v1310
        %v2946 = vpop.f32.mrb[0].mxu0
        %v2947 = vadd.f32 %v2875, %v2946
        %v2948 = vpop.f32.mrb[0].mxu0
        %v2949 = vpop.f32.mrb[0].mxu0
        %v2950 = vadd.f32 %v2878, %v2949
        %v2951 = vpop.f32.mrb[0].mxu0
        %2952 = vmatprep.mubr.bf16.mxu0 %v1335
        %2953 = vmatmul.mubr.bf16.gmra.mrb[0].mxu0 %v1334
        %v2954 = vpop.f32.mrb[0].mxu0
        %v2955 = vadd.f32 %v2883, %v2954
        %v2956 = vpop.f32.mrb[0].mxu0
        %v2957 = vpop.f32.mrb[0].mxu0
        %v2958 = vadd.f32 %v2886, %v2957
        %v2959 = vpop.f32.mrb[0].mxu0
        %2960 = vmatprep.mubr.bf16.mxu0 %v1359
        %2961 = vmatmul.mubr.bf16.gmra.mrb[0].mxu0 %v1358
        %v2962 = vpop.f32.mrb[0].mxu0
        %v2963 = vadd.f32 %v2891, %v2962
        %v2964 = vpop.f32.mrb[0].mxu0
        %v2965 = vpop.f32.mrb[0].mxu0
        %v2966 = vadd.f32 %v2894, %v2965
        %v2967 = vpop.f32.mrb[0].mxu0
        %2968 = vmatprep.mubr.bf16.mxu0 %v1383
        %2969 = vmatmul.mubr.bf16.gmra.mrb[0].mxu0 %v1382
        %v2970 = vpop.f32.mrb[0].mxu0
        %v2971 = vadd.f32 %v2899, %v2970
        %v2972 = vpop.f32.mrb[0].mxu0
        %v2973 = vpop.f32.mrb[0].mxu0
        %v2974 = vadd.f32 %v2902, %v2973
        %v2975 = vpop.f32.mrb[0].mxu0
        %2976 = vmatprep.mubr.bf16.mxu0 %v1407
        %2977 = vmatmul.mubr.bf16.gmra.mrb[0].mxu0 %v1406
        %v2978 = vpop.f32.mrb[0].mxu0
        %v2979 = vadd.f32 %v2907, %v2978
        %v2980 = vpop.f32.mrb[0].mxu0
        %v2981 = vpop.f32.mrb[0].mxu0
        %v2982 = vpop.f32.mrb[0].mxu0
        %2983 = vdwg.mxu0
        %2984 = vmatprep.subr.bf16.mxu0 0
        %2985 = vmatpush1.bf16.msra.mxu0 %v2376
        %2986 = vmatprep.subr.bf16.mxu0 0
        %2987 = vmatpush1.bf16.msra.mxu0 %v2377
        %2988 = vmatprep.subr.bf16.mxu0 0
        %2989 = vmatpush1.bf16.msra.mxu0 %v2378
        %2990 = vmatprep.subr.bf16.mxu0 0
        %2991 = vmatpush1.bf16.msra.mxu0 %v2379
        %2992 = vmatprep.subr.bf16.mxu0 0
        %2993 = vmatpush1.bf16.msra.mxu0 %v2380
        %2994 = vmatprep.subr.bf16.mxu0 0
        %2995 = vmatpush1.bf16.msra.mxu0 %v2381
        %2996 = vmatprep.subr.bf16.mxu0 0
        %2997 = vmatpush1.bf16.msra.mxu0 %v2382
        %2998 = vmatprep.subr.bf16.mxu0 0
        %2999 = vmatpush1.bf16.msra.mxu0 %v2383
        %3000 = vmatprep.subr.bf16.mxu0 0
        %3001 = vmatpush1.bf16.msra.mxu0 %v2384
        %3002 = vmatprep.subr.bf16.mxu0 0
        %3003 = vmatpush1.bf16.msra.mxu0 %v2385
        %3004 = vmatprep.subr.bf16.mxu0 0
        %3005 = vmatpush1.bf16.msra.mxu0 %v2386
        %3006 = vmatprep.subr.bf16.mxu0 0
        %3007 = vmatpush1.bf16.msra.mxu0 %v2387
        %3008 = vmatprep.subr.bf16.mxu0 0
        %3009 = vmatpush1.bf16.msra.mxu0 %v2388
        %3010 = vmatprep.subr.bf16.mxu0 0
        %3011 = vmatpush1.bf16.msra.mxu0 %v2389
        %3012 = vmatprep.subr.bf16.mxu0 0
        %3013 = vmatpush1.bf16.msra.mxu0 %v2390
        %3014 = vmatprep.subr.bf16.mxu0 0
        %3015 = vmatpush1.bf16.msra.mxu0 %v2391
        %3016 = vmatprep.mubr.bf16.mxu0 %v1313
        %3017 = vmatmul.mubr.bf16.gmra.mrb[0].mxu0 %v1312
        %v3018 = vpop.f32.mrb[0].mxu0
        %v3019 = vadd.f32 %v2947, %v3018
        %v3020 = vpop.f32.mrb[0].mxu0
        %v3021 = vpop.f32.mrb[0].mxu0
        %v3022 = vadd.f32 %v2950, %v3021
        %v3023 = vpop.f32.mrb[0].mxu0
        %3024 = vmatprep.mubr.bf16.mxu0 %v1337
        %3025 = vmatmul.mubr.bf16.gmra.mrb[0].mxu0 %v1336
        %v3026 = vpop.f32.mrb[0].mxu0
        %v3027 = vadd.f32 %v2955, %v3026
        %v3028 = vpop.f32.mrb[0].mxu0
        %v3029 = vpop.f32.mrb[0].mxu0
        %v3030 = vadd.f32 %v2958, %v3029
        %v3031 = vpop.f32.mrb[0].mxu0
        %3032 = vmatprep.mubr.bf16.mxu0 %v1361
        %3033 = vmatmul.mubr.bf16.gmra.mrb[0].mxu0 %v1360
        %v3034 = vpop.f32.mrb[0].mxu0
        %v3035 = vadd.f32 %v2963, %v3034
        %v3036 = vpop.f32.mrb[0].mxu0
        %v3037 = vpop.f32.mrb[0].mxu0
        %v3038 = vadd.f32 %v2966, %v3037
        %v3039 = vpop.f32.mrb[0].mxu0
        %3040 = vmatprep.mubr.bf16.mxu0 %v1385
        %3041 = vmatmul.mubr.bf16.gmra.mrb[0].mxu0 %v1384
        %v3042 = vpop.f32.mrb[0].mxu0
        %v3043 = vadd.f32 %v2971, %v3042
        %v3044 = vpop.f32.mrb[0].mxu0
        %v3045 = vpop.f32.mrb[0].mxu0
        %v3046 = vadd.f32 %v2974, %v3045
        %v3047 = vpop.f32.mrb[0].mxu0
        %3048 = vmatprep.mubr.bf16.mxu0 %v1409
        %3049 = vmatmul.mubr.bf16.gmra.mrb[0].mxu0 %v1408
        %v3050 = vpop.f32.mrb[0].mxu0
        %v3051 = vadd.f32 %v2979, %v3050
        %v3052 = vpop.f32.mrb[0].mxu0
        %v3053 = vpop.f32.mrb[0].mxu0
        %v3054 = vpop.f32.mrb[0].mxu0
        %3055 = vdwg.mxu0
        %3056 = vmatprep.subr.bf16.mxu0 0
        %3057 = vmatpush1.bf16.msra.mxu0 %v2392
        %3058 = vmatprep.subr.bf16.mxu0 0
        %3059 = vmatpush1.bf16.msra.mxu0 %v2393
        %3060 = vmatprep.subr.bf16.mxu0 0
        %3061 = vmatpush1.bf16.msra.mxu0 %v2394
        %3062 = vmatprep.subr.bf16.mxu0 0
        %3063 = vmatpush1.bf16.msra.mxu0 %v2395
        %3064 = vmatprep.subr.bf16.mxu0 0
        %3065 = vmatpush1.bf16.msra.mxu0 %v2396
        %3066 = vmatprep.subr.bf16.mxu0 0
        %3067 = vmatpush1.bf16.msra.mxu0 %v2397
        %3068 = vmatprep.subr.bf16.mxu0 0
        %3069 = vmatpush1.bf16.msra.mxu0 %v2398
        %3070 = vmatprep.subr.bf16.mxu0 0
        %3071 = vmatpush1.bf16.msra.mxu0 %v2399
        %3072 = vmatprep.subr.bf16.mxu0 0
        %3073 = vmatpush1.bf16.msra.mxu0 %v2400
        %3074 = vmatprep.subr.bf16.mxu0 0
        %3075 = vmatpush1.bf16.msra.mxu0 %v2401
        %3076 = vmatprep.subr.bf16.mxu0 0
        %3077 = vmatpush1.bf16.msra.mxu0 %v2402
        %3078 = vmatprep.subr.bf16.mxu0 0
        %3079 = vmatpush1.bf16.msra.mxu0 %v2403
        %3080 = vmatprep.subr.bf16.mxu0 0
        %3081 = vmatpush1.bf16.msra.mxu0 %v2404
        %3082 = vmatprep.subr.bf16.mxu0 0
        %3083 = vmatpush1.bf16.msra.mxu0 %v2405
        %3084 = vmatprep.subr.bf16.mxu0 0
        %3085 = vmatpush1.bf16.msra.mxu0 %v2406
        %3086 = vmatprep.subr.bf16.mxu0 0
        %3087 = vmatpush1.bf16.msra.mxu0 %v2407
        %3088 = vmatprep.mubr.bf16.mxu0 %v1315
        %3089 = vmatmul.mubr.bf16.gmra.mrb[0].mxu0 %v1314
        %v3090 = vpop.f32.mrb[0].mxu0
        %v3091 = vadd.f32 %v3019, %v3090
        %v3092 = vpop.f32.mrb[0].mxu0
        %v3093 = vpop.f32.mrb[0].mxu0
        %v3094 = vadd.f32 %v3022, %v3093
        %v3095 = vpop.f32.mrb[0].mxu0
        %3096 = vmatprep.mubr.bf16.mxu0 %v1339
        %3097 = vmatmul.mubr.bf16.gmra.mrb[0].mxu0 %v1338
        %v3098 = vpop.f32.mrb[0].mxu0
        %v3099 = vadd.f32 %v3027, %v3098
        %v3100 = vpop.f32.mrb[0].mxu0
        %v3101 = vpop.f32.mrb[0].mxu0
        %v3102 = vadd.f32 %v3030, %v3101
        %v3103 = vpop.f32.mrb[0].mxu0
        %3104 = vmatprep.mubr.bf16.mxu0 %v1363
        %3105 = vmatmul.mubr.bf16.gmra.mrb[0].mxu0 %v1362
        %v3106 = vpop.f32.mrb[0].mxu0
        %v3107 = vadd.f32 %v3035, %v3106
        %v3108 = vpop.f32.mrb[0].mxu0
        %v3109 = vpop.f32.mrb[0].mxu0
        %v3110 = vadd.f32 %v3038, %v3109
        %v3111 = vpop.f32.mrb[0].mxu0
        %3112 = vmatprep.mubr.bf16.mxu0 %v1387
        %3113 = vmatmul.mubr.bf16.gmra.mrb[0].mxu0 %v1386
        %v3114 = vpop.f32.mrb[0].mxu0
        %v3115 = vadd.f32 %v3043, %v3114
        %v3116 = vpop.f32.mrb[0].mxu0
        %v3117 = vpop.f32.mrb[0].mxu0
        %v3118 = vadd.f32 %v3046, %v3117
        %v3119 = vpop.f32.mrb[0].mxu0
        %3120 = vmatprep.mubr.bf16.mxu0 %v1411
        %3121 = vmatmul.mubr.bf16.gmra.mrb[0].mxu0 %v1410
        %v3122 = vpop.f32.mrb[0].mxu0
        %v3123 = vadd.f32 %v3051, %v3122
        %v3124 = vpop.f32.mrb[0].mxu0
        %v3125 = vpop.f32.mrb[0].mxu0
        %v3126 = vpop.f32.mrb[0].mxu0
        %3127 = vdwg.mxu0
        %3128 = vmatprep.subr.bf16.mxu0 0
        %3129 = vmatpush1.bf16.msra.mxu0 %v2408
        %3130 = vmatprep.subr.bf16.mxu0 0
        %3131 = vmatpush1.bf16.msra.mxu0 %v2409
        %3132 = vmatprep.subr.bf16.mxu0 0
        %3133 = vmatpush1.bf16.msra.mxu0 %v2410
        %3134 = vmatprep.subr.bf16.mxu0 0
        %3135 = vmatpush1.bf16.msra.mxu0 %v2411
        %3136 = vmatprep.subr.bf16.mxu0 0
        %3137 = vmatpush1.bf16.msra.mxu0 %v2412
        %3138 = vmatprep.subr.bf16.mxu0 0
        %3139 = vmatpush1.bf16.msra.mxu0 %v2413
        %3140 = vmatprep.subr.bf16.mxu0 0
        %3141 = vmatpush1.bf16.msra.mxu0 %v2414
        %3142 = vmatprep.subr.bf16.mxu0 0
        %3143 = vmatpush1.bf16.msra.mxu0 %v2415
        %3144 = vmatprep.subr.bf16.mxu0 0
        %3145 = vmatpush1.bf16.msra.mxu0 %v2416
        %3146 = vmatprep.subr.bf16.mxu0 0
        %3147 = vmatpush1.bf16.msra.mxu0 %v2417
        %3148 = vmatprep.subr.bf16.mxu0 0
        %3149 = vmatpush1.bf16.msra.mxu0 %v2418
        %3150 = vmatprep.subr.bf16.mxu0 0
        %3151 = vmatpush1.bf16.msra.mxu0 %v2419
        %3152 = vmatprep.subr.bf16.mxu0 0
        %3153 = vmatpush1.bf16.msra.mxu0 %v2420
        %3154 = vmatprep.subr.bf16.mxu0 0
        %3155 = vmatpush1.bf16.msra.mxu0 %v2421
        %3156 = vmatprep.subr.bf16.mxu0 0
        %3157 = vmatpush1.bf16.msra.mxu0 %v2422
        %3158 = vmatprep.subr.bf16.mxu0 0
        %3159 = vmatpush1.bf16.msra.mxu0 %v2423
        %3160 = vmatprep.mubr.bf16.mxu0 %v1317
        %3161 = vmatmul.mubr.bf16.gmra.mrb[0].mxu0 %v1316
        %v3162 = vpop.f32.mrb[0].mxu0
        %v3163 = vadd.f32 %v3091, %v3162
        %v3164 = vpop.f32.mrb[0].mxu0
        %v3165 = vpop.f32.mrb[0].mxu0
        %v3166 = vadd.f32 %v3094, %v3165
        %v3167 = vpop.f32.mrb[0].mxu0
        %3168 = vmatprep.mubr.bf16.mxu0 %v1341
        %3169 = vmatmul.mubr.bf16.gmra.mrb[0].mxu0 %v1340
        %v3170 = vpop.f32.mrb[0].mxu0
        %v3171 = vadd.f32 %v3099, %v3170
        %v3172 = vpop.f32.mrb[0].mxu0
        %v3173 = vpop.f32.mrb[0].mxu0
        %v3174 = vadd.f32 %v3102, %v3173
        %v3175 = vpop.f32.mrb[0].mxu0
        %3176 = vmatprep.mubr.bf16.mxu0 %v1365
        %3177 = vmatmul.mubr.bf16.gmra.mrb[0].mxu0 %v1364
        %v3178 = vpop.f32.mrb[0].mxu0
        %v3179 = vadd.f32 %v3107, %v3178
        %v3180 = vpop.f32.mrb[0].mxu0
        %v3181 = vpop.f32.mrb[0].mxu0
        %v3182 = vadd.f32 %v3110, %v3181
        %v3183 = vpop.f32.mrb[0].mxu0
        %3184 = vmatprep.mubr.bf16.mxu0 %v1389
        %3185 = vmatmul.mubr.bf16.gmra.mrb[0].mxu0 %v1388
        %v3186 = vpop.f32.mrb[0].mxu0
        %v3187 = vadd.f32 %v3115, %v3186
        %v3188 = vpop.f32.mrb[0].mxu0
        %v3189 = vpop.f32.mrb[0].mxu0
        %v3190 = vadd.f32 %v3118, %v3189
        %v3191 = vpop.f32.mrb[0].mxu0
        %3192 = vmatprep.mubr.bf16.mxu0 %v1413
        %3193 = vmatmul.mubr.bf16.gmra.mrb[0].mxu0 %v1412
        %v3194 = vpop.f32.mrb[0].mxu0
        %v3195 = vadd.f32 %v3123, %v3194
        %v3196 = vpop.f32.mrb[0].mxu0
        %v3197 = vpop.f32.mrb[0].mxu0
        %v3198 = vpop.f32.mrb[0].mxu0
        %3199 = vdwg.mxu0
        %3200 = vmatprep.subr.bf16.mxu0 0
        %3201 = vmatpush1.bf16.msra.mxu0 %v2424
        %3202 = vmatprep.subr.bf16.mxu0 0
        %3203 = vmatpush1.bf16.msra.mxu0 %v2425
        %3204 = vmatprep.subr.bf16.mxu0 0
        %3205 = vmatpush1.bf16.msra.mxu0 %v2426
        %3206 = vmatprep.subr.bf16.mxu0 0
        %3207 = vmatpush1.bf16.msra.mxu0 %v2427
        %3208 = vmatprep.subr.bf16.mxu0 0
        %3209 = vmatpush1.bf16.msra.mxu0 %v2428
        %3210 = vmatprep.subr.bf16.mxu0 0
        %3211 = vmatpush1.bf16.msra.mxu0 %v2429
        %3212 = vmatprep.subr.bf16.mxu0 0
        %3213 = vmatpush1.bf16.msra.mxu0 %v2430
        %3214 = vmatprep.subr.bf16.mxu0 0
        %3215 = vmatpush1.bf16.msra.mxu0 %v2431
        %3216 = vmatprep.subr.bf16.mxu0 0
        %3217 = vmatpush1.bf16.msra.mxu0 %v2432
        %3218 = vmatprep.subr.bf16.mxu0 0
        %3219 = vmatpush1.bf16.msra.mxu0 %v2433
        %3220 = vmatprep.subr.bf16.mxu0 0
        %3221 = vmatpush1.bf16.msra.mxu0 %v2434
        %3222 = vmatprep.subr.bf16.mxu0 0
        %3223 = vmatpush1.bf16.msra.mxu0 %v2435
        %3224 = vmatprep.subr.bf16.mxu0 0
        %3225 = vmatpush1.bf16.msra.mxu0 %v2436
        %3226 = vmatprep.subr.bf16.mxu0 0
        %3227 = vmatpush1.bf16.msra.mxu0 %v2437
        %3228 = vmatprep.subr.bf16.mxu0 0
        %3229 = vmatpush1.bf16.msra.mxu0 %v2438
        %3230 = vmatprep.subr.bf16.mxu0 0
        %3231 = vmatpush1.bf16.msra.mxu0 %v2439
        %3232 = vmatprep.mubr.bf16.mxu0 %v1319
        %3233 = vmatmul.mubr.bf16.gmra.mrb[0].mxu0 %v1318
        %v3234 = vpop.f32.mrb[0].mxu0
        %v3235 = vadd.f32 %v3163, %v3234
        %v3236 = vpop.f32.mrb[0].mxu0
        %v3237 = vpop.f32.mrb[0].mxu0
        %v3238 = vadd.f32 %v3166, %v3237
        %v3239 = vpop.f32.mrb[0].mxu0
        %3240 = vmatprep.mubr.bf16.mxu0 %v1343
        %3241 = vmatmul.mubr.bf16.gmra.mrb[0].mxu0 %v1342
        %v3242 = vpop.f32.mrb[0].mxu0
        %v3243 = vadd.f32 %v3171, %v3242
        %v3244 = vpop.f32.mrb[0].mxu0
        %v3245 = vpop.f32.mrb[0].mxu0
        %v3246 = vadd.f32 %v3174, %v3245
        %v3247 = vpop.f32.mrb[0].mxu0
        %3248 = vmatprep.mubr.bf16.mxu0 %v1367
        %3249 = vmatmul.mubr.bf16.gmra.mrb[0].mxu0 %v1366
        %v3250 = vpop.f32.mrb[0].mxu0
        %v3251 = vadd.f32 %v3179, %v3250
        %v3252 = vpop.f32.mrb[0].mxu0
        %v3253 = vpop.f32.mrb[0].mxu0
        %v3254 = vadd.f32 %v3182, %v3253
        %v3255 = vpop.f32.mrb[0].mxu0
        %3256 = vmatprep.mubr.bf16.mxu0 %v1391
        %3257 = vmatmul.mubr.bf16.gmra.mrb[0].mxu0 %v1390
        %v3258 = vpop.f32.mrb[0].mxu0
        %v3259 = vadd.f32 %v3187, %v3258
        %v3260 = vpop.f32.mrb[0].mxu0
        %v3261 = vpop.f32.mrb[0].mxu0
        %v3262 = vadd.f32 %v3190, %v3261
        %v3263 = vpop.f32.mrb[0].mxu0
        %3264 = vmatprep.mubr.bf16.mxu0 %v1415
        %3265 = vmatmul.mubr.bf16.gmra.mrb[0].mxu0 %v1414
        %v3266 = vpop.f32.mrb[0].mxu0
        %v3267 = vadd.f32 %v3195, %v3266
        %v3268 = vpop.f32.mrb[0].mxu0
        %v3269 = vpop.f32.mrb[0].mxu0
        %v3270 = vpop.f32.mrb[0].mxu0
        %3271 = vdwg.mxu0
        %3272 = vmatprep.subr.bf16.mxu0 0
        %3273 = vmatpush1.bf16.msra.mxu0 %v2440
        %3274 = vmatprep.subr.bf16.mxu0 0
        %3275 = vmatpush1.bf16.msra.mxu0 %v2441
        %3276 = vmatprep.subr.bf16.mxu0 0
        %3277 = vmatpush1.bf16.msra.mxu0 %v2442
        %3278 = vmatprep.subr.bf16.mxu0 0
        %3279 = vmatpush1.bf16.msra.mxu0 %v2443
        %3280 = vmatprep.subr.bf16.mxu0 0
        %3281 = vmatpush1.bf16.msra.mxu0 %v2444
        %3282 = vmatprep.subr.bf16.mxu0 0
        %3283 = vmatpush1.bf16.msra.mxu0 %v2445
        %3284 = vmatprep.subr.bf16.mxu0 0
        %3285 = vmatpush1.bf16.msra.mxu0 %v2446
        %3286 = vmatprep.subr.bf16.mxu0 0
        %3287 = vmatpush1.bf16.msra.mxu0 %v2447
        %3288 = vmatprep.subr.bf16.mxu0 0
        %3289 = vmatpush1.bf16.msra.mxu0 %v2448
        %3290 = vmatprep.subr.bf16.mxu0 0
        %3291 = vmatpush1.bf16.msra.mxu0 %v2449
        %3292 = vmatprep.subr.bf16.mxu0 0
        %3293 = vmatpush1.bf16.msra.mxu0 %v2450
        %3294 = vmatprep.subr.bf16.mxu0 0
        %3295 = vmatpush1.bf16.msra.mxu0 %v2451
        %3296 = vmatprep.subr.bf16.mxu0 0
        %3297 = vmatpush1.bf16.msra.mxu0 %v2452
        %3298 = vmatprep.subr.bf16.mxu0 0
        %3299 = vmatpush1.bf16.msra.mxu0 %v2453
        %3300 = vmatprep.subr.bf16.mxu0 0
        %3301 = vmatpush1.bf16.msra.mxu0 %v2454
        %3302 = vmatprep.subr.bf16.mxu0 0
        %3303 = vmatpush1.bf16.msra.mxu0 %v2455
        %3304 = vmatprep.mubr.bf16.mxu0 %v1321
        %3305 = vmatmul.mubr.bf16.gmra.mrb[0].mxu0 %v1320
        %v3306 = vpop.f32.mrb[0].mxu0
        %v3307 = vadd.f32 %v3235, %v3306
        %v3308 = vpop.f32.mrb[0].mxu0
        %v3309 = vpop.f32.mrb[0].mxu0
        %v3310 = vadd.f32 %v3238, %v3309
        %v3311 = vpop.f32.mrb[0].mxu0
        %3312 = vmatprep.mubr.bf16.mxu0 %v1345
        %3313 = vmatmul.mubr.bf16.gmra.mrb[0].mxu0 %v1344
        %v3314 = vpop.f32.mrb[0].mxu0
        %v3315 = vadd.f32 %v3243, %v3314
        %v3316 = vpop.f32.mrb[0].mxu0
        %v3317 = vpop.f32.mrb[0].mxu0
        %v3318 = vadd.f32 %v3246, %v3317
        %v3319 = vpop.f32.mrb[0].mxu0
        %3320 = vmatprep.mubr.bf16.mxu0 %v1369
        %3321 = vmatmul.mubr.bf16.gmra.mrb[0].mxu0 %v1368
        %v3322 = vpop.f32.mrb[0].mxu0
        %v3323 = vadd.f32 %v3251, %v3322
        %v3324 = vpop.f32.mrb[0].mxu0
        %v3325 = vpop.f32.mrb[0].mxu0
        %v3326 = vadd.f32 %v3254, %v3325
        %v3327 = vpop.f32.mrb[0].mxu0
        %3328 = vmatprep.mubr.bf16.mxu0 %v1393
        %3329 = vmatmul.mubr.bf16.gmra.mrb[0].mxu0 %v1392
        %v3330 = vpop.f32.mrb[0].mxu0
        %v3331 = vadd.f32 %v3259, %v3330
        %v3332 = vpop.f32.mrb[0].mxu0
        %v3333 = vpop.f32.mrb[0].mxu0
        %v3334 = vadd.f32 %v3262, %v3333
        %v3335 = vpop.f32.mrb[0].mxu0
        %3336 = vmatprep.mubr.bf16.mxu0 %v1417
        %3337 = vmatmul.mubr.bf16.gmra.mrb[0].mxu0 %v1416
        %v3338 = vpop.f32.mrb[0].mxu0
        %v3339 = vadd.f32 %v3267, %v3338
        %v3340 = vpop.f32.mrb[0].mxu0
        %v3341 = vpop.f32.mrb[0].mxu0
        %v3342 = vpop.f32.mrb[0].mxu0
        %3343 = vdwg.mxu0
        %3344 = vmatprep.subr.bf16.mxu0 0
        %3345 = vmatpush1.bf16.msra.mxu0 %v2456
        %3346 = vmatprep.subr.bf16.mxu0 0
        %3347 = vmatpush1.bf16.msra.mxu0 %v2457
        %3348 = vmatprep.subr.bf16.mxu0 0
        %3349 = vmatpush1.bf16.msra.mxu0 %v2458
        %3350 = vmatprep.subr.bf16.mxu0 0
        %3351 = vmatpush1.bf16.msra.mxu0 %v2459
        %3352 = vmatprep.subr.bf16.mxu0 0
        %3353 = vmatpush1.bf16.msra.mxu0 %v2460
        %3354 = vmatprep.subr.bf16.mxu0 0
        %3355 = vmatpush1.bf16.msra.mxu0 %v2461
        %3356 = vmatprep.subr.bf16.mxu0 0
        %3357 = vmatpush1.bf16.msra.mxu0 %v2462
        %3358 = vmatprep.subr.bf16.mxu0 0
        %3359 = vmatpush1.bf16.msra.mxu0 %v2463
        %3360 = vmatprep.subr.bf16.mxu0 0
        %3361 = vmatpush1.bf16.msra.mxu0 %v2464
        %3362 = vmatprep.subr.bf16.mxu0 0
        %3363 = vmatpush1.bf16.msra.mxu0 %v2465
        %3364 = vmatprep.subr.bf16.mxu0 0
        %3365 = vmatpush1.bf16.msra.mxu0 %v2466
        %3366 = vmatprep.subr.bf16.mxu0 0
        %3367 = vmatpush1.bf16.msra.mxu0 %v2467
        %3368 = vmatprep.subr.bf16.mxu0 0
        %3369 = vmatpush1.bf16.msra.mxu0 %v2468
        %3370 = vmatprep.subr.bf16.mxu0 0
        %3371 = vmatpush1.bf16.msra.mxu0 %v2469
        %3372 = vmatprep.subr.bf16.mxu0 0
        %3373 = vmatpush1.bf16.msra.mxu0 %v2470
        %3374 = vmatprep.subr.bf16.mxu0 0
        %3375 = vmatpush1.bf16.msra.mxu0 %v2471
        %3376 = vmatprep.mubr.bf16.mxu0 %v1323
        %3377 = vmatmul.mubr.bf16.gmra.mrb[0].mxu0 %v1322
        %v3378 = vpop.f32.mrb[0].mxu0
        %v3379 = vadd.f32 %v3307, %v3378
        %v3380 = vpop.f32.mrb[0].mxu0
        %v3381 = vpop.f32.mrb[0].mxu0
        %v3382 = vadd.f32 %v3310, %v3381
        %v3383 = vpop.f32.mrb[0].mxu0
        %3384 = vmatprep.mubr.bf16.mxu0 %v1347
        %3385 = vmatmul.mubr.bf16.gmra.mrb[0].mxu0 %v1346
        %v3386 = vpop.f32.mrb[0].mxu0
        %v3387 = vadd.f32 %v3315, %v3386
        %v3388 = vpop.f32.mrb[0].mxu0
        %v3389 = vpop.f32.mrb[0].mxu0
        %v3390 = vadd.f32 %v3318, %v3389
        %v3391 = vpop.f32.mrb[0].mxu0
        %3392 = vmatprep.mubr.bf16.mxu0 %v1371
        %3393 = vmatmul.mubr.bf16.gmra.mrb[0].mxu0 %v1370
        %v3394 = vpop.f32.mrb[0].mxu0
        %v3395 = vadd.f32 %v3323, %v3394
        %v3396 = vpop.f32.mrb[0].mxu0
        %v3397 = vpop.f32.mrb[0].mxu0
        %v3398 = vadd.f32 %v3326, %v3397
        %v3399 = vpop.f32.mrb[0].mxu0
        %3400 = vmatprep.mubr.bf16.mxu0 %v1395
        %3401 = vmatmul.mubr.bf16.gmra.mrb[0].mxu0 %v1394
        %v3402 = vpop.f32.mrb[0].mxu0
        %v3403 = vadd.f32 %v3331, %v3402
        %v3404 = vpop.f32.mrb[0].mxu0
        %v3405 = vpop.f32.mrb[0].mxu0
        %v3406 = vadd.f32 %v3334, %v3405
        %v3407 = vpop.f32.mrb[0].mxu0
        %3408 = vmatprep.mubr.bf16.mxu0 %v1419
        %3409 = vmatmul.mubr.bf16.gmra.mrb[0].mxu0 %v1418
        %v3410 = vpop.f32.mrb[0].mxu0
        %v3411 = vadd.f32 %v3339, %v3410
        %v3412 = vpop.f32.mrb[0].mxu0
        %v3413 = vpop.f32.mrb[0].mxu0
        %v3414 = vpop.f32.mrb[0].mxu0
        %3415 = vdwg.mxu0
        %3416 = vmatprep.subr.bf16.mxu0 0
        %3417 = vmatpush1.bf16.msra.mxu0 %v2472
        %3418 = vmatprep.subr.bf16.mxu0 0
        %3419 = vmatpush1.bf16.msra.mxu0 %v2473
        %3420 = vmatprep.subr.bf16.mxu0 0
        %3421 = vmatpush1.bf16.msra.mxu0 %v2474
        %3422 = vmatprep.subr.bf16.mxu0 0
        %3423 = vmatpush1.bf16.msra.mxu0 %v2475
        %3424 = vmatprep.subr.bf16.mxu0 0
        %3425 = vmatpush1.bf16.msra.mxu0 %v2476
        %3426 = vmatprep.subr.bf16.mxu0 0
        %3427 = vmatpush1.bf16.msra.mxu0 %v2477
        %3428 = vmatprep.subr.bf16.mxu0 0
        %3429 = vmatpush1.bf16.msra.mxu0 %v2478
        %3430 = vmatprep.subr.bf16.mxu0 0
        %3431 = vmatpush1.bf16.msra.mxu0 %v2479
        %3432 = vmatprep.subr.bf16.mxu0 0
        %3433 = vmatpush1.bf16.msra.mxu0 %v2480
        %3434 = vmatprep.subr.bf16.mxu0 0
        %3435 = vmatpush1.bf16.msra.mxu0 %v2481
        %3436 = vmatprep.subr.bf16.mxu0 0
        %3437 = vmatpush1.bf16.msra.mxu0 %v2482
        %3438 = vmatprep.subr.bf16.mxu0 0
        %3439 = vmatpush1.bf16.msra.mxu0 %v2483
        %3440 = vmatprep.subr.bf16.mxu0 0
        %3441 = vmatpush1.bf16.msra.mxu0 %v2484
        %3442 = vmatprep.subr.bf16.mxu0 0
        %3443 = vmatpush1.bf16.msra.mxu0 %v2485
        %3444 = vmatprep.subr.bf16.mxu0 0
        %3445 = vmatpush1.bf16.msra.mxu0 %v2486
        %3446 = vmatprep.subr.bf16.mxu0 0
        %3447 = vmatpush1.bf16.msra.mxu0 %v2487
        %3448 = vmatprep.mubr.bf16.mxu0 %v1325
        %3449 = vmatmul.mubr.bf16.gmra.mrb[0].mxu0 %v1324
        %v3450 = vpop.f32.mrb[0].mxu0
        %v3451 = vadd.f32 %v3379, %v3450
        %v3452 = vpop.f32.mrb[0].mxu0
        %v3453 = vpop.f32.mrb[0].mxu0
        %v3454 = vadd.f32 %v3382, %v3453
        %v3455 = vpop.f32.mrb[0].mxu0
        %3456 = vmatprep.mubr.bf16.mxu0 %v1349
        %3457 = vmatmul.mubr.bf16.gmra.mrb[0].mxu0 %v1348
        %v3458 = vpop.f32.mrb[0].mxu0
        %v3459 = vadd.f32 %v3387, %v3458
        %v3460 = vpop.f32.mrb[0].mxu0
        %v3461 = vpop.f32.mrb[0].mxu0
        %v3462 = vadd.f32 %v3390, %v3461
        %v3463 = vpop.f32.mrb[0].mxu0
        %3464 = vmatprep.mubr.bf16.mxu0 %v1373
        %3465 = vmatmul.mubr.bf16.gmra.mrb[0].mxu0 %v1372
        %v3466 = vpop.f32.mrb[0].mxu0
        %v3467 = vadd.f32 %v3395, %v3466
        %v3468 = vpop.f32.mrb[0].mxu0
        %v3469 = vpop.f32.mrb[0].mxu0
        %v3470 = vadd.f32 %v3398, %v3469
        %v3471 = vpop.f32.mrb[0].mxu0
        %3472 = vmatprep.mubr.bf16.mxu0 %v1397
        %3473 = vmatmul.mubr.bf16.gmra.mrb[0].mxu0 %v1396
        %v3474 = vpop.f32.mrb[0].mxu0
        %v3475 = vadd.f32 %v3403, %v3474
        %v3476 = vpop.f32.mrb[0].mxu0
        %v3477 = vpop.f32.mrb[0].mxu0
        %v3478 = vadd.f32 %v3406, %v3477
        %v3479 = vpop.f32.mrb[0].mxu0
        %3480 = vmatprep.mubr.bf16.mxu0 %v1421
        %3481 = vmatmul.mubr.bf16.gmra.mrb[0].mxu0 %v1420
        %v3482 = vpop.f32.mrb[0].mxu0
        %v3483 = vadd.f32 %v3411, %v3482
        %v3484 = vpop.f32.mrb[0].mxu0
        %v3485 = vpop.f32.mrb[0].mxu0
        %v3486 = vpop.f32.mrb[0].mxu0
        %3487 = vdwg.mxu0
        %3488 = vmatprep.subr.bf16.mxu0 0
        %3489 = vmatpush1.bf16.msra.mxu0 %v2488
        %3490 = vmatprep.subr.bf16.mxu0 0
        %3491 = vmatpush1.bf16.msra.mxu0 %v2489
        %3492 = vmatprep.subr.bf16.mxu0 0
        %3493 = vmatpush1.bf16.msra.mxu0 %v2490
        %3494 = vmatprep.subr.bf16.mxu0 0
        %3495 = vmatpush1.bf16.msra.mxu0 %v2491
        %3496 = vmatprep.subr.bf16.mxu0 0
        %3497 = vmatpush1.bf16.msra.mxu0 %v2492
        %3498 = vmatprep.subr.bf16.mxu0 0
        %3499 = vmatpush1.bf16.msra.mxu0 %v2493
        %3500 = vmatprep.subr.bf16.mxu0 0
        %3501 = vmatpush1.bf16.msra.mxu0 %v2494
        %3502 = vmatprep.subr.bf16.mxu0 0
        %3503 = vmatpush1.bf16.msra.mxu0 %v2495
        %3504 = vmatprep.subr.bf16.mxu0 0
        %3505 = vmatpush1.bf16.msra.mxu0 %v2496
        %3506 = vmatprep.subr.bf16.mxu0 0
        %3507 = vmatpush1.bf16.msra.mxu0 %v2497
        %3508 = vmatprep.subr.bf16.mxu0 0
        %3509 = vmatpush1.bf16.msra.mxu0 %v2498
        %3510 = vmatprep.subr.bf16.mxu0 0
        %3511 = vmatpush1.bf16.msra.mxu0 %v2499
        %3512 = vmatprep.subr.bf16.mxu0 0
        %3513 = vmatpush1.bf16.msra.mxu0 %v2500
        %3514 = vmatprep.subr.bf16.mxu0 0
        %3515 = vmatpush1.bf16.msra.mxu0 %v2501
        %3516 = vmatprep.subr.bf16.mxu0 0
        %3517 = vmatpush1.bf16.msra.mxu0 %v2502
        %3518 = vmatprep.subr.bf16.mxu0 0
        %3519 = vmatpush1.bf16.msra.mxu0 %v2503
        %3520 = vmatprep.mubr.bf16.mxu0 %v1327
        %3521 = vmatmul.mubr.bf16.gmra.mrb[0].mxu0 %v1326
        %v3522 = vpop.f32.mrb[0].mxu0
        %v3523 = vadd.f32 %v3451, %v3522
        %v3524 = vpop.f32.mrb[0].mxu0
        %v3525 = vpop.f32.mrb[0].mxu0
        %v3526 = vadd.f32 %v3454, %v3525
        %v3527 = vpop.f32.mrb[0].mxu0
        %3528 = vmatprep.mubr.bf16.mxu0 %v1351
        %3529 = vmatmul.mubr.bf16.gmra.mrb[0].mxu0 %v1350
        %v3530 = vpop.f32.mrb[0].mxu0
        %v3531 = vadd.f32 %v3459, %v3530
        %v3532 = vpop.f32.mrb[0].mxu0
        %v3533 = vpop.f32.mrb[0].mxu0
        %v3534 = vadd.f32 %v3462, %v3533
        %v3535 = vpop.f32.mrb[0].mxu0
        %3536 = vmatprep.mubr.bf16.mxu0 %v1375
        %3537 = vmatmul.mubr.bf16.gmra.mrb[0].mxu0 %v1374
        %v3538 = vpop.f32.mrb[0].mxu0
        %v3539 = vadd.f32 %v3467, %v3538
        %v3540 = vpop.f32.mrb[0].mxu0
        %v3541 = vpop.f32.mrb[0].mxu0
        %v3542 = vadd.f32 %v3470, %v3541
        %v3543 = vpop.f32.mrb[0].mxu0
        %3544 = vmatprep.mubr.bf16.mxu0 %v1399
        %3545 = vmatmul.mubr.bf16.gmra.mrb[0].mxu0 %v1398
        %v3546 = vpop.f32.mrb[0].mxu0
        %v3547 = vadd.f32 %v3475, %v3546
        %v3548 = vpop.f32.mrb[0].mxu0
        %v3549 = vpop.f32.mrb[0].mxu0
        %v3550 = vadd.f32 %v3478, %v3549
        %v3551 = vpop.f32.mrb[0].mxu0
        %3552 = vmatprep.mubr.bf16.mxu0 %v1423
        %3553 = vmatmul.mubr.bf16.gmra.mrb[0].mxu0 %v1422
        %v3554 = vpop.f32.mrb[0].mxu0
        %v3555 = vadd.f32 %v3483, %v3554
        %v3556 = vpop.f32.mrb[0].mxu0
        %v3557 = vpop.f32.mrb[0].mxu0
        %v3558 = vpop.f32.mrb[0].mxu0
        %3559 = vdwg.mxu0
        %p3560 = scmp.eq.s32.totalorder %s21, 0
        // Predicated region
        $region56: #{_lambda_.7} parent=50 // pred_check
          %p3561 = pneg %p3560
        $region57: #{_lambda_.7} parent=50 // pred_check_branch
          %3563 = sbr.rel (%p3561) target = $region59
        $region58: #{_lambda_.7} parent=50 // pred_region
          %3564 = vst [vmem:[%s485] sm:$0xff] 0.0
          %3565 = vst [vmem:[%s485 + $0x8] sm:$0xff] 0.0
          %3566 = vst [vmem:[%s485 + $0x10] sm:$0xff] 0.0
          %3567 = vst [vmem:[%s485 + $0x18] sm:$0xff] 0.0
          %3568 = vst [vmem:[%s485 + $0x20] sm:$0xff] 0.0
          %3569 = vst [vmem:[%s485 + $0x28] sm:$0xff] 0.0
          %3570 = vst [vmem:[%s485 + $0x30] sm:$0xff] 0.0
          %3571 = vst [vmem:[%s485 + $0x38] sm:$0xff] 0.0
          %3572 = vst [vmem:[%s485 + $0x40] sm:$0xff] 0.0
        $region59: #{_lambda_.7} parent=50 // pred_fallthru
          _
        %v3573 = vld [vmem:[%s485] sm:$0xff]
        %v3574 = vld [vmem:[%s485 + $0x8] sm:$0xff]
        %v3575 = vld [vmem:[%s485 + $0x10] sm:$0xff]
        %v3576 = vld [vmem:[%s485 + $0x18] sm:$0xff]
        %v3577 = vld [vmem:[%s485 + $0x20] sm:$0xff]
        %v3578 = vld [vmem:[%s485 + $0x28] sm:$0xff]
        %v3579 = vld [vmem:[%s485 + $0x30] sm:$0xff]
        %v3580 = vld [vmem:[%s485 + $0x38] sm:$0xff]
        %v3581 = vld [vmem:[%s485 + $0x40] sm:$0xff]
        %v3582 = vadd.f32 %v3573, %v3523
        %v3583 = vadd.f32 %v3574, %v3526
        %v3584 = vadd.f32 %v3575, %v3531
        %v3585 = vadd.f32 %v3576, %v3534
        %v3586 = vadd.f32 %v3577, %v3539
        %v3587 = vadd.f32 %v3578, %v3542
        %v3588 = vadd.f32 %v3579, %v3547
        %v3589 = vadd.f32 %v3580, %v3550
        %v3590 = vadd.f32 %v3581, %v3555
        %3591 = vst [vmem:[%s485] sm:$0xff] %v3582
        %3592 = vst [vmem:[%s485 + $0x8] sm:$0xff] %v3583
        %3593 = vst [vmem:[%s485 + $0x10] sm:$0xff] %v3584
        %3594 = vst [vmem:[%s485 + $0x18] sm:$0xff] %v3585
        %3595 = vst [vmem:[%s485 + $0x20] sm:$0xff] %v3586
        %3596 = vst [vmem:[%s485 + $0x28] sm:$0xff] %v3587
        %3597 = vst [vmem:[%s485 + $0x30] sm:$0xff] %v3588
        %3598 = vst [vmem:[%s485 + $0x38] sm:$0xff] %v3589
        %3599 = vst [vmem:[%s485 + $0x40] sm:$0xff] %v3590
        %p3600 = scmp.eq.s32.totalorder %s21, 2
        // Predicated region
        $region60: #{_lambda_.7} parent=50 // pred_check
          %p3601 = pneg %p3600
        $region61: #{_lambda_.7} parent=50 // pred_check_branch
          %3603 = sbr.rel (%p3601) target = $region63
        $region62: #{_lambda_.7} parent=50 // pred_region
          %v3604 = vld [vmem:[%s485] sm:$0xff]
          %v3605 = vld [vmem:[%s485 + $0x8] sm:$0xff]
          %v3606 = vld [vmem:[%s485 + $0x10] sm:$0xff]
          %v3607 = vld [vmem:[%s485 + $0x18] sm:$0xff]
          %v3608 = vld [vmem:[%s485 + $0x20] sm:$0xff]
          %v3609 = vld [vmem:[%s485 + $0x28] sm:$0xff]
          %v3610 = vld [vmem:[%s485 + $0x30] sm:$0xff]
          %v3611 = vld [vmem:[%s485 + $0x38] sm:$0xff]
          %v3612 = vld [vmem:[%s485 + $0x40] sm:$0xff]
          %v3613 = vld [vmem:[%s477] sm:$0x1]
          %v3615 = vlaneseq
          %v3616 = vshrl.u32 %v3615, 7
          %v3617 = vsub.s32 0, %v3616
          %v3618 = vrot.slane %v3613, %v3617
          %v3620 = vadd.f32 %v3604, %v3618
          %v3621 = vadd.f32 %v3605, %v3618
          %v3622 = vadd.f32 %v3606, %v3618
          %v3623 = vadd.f32 %v3607, %v3618
          %v3624 = vadd.f32 %v3608, %v3618
          %v3625 = vadd.f32 %v3609, %v3618
          %v3626 = vadd.f32 %v3610, %v3618
          %v3627 = vadd.f32 %v3611, %v3618
          %v3628 = vadd.f32 %v3612, %v3618
          %v3629 = vmax.f32 %v3620, 0.0
          %v3630 = vmax.f32 %v3621, 0.0
          %v3631 = vmax.f32 %v3622, 0.0
          %v3632 = vmax.f32 %v3623, 0.0
          %v3633 = vmax.f32 %v3624, 0.0
          %v3634 = vmax.f32 %v3625, 0.0
          %v3635 = vmax.f32 %v3626, 0.0
          %v3636 = vmax.f32 %v3627, 0.0
          %v3637 = vmax.f32 %v3628, 0.0
          %3638 = vst [vmem:[%s485] sm:$0xff] %v3629
          %3639 = vst [vmem:[%s485 + $0x8] sm:$0xff] %v3630
          %3640 = vst [vmem:[%s485 + $0x10] sm:$0xff] %v3631
          %3641 = vst [vmem:[%s485 + $0x18] sm:$0xff] %v3632
          %3642 = vst [vmem:[%s485 + $0x20] sm:$0xff] %v3633
          %3643 = vst [vmem:[%s485 + $0x28] sm:$0xff] %v3634
          %3644 = vst [vmem:[%s485 + $0x30] sm:$0xff] %v3635
          %3645 = vst [vmem:[%s485 + $0x38] sm:$0xff] %v3636
          %3646 = vst [vmem:[%s485 + $0x40] sm:$0xff] %v3637
        $region63: #{_lambda_.7} parent=50 // pred_fallthru
          _
        %s3647 = smul.u32 9, %s19
        %p3648 = scmp.lt.s32.totalorder %s3647, 8
        %s3649 = scalar_select %p3648, %s3647, 8
        %p3650 = scmp.lt.s32.totalorder %s20, 0
        %s3651 = scalar_select %p3650, %s20, 0
        %s3652 = sadd.s32 %s3651, %s3649
        %s3653 = smul.addr %s3652, 8
        %s3654 = scalar_lea.vmem %s3, %s3653
        // Predicated region
        $region64: #{_lambda_.7} parent=50 // pred_check
          %p3655 = pneg %p135
        $region65: #{_lambda_.7} parent=50 // pred_check_branch
          %3657 = sbr.rel (%p3655) target = $region67
        $region66: #{_lambda_.7} parent=50 // pred_region
          %s3658 = smul.u32 9, %s19
        $region67: #{_lambda_.7} parent=50 // pred_fallthru
          _
        // Predicated region
        $region68: #{_lambda_.7} parent=50 // pred_check
          %p3659 = pneg %p135
        $region69: #{_lambda_.7} parent=50 // pred_check_branch
          %3661 = sbr.rel (%p3659) target = $region71
        $region70: #{_lambda_.7} parent=50 // pred_region
          %s3662 = smul.u32 9, %s19
          %p3663 = scmp.lt.s32.totalorder %s3662, 8
          %s3664 = scalar_select %p3663, %s3662, 8
          %p3665 = scmp.lt.s32.totalorder %s20, 0
          %s3666 = scalar_select %p3665, %s20, 0
          %s3667 = sadd.s32 %s3666, %s3664
          %s3668 = smul.addr %s3667, 8
          %s3669 = scalar_lea.vmem %s3, %s3668
        $region71: #{_lambda_.7} parent=50 // pred_fallthru
          _
      $region51: #{_lambda_.7} parent=5 // pred_fallthru
        _
      %p3670 = scmp.le.s32.totalorder 2, %s9
      // Predicated region
      $region72: #{_lambda_.7} parent=5 // pred_check
        %p3671 = pneg %p3670
      $region73: #{_lambda_.7} parent=5 // pred_check_branch
        %3673 = sbr.rel (%p3671) target = $region75
      $region74: #{_lambda_.7} parent=5 // pred_region
        %s3674 = ssub.s32 %s9, 2
      $region75: #{_lambda_.7} parent=5 // pred_fallthru
        _
    $region6: #{_lambda_.7} parent=1 // loop_footer
      %s13 = sadd.s32 1, %s9
    $region7: #{_lambda_.7} parent=1 // loop_footer_branch
      %8 = sbr.rel target = $region3
    $region8: #{_lambda_.7} parent=1 // loop_exit
      _

</llo_original>
